<compile_context>
chip_gen: v6e
topology: v6e:2x2x1
jax: 0.10.0
libtpu: 0.0.40
codegen_flags: <defaults>
</compile_context>

<pallas_src>
import jax
import jax.numpy as jnp
from jax.experimental import pallas as pl
from jax.experimental.pallas import tpu as pltpu


KSIZE = 5  # both convs in CNNNetwork are 5x5, stride 1, valid padding


def _round_up(x, m):
    return ((x + m - 1) // m) * m


# ----------------------------------------------------------------------------
# Host-side (traced, tiny) one-time weight preparation
# ----------------------------------------------------------------------------
def _unfold_conv_weight(w, in_w):
    """(O, C, 5, 5) -> (5, in_w*C, out_w*O) 'unfolded' conv weights.

    For kernel row kh, with activations laid out rows=(oh, b), lanes=(w, c):
        out[(oh, b), (ow, o)] += act[(oh+kh, b), (w, c)] @ unf[kh][(w, c), (ow, o)]
    where unf[kh][(w, c), (ow, o)] = w[o, c, kh, w-ow] if 0 <= w-ow < 5 else 0.
    """
    O, C, KH, KW = w.shape
    out_w = in_w - KW + 1
    wi = jnp.arange(in_w)[:, None, None]
    owi = jnp.arange(out_w)[None, :, None]
    kwi = jnp.arange(KW)[None, None, :]
    pos = (wi == owi + kwi).astype(jnp.float32)              # (in_w, out_w, KW)
    unf = jnp.einsum("wzk,ochk->hwczo", pos, w.astype(jnp.float32))
    return unf.reshape(KH, in_w * C, out_w * O)


def _pool_col_selectors(out_w, c):
    """0/1 selectors (out_w*c, (out_w//2)*c) picking even / odd columns."""
    zw = out_w // 2
    sw = jnp.arange(out_w)[:, None, None, None]
    sc = jnp.arange(c)[None, :, None, None]
    dw = jnp.arange(zw)[None, None, :, None]
    dc = jnp.arange(c)[None, None, None, :]
    even = ((sw == 2 * dw) & (sc == dc)).astype(jnp.float32)
    odd = ((sw == 2 * dw + 1) & (sc == dc)).astype(jnp.float32)
    return even.reshape(out_w * c, zw * c), odd.reshape(out_w * c, zw * c)


# ----------------------------------------------------------------------------
# The fused forward kernel (one batch TILE per grid step)
# ----------------------------------------------------------------------------
def _cnn_kernel(x_ref, w1_ref, b1_ref, w2_ref, b2_ref,
                s1e_ref, s1o_ref, s2e_ref, s2o_ref,
                l1w_ref, l1b_ref, l2w_ref, l2b_ref, l3w_ref, l3b_ref,
                o_ref):
    f32 = jnp.float32
    x = x_ref[...].astype(f32)                         # (28, Bt, 28*C)
    _, Bt, WC = x.shape

    # ---- conv1 + bias + ReLU: rows=(oh, b), lanes=(ow, oc) ------------------
    OH1, L1 = 24, 24 * 6
    acc1 = jnp.dot(x[0:OH1].reshape(OH1 * Bt, WC), w1_ref[0],
                   preferred_element_type=f32)
    for kh in range(1, KSIZE):
        xs = x[kh:kh + OH1].reshape(OH1 * Bt, WC)
        acc1 = acc1 + jnp.dot(xs, w1_ref[kh], preferred_element_type=f32)
    a1 = jnp.maximum(acc1 + b1_ref[...], 0.0)          # (24*Bt, 144)

    # ---- maxpool 2x2 #1: lanes via resident 0/1 selectors, rows via split ---
    cmax = jnp.maximum(
        jnp.dot(a1, s1e_ref[...], preferred_element_type=f32),
        jnp.dot(a1, s1o_ref[...], preferred_element_type=f32))
    cmax = cmax.reshape(12, 2, Bt, 12 * 6)
    p1 = jnp.maximum(cmax[:, 0], cmax[:, 1])           # (12, Bt, 72)

    # ---- conv2 + bias + ReLU ------------------------------------------------
    OH2 = 8
    acc2 = jnp.dot(p1[0:OH2].reshape(OH2 * Bt, 12 * 6), w2_ref[0],
                   preferred_element_type=f32)
    for kh in range(1, KSIZE):
        xs = p1[kh:kh + OH2].reshape(OH2 * Bt, 12 * 6)
        acc2 = acc2 + jnp.dot(xs, w2_ref[kh], preferred_element_type=f32)
    a2 = jnp.maximum(acc2 + b2_ref[...], 0.0)          # (8*Bt, 128)

    # ---- maxpool 2x2 #2 -----------------------------------------------------
    cmax2 = jnp.maximum(
        jnp.dot(a2, s2e_ref[...], preferred_element_type=f32),
        jnp.dot(a2, s2o_ref[...], preferred_element_type=f32))
    cmax2 = cmax2.reshape(4, 2, Bt, 4 * 16)
    p2 = jnp.maximum(cmax2[:, 0], cmax2[:, 1])         # (4, Bt, 64)

    # ---- flatten + lin1 (+ReLU), lin2 (+ReLU), lin3 -------------------------
    # lin1 weights were pre-permuted host-side to the kernel's (y, x, c) order.
    h1 = jnp.dot(p2[0], l1w_ref[0:64, :], preferred_element_type=f32)
    for y in range(1, 4):
        h1 = h1 + jnp.dot(p2[y], l1w_ref[y * 64:(y + 1) * 64, :],
                          preferred_element_type=f32)
    h1 = jnp.maximum(h1 + l1b_ref[...], 0.0)           # (Bt, 128)
    h2 = jnp.maximum(
        jnp.dot(h1, l2w_ref[...], preferred_element_type=f32) + l2b_ref[...],
        0.0)                                           # (Bt, 64)
    out = (jnp.dot(h2, l3w_ref[...], preferred_element_type=f32)
           + l3b_ref[...])                             # (Bt, NPAD) lane-dense
    o_ref[...] = out.astype(o_ref.dtype)


# ----------------------------------------------------------------------------
# Wrapper: one-time weight layout prep + the single pallas_call
# ----------------------------------------------------------------------------
def cnn_forward(params, x, *, batch_tile=32):
    """x: (B, C, 28, 28) NCHW float32 -> logits (B, num_classes)."""
    B, C, H, W = x.shape
    assert (H, W) == (28, 28), "CNNNetwork expects 28x28 inputs (lin1 is 16*4*4)"
    num_classes = params["lin3_w"].shape[0]
    npad = _round_up(num_classes, 128)

    bt = _round_up(min(batch_tile, _round_up(B, 8)), 8)
    b_pad = _round_up(B, bt)
    grid = (b_pad // bt,)

    # --- one-time parameter layout prep (weights only) ----------------------
    w1 = _unfold_conv_weight(params["conv1_w"], 28)            # (5, 28*C, 144)
    b1 = jnp.tile(params["conv1_b"].astype(jnp.float32), 24).reshape(1, 144)
    w2 = _unfold_conv_weight(params["conv2_w"], 12)            # (5, 72, 128)
    b2 = jnp.tile(params["conv2_b"].astype(jnp.float32), 8).reshape(1, 128)
    s1e, s1o = _pool_col_selectors(24, 6)                      # (144, 72)
    s2e, s2o = _pool_col_selectors(8, 16)                      # (128, 64)
    # lin1: torch flatten order is (c, y, x); kernel flatten order is (y, x, c)
    l1w = jnp.transpose(params["lin1_w"].reshape(128, 16, 4, 4),
                        (2, 3, 1, 0)).reshape(256, 128).astype(jnp.float32)
    l1b = params["lin1_b"].reshape(1, 128).astype(jnp.float32)
    l2w = params["lin2_w"].T.astype(jnp.float32)               # (128, 64)
    l2b = params["lin2_b"].reshape(1, 64).astype(jnp.float32)
    l3w = jnp.pad(params["lin3_w"].T.astype(jnp.float32),
                  ((0, 0), (0, npad - num_classes)))           # (64, npad)
    l3b = jnp.pad(params["lin3_b"].reshape(1, -1).astype(jnp.float32),
                  ((0, 0), (0, npad - num_classes)))           # (1, npad)

    weights = (w1, b1, w2, b2, s1e, s1o, s2e, s2o,
               l1w, l1b, l2w, l2b, l3w, l3b)

    # Single input layout change at the boundary: NCHW -> (H, B_pad, W*C)
    # (batch on sublanes, flattened (w, c) on lanes).
    x_p = jnp.pad(x.astype(jnp.float32),
                  ((0, b_pad - B), (0, 0), (0, 0), (0, 0)))
    x_hbw = jnp.transpose(x_p, (2, 0, 3, 1)).reshape(28, b_pad, 28 * C)

    def _const_spec(a):
        nd = a.ndim
        return pl.BlockSpec(a.shape, lambda i, _nd=nd: (0,) * _nd)

    in_specs = [pl.BlockSpec((28, bt, 28 * C), lambda i: (0, i, 0))]
    in_specs += [_const_spec(wgt) for wgt in weights]

    steps = grid[0]
    flops = steps * (
        5 * 2 * (24 * bt) * (28 * C) * 144            # conv1 (unfolded)
        + 2 * 2 * (24 * bt) * 144 * 72                # pool1 selectors
        + 5 * 2 * (8 * bt) * 72 * 128                 # conv2 (unfolded)
        + 2 * 2 * (8 * bt) * 128 * 64                 # pool2 selectors
        + 4 * 2 * bt * 64 * 128                       # lin1
        + 2 * bt * 128 * 64 + 2 * bt * 64 * npad)     # lin2, lin3
    bytes_accessed = 4 * (x_hbw.size + sum(int(w_.size) for w_ in weights)
                          + b_pad * npad)

    out = pl.pallas_call(
        _cnn_kernel,
        grid=grid,
        in_specs=in_specs,
        out_specs=pl.BlockSpec((bt, npad), lambda i: (i, 0)),
        out_shape=jax.ShapeDtypeStruct((b_pad, npad), jnp.float32),
        compiler_params=pltpu.CompilerParams(
            dimension_semantics=("parallel",)),
        cost_estimate=pl.CostEstimate(
            flops=int(flops), transcendentals=0,
            bytes_accessed=int(bytes_accessed)),
    )(x_hbw, *weights)
    return out[:B, :num_classes]


# ----------------------------------------------------------------------------
# Parameters (deterministic, PyTorch-default-style uniform init)
# ----------------------------------------------------------------------------
def _uniform(key, shape, fan_in):
    bound = 1.0 / jnp.sqrt(jnp.float32(fan_in))
    return jax.random.uniform(key, shape, jnp.float32, -bound, bound)


def init_params(key, input_dim, num_classes):
    ks = jax.random.split(key, 10)
    p = {}
    p["conv1_w"] = _uniform(ks[0], (6, input_dim, 5, 5), input_dim * 25)
    p["conv1_b"] = _uniform(ks[1], (6,), input_dim * 25)
    p["conv2_w"] = _uniform(ks[2], (16, 6, 5, 5), 6 * 25)
    p["conv2_b"] = _uniform(ks[3], (16,), 6 * 25)
    p["lin1_w"] = _uniform(ks[4], (128, 16 * 4 * 4), 16 * 4 * 4)
    p["lin1_b"] = _uniform(ks[5], (128,), 16 * 4 * 4)
    p["lin2_w"] = _uniform(ks[6], (64, 128), 128)
    p["lin2_b"] = _uniform(ks[7], (64,), 128)
    p["lin3_w"] = _uniform(ks[8], (num_classes, 64), 64)
    p["lin3_b"] = _uniform(ks[9], (num_classes,), 64)
    return p


# ----------------------------------------------------------------------------
# Pure-JAX reference (correctness check only)
# ----------------------------------------------------------------------------
def cnn_forward_ref(params, x):
    def conv(x, w, b):
        y = jax.lax.conv(x, w, window_strides=(1, 1), padding="VALID")
        return jnp.maximum(y + b.reshape(1, -1, 1, 1), 0.0)

    def pool(x):
        return jax.lax.reduce_window(
            x, -jnp.inf, jax.lax.max, (1, 1, 2, 2), (1, 1, 2, 2), "VALID")

    x = pool(conv(x, params["conv1_w"], params["conv1_b"]))
    x = pool(conv(x, params["conv2_w"], params["conv2_b"]))
    x = x.reshape(x.shape[0], -1)
    x = jnp.maximum(x @ params["lin1_w"].T + params["lin1_b"], 0.0)
    x = jnp.maximum(x @ params["lin2_w"].T + params["lin2_b"], 0.0)
    return x @ params["lin3_w"].T + params["lin3_b"]


if __name__ == "__main__":
    key = jax.random.PRNGKey(0)
    k_param, k_x = jax.random.split(key)

    input_dimention = 1      # MNIST-style single channel
    num_classes = 10
    batch = 48               # exercises batch padding (->64) and a 2-step grid
    # Spatial size must be 28 so that lin1's 16*4*4 input dimension matches.
    x = jax.random.normal(k_x, (batch, input_dimention, 28, 28), jnp.float32)

    params = init_params(k_param, input_dimention, num_classes)

    fwd = jax.jit(cnn_forward)
    out = jax.block_until_ready(fwd(params, x))
    assert out.shape == (batch, num_classes), out.shape

    ref = jax.block_until_ready(cnn_forward_ref(params, x))
    assert jnp.allclose(out, ref, atol=1e-3, rtol=1e-3), (
        float(jnp.max(jnp.abs(out - ref))))

    print("KERNEL_OK")
</pallas_src>

<mosaic_0001>
module attributes {stable_mosaic.version = 11 : i64} {
  func.func @_cnn_kernel(%arg0: i32, %arg1: memref<28x32x28xf32, #tpu.memory_space<vmem>>, %arg2: memref<5x28x144xf32, #tpu.memory_space<vmem>>, %arg3: memref<1x144xf32, #tpu.memory_space<vmem>>, %arg4: memref<5x72x128xf32, #tpu.memory_space<vmem>>, %arg5: memref<1x128xf32, #tpu.memory_space<vmem>>, %arg6: memref<144x72xf32, #tpu.memory_space<vmem>>, %arg7: memref<144x72xf32, #tpu.memory_space<vmem>>, %arg8: memref<128x64xf32, #tpu.memory_space<vmem>>, %arg9: memref<128x64xf32, #tpu.memory_space<vmem>>, %arg10: memref<256x128xf32, #tpu.memory_space<vmem>>, %arg11: memref<1x128xf32, #tpu.memory_space<vmem>>, %arg12: memref<128x64xf32, #tpu.memory_space<vmem>>, %arg13: memref<1x64xf32, #tpu.memory_space<vmem>>, %arg14: memref<64x128xf32, #tpu.memory_space<vmem>>, %arg15: memref<1x128xf32, #tpu.memory_space<vmem>>, %arg16: memref<32x128xf32, #tpu.memory_space<vmem>>) attributes {dimension_semantics = [#tpu.dimension_semantics<parallel>], iteration_bounds = array<i64: 2>, scalar_prefetch = 0 : i64, scratch_operands = 0 : i64, tpu.core_type = #tpu.core_type<tc>, window_params = [{transform_indices = @transform_0, window_bounds = array<i64: 28, 32, 28>}, {pipeline_mode = #tpu.pipeline_mode<synchronous>, transform_indices = @transform_1, window_bounds = array<i64: 5, 28, 144>}, {pipeline_mode = #tpu.pipeline_mode<synchronous>, transform_indices = @transform_2, window_bounds = array<i64: 1, 144>}, {pipeline_mode = #tpu.pipeline_mode<synchronous>, transform_indices = @transform_3, window_bounds = array<i64: 5, 72, 128>}, {pipeline_mode = #tpu.pipeline_mode<synchronous>, transform_indices = @transform_4, window_bounds = array<i64: 1, 128>}, {pipeline_mode = #tpu.pipeline_mode<synchronous>, transform_indices = @transform_5, window_bounds = array<i64: 144, 72>}, {pipeline_mode = #tpu.pipeline_mode<synchronous>, transform_indices = @transform_6, window_bounds = array<i64: 144, 72>}, {pipeline_mode = #tpu.pipeline_mode<synchronous>, transform_indices = @transform_7, window_bounds = array<i64: 128, 64>}, {pipeline_mode = #tpu.pipeline_mode<synchronous>, transform_indices = @transform_8, window_bounds = array<i64: 128, 64>}, {pipeline_mode = #tpu.pipeline_mode<synchronous>, transform_indices = @transform_9, window_bounds = array<i64: 256, 128>}, {pipeline_mode = #tpu.pipeline_mode<synchronous>, transform_indices = @transform_10, window_bounds = array<i64: 1, 128>}, {pipeline_mode = #tpu.pipeline_mode<synchronous>, transform_indices = @transform_11, window_bounds = array<i64: 128, 64>}, {pipeline_mode = #tpu.pipeline_mode<synchronous>, transform_indices = @transform_12, window_bounds = array<i64: 1, 64>}, {pipeline_mode = #tpu.pipeline_mode<synchronous>, transform_indices = @transform_13, window_bounds = array<i64: 64, 128>}, {pipeline_mode = #tpu.pipeline_mode<synchronous>, transform_indices = @transform_14, window_bounds = array<i64: 1, 128>}, {transform_indices = @transform_15, window_bounds = array<i64: 32, 128>}]} {
    %c0 = arith.constant 0 : index
    %c0_0 = arith.constant 0 : index
    %c0_1 = arith.constant 0 : index
    %0 = vector.load %arg1[%c0, %c0_0, %c0_1] : memref<28x32x28xf32, #tpu.memory_space<vmem>>, vector<28x32x28xf32>
    %1 = vector.extract_strided_slice %0 {offsets = [0, 0, 0], sizes = [24, 32, 28], strides = [1, 1, 1]} : vector<28x32x28xf32> to vector<24x32x28xf32>
    %2 = vector.shape_cast %1 : vector<24x32x28xf32> to vector<768x28xf32>
    %c0_2 = arith.constant 0 : index
    %c0_3 = arith.constant 0 : index
    %c0_4 = arith.constant 0 : index
    %3 = vector.load %arg2[%c0_2, %c0_3, %c0_4] : memref<5x28x144xf32, #tpu.memory_space<vmem>>, vector<1x28x144xf32>
    %4 = vector.shape_cast %3 : vector<1x28x144xf32> to vector<28x144xf32>
    %cst = arith.constant dense<0.000000e+00> : vector<768x144xf32>
    %5 = tpu.matmul %2, %4, %cst {dimension_numbers = #tpu.dot_dimension_numbers<[1], [0], [0], [1], [0, 0, 1, 1], [], []>} : vector<768x28xf32>, vector<28x144xf32>, vector<768x144xf32> -> vector<768x144xf32>
    %6 = vector.extract_strided_slice %0 {offsets = [1, 0, 0], sizes = [24, 32, 28], strides = [1, 1, 1]} : vector<28x32x28xf32> to vector<24x32x28xf32>
    %7 = vector.shape_cast %6 : vector<24x32x28xf32> to vector<768x28xf32>
    %c1 = arith.constant 1 : index
    %c0_5 = arith.constant 0 : index
    %c0_6 = arith.constant 0 : index
    %8 = vector.load %arg2[%c1, %c0_5, %c0_6] : memref<5x28x144xf32, #tpu.memory_space<vmem>>, vector<1x28x144xf32>
    %9 = vector.shape_cast %8 : vector<1x28x144xf32> to vector<28x144xf32>
    %cst_7 = arith.constant dense<0.000000e+00> : vector<768x144xf32>
    %10 = tpu.matmul %7, %9, %cst_7 {dimension_numbers = #tpu.dot_dimension_numbers<[1], [0], [0], [1], [0, 0, 1, 1], [], []>} : vector<768x28xf32>, vector<28x144xf32>, vector<768x144xf32> -> vector<768x144xf32>
    %11 = arith.addf %5, %10 : vector<768x144xf32>
    %12 = vector.extract_strided_slice %0 {offsets = [2, 0, 0], sizes = [24, 32, 28], strides = [1, 1, 1]} : vector<28x32x28xf32> to vector<24x32x28xf32>
    %13 = vector.shape_cast %12 : vector<24x32x28xf32> to vector<768x28xf32>
    %c2 = arith.constant 2 : index
    %c0_8 = arith.constant 0 : index
    %c0_9 = arith.constant 0 : index
    %14 = vector.load %arg2[%c2, %c0_8, %c0_9] : memref<5x28x144xf32, #tpu.memory_space<vmem>>, vector<1x28x144xf32>
    %15 = vector.shape_cast %14 : vector<1x28x144xf32> to vector<28x144xf32>
    %cst_10 = arith.constant dense<0.000000e+00> : vector<768x144xf32>
    %16 = tpu.matmul %13, %15, %cst_10 {dimension_numbers = #tpu.dot_dimension_numbers<[1], [0], [0], [1], [0, 0, 1, 1], [], []>} : vector<768x28xf32>, vector<28x144xf32>, vector<768x144xf32> -> vector<768x144xf32>
    %17 = arith.addf %11, %16 : vector<768x144xf32>
    %18 = vector.extract_strided_slice %0 {offsets = [3, 0, 0], sizes = [24, 32, 28], strides = [1, 1, 1]} : vector<28x32x28xf32> to vector<24x32x28xf32>
    %19 = vector.shape_cast %18 : vector<24x32x28xf32> to vector<768x28xf32>
    %c3 = arith.constant 3 : index
    %c0_11 = arith.constant 0 : index
    %c0_12 = arith.constant 0 : index
    %20 = vector.load %arg2[%c3, %c0_11, %c0_12] : memref<5x28x144xf32, #tpu.memory_space<vmem>>, vector<1x28x144xf32>
    %21 = vector.shape_cast %20 : vector<1x28x144xf32> to vector<28x144xf32>
    %cst_13 = arith.constant dense<0.000000e+00> : vector<768x144xf32>
    %22 = tpu.matmul %19, %21, %cst_13 {dimension_numbers = #tpu.dot_dimension_numbers<[1], [0], [0], [1], [0, 0, 1, 1], [], []>} : vector<768x28xf32>, vector<28x144xf32>, vector<768x144xf32> -> vector<768x144xf32>
    %23 = arith.addf %17, %22 : vector<768x144xf32>
    %24 = vector.extract_strided_slice %0 {offsets = [4, 0, 0], sizes = [24, 32, 28], strides = [1, 1, 1]} : vector<28x32x28xf32> to vector<24x32x28xf32>
    %25 = vector.shape_cast %24 : vector<24x32x28xf32> to vector<768x28xf32>
    %c4 = arith.constant 4 : index
    %c0_14 = arith.constant 0 : index
    %c0_15 = arith.constant 0 : index
    %26 = vector.load %arg2[%c4, %c0_14, %c0_15] : memref<5x28x144xf32, #tpu.memory_space<vmem>>, vector<1x28x144xf32>
    %27 = vector.shape_cast %26 : vector<1x28x144xf32> to vector<28x144xf32>
    %cst_16 = arith.constant dense<0.000000e+00> : vector<768x144xf32>
    %28 = tpu.matmul %25, %27, %cst_16 {dimension_numbers = #tpu.dot_dimension_numbers<[1], [0], [0], [1], [0, 0, 1, 1], [], []>} : vector<768x28xf32>, vector<28x144xf32>, vector<768x144xf32> -> vector<768x144xf32>
    %29 = arith.addf %23, %28 : vector<768x144xf32>
    %c0_17 = arith.constant 0 : index
    %c0_18 = arith.constant 0 : index
    %30 = vector.load %arg3[%c0_17, %c0_18] : memref<1x144xf32, #tpu.memory_space<vmem>>, vector<1x144xf32>
    %31 = vector.broadcast %30 : vector<1x144xf32> to vector<768x144xf32>
    %32 = arith.addf %29, %31 : vector<768x144xf32>
    %cst_19 = arith.constant 0.000000e+00 : f32
    %33 = vector.broadcast %cst_19 : f32 to vector<768x144xf32>
    %34 = arith.maximumf %32, %33 : vector<768x144xf32>
    %c0_20 = arith.constant 0 : index
    %c0_21 = arith.constant 0 : index
    %35 = vector.load %arg6[%c0_20, %c0_21] : memref<144x72xf32, #tpu.memory_space<vmem>>, vector<144x72xf32>
    %cst_22 = arith.constant dense<0.000000e+00> : vector<768x72xf32>
    %36 = tpu.matmul %34, %35, %cst_22 {dimension_numbers = #tpu.dot_dimension_numbers<[1], [0], [0], [1], [0, 0, 1, 1], [], []>} : vector<768x144xf32>, vector<144x72xf32>, vector<768x72xf32> -> vector<768x72xf32>
    %c0_23 = arith.constant 0 : index
    %c0_24 = arith.constant 0 : index
    %37 = vector.load %arg7[%c0_23, %c0_24] : memref<144x72xf32, #tpu.memory_space<vmem>>, vector<144x72xf32>
    %cst_25 = arith.constant dense<0.000000e+00> : vector<768x72xf32>
    %38 = tpu.matmul %34, %37, %cst_25 {dimension_numbers = #tpu.dot_dimension_numbers<[1], [0], [0], [1], [0, 0, 1, 1], [], []>} : vector<768x144xf32>, vector<144x72xf32>, vector<768x72xf32> -> vector<768x72xf32>
    %39 = arith.maximumf %36, %38 : vector<768x72xf32>
    %40 = vector.shape_cast %39 : vector<768x72xf32> to vector<12x2x32x72xf32>
    %41 = vector.extract_strided_slice %40 {offsets = [0, 0, 0, 0], sizes = [12, 1, 32, 72], strides = [1, 1, 1, 1]} : vector<12x2x32x72xf32> to vector<12x1x32x72xf32>
    %42 = vector.shape_cast %41 : vector<12x1x32x72xf32> to vector<12x32x72xf32>
    %43 = vector.extract_strided_slice %40 {offsets = [0, 1, 0, 0], sizes = [12, 1, 32, 72], strides = [1, 1, 1, 1]} : vector<12x2x32x72xf32> to vector<12x1x32x72xf32>
    %44 = vector.shape_cast %43 : vector<12x1x32x72xf32> to vector<12x32x72xf32>
    %45 = arith.maximumf %42, %44 : vector<12x32x72xf32>
    %46 = vector.extract_strided_slice %45 {offsets = [0, 0, 0], sizes = [8, 32, 72], strides = [1, 1, 1]} : vector<12x32x72xf32> to vector<8x32x72xf32>
    %47 = vector.shape_cast %46 : vector<8x32x72xf32> to vector<256x72xf32>
    %c0_26 = arith.constant 0 : index
    %c0_27 = arith.constant 0 : index
    %c0_28 = arith.constant 0 : index
    %48 = vector.load %arg4[%c0_26, %c0_27, %c0_28] : memref<5x72x128xf32, #tpu.memory_space<vmem>>, vector<1x72x128xf32>
    %49 = vector.shape_cast %48 : vector<1x72x128xf32> to vector<72x128xf32>
    %cst_29 = arith.constant dense<0.000000e+00> : vector<256x128xf32>
    %50 = tpu.matmul %47, %49, %cst_29 {dimension_numbers = #tpu.dot_dimension_numbers<[1], [0], [0], [1], [0, 0, 1, 1], [], []>} : vector<256x72xf32>, vector<72x128xf32>, vector<256x128xf32> -> vector<256x128xf32>
    %51 = vector.extract_strided_slice %45 {offsets = [1, 0, 0], sizes = [8, 32, 72], strides = [1, 1, 1]} : vector<12x32x72xf32> to vector<8x32x72xf32>
    %52 = vector.shape_cast %51 : vector<8x32x72xf32> to vector<256x72xf32>
    %c1_30 = arith.constant 1 : index
    %c0_31 = arith.constant 0 : index
    %c0_32 = arith.constant 0 : index
    %53 = vector.load %arg4[%c1_30, %c0_31, %c0_32] : memref<5x72x128xf32, #tpu.memory_space<vmem>>, vector<1x72x128xf32>
    %54 = vector.shape_cast %53 : vector<1x72x128xf32> to vector<72x128xf32>
    %cst_33 = arith.constant dense<0.000000e+00> : vector<256x128xf32>
    %55 = tpu.matmul %52, %54, %cst_33 {dimension_numbers = #tpu.dot_dimension_numbers<[1], [0], [0], [1], [0, 0, 1, 1], [], []>} : vector<256x72xf32>, vector<72x128xf32>, vector<256x128xf32> -> vector<256x128xf32>
    %56 = arith.addf %50, %55 : vector<256x128xf32>
    %57 = vector.extract_strided_slice %45 {offsets = [2, 0, 0], sizes = [8, 32, 72], strides = [1, 1, 1]} : vector<12x32x72xf32> to vector<8x32x72xf32>
    %58 = vector.shape_cast %57 : vector<8x32x72xf32> to vector<256x72xf32>
    %c2_34 = arith.constant 2 : index
    %c0_35 = arith.constant 0 : index
    %c0_36 = arith.constant 0 : index
    %59 = vector.load %arg4[%c2_34, %c0_35, %c0_36] : memref<5x72x128xf32, #tpu.memory_space<vmem>>, vector<1x72x128xf32>
    %60 = vector.shape_cast %59 : vector<1x72x128xf32> to vector<72x128xf32>
    %cst_37 = arith.constant dense<0.000000e+00> : vector<256x128xf32>
    %61 = tpu.matmul %58, %60, %cst_37 {dimension_numbers = #tpu.dot_dimension_numbers<[1], [0], [0], [1], [0, 0, 1, 1], [], []>} : vector<256x72xf32>, vector<72x128xf32>, vector<256x128xf32> -> vector<256x128xf32>
    %62 = arith.addf %56, %61 : vector<256x128xf32>
    %63 = vector.extract_strided_slice %45 {offsets = [3, 0, 0], sizes = [8, 32, 72], strides = [1, 1, 1]} : vector<12x32x72xf32> to vector<8x32x72xf32>
    %64 = vector.shape_cast %63 : vector<8x32x72xf32> to vector<256x72xf32>
    %c3_38 = arith.constant 3 : index
    %c0_39 = arith.constant 0 : index
    %c0_40 = arith.constant 0 : index
    %65 = vector.load %arg4[%c3_38, %c0_39, %c0_40] : memref<5x72x128xf32, #tpu.memory_space<vmem>>, vector<1x72x128xf32>
    %66 = vector.shape_cast %65 : vector<1x72x128xf32> to vector<72x128xf32>
    %cst_41 = arith.constant dense<0.000000e+00> : vector<256x128xf32>
    %67 = tpu.matmul %64, %66, %cst_41 {dimension_numbers = #tpu.dot_dimension_numbers<[1], [0], [0], [1], [0, 0, 1, 1], [], []>} : vector<256x72xf32>, vector<72x128xf32>, vector<256x128xf32> -> vector<256x128xf32>
    %68 = arith.addf %62, %67 : vector<256x128xf32>
    %69 = vector.extract_strided_slice %45 {offsets = [4, 0, 0], sizes = [8, 32, 72], strides = [1, 1, 1]} : vector<12x32x72xf32> to vector<8x32x72xf32>
    %70 = vector.shape_cast %69 : vector<8x32x72xf32> to vector<256x72xf32>
    %c4_42 = arith.constant 4 : index
    %c0_43 = arith.constant 0 : index
    %c0_44 = arith.constant 0 : index
    %71 = vector.load %arg4[%c4_42, %c0_43, %c0_44] : memref<5x72x128xf32, #tpu.memory_space<vmem>>, vector<1x72x128xf32>
    %72 = vector.shape_cast %71 : vector<1x72x128xf32> to vector<72x128xf32>
    %cst_45 = arith.constant dense<0.000000e+00> : vector<256x128xf32>
    %73 = tpu.matmul %70, %72, %cst_45 {dimension_numbers = #tpu.dot_dimension_numbers<[1], [0], [0], [1], [0, 0, 1, 1], [], []>} : vector<256x72xf32>, vector<72x128xf32>, vector<256x128xf32> -> vector<256x128xf32>
    %74 = arith.addf %68, %73 : vector<256x128xf32>
    %c0_46 = arith.constant 0 : index
    %c0_47 = arith.constant 0 : index
    %75 = vector.load %arg5[%c0_46, %c0_47] : memref<1x128xf32, #tpu.memory_space<vmem>>, vector<1x128xf32>
    %76 = vector.broadcast %75 : vector<1x128xf32> to vector<256x128xf32>
    %77 = arith.addf %74, %76 : vector<256x128xf32>
    %cst_48 = arith.constant 0.000000e+00 : f32
    %78 = vector.broadcast %cst_48 : f32 to vector<256x128xf32>
    %79 = arith.maximumf %77, %78 : vector<256x128xf32>
    %c0_49 = arith.constant 0 : index
    %c0_50 = arith.constant 0 : index
    %80 = vector.load %arg8[%c0_49, %c0_50] : memref<128x64xf32, #tpu.memory_space<vmem>>, vector<128x64xf32>
    %cst_51 = arith.constant dense<0.000000e+00> : vector<256x64xf32>
    %81 = tpu.matmul %79, %80, %cst_51 {dimension_numbers = #tpu.dot_dimension_numbers<[1], [0], [0], [1], [0, 0, 1, 1], [], []>} : vector<256x128xf32>, vector<128x64xf32>, vector<256x64xf32> -> vector<256x64xf32>
    %c0_52 = arith.constant 0 : index
    %c0_53 = arith.constant 0 : index
    %82 = vector.load %arg9[%c0_52, %c0_53] : memref<128x64xf32, #tpu.memory_space<vmem>>, vector<128x64xf32>
    %cst_54 = arith.constant dense<0.000000e+00> : vector<256x64xf32>
    %83 = tpu.matmul %79, %82, %cst_54 {dimension_numbers = #tpu.dot_dimension_numbers<[1], [0], [0], [1], [0, 0, 1, 1], [], []>} : vector<256x128xf32>, vector<128x64xf32>, vector<256x64xf32> -> vector<256x64xf32>
    %84 = arith.maximumf %81, %83 : vector<256x64xf32>
    %85 = vector.shape_cast %84 : vector<256x64xf32> to vector<4x2x32x64xf32>
    %86 = vector.extract_strided_slice %85 {offsets = [0, 0, 0, 0], sizes = [4, 1, 32, 64], strides = [1, 1, 1, 1]} : vector<4x2x32x64xf32> to vector<4x1x32x64xf32>
    %87 = vector.shape_cast %86 : vector<4x1x32x64xf32> to vector<4x32x64xf32>
    %88 = vector.extract_strided_slice %85 {offsets = [0, 1, 0, 0], sizes = [4, 1, 32, 64], strides = [1, 1, 1, 1]} : vector<4x2x32x64xf32> to vector<4x1x32x64xf32>
    %89 = vector.shape_cast %88 : vector<4x1x32x64xf32> to vector<4x32x64xf32>
    %90 = arith.maximumf %87, %89 : vector<4x32x64xf32>
    %91 = vector.extract_strided_slice %90 {offsets = [0, 0, 0], sizes = [1, 32, 64], strides = [1, 1, 1]} : vector<4x32x64xf32> to vector<1x32x64xf32>
    %92 = vector.shape_cast %91 : vector<1x32x64xf32> to vector<32x64xf32>
    %c0_55 = arith.constant 0 : index
    %c0_56 = arith.constant 0 : index
    %93 = vector.load %arg10[%c0_55, %c0_56] : memref<256x128xf32, #tpu.memory_space<vmem>>, vector<64x128xf32>
    %cst_57 = arith.constant dense<0.000000e+00> : vector<32x128xf32>
    %94 = tpu.matmul %92, %93, %cst_57 {dimension_numbers = #tpu.dot_dimension_numbers<[1], [0], [0], [1], [0, 0, 1, 1], [], []>} : vector<32x64xf32>, vector<64x128xf32>, vector<32x128xf32> -> vector<32x128xf32>
    %95 = vector.extract_strided_slice %90 {offsets = [1, 0, 0], sizes = [1, 32, 64], strides = [1, 1, 1]} : vector<4x32x64xf32> to vector<1x32x64xf32>
    %96 = vector.shape_cast %95 : vector<1x32x64xf32> to vector<32x64xf32>
    %c64 = arith.constant 64 : index
    %c0_58 = arith.constant 0 : index
    %97 = vector.load %arg10[%c64, %c0_58] : memref<256x128xf32, #tpu.memory_space<vmem>>, vector<64x128xf32>
    %cst_59 = arith.constant dense<0.000000e+00> : vector<32x128xf32>
    %98 = tpu.matmul %96, %97, %cst_59 {dimension_numbers = #tpu.dot_dimension_numbers<[1], [0], [0], [1], [0, 0, 1, 1], [], []>} : vector<32x64xf32>, vector<64x128xf32>, vector<32x128xf32> -> vector<32x128xf32>
    %99 = arith.addf %94, %98 : vector<32x128xf32>
    %100 = vector.extract_strided_slice %90 {offsets = [2, 0, 0], sizes = [1, 32, 64], strides = [1, 1, 1]} : vector<4x32x64xf32> to vector<1x32x64xf32>
    %101 = vector.shape_cast %100 : vector<1x32x64xf32> to vector<32x64xf32>
    %c128 = arith.constant 128 : index
    %c0_60 = arith.constant 0 : index
    %102 = vector.load %arg10[%c128, %c0_60] : memref<256x128xf32, #tpu.memory_space<vmem>>, vector<64x128xf32>
    %cst_61 = arith.constant dense<0.000000e+00> : vector<32x128xf32>
    %103 = tpu.matmul %101, %102, %cst_61 {dimension_numbers = #tpu.dot_dimension_numbers<[1], [0], [0], [1], [0, 0, 1, 1], [], []>} : vector<32x64xf32>, vector<64x128xf32>, vector<32x128xf32> -> vector<32x128xf32>
    %104 = arith.addf %99, %103 : vector<32x128xf32>
    %105 = vector.extract_strided_slice %90 {offsets = [3, 0, 0], sizes = [1, 32, 64], strides = [1, 1, 1]} : vector<4x32x64xf32> to vector<1x32x64xf32>
    %106 = vector.shape_cast %105 : vector<1x32x64xf32> to vector<32x64xf32>
    %c192 = arith.constant 192 : index
    %c0_62 = arith.constant 0 : index
    %107 = vector.load %arg10[%c192, %c0_62] : memref<256x128xf32, #tpu.memory_space<vmem>>, vector<64x128xf32>
    %cst_63 = arith.constant dense<0.000000e+00> : vector<32x128xf32>
    %108 = tpu.matmul %106, %107, %cst_63 {dimension_numbers = #tpu.dot_dimension_numbers<[1], [0], [0], [1], [0, 0, 1, 1], [], []>} : vector<32x64xf32>, vector<64x128xf32>, vector<32x128xf32> -> vector<32x128xf32>
    %109 = arith.addf %104, %108 : vector<32x128xf32>
    %c0_64 = arith.constant 0 : index
    %c0_65 = arith.constant 0 : index
    %110 = vector.load %arg11[%c0_64, %c0_65] : memref<1x128xf32, #tpu.memory_space<vmem>>, vector<1x128xf32>
    %111 = vector.broadcast %110 : vector<1x128xf32> to vector<32x128xf32>
    %112 = arith.addf %109, %111 : vector<32x128xf32>
    %cst_66 = arith.constant 0.000000e+00 : f32
    %113 = vector.broadcast %cst_66 : f32 to vector<32x128xf32>
    %114 = arith.maximumf %112, %113 : vector<32x128xf32>
    %c0_67 = arith.constant 0 : index
    %c0_68 = arith.constant 0 : index
    %115 = vector.load %arg12[%c0_67, %c0_68] : memref<128x64xf32, #tpu.memory_space<vmem>>, vector<128x64xf32>
    %cst_69 = arith.constant dense<0.000000e+00> : vector<32x64xf32>
    %116 = tpu.matmul %114, %115, %cst_69 {dimension_numbers = #tpu.dot_dimension_numbers<[1], [0], [0], [1], [0, 0, 1, 1], [], []>} : vector<32x128xf32>, vector<128x64xf32>, vector<32x64xf32> -> vector<32x64xf32>
    %c0_70 = arith.constant 0 : index
    %c0_71 = arith.constant 0 : index
    %117 = vector.load %arg13[%c0_70, %c0_71] : memref<1x64xf32, #tpu.memory_space<vmem>>, vector<1x64xf32>
    %118 = vector.broadcast %117 : vector<1x64xf32> to vector<32x64xf32>
    %119 = arith.addf %116, %118 : vector<32x64xf32>
    %cst_72 = arith.constant 0.000000e+00 : f32
    %120 = vector.broadcast %cst_72 : f32 to vector<32x64xf32>
    %121 = arith.maximumf %119, %120 : vector<32x64xf32>
    %c0_73 = arith.constant 0 : index
    %c0_74 = arith.constant 0 : index
    %122 = vector.load %arg14[%c0_73, %c0_74] : memref<64x128xf32, #tpu.memory_space<vmem>>, vector<64x128xf32>
    %cst_75 = arith.constant dense<0.000000e+00> : vector<32x128xf32>
    %123 = tpu.matmul %121, %122, %cst_75 {dimension_numbers = #tpu.dot_dimension_numbers<[1], [0], [0], [1], [0, 0, 1, 1], [], []>} : vector<32x64xf32>, vector<64x128xf32>, vector<32x128xf32> -> vector<32x128xf32>
    %c0_76 = arith.constant 0 : index
    %c0_77 = arith.constant 0 : index
    %124 = vector.load %arg15[%c0_76, %c0_77] : memref<1x128xf32, #tpu.memory_space<vmem>>, vector<1x128xf32>
    %125 = vector.broadcast %124 : vector<1x128xf32> to vector<32x128xf32>
    %126 = arith.addf %123, %125 : vector<32x128xf32>
    %c0_78 = arith.constant 0 : index
    %c0_79 = arith.constant 0 : index
    %127 = vector.load %arg16[%c0_78, %c0_79] : memref<32x128xf32, #tpu.memory_space<vmem>>, vector<32x128xf32>
    tpu.vector_store %arg16[%c0_78, %c0_79], %126 {strides = array<i32>} : memref<32x128xf32, #tpu.memory_space<vmem>>, vector<32x128xf32>,
    return
  }
  func.func @transform_0(%arg0: i32) -> (i32, i32, i32) {
    %c0_i32 = arith.constant 0 : i32
    %c0_i32_0 = arith.constant 0 : i32
    %c0_i32_1 = arith.constant 0 : i32
    return %c0_i32, %arg0, %c0_i32_0 : i32, i32, i32
  }
  func.func @transform_1(%arg0: i32) -> (i32, i32, i32) {
    %c0_i32 = arith.constant 0 : i32
    %c0_i32_0 = arith.constant 0 : i32
    %c0_i32_1 = arith.constant 0 : i32
    %c0_i32_2 = arith.constant 0 : i32
    return %c0_i32, %c0_i32_0, %c0_i32_1 : i32, i32, i32
  }
  func.func @transform_2(%arg0: i32) -> (i32, i32) {
    %c0_i32 = arith.constant 0 : i32
    %c0_i32_0 = arith.constant 0 : i32
    %c0_i32_1 = arith.constant 0 : i32
    return %c0_i32, %c0_i32_0 : i32, i32
  }
  func.func @transform_3(%arg0: i32) -> (i32, i32, i32) {
    %c0_i32 = arith.constant 0 : i32
    %c0_i32_0 = arith.constant 0 : i32
    %c0_i32_1 = arith.constant 0 : i32
    %c0_i32_2 = arith.constant 0 : i32
    return %c0_i32, %c0_i32_0, %c0_i32_1 : i32, i32, i32
  }
  func.func @transform_4(%arg0: i32) -> (i32, i32) {
    %c0_i32 = arith.constant 0 : i32
    %c0_i32_0 = arith.constant 0 : i32
    %c0_i32_1 = arith.constant 0 : i32
    return %c0_i32, %c0_i32_0 : i32, i32
  }
  func.func @transform_5(%arg0: i32) -> (i32, i32) {
    %c0_i32 = arith.constant 0 : i32
    %c0_i32_0 = arith.constant 0 : i32
    %c0_i32_1 = arith.constant 0 : i32
    return %c0_i32, %c0_i32_0 : i32, i32
  }
  func.func @transform_6(%arg0: i32) -> (i32, i32) {
    %c0_i32 = arith.constant 0 : i32
    %c0_i32_0 = arith.constant 0 : i32
    %c0_i32_1 = arith.constant 0 : i32
    return %c0_i32, %c0_i32_0 : i32, i32
  }
  func.func @transform_7(%arg0: i32) -> (i32, i32) {
    %c0_i32 = arith.constant 0 : i32
    %c0_i32_0 = arith.constant 0 : i32
    %c0_i32_1 = arith.constant 0 : i32
    return %c0_i32, %c0_i32_0 : i32, i32
  }
  func.func @transform_8(%arg0: i32) -> (i32, i32) {
    %c0_i32 = arith.constant 0 : i32
    %c0_i32_0 = arith.constant 0 : i32
    %c0_i32_1 = arith.constant 0 : i32
    return %c0_i32, %c0_i32_0 : i32, i32
  }
  func.func @transform_9(%arg0: i32) -> (i32, i32) {
    %c0_i32 = arith.constant 0 : i32
    %c0_i32_0 = arith.constant 0 : i32
    %c0_i32_1 = arith.constant 0 : i32
    return %c0_i32, %c0_i32_0 : i32, i32
  }
  func.func @transform_10(%arg0: i32) -> (i32, i32) {
    %c0_i32 = arith.constant 0 : i32
    %c0_i32_0 = arith.constant 0 : i32
    %c0_i32_1 = arith.constant 0 : i32
    return %c0_i32, %c0_i32_0 : i32, i32
  }
  func.func @transform_11(%arg0: i32) -> (i32, i32) {
    %c0_i32 = arith.constant 0 : i32
    %c0_i32_0 = arith.constant 0 : i32
    %c0_i32_1 = arith.constant 0 : i32
    return %c0_i32, %c0_i32_0 : i32, i32
  }
  func.func @transform_12(%arg0: i32) -> (i32, i32) {
    %c0_i32 = arith.constant 0 : i32
    %c0_i32_0 = arith.constant 0 : i32
    %c0_i32_1 = arith.constant 0 : i32
    return %c0_i32, %c0_i32_0 : i32, i32
  }
  func.func @transform_13(%arg0: i32) -> (i32, i32) {
    %c0_i32 = arith.constant 0 : i32
    %c0_i32_0 = arith.constant 0 : i32
    %c0_i32_1 = arith.constant 0 : i32
    return %c0_i32, %c0_i32_0 : i32, i32
  }
  func.func @transform_14(%arg0: i32) -> (i32, i32) {
    %c0_i32 = arith.constant 0 : i32
    %c0_i32_0 = arith.constant 0 : i32
    %c0_i32_1 = arith.constant 0 : i32
    return %c0_i32, %c0_i32_0 : i32, i32
  }
  func.func @transform_15(%arg0: i32) -> (i32, i32) {
    %c0_i32 = arith.constant 0 : i32
    %c0_i32_0 = arith.constant 0 : i32
    return %arg0, %c0_i32 : i32, i32
  }
}

</mosaic_0001>

<llo_original>
// kernel: tile.13
$region0: #{tile.13}
  #allocation0 [shape = 's32[1]{0}', space=sflag, size = 0x4, scoped, tag = 'scoped memory for tile.13']
  %s0 = inlined_call_operand.vmem [shape: f32[6], index: 0, kind: input, shape index: {}]
  %s1 = inlined_call_operand.vmem [shape: f32[24,6], index: 1, kind: output, shape index: {}]
  // Predicated region
  $region2: #{tile.13} parent=0 // pred_check
    _
  $region3: #{tile.13} parent=0 // pred_check_branch
    %3 = sbr.rel (0) target = $region5
  $region4: #{tile.13} parent=0 // pred_region
    _
  $region5: #{tile.13} parent=0 // pred_fallthru
    _
  %v4 = vld [vmem:[%s0] ss:$0 sm:$0xff]
  %5 = vst [vmem:[%s1] sm:$0xff] %v4
  %s6 = scalar_lea.vmem %s1, 8
  %7 = vst [vmem:[%s6] sm:$0xff] %v4
  %s8 = scalar_lea.vmem %s1, 16
  %9 = vst [vmem:[%s8] sm:$0xff] %v4

// kernel: tile.14
$region0: #{tile.14}
  %s0 = inlined_call_operand.vmem [shape: f32[24,6], index: 0, kind: input, shape index: {}]
  %s1 = inlined_call_operand.vmem [shape: f32[1,144], index: 1, kind: output, shape index: {}]
  $region1: #{tile.14} parent=0
    #allocation0 [shape = 'u8[8192]{0}', space=vmem, size = 0x2000, scoped, tag = 'scoped mem for output reshape']
    %v2 = vld [vmem:[%s0] sm:$0x1]
    %vm3 = vcmask 48128
    %4 = vst.msk [vmem:[#allocation0] sm:$0x1] %vm3, %v2
    %s5 = scalar_lea.vmem %s0, 21
    %v6 = vld [vmem:[%s5] sm:$0x1]
    %s7 = scalar_lea.vmem %s0, 21
    %v8 = vld [vmem:[%s7] sm:$0x1]
    %vm9 = vcmask 15360
    %v10 = vsel %vm9, %v8, %v6
    %11 = vrot.lane.b32.xlu0 %v10, 126
    %v12 = vpop.permute.xlu0 %11
    %vm13 = vcmask 31744
    %s14 = scalar_lea.vmem [#allocation0], 8
    %15 = vst.msk [vmem:[%s14] sm:$0x1] %vm13, %v12
    %vm16 = vcmask 1048560
    %17 = vst.msk [vmem:[#allocation0] sm:$0x1] %vm16, %v12
    %s18 = scalar_lea.vmem %s0, 20
    %v19 = vld [vmem:[%s18] sm:$0x1]
    %20 = vrot.lane.b32.xlu0 %v19, 120
    %v21 = vpop.permute.xlu0 %20
    %vm22 = vcmask 1032128
    %23 = vst.msk [vmem:[#allocation0] sm:$0x1] %vm22, %v21
    %s24 = scalar_lea.vmem %s0, 19
    %v25 = vld [vmem:[%s24] sm:$0x1]
    %26 = vrot.lane.b32.xlu0 %v25, 114
    %v27 = vpop.permute.xlu0 %26
    %vm28 = vcmask 982928
    %29 = vst.msk [vmem:[#allocation0] sm:$0x1] %vm28, %v27
    %s30 = scalar_lea.vmem %s0, 18
    %v31 = vld [vmem:[%s30] sm:$0x1]
    %32 = vrot.lane.b32.xlu0 %v31, 108
    %v33 = vpop.permute.xlu0 %32
    %vm34 = vcmask 933728
    %35 = vst.msk [vmem:[#allocation0] sm:$0x1] %vm34, %v33
    %s36 = scalar_lea.vmem %s0, 17
    %v37 = vld [vmem:[%s36] sm:$0x1]
    %38 = vrot.lane.b32.xlu0 %v37, 102
    %v39 = vpop.permute.xlu0 %38
    %vm40 = vcmask 884528
    %41 = vst.msk [vmem:[#allocation0] sm:$0x1] %vm40, %v39
    %s42 = scalar_lea.vmem %s0, 16
    %v43 = vld [vmem:[%s42] sm:$0x1]
    %44 = vrot.lane.b32.xlu0 %v43, 96
    %v45 = vpop.permute.xlu0 %44
    %vm46 = vcmask 835328
    %47 = vst.msk [vmem:[#allocation0] sm:$0x1] %vm46, %v45
    %s48 = scalar_lea.vmem %s0, 15
    %v49 = vld [vmem:[%s48] sm:$0x1]
    %50 = vrot.lane.b32.xlu0 %v49, 90
    %v51 = vpop.permute.xlu0 %50
    %vm52 = vcmask 786128
    %53 = vst.msk [vmem:[#allocation0] sm:$0x1] %vm52, %v51
    %s54 = scalar_lea.vmem %s0, 14
    %v55 = vld [vmem:[%s54] sm:$0x1]
    %56 = vrot.lane.b32.xlu0 %v55, 84
    %v57 = vpop.permute.xlu0 %56
    %vm58 = vcmask 736928
    %59 = vst.msk [vmem:[#allocation0] sm:$0x1] %vm58, %v57
    %s60 = scalar_lea.vmem %s0, 13
    %v61 = vld [vmem:[%s60] sm:$0x1]
    %62 = vrot.lane.b32.xlu0 %v61, 78
    %v63 = vpop.permute.xlu0 %62
    %vm64 = vcmask 687728
    %65 = vst.msk [vmem:[#allocation0] sm:$0x1] %vm64, %v63
    %s66 = scalar_lea.vmem %s0, 12
    %v67 = vld [vmem:[%s66] sm:$0x1]
    %68 = vrot.lane.b32.xlu0 %v67, 72
    %v69 = vpop.permute.xlu0 %68
    %vm70 = vcmask 638528
    %71 = vst.msk [vmem:[#allocation0] sm:$0x1] %vm70, %v69
    %s72 = scalar_lea.vmem %s0, 11
    %v73 = vld [vmem:[%s72] sm:$0x1]
    %74 = vrot.lane.b32.xlu0 %v73, 66
    %v75 = vpop.permute.xlu0 %74
    %vm76 = vcmask 589328
    %77 = vst.msk [vmem:[#allocation0] sm:$0x1] %vm76, %v75
    %s78 = scalar_lea.vmem %s0, 10
    %v79 = vld [vmem:[%s78] sm:$0x1]
    %80 = vrot.lane.b32.xlu0 %v79, 60
    %v81 = vpop.permute.xlu0 %80
    %vm82 = vcmask 540128
    %83 = vst.msk [vmem:[#allocation0] sm:$0x1] %vm82, %v81
    %s84 = scalar_lea.vmem %s0, 9
    %v85 = vld [vmem:[%s84] sm:$0x1]
    %86 = vrot.lane.b32.xlu0 %v85, 54
    %v87 = vpop.permute.xlu0 %86
    %vm88 = vcmask 490928
    %89 = vst.msk [vmem:[#allocation0] sm:$0x1] %vm88, %v87
    %s90 = scalar_lea.vmem %s0, 8
    %v91 = vld [vmem:[%s90] sm:$0x1]
    %92 = vrot.lane.b32.xlu0 %v91, 48
    %v93 = vpop.permute.xlu0 %92
    %vm94 = vcmask 441728
    %95 = vst.msk [vmem:[#allocation0] sm:$0x1] %vm94, %v93
    %s96 = scalar_lea.vmem %s0, 7
    %v97 = vld [vmem:[%s96] sm:$0x1]
    %98 = vrot.lane.b32.xlu0 %v97, 42
    %v99 = vpop.permute.xlu0 %98
    %vm100 = vcmask 392528
    %101 = vst.msk [vmem:[#allocation0] sm:$0x1] %vm100, %v99
    %s102 = scalar_lea.vmem %s0, 6
    %v103 = vld [vmem:[%s102] sm:$0x1]
    %104 = vrot.lane.b32.xlu0 %v103, 36
    %v105 = vpop.permute.xlu0 %104
    %vm106 = vcmask 343328
    %107 = vst.msk [vmem:[#allocation0] sm:$0x1] %vm106, %v105
    %s108 = scalar_lea.vmem %s0, 5
    %v109 = vld [vmem:[%s108] sm:$0x1]
    %110 = vrot.lane.b32.xlu0 %v109, 30
    %v111 = vpop.permute.xlu0 %110
    %vm112 = vcmask 294128
    %113 = vst.msk [vmem:[#allocation0] sm:$0x1] %vm112, %v111
    %s114 = scalar_lea.vmem %s0, 4
    %v115 = vld [vmem:[%s114] sm:$0x1]
    %116 = vrot.lane.b32.xlu0 %v115, 24
    %v117 = vpop.permute.xlu0 %116
    %vm118 = vcmask 244928
    %119 = vst.msk [vmem:[#allocation0] sm:$0x1] %vm118, %v117
    %s120 = scalar_lea.vmem %s0, 3
    %v121 = vld [vmem:[%s120] sm:$0x1]
    %122 = vrot.lane.b32.xlu0 %v121, 18
    %v123 = vpop.permute.xlu0 %122
    %vm124 = vcmask 195728
    %125 = vst.msk [vmem:[#allocation0] sm:$0x1] %vm124, %v123
    %s126 = scalar_lea.vmem %s0, 2
    %v127 = vld [vmem:[%s126] sm:$0x1]
    %128 = vrot.lane.b32.xlu0 %v127, 12
    %v129 = vpop.permute.xlu0 %128
    %vm130 = vcmask 146528
    %131 = vst.msk [vmem:[#allocation0] sm:$0x1] %vm130, %v129
    %s132 = scalar_lea.vmem %s0, 23
    %v133 = vld [vmem:[%s132] sm:$0x1]
    %134 = vrot.lane.b32.xlu0 %v133, 10
    %v135 = vpop.permute.xlu0 %134
    %vm136 = vcmask 130128
    %s137 = scalar_lea.vmem [#allocation0], 8
    %138 = vst.msk [vmem:[%s137] sm:$0x1] %vm136, %v135
    %s139 = scalar_lea.vmem %s0, 1
    %v140 = vld [vmem:[%s139] sm:$0x1]
    %141 = vrot.lane.b32.xlu0 %v140, 6
    %v142 = vpop.permute.xlu0 %141
    %vm143 = vcmask 97328
    %144 = vst.msk [vmem:[#allocation0] sm:$0x1] %vm143, %v142
    %s145 = scalar_lea.vmem %s0, 22
    %v146 = vld [vmem:[%s145] sm:$0x1]
    %147 = vrot.lane.b32.xlu0 %v146, 4
    %v148 = vpop.permute.xlu0 %147
    %vm149 = vcmask 80928
    %s150 = scalar_lea.vmem [#allocation0], 8
    %151 = vst.msk [vmem:[%s150] sm:$0x1] %vm149, %v148
    %s153 = sshll.u32 1, 1
    %s154 = ssub.s32 %s153, 1
    %v156 = vld [vmem:[#allocation0] sm:%s154]
    %s157 = sshll.u32 1, 1
    %s158 = ssub.s32 %s157, 1
    %159 = vst [vmem:[%s1] sm:%s158] %v156
    %s160 = scalar_lea.vmem [#allocation0], 8
    %v161 = vld [vmem:[%s160] sm:%s154]
    %s162 = sshll.u32 1, 1
    %s163 = ssub.s32 %s162, 1
    %s164 = scalar_lea.vmem %s1, 1
    %165 = vst [vmem:[%s164] sm:%s163] %v161

// kernel: tile.18
$region0: #{tile.18}
  #allocation0 [shape = 's32[1]{0}', space=sflag, size = 0x4, scoped, tag = 'scoped memory for tile.18']
  %s0 = inlined_call_operand.vmem [shape: f32[16], index: 0, kind: input, shape index: {}]
  %s1 = inlined_call_operand.vmem [shape: f32[8,16], index: 1, kind: output, shape index: {}]
  // Predicated region
  $region2: #{tile.18} parent=0 // pred_check
    _
  $region3: #{tile.18} parent=0 // pred_check_branch
    %3 = sbr.rel (0) target = $region5
  $region4: #{tile.18} parent=0 // pred_region
    _
  $region5: #{tile.18} parent=0 // pred_fallthru
    _
  %v4 = vld [vmem:[%s0] ss:$0 sm:$0xff]
  %5 = vst [vmem:[%s1] sm:$0xff] %v4

// kernel: tile.19
$region0: #{tile.19}
  %s0 = inlined_call_operand.vmem [shape: f32[8,16], index: 0, kind: input, shape index: {}]
  %s1 = inlined_call_operand.vmem [shape: f32[1,128], index: 1, kind: output, shape index: {}]
  $region1: #{tile.19} parent=0
    #allocation0 [shape = 'u8[4096]{0}', space=vmem, size = 0x1000, scoped, tag = 'scoped mem for output reshape']
    %v2 = vld [vmem:[%s0] sm:$0x1]
    %vm3 = vcmask 130048
    %4 = vst.msk [vmem:[#allocation0] sm:$0x1] %vm3, %v2
    %s5 = scalar_lea.vmem %s0, 7
    %v6 = vld [vmem:[%s5] sm:$0x1]
    %7 = vrot.lane.b32.xlu0 %v6, 112
    %v8 = vpop.permute.xlu0 %7
    %vm9 = vcmask 1048448
    %10 = vst.msk [vmem:[#allocation0] sm:$0x1] %vm9, %v8
    %s11 = scalar_lea.vmem %s0, 6
    %v12 = vld [vmem:[%s11] sm:$0x1]
    %13 = vrot.lane.b32.xlu0 %v12, 96
    %v14 = vpop.permute.xlu0 %13
    %vm15 = vcmask 917248
    %16 = vst.msk [vmem:[#allocation0] sm:$0x1] %vm15, %v14
    %s17 = scalar_lea.vmem %s0, 5
    %v18 = vld [vmem:[%s17] sm:$0x1]
    %19 = vrot.lane.b32.xlu0 %v18, 80
    %v20 = vpop.permute.xlu0 %19
    %vm21 = vcmask 786048
    %22 = vst.msk [vmem:[#allocation0] sm:$0x1] %vm21, %v20
    %s23 = scalar_lea.vmem %s0, 4
    %v24 = vld [vmem:[%s23] sm:$0x1]
    %25 = vrot.lane.b32.xlu0 %v24, 64
    %v26 = vpop.permute.xlu0 %25
    %vm27 = vcmask 654848
    %28 = vst.msk [vmem:[#allocation0] sm:$0x1] %vm27, %v26
    %s29 = scalar_lea.vmem %s0, 3
    %v30 = vld [vmem:[%s29] sm:$0x1]
    %31 = vrot.lane.b32.xlu0 %v30, 48
    %v32 = vpop.permute.xlu0 %31
    %vm33 = vcmask 523648
    %34 = vst.msk [vmem:[#allocation0] sm:$0x1] %vm33, %v32
    %s35 = scalar_lea.vmem %s0, 2
    %v36 = vld [vmem:[%s35] sm:$0x1]
    %37 = vrot.lane.b32.xlu0 %v36, 32
    %v38 = vpop.permute.xlu0 %37
    %vm39 = vcmask 392448
    %40 = vst.msk [vmem:[#allocation0] sm:$0x1] %vm39, %v38
    %s41 = scalar_lea.vmem %s0, 1
    %v42 = vld [vmem:[%s41] sm:$0x1]
    %43 = vrot.lane.b32.xlu0 %v42, 16
    %v44 = vpop.permute.xlu0 %43
    %vm45 = vcmask 261248
    %46 = vst.msk [vmem:[#allocation0] sm:$0x1] %vm45, %v44
    %s48 = sshll.u32 1, 1
    %s49 = ssub.s32 %s48, 1
    %v51 = vld [vmem:[#allocation0] sm:%s49]
    %s52 = sshll.u32 1, 1
    %s53 = ssub.s32 %s52, 1
    %54 = vst [vmem:[%s1] sm:%s53] %v51

// kernel: cnn_forward.1
$region0: #{cnn_forward.1}
  #allocation0 [shape = 'u32[]', space=smem, size = 0x4, offset = 0x4, fixed_abs, tag = 'smem constant byte address 0x4 - core index']
  #allocation1 [shape = 'u32[144,128]{1,0:T(1,128)}', space=vmem, size = 0x12000, scoped, tag = 'internal scratch']
  %s0 = inlined_call_operand.vmem [shape: f32[28,64,28], index: 0, kind: input, shape index: {}]
  %s1 = inlined_call_operand.vmem [shape: f32[5,28,144], index: 1, kind: input, shape index: {}]
  %s2 = inlined_call_operand.vmem [shape: f32[1,144], index: 2, kind: input, shape index: {}]
  %s3 = inlined_call_operand.vmem [shape: f32[5,72,128], index: 3, kind: input, shape index: {}]
  %s4 = inlined_call_operand.vmem [shape: f32[1,128], index: 4, kind: input, shape index: {}]
  %s5 = inlined_call_operand.vmem [shape: f32[144,72], index: 5, kind: input, shape index: {}]
  %s6 = inlined_call_operand.vmem [shape: f32[144,72], index: 6, kind: input, shape index: {}]
  %s7 = inlined_call_operand.vmem [shape: f32[128,64], index: 7, kind: input, shape index: {}]
  %s8 = inlined_call_operand.vmem [shape: f32[128,64], index: 8, kind: input, shape index: {}]
  %s9 = inlined_call_operand.vmem [shape: f32[256,128], index: 9, kind: input, shape index: {}]
  %s10 = inlined_call_operand.vmem [shape: f32[1,128], index: 10, kind: input, shape index: {}]
  %s11 = inlined_call_operand.vmem [shape: f32[128,64], index: 11, kind: input, shape index: {}]
  %s12 = inlined_call_operand.vmem [shape: f32[1,64], index: 12, kind: input, shape index: {}]
  %s13 = inlined_call_operand.vmem [shape: f32[64,128], index: 13, kind: input, shape index: {}]
  %s14 = inlined_call_operand.vmem [shape: f32[1,128], index: 14, kind: input, shape index: {}]
  %s15 = inlined_call_operand.vmem [shape: f32[64,128], index: 15, kind: output, shape index: {}]
  %s16 = sld [smem:[#allocation0]]
  $region131: #{cnn_forward.1} parent=0
    _
  %s18 = ssub.s32 1, %s16
  %s19 = scalar_select 0, %s18, %s16
  $region1: #{cnn_forward.1} parent=0
    #allocation2 [shape = 'u8[917504]{0}', space=vmem, size = 0xe0000, scoped, tag = 'input window, operand 0']
    loop: start=0, step=1, limit=4
    $region2: #{cnn_forward.1} parent=1 // loop_pre_header
      _
    $region3: #{cnn_forward.1} parent=1 // loop_header
      %s21 = sphi 0, %s25
      %p22 = scmp.ge.s32.totalorder %s21, 4
      %s31 = sphi 0, %s33
      %s34 = sphi 0, %s31
      %s35 = sphi 0, %s34
      %s51 = sphi 0, %s35
      %s55 = sphi 0, %s55
      %s57 = sphi 0, %s55
      %s58 = sphi 0, %s57
      %s72 = sphi 0, %s58
      %s76 = sphi 0, %s76
      %s78 = sphi 0, %s76
      %s79 = sphi 0, %s78
      %s93 = sphi 0, %s79
      %s97 = sphi 0, %s97
      %s99 = sphi 0, %s97
      %s100 = sphi 0, %s99
      %s114 = sphi 0, %s100
      %s118 = sphi 0, %s118
      %s120 = sphi 0, %s118
      %s121 = sphi 0, %s120
      %s135 = sphi 0, %s121
      %s139 = sphi 0, %s139
      %s141 = sphi 0, %s139
      %s142 = sphi 0, %s141
      %s156 = sphi 0, %s142
      %s160 = sphi 0, %s160
      %s162 = sphi 0, %s160
      %s163 = sphi 0, %s162
      %s177 = sphi 0, %s163
      %s181 = sphi 0, %s181
      %s183 = sphi 0, %s181
      %s184 = sphi 0, %s183
      %s198 = sphi 0, %s184
      %s202 = sphi 0, %s202
      %s204 = sphi 0, %s202
      %s205 = sphi 0, %s204
      %s219 = sphi 0, %s205
      %s223 = sphi 0, %s223
      %s225 = sphi 0, %s223
      %s226 = sphi 0, %s225
      %s240 = sphi 0, %s226
      %s244 = sphi 0, %s244
      %s246 = sphi 0, %s244
      %s247 = sphi 0, %s246
      %s261 = sphi 0, %s247
      %s265 = sphi 0, %s265
      %s267 = sphi 0, %s265
      %s268 = sphi 0, %s267
      %s282 = sphi 0, %s268
      %s286 = sphi 0, %s286
      %s288 = sphi 0, %s286
      %s289 = sphi 0, %s288
      %s303 = sphi 0, %s289
      %s307 = sphi 0, %s307
      %s309 = sphi 0, %s307
      %s310 = sphi 0, %s309
      %s324 = sphi 0, %s310
      %s328 = sphi 0, %s328
      %s330 = sphi 0, %s328
      %s331 = sphi 0, %s330
      %s345 = sphi 0, %s331
      %s351 = sphi 0, %s353
      %s354 = sphi 0, %s351
      %s355 = sphi 0, %s354
      %s371 = sphi 0, %s355
    $region4: #{cnn_forward.1} parent=1 // loop_header_branch
      %24 = sbr.rel (%p22) target = $region8
    $region5: #{cnn_forward.1} parent=1 // loop_body
      %s26 = ssub.s32 %s21, 1
      %s27 = ssub.s32 %s21, 2
      %s28 = sadd.s32 %s21, 1
      %s29 = ssub.s32 %s21, %s28
      %p30 = scmp.eq.s32.totalorder %s29, 0
      %s32 = sadd.s32 %s31, 1
      %s33 = scalar_select %p30, %s31, %s32
      %p36 = pneg %p30
      %p37 = scmp.eq.s32.totalorder %s21, 1
      %p38 = por %p36, %p37
      %p39 = scmp.ne.s32.totalorder %s31, %s34
      %p40 = scmp.eq.s32.totalorder %s21, 0
      %p41 = por %p39, %p40
      %p42 = scmp.ne.s32.totalorder %s31, %s34
      %p43 = scmp.eq.s32.totalorder %s26, 1
      %p44 = por %p42, %p43
      %p45 = scmp.ne.s32.totalorder %s34, %s35
      %p46 = scmp.eq.s32.totalorder %s26, 0
      %p47 = por %p45, %p46
      %p48 = scmp.ne.s32.totalorder %s34, %s35
      %p49 = scmp.eq.s32.totalorder %s27, 1
      %p50 = por %p48, %p49
      %p52 = scmp.ne.s32.totalorder %s35, %s51
      %p53 = scmp.eq.s32.totalorder %s27, 0
      %p54 = por %p52, %p53
      %s56 = sadd.s32 %s55, 1
      %p59 = scmp.eq.s32.totalorder %s21, 1
      %p60 = scmp.ne.s32.totalorder %s55, %s57
      %p61 = scmp.eq.s32.totalorder %s21, 0
      %p62 = por %p60, %p61
      %p63 = scmp.ne.s32.totalorder %s55, %s57
      %p64 = scmp.eq.s32.totalorder %s26, 1
      %p65 = por %p63, %p64
      %p66 = scmp.ne.s32.totalorder %s57, %s58
      %p67 = scmp.eq.s32.totalorder %s26, 0
      %p68 = por %p66, %p67
      %p69 = scmp.ne.s32.totalorder %s57, %s58
      %p70 = scmp.eq.s32.totalorder %s27, 1
      %p71 = por %p69, %p70
      %p73 = scmp.ne.s32.totalorder %s58, %s72
      %p74 = scmp.eq.s32.totalorder %s27, 0
      %p75 = por %p73, %p74
      %s77 = sadd.s32 %s76, 1
      %p80 = scmp.eq.s32.totalorder %s21, 1
      %p81 = scmp.ne.s32.totalorder %s76, %s78
      %p82 = scmp.eq.s32.totalorder %s21, 0
      %p83 = por %p81, %p82
      %p84 = scmp.ne.s32.totalorder %s76, %s78
      %p85 = scmp.eq.s32.totalorder %s26, 1
      %p86 = por %p84, %p85
      %p87 = scmp.ne.s32.totalorder %s78, %s79
      %p88 = scmp.eq.s32.totalorder %s26, 0
      %p89 = por %p87, %p88
      %p90 = scmp.ne.s32.totalorder %s78, %s79
      %p91 = scmp.eq.s32.totalorder %s27, 1
      %p92 = por %p90, %p91
      %p94 = scmp.ne.s32.totalorder %s79, %s93
      %p95 = scmp.eq.s32.totalorder %s27, 0
      %p96 = por %p94, %p95
      %s98 = sadd.s32 %s97, 1
      %p101 = scmp.eq.s32.totalorder %s21, 1
      %p102 = scmp.ne.s32.totalorder %s97, %s99
      %p103 = scmp.eq.s32.totalorder %s21, 0
      %p104 = por %p102, %p103
      %p105 = scmp.ne.s32.totalorder %s97, %s99
      %p106 = scmp.eq.s32.totalorder %s26, 1
      %p107 = por %p105, %p106
      %p108 = scmp.ne.s32.totalorder %s99, %s100
      %p109 = scmp.eq.s32.totalorder %s26, 0
      %p110 = por %p108, %p109
      %p111 = scmp.ne.s32.totalorder %s99, %s100
      %p112 = scmp.eq.s32.totalorder %s27, 1
      %p113 = por %p111, %p112
      %p115 = scmp.ne.s32.totalorder %s100, %s114
      %p116 = scmp.eq.s32.totalorder %s27, 0
      %p117 = por %p115, %p116
      %s119 = sadd.s32 %s118, 1
      %p122 = scmp.eq.s32.totalorder %s21, 1
      %p123 = scmp.ne.s32.totalorder %s118, %s120
      %p124 = scmp.eq.s32.totalorder %s21, 0
      %p125 = por %p123, %p124
      %p126 = scmp.ne.s32.totalorder %s118, %s120
      %p127 = scmp.eq.s32.totalorder %s26, 1
      %p128 = por %p126, %p127
      %p129 = scmp.ne.s32.totalorder %s120, %s121
      %p130 = scmp.eq.s32.totalorder %s26, 0
      %p131 = por %p129, %p130
      %p132 = scmp.ne.s32.totalorder %s120, %s121
      %p133 = scmp.eq.s32.totalorder %s27, 1
      %p134 = por %p132, %p133
      %p136 = scmp.ne.s32.totalorder %s121, %s135
      %p137 = scmp.eq.s32.totalorder %s27, 0
      %p138 = por %p136, %p137
      %s140 = sadd.s32 %s139, 1
      %p143 = scmp.eq.s32.totalorder %s21, 1
      %p144 = scmp.ne.s32.totalorder %s139, %s141
      %p145 = scmp.eq.s32.totalorder %s21, 0
      %p146 = por %p144, %p145
      %p147 = scmp.ne.s32.totalorder %s139, %s141
      %p148 = scmp.eq.s32.totalorder %s26, 1
      %p149 = por %p147, %p148
      %p150 = scmp.ne.s32.totalorder %s141, %s142
      %p151 = scmp.eq.s32.totalorder %s26, 0
      %p152 = por %p150, %p151
      %p153 = scmp.ne.s32.totalorder %s141, %s142
      %p154 = scmp.eq.s32.totalorder %s27, 1
      %p155 = por %p153, %p154
      %p157 = scmp.ne.s32.totalorder %s142, %s156
      %p158 = scmp.eq.s32.totalorder %s27, 0
      %p159 = por %p157, %p158
      %s161 = sadd.s32 %s160, 1
      %p164 = scmp.eq.s32.totalorder %s21, 1
      %p165 = scmp.ne.s32.totalorder %s160, %s162
      %p166 = scmp.eq.s32.totalorder %s21, 0
      %p167 = por %p165, %p166
      %p168 = scmp.ne.s32.totalorder %s160, %s162
      %p169 = scmp.eq.s32.totalorder %s26, 1
      %p170 = por %p168, %p169
      %p171 = scmp.ne.s32.totalorder %s162, %s163
      %p172 = scmp.eq.s32.totalorder %s26, 0
      %p173 = por %p171, %p172
      %p174 = scmp.ne.s32.totalorder %s162, %s163
      %p175 = scmp.eq.s32.totalorder %s27, 1
      %p176 = por %p174, %p175
      %p178 = scmp.ne.s32.totalorder %s163, %s177
      %p179 = scmp.eq.s32.totalorder %s27, 0
      %p180 = por %p178, %p179
      %s182 = sadd.s32 %s181, 1
      %p185 = scmp.eq.s32.totalorder %s21, 1
      %p186 = scmp.ne.s32.totalorder %s181, %s183
      %p187 = scmp.eq.s32.totalorder %s21, 0
      %p188 = por %p186, %p187
      %p189 = scmp.ne.s32.totalorder %s181, %s183
      %p190 = scmp.eq.s32.totalorder %s26, 1
      %p191 = por %p189, %p190
      %p192 = scmp.ne.s32.totalorder %s183, %s184
      %p193 = scmp.eq.s32.totalorder %s26, 0
      %p194 = por %p192, %p193
      %p195 = scmp.ne.s32.totalorder %s183, %s184
      %p196 = scmp.eq.s32.totalorder %s27, 1
      %p197 = por %p195, %p196
      %p199 = scmp.ne.s32.totalorder %s184, %s198
      %p200 = scmp.eq.s32.totalorder %s27, 0
      %p201 = por %p199, %p200
      %s203 = sadd.s32 %s202, 1
      %p206 = scmp.eq.s32.totalorder %s21, 1
      %p207 = scmp.ne.s32.totalorder %s202, %s204
      %p208 = scmp.eq.s32.totalorder %s21, 0
      %p209 = por %p207, %p208
      %p210 = scmp.ne.s32.totalorder %s202, %s204
      %p211 = scmp.eq.s32.totalorder %s26, 1
      %p212 = por %p210, %p211
      %p213 = scmp.ne.s32.totalorder %s204, %s205
      %p214 = scmp.eq.s32.totalorder %s26, 0
      %p215 = por %p213, %p214
      %p216 = scmp.ne.s32.totalorder %s204, %s205
      %p217 = scmp.eq.s32.totalorder %s27, 1
      %p218 = por %p216, %p217
      %p220 = scmp.ne.s32.totalorder %s205, %s219
      %p221 = scmp.eq.s32.totalorder %s27, 0
      %p222 = por %p220, %p221
      %s224 = sadd.s32 %s223, 1
      %p227 = scmp.eq.s32.totalorder %s21, 1
      %p228 = scmp.ne.s32.totalorder %s223, %s225
      %p229 = scmp.eq.s32.totalorder %s21, 0
      %p230 = por %p228, %p229
      %p231 = scmp.ne.s32.totalorder %s223, %s225
      %p232 = scmp.eq.s32.totalorder %s26, 1
      %p233 = por %p231, %p232
      %p234 = scmp.ne.s32.totalorder %s225, %s226
      %p235 = scmp.eq.s32.totalorder %s26, 0
      %p236 = por %p234, %p235
      %p237 = scmp.ne.s32.totalorder %s225, %s226
      %p238 = scmp.eq.s32.totalorder %s27, 1
      %p239 = por %p237, %p238
      %p241 = scmp.ne.s32.totalorder %s226, %s240
      %p242 = scmp.eq.s32.totalorder %s27, 0
      %p243 = por %p241, %p242
      %s245 = sadd.s32 %s244, 1
      %p248 = scmp.eq.s32.totalorder %s21, 1
      %p249 = scmp.ne.s32.totalorder %s244, %s246
      %p250 = scmp.eq.s32.totalorder %s21, 0
      %p251 = por %p249, %p250
      %p252 = scmp.ne.s32.totalorder %s244, %s246
      %p253 = scmp.eq.s32.totalorder %s26, 1
      %p254 = por %p252, %p253
      %p255 = scmp.ne.s32.totalorder %s246, %s247
      %p256 = scmp.eq.s32.totalorder %s26, 0
      %p257 = por %p255, %p256
      %p258 = scmp.ne.s32.totalorder %s246, %s247
      %p259 = scmp.eq.s32.totalorder %s27, 1
      %p260 = por %p258, %p259
      %p262 = scmp.ne.s32.totalorder %s247, %s261
      %p263 = scmp.eq.s32.totalorder %s27, 0
      %p264 = por %p262, %p263
      %s266 = sadd.s32 %s265, 1
      %p269 = scmp.eq.s32.totalorder %s21, 1
      %p270 = scmp.ne.s32.totalorder %s265, %s267
      %p271 = scmp.eq.s32.totalorder %s21, 0
      %p272 = por %p270, %p271
      %p273 = scmp.ne.s32.totalorder %s265, %s267
      %p274 = scmp.eq.s32.totalorder %s26, 1
      %p275 = por %p273, %p274
      %p276 = scmp.ne.s32.totalorder %s267, %s268
      %p277 = scmp.eq.s32.totalorder %s26, 0
      %p278 = por %p276, %p277
      %p279 = scmp.ne.s32.totalorder %s267, %s268
      %p280 = scmp.eq.s32.totalorder %s27, 1
      %p281 = por %p279, %p280
      %p283 = scmp.ne.s32.totalorder %s268, %s282
      %p284 = scmp.eq.s32.totalorder %s27, 0
      %p285 = por %p283, %p284
      %s287 = sadd.s32 %s286, 1
      %p290 = scmp.eq.s32.totalorder %s21, 1
      %p291 = scmp.ne.s32.totalorder %s286, %s288
      %p292 = scmp.eq.s32.totalorder %s21, 0
      %p293 = por %p291, %p292
      %p294 = scmp.ne.s32.totalorder %s286, %s288
      %p295 = scmp.eq.s32.totalorder %s26, 1
      %p296 = por %p294, %p295
      %p297 = scmp.ne.s32.totalorder %s288, %s289
      %p298 = scmp.eq.s32.totalorder %s26, 0
      %p299 = por %p297, %p298
      %p300 = scmp.ne.s32.totalorder %s288, %s289
      %p301 = scmp.eq.s32.totalorder %s27, 1
      %p302 = por %p300, %p301
      %p304 = scmp.ne.s32.totalorder %s289, %s303
      %p305 = scmp.eq.s32.totalorder %s27, 0
      %p306 = por %p304, %p305
      %s308 = sadd.s32 %s307, 1
      %p311 = scmp.eq.s32.totalorder %s21, 1
      %p312 = scmp.ne.s32.totalorder %s307, %s309
      %p313 = scmp.eq.s32.totalorder %s21, 0
      %p314 = por %p312, %p313
      %p315 = scmp.ne.s32.totalorder %s307, %s309
      %p316 = scmp.eq.s32.totalorder %s26, 1
      %p317 = por %p315, %p316
      %p318 = scmp.ne.s32.totalorder %s309, %s310
      %p319 = scmp.eq.s32.totalorder %s26, 0
      %p320 = por %p318, %p319
      %p321 = scmp.ne.s32.totalorder %s309, %s310
      %p322 = scmp.eq.s32.totalorder %s27, 1
      %p323 = por %p321, %p322
      %p325 = scmp.ne.s32.totalorder %s310, %s324
      %p326 = scmp.eq.s32.totalorder %s27, 0
      %p327 = por %p325, %p326
      %s329 = sadd.s32 %s328, 1
      %p332 = scmp.eq.s32.totalorder %s21, 1
      %p333 = scmp.ne.s32.totalorder %s328, %s330
      %p334 = scmp.eq.s32.totalorder %s21, 0
      %p335 = por %p333, %p334
      %p336 = scmp.ne.s32.totalorder %s328, %s330
      %p337 = scmp.eq.s32.totalorder %s26, 1
      %p338 = por %p336, %p337
      %p339 = scmp.ne.s32.totalorder %s330, %s331
      %p340 = scmp.eq.s32.totalorder %s26, 0
      %p341 = por %p339, %p340
      %p342 = scmp.ne.s32.totalorder %s330, %s331
      %p343 = scmp.eq.s32.totalorder %s27, 1
      %p344 = por %p342, %p343
      %p346 = scmp.ne.s32.totalorder %s331, %s345
      %p347 = scmp.eq.s32.totalorder %s27, 0
      %p348 = por %p346, %p347
      %s349 = ssub.s32 %s21, %s28
      %p350 = scmp.eq.s32.totalorder %s349, 0
      %s352 = sadd.s32 %s351, 1
      %s353 = scalar_select %p350, %s351, %s352
      %p356 = pneg %p350
      %p357 = scmp.eq.s32.totalorder %s21, 1
      %p358 = por %p356, %p357
      %p359 = scmp.ne.s32.totalorder %s351, %s354
      %p360 = scmp.eq.s32.totalorder %s21, 0
      %p361 = por %p359, %p360
      %p362 = scmp.ne.s32.totalorder %s351, %s354
      %p363 = scmp.eq.s32.totalorder %s26, 1
      %p364 = por %p362, %p363
      %p365 = scmp.ne.s32.totalorder %s354, %s355
      %p366 = scmp.eq.s32.totalorder %s26, 0
      %p367 = por %p365, %p366
      %p368 = scmp.ne.s32.totalorder %s354, %s355
      %p369 = scmp.eq.s32.totalorder %s27, 1
      %p370 = por %p368, %p369
      %p372 = scmp.ne.s32.totalorder %s355, %s371
      %p373 = scmp.eq.s32.totalorder %s27, 0
      %p374 = por %p372, %p373
      %p375 = scmp.le.s32.totalorder 1, %s21
      %p376 = scmp.lt.s32.totalorder %s21, 3
      %p377 = pnand %p375, %p376
      %p378 = pneg %p377
      // Predicated region
      $region9: #{cnn_forward.1} parent=5 // pred_check
        _
      $region10: #{cnn_forward.1} parent=5 // pred_check_branch
        %380 = sbr.rel (%p377) target = $region12
      $region11: #{cnn_forward.1} parent=5 // pred_region
        %s381 = ssub.s32 %s21, 1
        // Predicated region
        $region13: #{cnn_forward.1} parent=11 // pred_check
          %p382 = pneg %p68
        $region14: #{cnn_forward.1} parent=11 // pred_check_branch
          %384 = sbr.rel (%p382) target = $region16
        $region15: #{cnn_forward.1} parent=11 // pred_region
          _
        $region16: #{cnn_forward.1} parent=11 // pred_fallthru
          _
        // Predicated region
        $region17: #{cnn_forward.1} parent=11 // pred_check
          %p385 = pneg %p89
        $region18: #{cnn_forward.1} parent=11 // pred_check_branch
          %387 = sbr.rel (%p385) target = $region20
        $region19: #{cnn_forward.1} parent=11 // pred_region
          _
        $region20: #{cnn_forward.1} parent=11 // pred_fallthru
          _
        // Predicated region
        $region21: #{cnn_forward.1} parent=11 // pred_check
          %p388 = pneg %p110
        $region22: #{cnn_forward.1} parent=11 // pred_check_branch
          %390 = sbr.rel (%p388) target = $region24
        $region23: #{cnn_forward.1} parent=11 // pred_region
          _
        $region24: #{cnn_forward.1} parent=11 // pred_fallthru
          _
        // Predicated region
        $region25: #{cnn_forward.1} parent=11 // pred_check
          %p391 = pneg %p131
        $region26: #{cnn_forward.1} parent=11 // pred_check_branch
          %393 = sbr.rel (%p391) target = $region28
        $region27: #{cnn_forward.1} parent=11 // pred_region
          _
        $region28: #{cnn_forward.1} parent=11 // pred_fallthru
          _
        // Predicated region
        $region29: #{cnn_forward.1} parent=11 // pred_check
          %p394 = pneg %p152
        $region30: #{cnn_forward.1} parent=11 // pred_check_branch
          %396 = sbr.rel (%p394) target = $region32
        $region31: #{cnn_forward.1} parent=11 // pred_region
          _
        $region32: #{cnn_forward.1} parent=11 // pred_fallthru
          _
        // Predicated region
        $region33: #{cnn_forward.1} parent=11 // pred_check
          %p397 = pneg %p173
        $region34: #{cnn_forward.1} parent=11 // pred_check_branch
          %399 = sbr.rel (%p397) target = $region36
        $region35: #{cnn_forward.1} parent=11 // pred_region
          _
        $region36: #{cnn_forward.1} parent=11 // pred_fallthru
          _
        // Predicated region
        $region37: #{cnn_forward.1} parent=11 // pred_check
          %p400 = pneg %p194
        $region38: #{cnn_forward.1} parent=11 // pred_check_branch
          %402 = sbr.rel (%p400) target = $region40
        $region39: #{cnn_forward.1} parent=11 // pred_region
          _
        $region40: #{cnn_forward.1} parent=11 // pred_fallthru
          _
        // Predicated region
        $region41: #{cnn_forward.1} parent=11 // pred_check
          %p403 = pneg %p215
        $region42: #{cnn_forward.1} parent=11 // pred_check_branch
          %405 = sbr.rel (%p403) target = $region44
        $region43: #{cnn_forward.1} parent=11 // pred_region
          _
        $region44: #{cnn_forward.1} parent=11 // pred_fallthru
          _
        // Predicated region
        $region45: #{cnn_forward.1} parent=11 // pred_check
          %p406 = pneg %p236
        $region46: #{cnn_forward.1} parent=11 // pred_check_branch
          %408 = sbr.rel (%p406) target = $region48
        $region47: #{cnn_forward.1} parent=11 // pred_region
          _
        $region48: #{cnn_forward.1} parent=11 // pred_fallthru
          _
        // Predicated region
        $region49: #{cnn_forward.1} parent=11 // pred_check
          %p409 = pneg %p257
        $region50: #{cnn_forward.1} parent=11 // pred_check_branch
          %411 = sbr.rel (%p409) target = $region52
        $region51: #{cnn_forward.1} parent=11 // pred_region
          _
        $region52: #{cnn_forward.1} parent=11 // pred_fallthru
          _
        // Predicated region
        $region53: #{cnn_forward.1} parent=11 // pred_check
          %p412 = pneg %p278
        $region54: #{cnn_forward.1} parent=11 // pred_check_branch
          %414 = sbr.rel (%p412) target = $region56
        $region55: #{cnn_forward.1} parent=11 // pred_region
          _
        $region56: #{cnn_forward.1} parent=11 // pred_fallthru
          _
        // Predicated region
        $region57: #{cnn_forward.1} parent=11 // pred_check
          %p415 = pneg %p299
        $region58: #{cnn_forward.1} parent=11 // pred_check_branch
          %417 = sbr.rel (%p415) target = $region60
        $region59: #{cnn_forward.1} parent=11 // pred_region
          _
        $region60: #{cnn_forward.1} parent=11 // pred_fallthru
          _
        // Predicated region
        $region61: #{cnn_forward.1} parent=11 // pred_check
          %p418 = pneg %p320
        $region62: #{cnn_forward.1} parent=11 // pred_check_branch
          %420 = sbr.rel (%p418) target = $region64
        $region63: #{cnn_forward.1} parent=11 // pred_region
          _
        $region64: #{cnn_forward.1} parent=11 // pred_fallthru
          _
        // Predicated region
        $region65: #{cnn_forward.1} parent=11 // pred_check
          %p421 = pneg %p341
        $region66: #{cnn_forward.1} parent=11 // pred_check_branch
          %423 = sbr.rel (%p421) target = $region68
        $region67: #{cnn_forward.1} parent=11 // pred_region
          _
        $region68: #{cnn_forward.1} parent=11 // pred_fallthru
          _
      $region12: #{cnn_forward.1} parent=5 // pred_fallthru
        _
      %p424 = scmp.lt.s32.totalorder %s21, 2
      // Predicated region
      $region69: #{cnn_forward.1} parent=5 // pred_check
        %p425 = pneg %p424
      $region70: #{cnn_forward.1} parent=5 // pred_check_branch
        %427 = sbr.rel (%p425) target = $region72
      $region71: #{cnn_forward.1} parent=5 // pred_region
        // Predicated region
        $region73: #{cnn_forward.1} parent=71 // pred_check
          %p428 = pneg %p41
        $region74: #{cnn_forward.1} parent=71 // pred_check_branch
          %430 = sbr.rel (%p428) target = $region76
        $region75: #{cnn_forward.1} parent=71 // pred_region
          %s431 = sand.u32 %s31, 1
          %s432 = sand.u32 %s31, 1
          %s433 = smul.addr %s432, 896
          %s434 = scalar_lea.vmem [#allocation2], %s433
          %s435 = smul.u32 4, %s21
          %s436 = smul.addr %s435, 8
          %s437 = scalar_lea.vmem %s0, %s436
          // Predicated region
          $region77: #{cnn_forward.1} parent=75 // pred_check
            _
          $region78: #{cnn_forward.1} parent=75 // pred_check_branch
            %439 = sbr.rel (0) target = $region80
          $region79: #{cnn_forward.1} parent=75 // pred_region
            // Predicated region
            $region81: #{cnn_forward.1} parent=79 // pred_check
              _
            $region82: #{cnn_forward.1} parent=79 // pred_check_branch
              %441 = sbr.rel (0) target = $region84
            $region83: #{cnn_forward.1} parent=79 // pred_region
              // Predicated region
              $region96: #{cnn_forward.1} parent=83 // pred_check
                _
              $region97: #{cnn_forward.1} parent=83 // pred_check_branch
                %679 = sbr.rel (0) target = $region99
              $region98: #{cnn_forward.1} parent=83 // pred_region
                loop: start=0, step=1, limit=1
                $region100: #{cnn_forward.1} parent=98 // loop_pre_header
                  _
                $region101: #{cnn_forward.1} parent=98 // loop_header
                  %s681 = sphi 0, %s685
                  %p682 = scmp.ge.s32.totalorder %s681, 1
                  %s686 = sphi %s437, %s437
                  %s687 = sphi %s434, %s434
                $region102: #{cnn_forward.1} parent=98 // loop_header_branch
                  %684 = sbr.rel (%p682) target = $region106
                $region103: #{cnn_forward.1} parent=98 // loop_body
                  %v688 = vld [vmem:[%s686] sm:$0xff]
                  %689 = vst [vmem:[%s687] sm:$0xff] %v688
                  %v690 = vld [vmem:[%s686 + $0x8] sm:$0xff]
                  %691 = vst [vmem:[%s687 + $0x8] sm:$0xff] %v690
                  %v692 = vld [vmem:[%s686 + $0x10] sm:$0xff]
                  %693 = vst [vmem:[%s687 + $0x10] sm:$0xff] %v692
                  %v694 = vld [vmem:[%s686 + $0x18] sm:$0xff]
                  %695 = vst [vmem:[%s687 + $0x18] sm:$0xff] %v694
                  %v696 = vld [vmem:[%s686 + $0x40] sm:$0xff]
                  %697 = vst [vmem:[%s687 + $0x20] sm:$0xff] %v696
                  %v698 = vld [vmem:[%s686 + $0x48] sm:$0xff]
                  %699 = vst [vmem:[%s687 + $0x28] sm:$0xff] %v698
                  %v700 = vld [vmem:[%s686 + $0x50] sm:$0xff]
                  %701 = vst [vmem:[%s687 + $0x30] sm:$0xff] %v700
                  %v702 = vld [vmem:[%s686 + $0x58] sm:$0xff]
                  %703 = vst [vmem:[%s687 + $0x38] sm:$0xff] %v702
                  %v704 = vld [vmem:[%s686 + $0x80] sm:$0xff]
                  %705 = vst [vmem:[%s687 + $0x40] sm:$0xff] %v704
                  %v706 = vld [vmem:[%s686 + $0x88] sm:$0xff]
                  %707 = vst [vmem:[%s687 + $0x48] sm:$0xff] %v706
                  %v708 = vld [vmem:[%s686 + $0x90] sm:$0xff]
                  %709 = vst [vmem:[%s687 + $0x50] sm:$0xff] %v708
                  %v710 = vld [vmem:[%s686 + $0x98] sm:$0xff]
                  %711 = vst [vmem:[%s687 + $0x58] sm:$0xff] %v710
                  %v712 = vld [vmem:[%s686 + $0xc0] sm:$0xff]
                  %713 = vst [vmem:[%s687 + $0x60] sm:$0xff] %v712
                  %v714 = vld [vmem:[%s686 + $0xc8] sm:$0xff]
                  %715 = vst [vmem:[%s687 + $0x68] sm:$0xff] %v714
                  %v716 = vld [vmem:[%s686 + $0xd0] sm:$0xff]
                  %717 = vst [vmem:[%s687 + $0x70] sm:$0xff] %v716
                  %v718 = vld [vmem:[%s686 + $0xd8] sm:$0xff]
                  %719 = vst [vmem:[%s687 + $0x78] sm:$0xff] %v718
                  %v720 = vld [vmem:[%s686 + $0x100] sm:$0xff]
                  %721 = vst [vmem:[%s687 + $0x80] sm:$0xff] %v720
                  %v722 = vld [vmem:[%s686 + $0x108] sm:$0xff]
                  %723 = vst [vmem:[%s687 + $0x88] sm:$0xff] %v722
                  %v724 = vld [vmem:[%s686 + $0x110] sm:$0xff]
                  %725 = vst [vmem:[%s687 + $0x90] sm:$0xff] %v724
                  %v726 = vld [vmem:[%s686 + $0x118] sm:$0xff]
                  %727 = vst [vmem:[%s687 + $0x98] sm:$0xff] %v726
                  %v728 = vld [vmem:[%s686 + $0x140] sm:$0xff]
                  %729 = vst [vmem:[%s687 + $0xa0] sm:$0xff] %v728
                  %v730 = vld [vmem:[%s686 + $0x148] sm:$0xff]
                  %731 = vst [vmem:[%s687 + $0xa8] sm:$0xff] %v730
                  %v732 = vld [vmem:[%s686 + $0x150] sm:$0xff]
                  %733 = vst [vmem:[%s687 + $0xb0] sm:$0xff] %v732
                  %v734 = vld [vmem:[%s686 + $0x158] sm:$0xff]
                  %735 = vst [vmem:[%s687 + $0xb8] sm:$0xff] %v734
                  %v736 = vld [vmem:[%s686 + $0x180] sm:$0xff]
                  %737 = vst [vmem:[%s687 + $0xc0] sm:$0xff] %v736
                  %v738 = vld [vmem:[%s686 + $0x188] sm:$0xff]
                  %739 = vst [vmem:[%s687 + $0xc8] sm:$0xff] %v738
                  %v740 = vld [vmem:[%s686 + $0x190] sm:$0xff]
                  %741 = vst [vmem:[%s687 + $0xd0] sm:$0xff] %v740
                  %v742 = vld [vmem:[%s686 + $0x198] sm:$0xff]
                  %743 = vst [vmem:[%s687 + $0xd8] sm:$0xff] %v742
                  %v744 = vld [vmem:[%s686 + $0x1c0] sm:$0xff]
                  %745 = vst [vmem:[%s687 + $0xe0] sm:$0xff] %v744
                  %v746 = vld [vmem:[%s686 + $0x1c8] sm:$0xff]
                  %747 = vst [vmem:[%s687 + $0xe8] sm:$0xff] %v746
                  %v748 = vld [vmem:[%s686 + $0x1d0] sm:$0xff]
                  %749 = vst [vmem:[%s687 + $0xf0] sm:$0xff] %v748
                  %v750 = vld [vmem:[%s686 + $0x1d8] sm:$0xff]
                  %751 = vst [vmem:[%s687 + $0xf8] sm:$0xff] %v750
                  %v752 = vld [vmem:[%s686 + $0x200] sm:$0xff]
                  %753 = vst [vmem:[%s687 + $0x100] sm:$0xff] %v752
                  %v754 = vld [vmem:[%s686 + $0x208] sm:$0xff]
                  %755 = vst [vmem:[%s687 + $0x108] sm:$0xff] %v754
                  %v756 = vld [vmem:[%s686 + $0x210] sm:$0xff]
                  %757 = vst [vmem:[%s687 + $0x110] sm:$0xff] %v756
                  %v758 = vld [vmem:[%s686 + $0x218] sm:$0xff]
                  %759 = vst [vmem:[%s687 + $0x118] sm:$0xff] %v758
                  %v760 = vld [vmem:[%s686 + $0x240] sm:$0xff]
                  %761 = vst [vmem:[%s687 + $0x120] sm:$0xff] %v760
                  %v762 = vld [vmem:[%s686 + $0x248] sm:$0xff]
                  %763 = vst [vmem:[%s687 + $0x128] sm:$0xff] %v762
                  %v764 = vld [vmem:[%s686 + $0x250] sm:$0xff]
                  %765 = vst [vmem:[%s687 + $0x130] sm:$0xff] %v764
                  %v766 = vld [vmem:[%s686 + $0x258] sm:$0xff]
                  %767 = vst [vmem:[%s687 + $0x138] sm:$0xff] %v766
                  %v768 = vld [vmem:[%s686 + $0x280] sm:$0xff]
                  %769 = vst [vmem:[%s687 + $0x140] sm:$0xff] %v768
                  %v770 = vld [vmem:[%s686 + $0x288] sm:$0xff]
                  %771 = vst [vmem:[%s687 + $0x148] sm:$0xff] %v770
                  %v772 = vld [vmem:[%s686 + $0x290] sm:$0xff]
                  %773 = vst [vmem:[%s687 + $0x150] sm:$0xff] %v772
                  %v774 = vld [vmem:[%s686 + $0x298] sm:$0xff]
                  %775 = vst [vmem:[%s687 + $0x158] sm:$0xff] %v774
                  %v776 = vld [vmem:[%s686 + $0x2c0] sm:$0xff]
                  %777 = vst [vmem:[%s687 + $0x160] sm:$0xff] %v776
                  %v778 = vld [vmem:[%s686 + $0x2c8] sm:$0xff]
                  %779 = vst [vmem:[%s687 + $0x168] sm:$0xff] %v778
                  %v780 = vld [vmem:[%s686 + $0x2d0] sm:$0xff]
                  %781 = vst [vmem:[%s687 + $0x170] sm:$0xff] %v780
                  %v782 = vld [vmem:[%s686 + $0x2d8] sm:$0xff]
                  %783 = vst [vmem:[%s687 + $0x178] sm:$0xff] %v782
                  %v784 = vld [vmem:[%s686 + $0x300] sm:$0xff]
                  %785 = vst [vmem:[%s687 + $0x180] sm:$0xff] %v784
                  %v786 = vld [vmem:[%s686 + $0x308] sm:$0xff]
                  %787 = vst [vmem:[%s687 + $0x188] sm:$0xff] %v786
                  %v788 = vld [vmem:[%s686 + $0x310] sm:$0xff]
                  %789 = vst [vmem:[%s687 + $0x190] sm:$0xff] %v788
                  %v790 = vld [vmem:[%s686 + $0x318] sm:$0xff]
                  %791 = vst [vmem:[%s687 + $0x198] sm:$0xff] %v790
                  %v792 = vld [vmem:[%s686 + $0x340] sm:$0xff]
                  %793 = vst [vmem:[%s687 + $0x1a0] sm:$0xff] %v792
                  %v794 = vld [vmem:[%s686 + $0x348] sm:$0xff]
                  %795 = vst [vmem:[%s687 + $0x1a8] sm:$0xff] %v794
                  %v796 = vld [vmem:[%s686 + $0x350] sm:$0xff]
                  %797 = vst [vmem:[%s687 + $0x1b0] sm:$0xff] %v796
                  %v798 = vld [vmem:[%s686 + $0x358] sm:$0xff]
                  %799 = vst [vmem:[%s687 + $0x1b8] sm:$0xff] %v798
                  %v800 = vld [vmem:[%s686 + $0x380] sm:$0xff]
                  %801 = vst [vmem:[%s687 + $0x1c0] sm:$0xff] %v800
                  %v802 = vld [vmem:[%s686 + $0x388] sm:$0xff]
                  %803 = vst [vmem:[%s687 + $0x1c8] sm:$0xff] %v802
                  %v804 = vld [vmem:[%s686 + $0x390] sm:$0xff]
                  %805 = vst [vmem:[%s687 + $0x1d0] sm:$0xff] %v804
                  %v806 = vld [vmem:[%s686 + $0x398] sm:$0xff]
                  %807 = vst [vmem:[%s687 + $0x1d8] sm:$0xff] %v806
                  %v808 = vld [vmem:[%s686 + $0x3c0] sm:$0xff]
                  %809 = vst [vmem:[%s687 + $0x1e0] sm:$0xff] %v808
                  %v810 = vld [vmem:[%s686 + $0x3c8] sm:$0xff]
                  %811 = vst [vmem:[%s687 + $0x1e8] sm:$0xff] %v810
                  %v812 = vld [vmem:[%s686 + $0x3d0] sm:$0xff]
                  %813 = vst [vmem:[%s687 + $0x1f0] sm:$0xff] %v812
                  %v814 = vld [vmem:[%s686 + $0x3d8] sm:$0xff]
                  %815 = vst [vmem:[%s687 + $0x1f8] sm:$0xff] %v814
                  %v816 = vld [vmem:[%s686 + $0x400] sm:$0xff]
                  %817 = vst [vmem:[%s687 + $0x200] sm:$0xff] %v816
                  %v818 = vld [vmem:[%s686 + $0x408] sm:$0xff]
                  %819 = vst [vmem:[%s687 + $0x208] sm:$0xff] %v818
                  %v820 = vld [vmem:[%s686 + $0x410] sm:$0xff]
                  %821 = vst [vmem:[%s687 + $0x210] sm:$0xff] %v820
                  %v822 = vld [vmem:[%s686 + $0x418] sm:$0xff]
                  %823 = vst [vmem:[%s687 + $0x218] sm:$0xff] %v822
                  %v824 = vld [vmem:[%s686 + $0x440] sm:$0xff]
                  %825 = vst [vmem:[%s687 + $0x220] sm:$0xff] %v824
                  %v826 = vld [vmem:[%s686 + $0x448] sm:$0xff]
                  %827 = vst [vmem:[%s687 + $0x228] sm:$0xff] %v826
                  %v828 = vld [vmem:[%s686 + $0x450] sm:$0xff]
                  %829 = vst [vmem:[%s687 + $0x230] sm:$0xff] %v828
                  %v830 = vld [vmem:[%s686 + $0x458] sm:$0xff]
                  %831 = vst [vmem:[%s687 + $0x238] sm:$0xff] %v830
                  %v832 = vld [vmem:[%s686 + $0x480] sm:$0xff]
                  %833 = vst [vmem:[%s687 + $0x240] sm:$0xff] %v832
                  %v834 = vld [vmem:[%s686 + $0x488] sm:$0xff]
                  %835 = vst [vmem:[%s687 + $0x248] sm:$0xff] %v834
                  %v836 = vld [vmem:[%s686 + $0x490] sm:$0xff]
                  %837 = vst [vmem:[%s687 + $0x250] sm:$0xff] %v836
                  %v838 = vld [vmem:[%s686 + $0x498] sm:$0xff]
                  %839 = vst [vmem:[%s687 + $0x258] sm:$0xff] %v838
                  %v840 = vld [vmem:[%s686 + $0x4c0] sm:$0xff]
                  %841 = vst [vmem:[%s687 + $0x260] sm:$0xff] %v840
                  %v842 = vld [vmem:[%s686 + $0x4c8] sm:$0xff]
                  %843 = vst [vmem:[%s687 + $0x268] sm:$0xff] %v842
                  %v844 = vld [vmem:[%s686 + $0x4d0] sm:$0xff]
                  %845 = vst [vmem:[%s687 + $0x270] sm:$0xff] %v844
                  %v846 = vld [vmem:[%s686 + $0x4d8] sm:$0xff]
                  %847 = vst [vmem:[%s687 + $0x278] sm:$0xff] %v846
                  %v848 = vld [vmem:[%s686 + $0x500] sm:$0xff]
                  %849 = vst [vmem:[%s687 + $0x280] sm:$0xff] %v848
                  %v850 = vld [vmem:[%s686 + $0x508] sm:$0xff]
                  %851 = vst [vmem:[%s687 + $0x288] sm:$0xff] %v850
                  %v852 = vld [vmem:[%s686 + $0x510] sm:$0xff]
                  %853 = vst [vmem:[%s687 + $0x290] sm:$0xff] %v852
                  %v854 = vld [vmem:[%s686 + $0x518] sm:$0xff]
                  %855 = vst [vmem:[%s687 + $0x298] sm:$0xff] %v854
                  %v856 = vld [vmem:[%s686 + $0x540] sm:$0xff]
                  %857 = vst [vmem:[%s687 + $0x2a0] sm:$0xff] %v856
                  %v858 = vld [vmem:[%s686 + $0x548] sm:$0xff]
                  %859 = vst [vmem:[%s687 + $0x2a8] sm:$0xff] %v858
                  %v860 = vld [vmem:[%s686 + $0x550] sm:$0xff]
                  %861 = vst [vmem:[%s687 + $0x2b0] sm:$0xff] %v860
                  %v862 = vld [vmem:[%s686 + $0x558] sm:$0xff]
                  %863 = vst [vmem:[%s687 + $0x2b8] sm:$0xff] %v862
                  %v864 = vld [vmem:[%s686 + $0x580] sm:$0xff]
                  %865 = vst [vmem:[%s687 + $0x2c0] sm:$0xff] %v864
                  %v866 = vld [vmem:[%s686 + $0x588] sm:$0xff]
                  %867 = vst [vmem:[%s687 + $0x2c8] sm:$0xff] %v866
                  %v868 = vld [vmem:[%s686 + $0x590] sm:$0xff]
                  %869 = vst [vmem:[%s687 + $0x2d0] sm:$0xff] %v868
                  %v870 = vld [vmem:[%s686 + $0x598] sm:$0xff]
                  %871 = vst [vmem:[%s687 + $0x2d8] sm:$0xff] %v870
                  %v872 = vld [vmem:[%s686 + $0x5c0] sm:$0xff]
                  %873 = vst [vmem:[%s687 + $0x2e0] sm:$0xff] %v872
                  %v874 = vld [vmem:[%s686 + $0x5c8] sm:$0xff]
                  %875 = vst [vmem:[%s687 + $0x2e8] sm:$0xff] %v874
                  %v876 = vld [vmem:[%s686 + $0x5d0] sm:$0xff]
                  %877 = vst [vmem:[%s687 + $0x2f0] sm:$0xff] %v876
                  %v878 = vld [vmem:[%s686 + $0x5d8] sm:$0xff]
                  %879 = vst [vmem:[%s687 + $0x2f8] sm:$0xff] %v878
                  %v880 = vld [vmem:[%s686 + $0x600] sm:$0xff]
                  %881 = vst [vmem:[%s687 + $0x300] sm:$0xff] %v880
                  %v882 = vld [vmem:[%s686 + $0x608] sm:$0xff]
                  %883 = vst [vmem:[%s687 + $0x308] sm:$0xff] %v882
                  %v884 = vld [vmem:[%s686 + $0x610] sm:$0xff]
                  %885 = vst [vmem:[%s687 + $0x310] sm:$0xff] %v884
                  %v886 = vld [vmem:[%s686 + $0x618] sm:$0xff]
                  %887 = vst [vmem:[%s687 + $0x318] sm:$0xff] %v886
                  %v888 = vld [vmem:[%s686 + $0x640] sm:$0xff]
                  %889 = vst [vmem:[%s687 + $0x320] sm:$0xff] %v888
                  %v890 = vld [vmem:[%s686 + $0x648] sm:$0xff]
                  %891 = vst [vmem:[%s687 + $0x328] sm:$0xff] %v890
                  %v892 = vld [vmem:[%s686 + $0x650] sm:$0xff]
                  %893 = vst [vmem:[%s687 + $0x330] sm:$0xff] %v892
                  %v894 = vld [vmem:[%s686 + $0x658] sm:$0xff]
                  %895 = vst [vmem:[%s687 + $0x338] sm:$0xff] %v894
                  %v896 = vld [vmem:[%s686 + $0x680] sm:$0xff]
                  %897 = vst [vmem:[%s687 + $0x340] sm:$0xff] %v896
                  %v898 = vld [vmem:[%s686 + $0x688] sm:$0xff]
                  %899 = vst [vmem:[%s687 + $0x348] sm:$0xff] %v898
                  %v900 = vld [vmem:[%s686 + $0x690] sm:$0xff]
                  %901 = vst [vmem:[%s687 + $0x350] sm:$0xff] %v900
                  %v902 = vld [vmem:[%s686 + $0x698] sm:$0xff]
                  %903 = vst [vmem:[%s687 + $0x358] sm:$0xff] %v902
                  %v904 = vld [vmem:[%s686 + $0x6c0] sm:$0xff]
                  %905 = vst [vmem:[%s687 + $0x360] sm:$0xff] %v904
                  %v906 = vld [vmem:[%s686 + $0x6c8] sm:$0xff]
                  %907 = vst [vmem:[%s687 + $0x368] sm:$0xff] %v906
                  %v908 = vld [vmem:[%s686 + $0x6d0] sm:$0xff]
                  %909 = vst [vmem:[%s687 + $0x370] sm:$0xff] %v908
                  %v910 = vld [vmem:[%s686 + $0x6d8] sm:$0xff]
                  %911 = vst [vmem:[%s687 + $0x378] sm:$0xff] %v910
                $region104: #{cnn_forward.1} parent=98 // loop_footer
                  %s685 = sadd.s32 1, %s681
                $region105: #{cnn_forward.1} parent=98 // loop_footer_branch
                  %680 = sbr.rel target = $region101
                $region106: #{cnn_forward.1} parent=98 // loop_exit
                  _
              $region99: #{cnn_forward.1} parent=83 // pred_fallthru
                _
              // Predicated region
              $region107: #{cnn_forward.1} parent=83 // pred_check
                _
              $region108: #{cnn_forward.1} parent=83 // pred_check_branch
                %913 = sbr.rel target = $region110
              $region109: #{cnn_forward.1} parent=83 // pred_region
                _
              $region110: #{cnn_forward.1} parent=83 // pred_fallthru
                _
            $region84: #{cnn_forward.1} parent=79 // pred_fallthru
              _
            // Predicated region
            $region85: #{cnn_forward.1} parent=79 // pred_check
              _
            $region86: #{cnn_forward.1} parent=79 // pred_check_branch
              %443 = sbr.rel target = $region88
            $region87: #{cnn_forward.1} parent=79 // pred_region
              %s445 = ssub.s32 256, 1
              loop: start=0, step=1, limit=1
              $region89: #{cnn_forward.1} parent=87 // loop_pre_header
                _
              $region90: #{cnn_forward.1} parent=87 // loop_header
                %s447 = sphi 0, %s451
                %p448 = scmp.ge.s32.totalorder %s447, 1
                %s452 = sphi %s437, %s437
                %s453 = sphi %s434, %s434
              $region91: #{cnn_forward.1} parent=87 // loop_header_branch
                %450 = sbr.rel (%p448) target = $region95
              $region92: #{cnn_forward.1} parent=87 // loop_body
                %v454 = vld [vmem:[%s452] sm:%s445]
                %455 = vst [vmem:[%s453] sm:%s445] %v454
                %v456 = vld [vmem:[%s452 + $0x8] sm:%s445]
                %457 = vst [vmem:[%s453 + $0x8] sm:%s445] %v456
                %v458 = vld [vmem:[%s452 + $0x10] sm:%s445]
                %459 = vst [vmem:[%s453 + $0x10] sm:%s445] %v458
                %v460 = vld [vmem:[%s452 + $0x18] sm:%s445]
                %461 = vst [vmem:[%s453 + $0x18] sm:%s445] %v460
                %v462 = vld [vmem:[%s452 + $0x40] sm:%s445]
                %463 = vst [vmem:[%s453 + $0x20] sm:%s445] %v462
                %v464 = vld [vmem:[%s452 + $0x48] sm:%s445]
                %465 = vst [vmem:[%s453 + $0x28] sm:%s445] %v464
                %v466 = vld [vmem:[%s452 + $0x50] sm:%s445]
                %467 = vst [vmem:[%s453 + $0x30] sm:%s445] %v466
                %v468 = vld [vmem:[%s452 + $0x58] sm:%s445]
                %469 = vst [vmem:[%s453 + $0x38] sm:%s445] %v468
                %v470 = vld [vmem:[%s452 + $0x80] sm:%s445]
                %471 = vst [vmem:[%s453 + $0x40] sm:%s445] %v470
                %v472 = vld [vmem:[%s452 + $0x88] sm:%s445]
                %473 = vst [vmem:[%s453 + $0x48] sm:%s445] %v472
                %v474 = vld [vmem:[%s452 + $0x90] sm:%s445]
                %475 = vst [vmem:[%s453 + $0x50] sm:%s445] %v474
                %v476 = vld [vmem:[%s452 + $0x98] sm:%s445]
                %477 = vst [vmem:[%s453 + $0x58] sm:%s445] %v476
                %v478 = vld [vmem:[%s452 + $0xc0] sm:%s445]
                %479 = vst [vmem:[%s453 + $0x60] sm:%s445] %v478
                %v480 = vld [vmem:[%s452 + $0xc8] sm:%s445]
                %481 = vst [vmem:[%s453 + $0x68] sm:%s445] %v480
                %v482 = vld [vmem:[%s452 + $0xd0] sm:%s445]
                %483 = vst [vmem:[%s453 + $0x70] sm:%s445] %v482
                %v484 = vld [vmem:[%s452 + $0xd8] sm:%s445]
                %485 = vst [vmem:[%s453 + $0x78] sm:%s445] %v484
                %v486 = vld [vmem:[%s452 + $0x100] sm:%s445]
                %487 = vst [vmem:[%s453 + $0x80] sm:%s445] %v486
                %v488 = vld [vmem:[%s452 + $0x108] sm:%s445]
                %489 = vst [vmem:[%s453 + $0x88] sm:%s445] %v488
                %v490 = vld [vmem:[%s452 + $0x110] sm:%s445]
                %491 = vst [vmem:[%s453 + $0x90] sm:%s445] %v490
                %v492 = vld [vmem:[%s452 + $0x118] sm:%s445]
                %493 = vst [vmem:[%s453 + $0x98] sm:%s445] %v492
                %v494 = vld [vmem:[%s452 + $0x140] sm:%s445]
                %495 = vst [vmem:[%s453 + $0xa0] sm:%s445] %v494
                %v496 = vld [vmem:[%s452 + $0x148] sm:%s445]
                %497 = vst [vmem:[%s453 + $0xa8] sm:%s445] %v496
                %v498 = vld [vmem:[%s452 + $0x150] sm:%s445]
                %499 = vst [vmem:[%s453 + $0xb0] sm:%s445] %v498
                %v500 = vld [vmem:[%s452 + $0x158] sm:%s445]
                %501 = vst [vmem:[%s453 + $0xb8] sm:%s445] %v500
                %v502 = vld [vmem:[%s452 + $0x180] sm:%s445]
                %503 = vst [vmem:[%s453 + $0xc0] sm:%s445] %v502
                %v504 = vld [vmem:[%s452 + $0x188] sm:%s445]
                %505 = vst [vmem:[%s453 + $0xc8] sm:%s445] %v504
                %v506 = vld [vmem:[%s452 + $0x190] sm:%s445]
                %507 = vst [vmem:[%s453 + $0xd0] sm:%s445] %v506
                %v508 = vld [vmem:[%s452 + $0x198] sm:%s445]
                %509 = vst [vmem:[%s453 + $0xd8] sm:%s445] %v508
                %v510 = vld [vmem:[%s452 + $0x1c0] sm:%s445]
                %511 = vst [vmem:[%s453 + $0xe0] sm:%s445] %v510
                %v512 = vld [vmem:[%s452 + $0x1c8] sm:%s445]
                %513 = vst [vmem:[%s453 + $0xe8] sm:%s445] %v512
                %v514 = vld [vmem:[%s452 + $0x1d0] sm:%s445]
                %515 = vst [vmem:[%s453 + $0xf0] sm:%s445] %v514
                %v516 = vld [vmem:[%s452 + $0x1d8] sm:%s445]
                %517 = vst [vmem:[%s453 + $0xf8] sm:%s445] %v516
                %v518 = vld [vmem:[%s452 + $0x200] sm:%s445]
                %519 = vst [vmem:[%s453 + $0x100] sm:%s445] %v518
                %v520 = vld [vmem:[%s452 + $0x208] sm:%s445]
                %521 = vst [vmem:[%s453 + $0x108] sm:%s445] %v520
                %v522 = vld [vmem:[%s452 + $0x210] sm:%s445]
                %523 = vst [vmem:[%s453 + $0x110] sm:%s445] %v522
                %v524 = vld [vmem:[%s452 + $0x218] sm:%s445]
                %525 = vst [vmem:[%s453 + $0x118] sm:%s445] %v524
                %v526 = vld [vmem:[%s452 + $0x240] sm:%s445]
                %527 = vst [vmem:[%s453 + $0x120] sm:%s445] %v526
                %v528 = vld [vmem:[%s452 + $0x248] sm:%s445]
                %529 = vst [vmem:[%s453 + $0x128] sm:%s445] %v528
                %v530 = vld [vmem:[%s452 + $0x250] sm:%s445]
                %531 = vst [vmem:[%s453 + $0x130] sm:%s445] %v530
                %v532 = vld [vmem:[%s452 + $0x258] sm:%s445]
                %533 = vst [vmem:[%s453 + $0x138] sm:%s445] %v532
                %v534 = vld [vmem:[%s452 + $0x280] sm:%s445]
                %535 = vst [vmem:[%s453 + $0x140] sm:%s445] %v534
                %v536 = vld [vmem:[%s452 + $0x288] sm:%s445]
                %537 = vst [vmem:[%s453 + $0x148] sm:%s445] %v536
                %v538 = vld [vmem:[%s452 + $0x290] sm:%s445]
                %539 = vst [vmem:[%s453 + $0x150] sm:%s445] %v538
                %v540 = vld [vmem:[%s452 + $0x298] sm:%s445]
                %541 = vst [vmem:[%s453 + $0x158] sm:%s445] %v540
                %v542 = vld [vmem:[%s452 + $0x2c0] sm:%s445]
                %543 = vst [vmem:[%s453 + $0x160] sm:%s445] %v542
                %v544 = vld [vmem:[%s452 + $0x2c8] sm:%s445]
                %545 = vst [vmem:[%s453 + $0x168] sm:%s445] %v544
                %v546 = vld [vmem:[%s452 + $0x2d0] sm:%s445]
                %547 = vst [vmem:[%s453 + $0x170] sm:%s445] %v546
                %v548 = vld [vmem:[%s452 + $0x2d8] sm:%s445]
                %549 = vst [vmem:[%s453 + $0x178] sm:%s445] %v548
                %v550 = vld [vmem:[%s452 + $0x300] sm:%s445]
                %551 = vst [vmem:[%s453 + $0x180] sm:%s445] %v550
                %v552 = vld [vmem:[%s452 + $0x308] sm:%s445]
                %553 = vst [vmem:[%s453 + $0x188] sm:%s445] %v552
                %v554 = vld [vmem:[%s452 + $0x310] sm:%s445]
                %555 = vst [vmem:[%s453 + $0x190] sm:%s445] %v554
                %v556 = vld [vmem:[%s452 + $0x318] sm:%s445]
                %557 = vst [vmem:[%s453 + $0x198] sm:%s445] %v556
                %v558 = vld [vmem:[%s452 + $0x340] sm:%s445]
                %559 = vst [vmem:[%s453 + $0x1a0] sm:%s445] %v558
                %v560 = vld [vmem:[%s452 + $0x348] sm:%s445]
                %561 = vst [vmem:[%s453 + $0x1a8] sm:%s445] %v560
                %v562 = vld [vmem:[%s452 + $0x350] sm:%s445]
                %563 = vst [vmem:[%s453 + $0x1b0] sm:%s445] %v562
                %v564 = vld [vmem:[%s452 + $0x358] sm:%s445]
                %565 = vst [vmem:[%s453 + $0x1b8] sm:%s445] %v564
                %v566 = vld [vmem:[%s452 + $0x380] sm:%s445]
                %567 = vst [vmem:[%s453 + $0x1c0] sm:%s445] %v566
                %v568 = vld [vmem:[%s452 + $0x388] sm:%s445]
                %569 = vst [vmem:[%s453 + $0x1c8] sm:%s445] %v568
                %v570 = vld [vmem:[%s452 + $0x390] sm:%s445]
                %571 = vst [vmem:[%s453 + $0x1d0] sm:%s445] %v570
                %v572 = vld [vmem:[%s452 + $0x398] sm:%s445]
                %573 = vst [vmem:[%s453 + $0x1d8] sm:%s445] %v572
                %v574 = vld [vmem:[%s452 + $0x3c0] sm:%s445]
                %575 = vst [vmem:[%s453 + $0x1e0] sm:%s445] %v574
                %v576 = vld [vmem:[%s452 + $0x3c8] sm:%s445]
                %577 = vst [vmem:[%s453 + $0x1e8] sm:%s445] %v576
                %v578 = vld [vmem:[%s452 + $0x3d0] sm:%s445]
                %579 = vst [vmem:[%s453 + $0x1f0] sm:%s445] %v578
                %v580 = vld [vmem:[%s452 + $0x3d8] sm:%s445]
                %581 = vst [vmem:[%s453 + $0x1f8] sm:%s445] %v580
                %v582 = vld [vmem:[%s452 + $0x400] sm:%s445]
                %583 = vst [vmem:[%s453 + $0x200] sm:%s445] %v582
                %v584 = vld [vmem:[%s452 + $0x408] sm:%s445]
                %585 = vst [vmem:[%s453 + $0x208] sm:%s445] %v584
                %v586 = vld [vmem:[%s452 + $0x410] sm:%s445]
                %587 = vst [vmem:[%s453 + $0x210] sm:%s445] %v586
                %v588 = vld [vmem:[%s452 + $0x418] sm:%s445]
                %589 = vst [vmem:[%s453 + $0x218] sm:%s445] %v588
                %v590 = vld [vmem:[%s452 + $0x440] sm:%s445]
                %591 = vst [vmem:[%s453 + $0x220] sm:%s445] %v590
                %v592 = vld [vmem:[%s452 + $0x448] sm:%s445]
                %593 = vst [vmem:[%s453 + $0x228] sm:%s445] %v592
                %v594 = vld [vmem:[%s452 + $0x450] sm:%s445]
                %595 = vst [vmem:[%s453 + $0x230] sm:%s445] %v594
                %v596 = vld [vmem:[%s452 + $0x458] sm:%s445]
                %597 = vst [vmem:[%s453 + $0x238] sm:%s445] %v596
                %v598 = vld [vmem:[%s452 + $0x480] sm:%s445]
                %599 = vst [vmem:[%s453 + $0x240] sm:%s445] %v598
                %v600 = vld [vmem:[%s452 + $0x488] sm:%s445]
                %601 = vst [vmem:[%s453 + $0x248] sm:%s445] %v600
                %v602 = vld [vmem:[%s452 + $0x490] sm:%s445]
                %603 = vst [vmem:[%s453 + $0x250] sm:%s445] %v602
                %v604 = vld [vmem:[%s452 + $0x498] sm:%s445]
                %605 = vst [vmem:[%s453 + $0x258] sm:%s445] %v604
                %v606 = vld [vmem:[%s452 + $0x4c0] sm:%s445]
                %607 = vst [vmem:[%s453 + $0x260] sm:%s445] %v606
                %v608 = vld [vmem:[%s452 + $0x4c8] sm:%s445]
                %609 = vst [vmem:[%s453 + $0x268] sm:%s445] %v608
                %v610 = vld [vmem:[%s452 + $0x4d0] sm:%s445]
                %611 = vst [vmem:[%s453 + $0x270] sm:%s445] %v610
                %v612 = vld [vmem:[%s452 + $0x4d8] sm:%s445]
                %613 = vst [vmem:[%s453 + $0x278] sm:%s445] %v612
                %v614 = vld [vmem:[%s452 + $0x500] sm:%s445]
                %615 = vst [vmem:[%s453 + $0x280] sm:%s445] %v614
                %v616 = vld [vmem:[%s452 + $0x508] sm:%s445]
                %617 = vst [vmem:[%s453 + $0x288] sm:%s445] %v616
                %v618 = vld [vmem:[%s452 + $0x510] sm:%s445]
                %619 = vst [vmem:[%s453 + $0x290] sm:%s445] %v618
                %v620 = vld [vmem:[%s452 + $0x518] sm:%s445]
                %621 = vst [vmem:[%s453 + $0x298] sm:%s445] %v620
                %v622 = vld [vmem:[%s452 + $0x540] sm:%s445]
                %623 = vst [vmem:[%s453 + $0x2a0] sm:%s445] %v622
                %v624 = vld [vmem:[%s452 + $0x548] sm:%s445]
                %625 = vst [vmem:[%s453 + $0x2a8] sm:%s445] %v624
                %v626 = vld [vmem:[%s452 + $0x550] sm:%s445]
                %627 = vst [vmem:[%s453 + $0x2b0] sm:%s445] %v626
                %v628 = vld [vmem:[%s452 + $0x558] sm:%s445]
                %629 = vst [vmem:[%s453 + $0x2b8] sm:%s445] %v628
                %v630 = vld [vmem:[%s452 + $0x580] sm:%s445]
                %631 = vst [vmem:[%s453 + $0x2c0] sm:%s445] %v630
                %v632 = vld [vmem:[%s452 + $0x588] sm:%s445]
                %633 = vst [vmem:[%s453 + $0x2c8] sm:%s445] %v632
                %v634 = vld [vmem:[%s452 + $0x590] sm:%s445]
                %635 = vst [vmem:[%s453 + $0x2d0] sm:%s445] %v634
                %v636 = vld [vmem:[%s452 + $0x598] sm:%s445]
                %637 = vst [vmem:[%s453 + $0x2d8] sm:%s445] %v636
                %v638 = vld [vmem:[%s452 + $0x5c0] sm:%s445]
                %639 = vst [vmem:[%s453 + $0x2e0] sm:%s445] %v638
                %v640 = vld [vmem:[%s452 + $0x5c8] sm:%s445]
                %641 = vst [vmem:[%s453 + $0x2e8] sm:%s445] %v640
                %v642 = vld [vmem:[%s452 + $0x5d0] sm:%s445]
                %643 = vst [vmem:[%s453 + $0x2f0] sm:%s445] %v642
                %v644 = vld [vmem:[%s452 + $0x5d8] sm:%s445]
                %645 = vst [vmem:[%s453 + $0x2f8] sm:%s445] %v644
                %v646 = vld [vmem:[%s452 + $0x600] sm:%s445]
                %647 = vst [vmem:[%s453 + $0x300] sm:%s445] %v646
                %v648 = vld [vmem:[%s452 + $0x608] sm:%s445]
                %649 = vst [vmem:[%s453 + $0x308] sm:%s445] %v648
                %v650 = vld [vmem:[%s452 + $0x610] sm:%s445]
                %651 = vst [vmem:[%s453 + $0x310] sm:%s445] %v650
                %v652 = vld [vmem:[%s452 + $0x618] sm:%s445]
                %653 = vst [vmem:[%s453 + $0x318] sm:%s445] %v652
                %v654 = vld [vmem:[%s452 + $0x640] sm:%s445]
                %655 = vst [vmem:[%s453 + $0x320] sm:%s445] %v654
                %v656 = vld [vmem:[%s452 + $0x648] sm:%s445]
                %657 = vst [vmem:[%s453 + $0x328] sm:%s445] %v656
                %v658 = vld [vmem:[%s452 + $0x650] sm:%s445]
                %659 = vst [vmem:[%s453 + $0x330] sm:%s445] %v658
                %v660 = vld [vmem:[%s452 + $0x658] sm:%s445]
                %661 = vst [vmem:[%s453 + $0x338] sm:%s445] %v660
                %v662 = vld [vmem:[%s452 + $0x680] sm:%s445]
                %663 = vst [vmem:[%s453 + $0x340] sm:%s445] %v662
                %v664 = vld [vmem:[%s452 + $0x688] sm:%s445]
                %665 = vst [vmem:[%s453 + $0x348] sm:%s445] %v664
                %v666 = vld [vmem:[%s452 + $0x690] sm:%s445]
                %667 = vst [vmem:[%s453 + $0x350] sm:%s445] %v666
                %v668 = vld [vmem:[%s452 + $0x698] sm:%s445]
                %669 = vst [vmem:[%s453 + $0x358] sm:%s445] %v668
                %v670 = vld [vmem:[%s452 + $0x6c0] sm:%s445]
                %671 = vst [vmem:[%s453 + $0x360] sm:%s445] %v670
                %v672 = vld [vmem:[%s452 + $0x6c8] sm:%s445]
                %673 = vst [vmem:[%s453 + $0x368] sm:%s445] %v672
                %v674 = vld [vmem:[%s452 + $0x6d0] sm:%s445]
                %675 = vst [vmem:[%s453 + $0x370] sm:%s445] %v674
                %v676 = vld [vmem:[%s452 + $0x6d8] sm:%s445]
                %677 = vst [vmem:[%s453 + $0x378] sm:%s445] %v676
              $region93: #{cnn_forward.1} parent=87 // loop_footer
                %s451 = sadd.s32 1, %s447
              $region94: #{cnn_forward.1} parent=87 // loop_footer_branch
                %446 = sbr.rel target = $region90
              $region95: #{cnn_forward.1} parent=87 // loop_exit
                _
            $region88: #{cnn_forward.1} parent=79 // pred_fallthru
              _
          $region80: #{cnn_forward.1} parent=75 // pred_fallthru
            _
          %914 = vnop
        $region76: #{cnn_forward.1} parent=71 // pred_fallthru
          _
      $region72: #{cnn_forward.1} parent=5 // pred_fallthru
        _
      %p915 = scmp.le.s32.totalorder 1, %s21
      %p916 = scmp.lt.s32.totalorder %s21, 3
      %p917 = pnand %p915, %p916
      %p918 = pneg %p917
      // Predicated region
      $region111: #{cnn_forward.1} parent=5 // pred_check
        _
      $region112: #{cnn_forward.1} parent=5 // pred_check_branch
        %920 = sbr.rel (%p917) target = $region114
      $region113: #{cnn_forward.1} parent=5 // pred_region
        %s921 = ssub.s32 %s21, 1
        %s922 = sand.u32 %s34, 1
        %s923 = sand.u32 %s34, 1
        %s924 = smul.addr %s923, 896
        %s925 = scalar_lea.vmem [#allocation2], %s924
        // Predicated region
        $region115: #{cnn_forward.1} parent=113 // pred_check
          %p926 = pneg %p47
        $region116: #{cnn_forward.1} parent=113 // pred_check_branch
          %928 = sbr.rel (%p926) target = $region118
        $region117: #{cnn_forward.1} parent=113 // pred_region
          _
        $region118: #{cnn_forward.1} parent=113 // pred_fallthru
          _
        %s929 = sand.u32 %s34, 1
        %s930 = sand.u32 %s34, 1
        %s931 = smul.addr %s930, 896
        %s932 = scalar_lea.vmem [#allocation2], %s931
        %p933 = pneg %p47
        %p934 = pneg %p44
        %p935 = pneg %p68
        %p936 = pneg %p65
        %p937 = pneg %p89
        %p938 = pneg %p86
        %p939 = pneg %p110
        %p940 = pneg %p107
        %p941 = pneg %p131
        %p942 = pneg %p128
        %p943 = pneg %p152
        %p944 = pneg %p149
        %p945 = pneg %p173
        %p946 = pneg %p170
        %p947 = pneg %p194
        %p948 = pneg %p191
        %p949 = pneg %p215
        %p950 = pneg %p212
        %p951 = pneg %p236
        %p952 = pneg %p233
        %p953 = pneg %p257
        %p954 = pneg %p254
        %p955 = pneg %p278
        %p956 = pneg %p275
        %p957 = pneg %p299
        %p958 = pneg %p296
        %p959 = pneg %p320
        %p960 = pneg %p317
        %p961 = pneg %p341
        %p962 = pneg %p338
        %p963 = pneg %p367
        %p964 = pneg %p364
        %s965 = smul.u32 4, %s26
        %p966 = scmp.lt.s32.totalorder %s965, 7
        %s967 = scalar_select %p966, %s965, 7
        %s968 = smul.addr %s967, 8
        %s969 = scalar_lea.vmem %s15, %s968
        %s970 = smul.u32 4, %s26
        %s971 = smul.u32 4, %s26
        %p972 = scmp.lt.s32.totalorder %s971, 7
        %s973 = scalar_select %p972, %s971, 7
        %s974 = smul.addr %s973, 8
        %s975 = scalar_lea.vmem %s15, %s974
        %s976 = smul.u32 4, %s26
        %v977 = vld [vmem:[%s925] sm:$0xff]
        %v978 = vld [vmem:[%s925 + $0x8] sm:$0xff]
        %v979 = vld [vmem:[%s925 + $0x10] sm:$0xff]
        %v980 = vld [vmem:[%s925 + $0x18] sm:$0xff]
        %v981 = vld [vmem:[%s925 + $0x20] sm:$0xff]
        %v982 = vld [vmem:[%s925 + $0x28] sm:$0xff]
        %v983 = vld [vmem:[%s925 + $0x30] sm:$0xff]
        %v984 = vld [vmem:[%s925 + $0x38] sm:$0xff]
        %v985 = vld [vmem:[%s925 + $0x40] sm:$0xff]
        %v986 = vld [vmem:[%s925 + $0x48] sm:$0xff]
        %v987 = vld [vmem:[%s925 + $0x50] sm:$0xff]
        %v988 = vld [vmem:[%s925 + $0x58] sm:$0xff]
        %v989 = vld [vmem:[%s925 + $0x60] sm:$0xff]
        %v990 = vld [vmem:[%s925 + $0x68] sm:$0xff]
        %v991 = vld [vmem:[%s925 + $0x70] sm:$0xff]
        %v992 = vld [vmem:[%s925 + $0x78] sm:$0xff]
        %v993 = vld [vmem:[%s925 + $0x80] sm:$0xff]
        %v994 = vld [vmem:[%s925 + $0x88] sm:$0xff]
        %v995 = vld [vmem:[%s925 + $0x90] sm:$0xff]
        %v996 = vld [vmem:[%s925 + $0x98] sm:$0xff]
        %v997 = vld [vmem:[%s925 + $0xa0] sm:$0xff]
        %v998 = vld [vmem:[%s925 + $0xa8] sm:$0xff]
        %v999 = vld [vmem:[%s925 + $0xb0] sm:$0xff]
        %v1000 = vld [vmem:[%s925 + $0xb8] sm:$0xff]
        %v1001 = vld [vmem:[%s925 + $0xc0] sm:$0xff]
        %v1002 = vld [vmem:[%s925 + $0xc8] sm:$0xff]
        %v1003 = vld [vmem:[%s925 + $0xd0] sm:$0xff]
        %v1004 = vld [vmem:[%s925 + $0xd8] sm:$0xff]
        %v1005 = vld [vmem:[%s925 + $0xe0] sm:$0xff]
        %v1006 = vld [vmem:[%s925 + $0xe8] sm:$0xff]
        %v1007 = vld [vmem:[%s925 + $0xf0] sm:$0xff]
        %v1008 = vld [vmem:[%s925 + $0xf8] sm:$0xff]
        %v1009 = vld [vmem:[%s925 + $0x100] sm:$0xff]
        %v1010 = vld [vmem:[%s925 + $0x108] sm:$0xff]
        %v1011 = vld [vmem:[%s925 + $0x110] sm:$0xff]
        %v1012 = vld [vmem:[%s925 + $0x118] sm:$0xff]
        %v1013 = vld [vmem:[%s925 + $0x120] sm:$0xff]
        %v1014 = vld [vmem:[%s925 + $0x128] sm:$0xff]
        %v1015 = vld [vmem:[%s925 + $0x130] sm:$0xff]
        %v1016 = vld [vmem:[%s925 + $0x138] sm:$0xff]
        %v1017 = vld [vmem:[%s925 + $0x140] sm:$0xff]
        %v1018 = vld [vmem:[%s925 + $0x148] sm:$0xff]
        %v1019 = vld [vmem:[%s925 + $0x150] sm:$0xff]
        %v1020 = vld [vmem:[%s925 + $0x158] sm:$0xff]
        %v1021 = vld [vmem:[%s925 + $0x160] sm:$0xff]
        %v1022 = vld [vmem:[%s925 + $0x168] sm:$0xff]
        %v1023 = vld [vmem:[%s925 + $0x170] sm:$0xff]
        %v1024 = vld [vmem:[%s925 + $0x178] sm:$0xff]
        %v1025 = vld [vmem:[%s925 + $0x180] sm:$0xff]
        %v1026 = vld [vmem:[%s925 + $0x188] sm:$0xff]
        %v1027 = vld [vmem:[%s925 + $0x190] sm:$0xff]
        %v1028 = vld [vmem:[%s925 + $0x198] sm:$0xff]
        %v1029 = vld [vmem:[%s925 + $0x1a0] sm:$0xff]
        %v1030 = vld [vmem:[%s925 + $0x1a8] sm:$0xff]
        %v1031 = vld [vmem:[%s925 + $0x1b0] sm:$0xff]
        %v1032 = vld [vmem:[%s925 + $0x1b8] sm:$0xff]
        %v1033 = vld [vmem:[%s925 + $0x1c0] sm:$0xff]
        %v1034 = vld [vmem:[%s925 + $0x1c8] sm:$0xff]
        %v1035 = vld [vmem:[%s925 + $0x1d0] sm:$0xff]
        %v1036 = vld [vmem:[%s925 + $0x1d8] sm:$0xff]
        %v1037 = vld [vmem:[%s925 + $0x1e0] sm:$0xff]
        %v1038 = vld [vmem:[%s925 + $0x1e8] sm:$0xff]
        %v1039 = vld [vmem:[%s925 + $0x1f0] sm:$0xff]
        %v1040 = vld [vmem:[%s925 + $0x1f8] sm:$0xff]
        %v1041 = vld [vmem:[%s925 + $0x200] sm:$0xff]
        %v1042 = vld [vmem:[%s925 + $0x208] sm:$0xff]
        %v1043 = vld [vmem:[%s925 + $0x210] sm:$0xff]
        %v1044 = vld [vmem:[%s925 + $0x218] sm:$0xff]
        %v1045 = vld [vmem:[%s925 + $0x220] sm:$0xff]
        %v1046 = vld [vmem:[%s925 + $0x228] sm:$0xff]
        %v1047 = vld [vmem:[%s925 + $0x230] sm:$0xff]
        %v1048 = vld [vmem:[%s925 + $0x238] sm:$0xff]
        %v1049 = vld [vmem:[%s925 + $0x240] sm:$0xff]
        %v1050 = vld [vmem:[%s925 + $0x248] sm:$0xff]
        %v1051 = vld [vmem:[%s925 + $0x250] sm:$0xff]
        %v1052 = vld [vmem:[%s925 + $0x258] sm:$0xff]
        %v1053 = vld [vmem:[%s925 + $0x260] sm:$0xff]
        %v1054 = vld [vmem:[%s925 + $0x268] sm:$0xff]
        %v1055 = vld [vmem:[%s925 + $0x270] sm:$0xff]
        %v1056 = vld [vmem:[%s925 + $0x278] sm:$0xff]
        %v1057 = vld [vmem:[%s925 + $0x280] sm:$0xff]
        %v1058 = vld [vmem:[%s925 + $0x288] sm:$0xff]
        %v1059 = vld [vmem:[%s925 + $0x290] sm:$0xff]
        %v1060 = vld [vmem:[%s925 + $0x298] sm:$0xff]
        %v1061 = vld [vmem:[%s925 + $0x2a0] sm:$0xff]
        %v1062 = vld [vmem:[%s925 + $0x2a8] sm:$0xff]
        %v1063 = vld [vmem:[%s925 + $0x2b0] sm:$0xff]
        %v1064 = vld [vmem:[%s925 + $0x2b8] sm:$0xff]
        %v1065 = vld [vmem:[%s925 + $0x2c0] sm:$0xff]
        %v1066 = vld [vmem:[%s925 + $0x2c8] sm:$0xff]
        %v1067 = vld [vmem:[%s925 + $0x2d0] sm:$0xff]
        %v1068 = vld [vmem:[%s925 + $0x2d8] sm:$0xff]
        %v1069 = vld [vmem:[%s925 + $0x2e0] sm:$0xff]
        %v1070 = vld [vmem:[%s925 + $0x2e8] sm:$0xff]
        %v1071 = vld [vmem:[%s925 + $0x2f0] sm:$0xff]
        %v1072 = vld [vmem:[%s925 + $0x2f8] sm:$0xff]
        %v1073 = vld [vmem:[%s925 + $0x300] sm:$0xff]
        %v1074 = vld [vmem:[%s925 + $0x308] sm:$0xff]
        %v1075 = vld [vmem:[%s925 + $0x310] sm:$0xff]
        %v1076 = vld [vmem:[%s925 + $0x318] sm:$0xff]
        %v1077 = vld [vmem:[%s925 + $0x320] sm:$0xff]
        %v1078 = vld [vmem:[%s925 + $0x328] sm:$0xff]
        %v1079 = vld [vmem:[%s925 + $0x330] sm:$0xff]
        %v1080 = vld [vmem:[%s925 + $0x338] sm:$0xff]
        %v1081 = vld [vmem:[%s925 + $0x340] sm:$0xff]
        %v1082 = vld [vmem:[%s925 + $0x348] sm:$0xff]
        %v1083 = vld [vmem:[%s925 + $0x350] sm:$0xff]
        %v1084 = vld [vmem:[%s925 + $0x358] sm:$0xff]
        %v1085 = vld [vmem:[%s925 + $0x360] sm:$0xff]
        %v1086 = vld [vmem:[%s925 + $0x368] sm:$0xff]
        %v1087 = vld [vmem:[%s925 + $0x370] sm:$0xff]
        %v1088 = vld [vmem:[%s925 + $0x378] sm:$0xff]
        %v1089 = vld [vmem:[%s1] sm:$0xff]
        %v1090 = vld [vmem:[%s1 + $0x8] sm:$0xff]
        %v1091 = vld [vmem:[%s1 + $0x10] sm:$0xff]
        %v1092 = vld [vmem:[%s1 + $0x18] sm:$0xff]
        %v1093 = vld [vmem:[%s1 + $0x20] sm:$0xff]
        %v1094 = vld [vmem:[%s1 + $0x28] sm:$0xff]
        %v1095 = vld [vmem:[%s1 + $0x30] sm:$0xf]
        %v1096 = vld [vmem:[%s1 + $0x38] sm:$0xf]
        %s1097 = scalar_lea.vmem %s1, 64
        %v1098 = vld [vmem:[%s1097] sm:$0xff]
        %v1099 = vld [vmem:[%s1097 + $0x8] sm:$0xff]
        %v1100 = vld [vmem:[%s1097 + $0x10] sm:$0xff]
        %v1101 = vld [vmem:[%s1097 + $0x18] sm:$0xff]
        %v1102 = vld [vmem:[%s1097 + $0x20] sm:$0xff]
        %v1103 = vld [vmem:[%s1097 + $0x28] sm:$0xff]
        %v1104 = vld [vmem:[%s1097 + $0x30] sm:$0xf]
        %v1105 = vld [vmem:[%s1097 + $0x38] sm:$0xf]
        %vm1106 = vcmask 228352
        %v1108 = vsel %vm1106, %v981, 0
        %v1111 = vsel %vm1106, %v982, 0
        %v1114 = vsel %vm1106, %v983, 0
        %v1117 = vsel %vm1106, %v984, 0
        %v1120 = vsel %vm1106, %v985, 0
        %v1123 = vsel %vm1106, %v986, 0
        %v1126 = vsel %vm1106, %v987, 0
        %v1129 = vsel %vm1106, %v988, 0
        %v1132 = vsel %vm1106, %v989, 0
        %v1135 = vsel %vm1106, %v990, 0
        %v1138 = vsel %vm1106, %v991, 0
        %v1141 = vsel %vm1106, %v992, 0
        %v1144 = vsel %vm1106, %v993, 0
        %v1147 = vsel %vm1106, %v994, 0
        %v1150 = vsel %vm1106, %v995, 0
        %v1153 = vsel %vm1106, %v996, 0
        %v1156 = vsel %vm1106, %v997, 0
        %v1159 = vsel %vm1106, %v998, 0
        %v1162 = vsel %vm1106, %v999, 0
        %v1165 = vsel %vm1106, %v1000, 0
        %v1168 = vsel %vm1106, %v1001, 0
        %v1171 = vsel %vm1106, %v1002, 0
        %v1174 = vsel %vm1106, %v1003, 0
        %v1177 = vsel %vm1106, %v1004, 0
        %v1180 = vsel %vm1106, %v1005, 0
        %v1183 = vsel %vm1106, %v1006, 0
        %v1186 = vsel %vm1106, %v1007, 0
        %v1189 = vsel %vm1106, %v1008, 0
        %v1192 = vsel %vm1106, %v1009, 0
        %v1195 = vsel %vm1106, %v1010, 0
        %v1198 = vsel %vm1106, %v1011, 0
        %v1201 = vsel %vm1106, %v1012, 0
        %v1204 = vsel %vm1106, %v1013, 0
        %v1207 = vsel %vm1106, %v1014, 0
        %v1210 = vsel %vm1106, %v1015, 0
        %v1213 = vsel %vm1106, %v1016, 0
        %v1216 = vsel %vm1106, %v1017, 0
        %v1219 = vsel %vm1106, %v1018, 0
        %v1222 = vsel %vm1106, %v1019, 0
        %v1225 = vsel %vm1106, %v1020, 0
        %v1228 = vsel %vm1106, %v1021, 0
        %v1231 = vsel %vm1106, %v1022, 0
        %v1234 = vsel %vm1106, %v1023, 0
        %v1237 = vsel %vm1106, %v1024, 0
        %v1240 = vsel %vm1106, %v1025, 0
        %v1243 = vsel %vm1106, %v1026, 0
        %v1246 = vsel %vm1106, %v1027, 0
        %v1249 = vsel %vm1106, %v1028, 0
        %v1252 = vsel %vm1106, %v1029, 0
        %v1255 = vsel %vm1106, %v1030, 0
        %v1258 = vsel %vm1106, %v1031, 0
        %v1261 = vsel %vm1106, %v1032, 0
        %v1264 = vsel %vm1106, %v1033, 0
        %v1267 = vsel %vm1106, %v1034, 0
        %v1270 = vsel %vm1106, %v1035, 0
        %v1273 = vsel %vm1106, %v1036, 0
        %v1276 = vsel %vm1106, %v1037, 0
        %v1279 = vsel %vm1106, %v1038, 0
        %v1282 = vsel %vm1106, %v1039, 0
        %v1285 = vsel %vm1106, %v1040, 0
        %v1288 = vsel %vm1106, %v1041, 0
        %v1291 = vsel %vm1106, %v1042, 0
        %v1294 = vsel %vm1106, %v1043, 0
        %v1297 = vsel %vm1106, %v1044, 0
        %v1300 = vsel %vm1106, %v1045, 0
        %v1303 = vsel %vm1106, %v1046, 0
        %v1306 = vsel %vm1106, %v1047, 0
        %v1309 = vsel %vm1106, %v1048, 0
        %v1312 = vsel %vm1106, %v1049, 0
        %v1315 = vsel %vm1106, %v1050, 0
        %v1318 = vsel %vm1106, %v1051, 0
        %v1321 = vsel %vm1106, %v1052, 0
        %v1324 = vsel %vm1106, %v1053, 0
        %v1327 = vsel %vm1106, %v1054, 0
        %v1330 = vsel %vm1106, %v1055, 0
        %v1333 = vsel %vm1106, %v1056, 0
        %v1336 = vsel %vm1106, %v1057, 0
        %v1339 = vsel %vm1106, %v1058, 0
        %v1342 = vsel %vm1106, %v1059, 0
        %v1345 = vsel %vm1106, %v1060, 0
        %v1348 = vsel %vm1106, %v1061, 0
        %v1351 = vsel %vm1106, %v1062, 0
        %v1354 = vsel %vm1106, %v1063, 0
        %v1357 = vsel %vm1106, %v1064, 0
        %v1360 = vsel %vm1106, %v1065, 0
        %v1363 = vsel %vm1106, %v1066, 0
        %v1366 = vsel %vm1106, %v1067, 0
        %v1369 = vsel %vm1106, %v1068, 0
        %v1372 = vsel %vm1106, %v1069, 0
        %v1375 = vsel %vm1106, %v1070, 0
        %v1378 = vsel %vm1106, %v1071, 0
        %v1381 = vsel %vm1106, %v1072, 0
        %v1384 = vsel %vm1106, %v1073, 0
        %v1387 = vsel %vm1106, %v1074, 0
        %v1390 = vsel %vm1106, %v1075, 0
        %v1393 = vsel %vm1106, %v1076, 0
        %vm1395 = vcmask 1043456
        %v1397 = vsel %vm1395, %v1104, 0
        %v1400 = vsel %vm1395, %v1105, 0
        %1402 = vmatprep.subr.mxu0 0.0
        %1403 = vmatpush1.msra.mxu0 0.0
        %1404 = vmatprep.subr.mxu0 0.0
        %1405 = vmatpush1.msra.mxu0 0.0
        %1406 = vmatprep.subr.mxu0 0.0
        %1407 = vmatpush1.msra.mxu0 0.0
        %1408 = vmatprep.subr.mxu0 0.0
        %1409 = vmatpush1.msra.mxu0 0.0
        %1410 = vmatprep.subr.mxu0 0.0
        %1411 = vmatpush1.msra.mxu0 0.0
        %1412 = vmatprep.subr.mxu0 0.0
        %1413 = vmatpush1.msra.mxu0 0.0
        %1414 = vmatprep.subr.mxu0 0.0
        %1415 = vmatpush1.msra.mxu0 0.0
        %1416 = vmatprep.subr.mxu0 0.0
        %1417 = vmatpush1.msra.mxu0 0.0
        %1418 = vmatprep.subr.mxu0 0.0
        %1419 = vmatpush1.msra.mxu0 0.0
        %1420 = vmatprep.subr.mxu0 0.0
        %1421 = vmatpush1.msra.mxu0 0.0
        %1422 = vmatprep.subr.mxu0 0.0
        %1423 = vmatpush1.msra.mxu0 0.0
        %1424 = vmatprep.subr.mxu0 0.0
        %1425 = vmatpush1.msra.mxu0 0.0
        %1426 = vmatprep.subr.mxu0 %v1400
        %1427 = vmatpush1.msra.mxu0 %v1397
        %1428 = vmatprep.subr.mxu0 %v1103
        %1429 = vmatpush1.msra.mxu0 %v1102
        %1430 = vmatprep.subr.mxu0 %v1101
        %1431 = vmatpush1.msra.mxu0 %v1100
        %1432 = vmatprep.subr.mxu0 %v1099
        %1433 = vmatpush1.msra.mxu0 %v1098
        %1434 = vmatprep.subr.mxu0 0.0
        %1435 = vmatpush2.msra.mxu0 0.0
        %1436 = vmatprep.subr.mxu0 0.0
        %1437 = vmatpush2.msra.mxu0 0.0
        %1438 = vmatprep.subr.mxu0 0.0
        %1439 = vmatpush2.msra.mxu0 0.0
        %1440 = vmatprep.subr.mxu0 0.0
        %1441 = vmatpush2.msra.mxu0 0.0
        %1442 = vmatprep.subr.mxu0 0.0
        %1443 = vmatpush2.msra.mxu0 0.0
        %1444 = vmatprep.subr.mxu0 0.0
        %1445 = vmatpush2.msra.mxu0 0.0
        %1446 = vmatprep.subr.mxu0 0.0
        %1447 = vmatpush2.msra.mxu0 0.0
        %1448 = vmatprep.subr.mxu0 0.0
        %1449 = vmatpush2.msra.mxu0 0.0
        %1450 = vmatprep.subr.mxu0 0.0
        %1451 = vmatpush2.msra.mxu0 0.0
        %1452 = vmatprep.subr.mxu0 0.0
        %1453 = vmatpush2.msra.mxu0 0.0
        %1454 = vmatprep.subr.mxu0 0.0
        %1455 = vmatpush2.msra.mxu0 0.0
        %1456 = vmatprep.subr.mxu0 0.0
        %1457 = vmatpush2.msra.mxu0 0.0
        %1458 = vmatprep.subr.mxu0 0.0
        %1459 = vmatpush2.msra.mxu0 0.0
        %1460 = vmatprep.subr.mxu0 0.0
        %1461 = vmatpush2.msra.mxu0 0.0
        %1462 = vmatprep.subr.mxu0 0.0
        %1463 = vmatpush2.msra.mxu0 0.0
        %1464 = vmatprep.subr.mxu0 0.0
        %1465 = vmatpush2.msra.mxu0 0.0
        %1466 = vmatprep.mubr.f32.mxu0 0.0
        %1467 = vmatmul.mubr.f32.gmra.mxu0 %v1108
        %v1468 = vpop.f32.mrf.mxu0
        %v1469 = vadd.f32 0.0, %v1468
        %v1470 = vpop.f32.mrf.mxu0
        %v1471 = vadd.f32 0.0, %v1470
        %1472 = vmatprep.mubr.f32.mxu0 0.0
        %1473 = vmatmul.mubr.f32.gmra.mxu0 %v1111
        %v1474 = vpop.f32.mrf.mxu0
        %v1475 = vadd.f32 0.0, %v1474
        %v1476 = vpop.f32.mrf.mxu0
        %v1477 = vadd.f32 0.0, %v1476
        %1478 = vmatprep.mubr.f32.mxu0 0.0
        %1479 = vmatmul.mubr.f32.gmra.mxu0 %v1114
        %v1480 = vpop.f32.mrf.mxu0
        %v1481 = vadd.f32 0.0, %v1480
        %v1482 = vpop.f32.mrf.mxu0
        %v1483 = vadd.f32 0.0, %v1482
        %1484 = vmatprep.mubr.f32.mxu0 0.0
        %1485 = vmatmul.mubr.f32.gmra.mxu0 %v1117
        %v1486 = vpop.f32.mrf.mxu0
        %v1487 = vadd.f32 0.0, %v1486
        %v1488 = vpop.f32.mrf.mxu0
        %v1489 = vadd.f32 0.0, %v1488
        %1490 = vmatprep.mubr.f32.mxu0 0.0
        %1491 = vmatmul.mubr.f32.gmra.mxu0 %v1120
        %v1492 = vpop.f32.mrf.mxu0
        %v1493 = vadd.f32 0.0, %v1492
        %v1494 = vpop.f32.mrf.mxu0
        %v1495 = vadd.f32 0.0, %v1494
        %1496 = vmatprep.mubr.f32.mxu0 0.0
        %1497 = vmatmul.mubr.f32.gmra.mxu0 %v1123
        %v1498 = vpop.f32.mrf.mxu0
        %v1499 = vadd.f32 0.0, %v1498
        %v1500 = vpop.f32.mrf.mxu0
        %v1501 = vadd.f32 0.0, %v1500
        %1502 = vmatprep.mubr.f32.mxu0 0.0
        %1503 = vmatmul.mubr.f32.gmra.mxu0 %v1126
        %v1504 = vpop.f32.mrf.mxu0
        %v1505 = vadd.f32 0.0, %v1504
        %v1506 = vpop.f32.mrf.mxu0
        %v1507 = vadd.f32 0.0, %v1506
        %1508 = vmatprep.mubr.f32.mxu0 0.0
        %1509 = vmatmul.mubr.f32.gmra.mxu0 %v1129
        %v1510 = vpop.f32.mrf.mxu0
        %v1511 = vadd.f32 0.0, %v1510
        %v1512 = vpop.f32.mrf.mxu0
        %v1513 = vadd.f32 0.0, %v1512
        %1514 = vmatprep.mubr.f32.mxu0 0.0
        %1515 = vmatmul.mubr.f32.gmra.mxu0 %v1132
        %v1516 = vpop.f32.mrf.mxu0
        %v1517 = vadd.f32 0.0, %v1516
        %v1518 = vpop.f32.mrf.mxu0
        %v1519 = vadd.f32 0.0, %v1518
        %1520 = vmatprep.mubr.f32.mxu0 0.0
        %1521 = vmatmul.mubr.f32.gmra.mxu0 %v1135
        %v1522 = vpop.f32.mrf.mxu0
        %v1523 = vadd.f32 0.0, %v1522
        %v1524 = vpop.f32.mrf.mxu0
        %v1525 = vadd.f32 0.0, %v1524
        %1526 = vmatprep.mubr.f32.mxu0 0.0
        %1527 = vmatmul.mubr.f32.gmra.mxu0 %v1138
        %v1528 = vpop.f32.mrf.mxu0
        %v1529 = vadd.f32 0.0, %v1528
        %v1530 = vpop.f32.mrf.mxu0
        %v1531 = vadd.f32 0.0, %v1530
        %1532 = vmatprep.mubr.f32.mxu0 0.0
        %1533 = vmatmul.mubr.f32.gmra.mxu0 %v1141
        %v1534 = vpop.f32.mrf.mxu0
        %v1535 = vadd.f32 0.0, %v1534
        %v1536 = vpop.f32.mrf.mxu0
        %v1537 = vadd.f32 0.0, %v1536
        %1538 = vmatprep.mubr.f32.mxu0 0.0
        %1539 = vmatmul.mubr.f32.gmra.mxu0 %v1144
        %v1540 = vpop.f32.mrf.mxu0
        %v1541 = vadd.f32 0.0, %v1540
        %v1542 = vpop.f32.mrf.mxu0
        %v1543 = vadd.f32 0.0, %v1542
        %1544 = vmatprep.mubr.f32.mxu0 0.0
        %1545 = vmatmul.mubr.f32.gmra.mxu0 %v1147
        %v1546 = vpop.f32.mrf.mxu0
        %v1547 = vadd.f32 0.0, %v1546
        %v1548 = vpop.f32.mrf.mxu0
        %v1549 = vadd.f32 0.0, %v1548
        %1550 = vmatprep.mubr.f32.mxu0 0.0
        %1551 = vmatmul.mubr.f32.gmra.mxu0 %v1150
        %v1552 = vpop.f32.mrf.mxu0
        %v1553 = vadd.f32 0.0, %v1552
        %v1554 = vpop.f32.mrf.mxu0
        %v1555 = vadd.f32 0.0, %v1554
        %1556 = vmatprep.mubr.f32.mxu0 0.0
        %1557 = vmatmul.mubr.f32.gmra.mxu0 %v1153
        %v1558 = vpop.f32.mrf.mxu0
        %v1559 = vadd.f32 0.0, %v1558
        %v1560 = vpop.f32.mrf.mxu0
        %v1561 = vadd.f32 0.0, %v1560
        %1562 = vmatprep.mubr.f32.mxu0 0.0
        %1563 = vmatmul.mubr.f32.gmra.mxu0 %v1156
        %v1564 = vpop.f32.mrf.mxu0
        %v1565 = vadd.f32 0.0, %v1564
        %v1566 = vpop.f32.mrf.mxu0
        %v1567 = vadd.f32 0.0, %v1566
        %1568 = vmatprep.mubr.f32.mxu0 0.0
        %1569 = vmatmul.mubr.f32.gmra.mxu0 %v1159
        %v1570 = vpop.f32.mrf.mxu0
        %v1571 = vadd.f32 0.0, %v1570
        %v1572 = vpop.f32.mrf.mxu0
        %v1573 = vadd.f32 0.0, %v1572
        %1574 = vmatprep.mubr.f32.mxu0 0.0
        %1575 = vmatmul.mubr.f32.gmra.mxu0 %v1162
        %v1576 = vpop.f32.mrf.mxu0
        %v1577 = vadd.f32 0.0, %v1576
        %v1578 = vpop.f32.mrf.mxu0
        %v1579 = vadd.f32 0.0, %v1578
        %1580 = vmatprep.mubr.f32.mxu0 0.0
        %1581 = vmatmul.mubr.f32.gmra.mxu0 %v1165
        %v1582 = vpop.f32.mrf.mxu0
        %v1583 = vadd.f32 0.0, %v1582
        %v1584 = vpop.f32.mrf.mxu0
        %v1585 = vadd.f32 0.0, %v1584
        %1586 = vmatprep.mubr.f32.mxu0 0.0
        %1587 = vmatmul.mubr.f32.gmra.mxu0 %v1168
        %v1588 = vpop.f32.mrf.mxu0
        %v1589 = vadd.f32 0.0, %v1588
        %v1590 = vpop.f32.mrf.mxu0
        %v1591 = vadd.f32 0.0, %v1590
        %1592 = vmatprep.mubr.f32.mxu0 0.0
        %1593 = vmatmul.mubr.f32.gmra.mxu0 %v1171
        %v1594 = vpop.f32.mrf.mxu0
        %v1595 = vadd.f32 0.0, %v1594
        %v1596 = vpop.f32.mrf.mxu0
        %v1597 = vadd.f32 0.0, %v1596
        %1598 = vmatprep.mubr.f32.mxu0 0.0
        %1599 = vmatmul.mubr.f32.gmra.mxu0 %v1174
        %v1600 = vpop.f32.mrf.mxu0
        %v1601 = vadd.f32 0.0, %v1600
        %v1602 = vpop.f32.mrf.mxu0
        %v1603 = vadd.f32 0.0, %v1602
        %1604 = vmatprep.mubr.f32.mxu0 0.0
        %1605 = vmatmul.mubr.f32.gmra.mxu0 %v1177
        %v1606 = vpop.f32.mrf.mxu0
        %v1607 = vadd.f32 0.0, %v1606
        %v1608 = vpop.f32.mrf.mxu0
        %v1609 = vadd.f32 0.0, %v1608
        %1610 = vmatprep.mubr.f32.mxu0 0.0
        %1611 = vmatmul.mubr.f32.gmra.mxu0 %v1180
        %v1612 = vpop.f32.mrf.mxu0
        %v1613 = vadd.f32 0.0, %v1612
        %v1614 = vpop.f32.mrf.mxu0
        %v1615 = vadd.f32 0.0, %v1614
        %1616 = vmatprep.mubr.f32.mxu0 0.0
        %1617 = vmatmul.mubr.f32.gmra.mxu0 %v1183
        %v1618 = vpop.f32.mrf.mxu0
        %v1619 = vadd.f32 0.0, %v1618
        %v1620 = vpop.f32.mrf.mxu0
        %v1621 = vadd.f32 0.0, %v1620
        %1622 = vmatprep.mubr.f32.mxu0 0.0
        %1623 = vmatmul.mubr.f32.gmra.mxu0 %v1186
        %v1624 = vpop.f32.mrf.mxu0
        %v1625 = vadd.f32 0.0, %v1624
        %v1626 = vpop.f32.mrf.mxu0
        %v1627 = vadd.f32 0.0, %v1626
        %1628 = vmatprep.mubr.f32.mxu0 0.0
        %1629 = vmatmul.mubr.f32.gmra.mxu0 %v1189
        %v1630 = vpop.f32.mrf.mxu0
        %v1631 = vadd.f32 0.0, %v1630
        %v1632 = vpop.f32.mrf.mxu0
        %v1633 = vadd.f32 0.0, %v1632
        %1634 = vmatprep.mubr.f32.mxu0 0.0
        %1635 = vmatmul.mubr.f32.gmra.mxu0 %v1192
        %v1636 = vpop.f32.mrf.mxu0
        %v1637 = vadd.f32 0.0, %v1636
        %v1638 = vpop.f32.mrf.mxu0
        %v1639 = vadd.f32 0.0, %v1638
        %1640 = vmatprep.mubr.f32.mxu0 0.0
        %1641 = vmatmul.mubr.f32.gmra.mxu0 %v1195
        %v1642 = vpop.f32.mrf.mxu0
        %v1643 = vadd.f32 0.0, %v1642
        %v1644 = vpop.f32.mrf.mxu0
        %v1645 = vadd.f32 0.0, %v1644
        %1646 = vmatprep.mubr.f32.mxu0 0.0
        %1647 = vmatmul.mubr.f32.gmra.mxu0 %v1198
        %v1648 = vpop.f32.mrf.mxu0
        %v1649 = vadd.f32 0.0, %v1648
        %v1650 = vpop.f32.mrf.mxu0
        %v1651 = vadd.f32 0.0, %v1650
        %1652 = vmatprep.mubr.f32.mxu0 0.0
        %1653 = vmatmul.mubr.f32.gmra.mxu0 %v1201
        %v1654 = vpop.f32.mrf.mxu0
        %v1655 = vadd.f32 0.0, %v1654
        %v1656 = vpop.f32.mrf.mxu0
        %v1657 = vadd.f32 0.0, %v1656
        %1658 = vmatprep.mubr.f32.mxu0 0.0
        %1659 = vmatmul.mubr.f32.gmra.mxu0 %v1204
        %v1660 = vpop.f32.mrf.mxu0
        %v1661 = vadd.f32 0.0, %v1660
        %v1662 = vpop.f32.mrf.mxu0
        %v1663 = vadd.f32 0.0, %v1662
        %1664 = vmatprep.mubr.f32.mxu0 0.0
        %1665 = vmatmul.mubr.f32.gmra.mxu0 %v1207
        %v1666 = vpop.f32.mrf.mxu0
        %v1667 = vadd.f32 0.0, %v1666
        %v1668 = vpop.f32.mrf.mxu0
        %v1669 = vadd.f32 0.0, %v1668
        %1670 = vmatprep.mubr.f32.mxu0 0.0
        %1671 = vmatmul.mubr.f32.gmra.mxu0 %v1210
        %v1672 = vpop.f32.mrf.mxu0
        %v1673 = vadd.f32 0.0, %v1672
        %v1674 = vpop.f32.mrf.mxu0
        %v1675 = vadd.f32 0.0, %v1674
        %1676 = vmatprep.mubr.f32.mxu0 0.0
        %1677 = vmatmul.mubr.f32.gmra.mxu0 %v1213
        %v1678 = vpop.f32.mrf.mxu0
        %v1679 = vadd.f32 0.0, %v1678
        %v1680 = vpop.f32.mrf.mxu0
        %v1681 = vadd.f32 0.0, %v1680
        %1682 = vmatprep.mubr.f32.mxu0 0.0
        %1683 = vmatmul.mubr.f32.gmra.mxu0 %v1216
        %v1684 = vpop.f32.mrf.mxu0
        %v1685 = vadd.f32 0.0, %v1684
        %v1686 = vpop.f32.mrf.mxu0
        %v1687 = vadd.f32 0.0, %v1686
        %1688 = vmatprep.mubr.f32.mxu0 0.0
        %1689 = vmatmul.mubr.f32.gmra.mxu0 %v1219
        %v1690 = vpop.f32.mrf.mxu0
        %v1691 = vadd.f32 0.0, %v1690
        %v1692 = vpop.f32.mrf.mxu0
        %v1693 = vadd.f32 0.0, %v1692
        %1694 = vmatprep.mubr.f32.mxu0 0.0
        %1695 = vmatmul.mubr.f32.gmra.mxu0 %v1222
        %v1696 = vpop.f32.mrf.mxu0
        %v1697 = vadd.f32 0.0, %v1696
        %v1698 = vpop.f32.mrf.mxu0
        %v1699 = vadd.f32 0.0, %v1698
        %1700 = vmatprep.mubr.f32.mxu0 0.0
        %1701 = vmatmul.mubr.f32.gmra.mxu0 %v1225
        %v1702 = vpop.f32.mrf.mxu0
        %v1703 = vadd.f32 0.0, %v1702
        %v1704 = vpop.f32.mrf.mxu0
        %v1705 = vadd.f32 0.0, %v1704
        %1706 = vmatprep.mubr.f32.mxu0 0.0
        %1707 = vmatmul.mubr.f32.gmra.mxu0 %v1228
        %v1708 = vpop.f32.mrf.mxu0
        %v1709 = vadd.f32 0.0, %v1708
        %v1710 = vpop.f32.mrf.mxu0
        %v1711 = vadd.f32 0.0, %v1710
        %1712 = vmatprep.mubr.f32.mxu0 0.0
        %1713 = vmatmul.mubr.f32.gmra.mxu0 %v1231
        %v1714 = vpop.f32.mrf.mxu0
        %v1715 = vadd.f32 0.0, %v1714
        %v1716 = vpop.f32.mrf.mxu0
        %v1717 = vadd.f32 0.0, %v1716
        %1718 = vmatprep.mubr.f32.mxu0 0.0
        %1719 = vmatmul.mubr.f32.gmra.mxu0 %v1234
        %v1720 = vpop.f32.mrf.mxu0
        %v1721 = vadd.f32 0.0, %v1720
        %v1722 = vpop.f32.mrf.mxu0
        %v1723 = vadd.f32 0.0, %v1722
        %1724 = vmatprep.mubr.f32.mxu0 0.0
        %1725 = vmatmul.mubr.f32.gmra.mxu0 %v1237
        %v1726 = vpop.f32.mrf.mxu0
        %v1727 = vadd.f32 0.0, %v1726
        %v1728 = vpop.f32.mrf.mxu0
        %v1729 = vadd.f32 0.0, %v1728
        %1730 = vmatprep.mubr.f32.mxu0 0.0
        %1731 = vmatmul.mubr.f32.gmra.mxu0 %v1240
        %v1732 = vpop.f32.mrf.mxu0
        %v1733 = vadd.f32 0.0, %v1732
        %v1734 = vpop.f32.mrf.mxu0
        %v1735 = vadd.f32 0.0, %v1734
        %1736 = vmatprep.mubr.f32.mxu0 0.0
        %1737 = vmatmul.mubr.f32.gmra.mxu0 %v1243
        %v1738 = vpop.f32.mrf.mxu0
        %v1739 = vadd.f32 0.0, %v1738
        %v1740 = vpop.f32.mrf.mxu0
        %v1741 = vadd.f32 0.0, %v1740
        %1742 = vmatprep.mubr.f32.mxu0 0.0
        %1743 = vmatmul.mubr.f32.gmra.mxu0 %v1246
        %v1744 = vpop.f32.mrf.mxu0
        %v1745 = vadd.f32 0.0, %v1744
        %v1746 = vpop.f32.mrf.mxu0
        %v1747 = vadd.f32 0.0, %v1746
        %1748 = vmatprep.mubr.f32.mxu0 0.0
        %1749 = vmatmul.mubr.f32.gmra.mxu0 %v1249
        %v1750 = vpop.f32.mrf.mxu0
        %v1751 = vadd.f32 0.0, %v1750
        %v1752 = vpop.f32.mrf.mxu0
        %v1753 = vadd.f32 0.0, %v1752
        %1754 = vmatprep.mubr.f32.mxu0 0.0
        %1755 = vmatmul.mubr.f32.gmra.mxu0 %v1252
        %v1756 = vpop.f32.mrf.mxu0
        %v1757 = vadd.f32 0.0, %v1756
        %v1758 = vpop.f32.mrf.mxu0
        %v1759 = vadd.f32 0.0, %v1758
        %1760 = vmatprep.mubr.f32.mxu0 0.0
        %1761 = vmatmul.mubr.f32.gmra.mxu0 %v1255
        %v1762 = vpop.f32.mrf.mxu0
        %v1763 = vadd.f32 0.0, %v1762
        %v1764 = vpop.f32.mrf.mxu0
        %v1765 = vadd.f32 0.0, %v1764
        %1766 = vmatprep.mubr.f32.mxu0 0.0
        %1767 = vmatmul.mubr.f32.gmra.mxu0 %v1258
        %v1768 = vpop.f32.mrf.mxu0
        %v1769 = vadd.f32 0.0, %v1768
        %v1770 = vpop.f32.mrf.mxu0
        %v1771 = vadd.f32 0.0, %v1770
        %1772 = vmatprep.mubr.f32.mxu0 0.0
        %1773 = vmatmul.mubr.f32.gmra.mxu0 %v1261
        %v1774 = vpop.f32.mrf.mxu0
        %v1775 = vadd.f32 0.0, %v1774
        %v1776 = vpop.f32.mrf.mxu0
        %v1777 = vadd.f32 0.0, %v1776
        %1778 = vmatprep.mubr.f32.mxu0 0.0
        %1779 = vmatmul.mubr.f32.gmra.mxu0 %v1264
        %v1780 = vpop.f32.mrf.mxu0
        %v1781 = vadd.f32 0.0, %v1780
        %v1782 = vpop.f32.mrf.mxu0
        %v1783 = vadd.f32 0.0, %v1782
        %1784 = vmatprep.mubr.f32.mxu0 0.0
        %1785 = vmatmul.mubr.f32.gmra.mxu0 %v1267
        %v1786 = vpop.f32.mrf.mxu0
        %v1787 = vadd.f32 0.0, %v1786
        %v1788 = vpop.f32.mrf.mxu0
        %v1789 = vadd.f32 0.0, %v1788
        %1790 = vmatprep.mubr.f32.mxu0 0.0
        %1791 = vmatmul.mubr.f32.gmra.mxu0 %v1270
        %v1792 = vpop.f32.mrf.mxu0
        %v1793 = vadd.f32 0.0, %v1792
        %v1794 = vpop.f32.mrf.mxu0
        %v1795 = vadd.f32 0.0, %v1794
        %1796 = vmatprep.mubr.f32.mxu0 0.0
        %1797 = vmatmul.mubr.f32.gmra.mxu0 %v1273
        %v1798 = vpop.f32.mrf.mxu0
        %v1799 = vadd.f32 0.0, %v1798
        %v1800 = vpop.f32.mrf.mxu0
        %v1801 = vadd.f32 0.0, %v1800
        %1802 = vmatprep.mubr.f32.mxu0 0.0
        %1803 = vmatmul.mubr.f32.gmra.mxu0 %v1276
        %v1804 = vpop.f32.mrf.mxu0
        %v1805 = vadd.f32 0.0, %v1804
        %v1806 = vpop.f32.mrf.mxu0
        %v1807 = vadd.f32 0.0, %v1806
        %1808 = vmatprep.mubr.f32.mxu0 0.0
        %1809 = vmatmul.mubr.f32.gmra.mxu0 %v1279
        %v1810 = vpop.f32.mrf.mxu0
        %v1811 = vadd.f32 0.0, %v1810
        %v1812 = vpop.f32.mrf.mxu0
        %v1813 = vadd.f32 0.0, %v1812
        %1814 = vmatprep.mubr.f32.mxu0 0.0
        %1815 = vmatmul.mubr.f32.gmra.mxu0 %v1282
        %v1816 = vpop.f32.mrf.mxu0
        %v1817 = vadd.f32 0.0, %v1816
        %v1818 = vpop.f32.mrf.mxu0
        %v1819 = vadd.f32 0.0, %v1818
        %1820 = vmatprep.mubr.f32.mxu0 0.0
        %1821 = vmatmul.mubr.f32.gmra.mxu0 %v1285
        %v1822 = vpop.f32.mrf.mxu0
        %v1823 = vadd.f32 0.0, %v1822
        %v1824 = vpop.f32.mrf.mxu0
        %v1825 = vadd.f32 0.0, %v1824
        %1826 = vmatprep.mubr.f32.mxu0 0.0
        %1827 = vmatmul.mubr.f32.gmra.mxu0 %v1288
        %v1828 = vpop.f32.mrf.mxu0
        %v1829 = vadd.f32 0.0, %v1828
        %v1830 = vpop.f32.mrf.mxu0
        %v1831 = vadd.f32 0.0, %v1830
        %1832 = vmatprep.mubr.f32.mxu0 0.0
        %1833 = vmatmul.mubr.f32.gmra.mxu0 %v1291
        %v1834 = vpop.f32.mrf.mxu0
        %v1835 = vadd.f32 0.0, %v1834
        %v1836 = vpop.f32.mrf.mxu0
        %v1837 = vadd.f32 0.0, %v1836
        %1838 = vmatprep.mubr.f32.mxu0 0.0
        %1839 = vmatmul.mubr.f32.gmra.mxu0 %v1294
        %v1840 = vpop.f32.mrf.mxu0
        %v1841 = vadd.f32 0.0, %v1840
        %v1842 = vpop.f32.mrf.mxu0
        %v1843 = vadd.f32 0.0, %v1842
        %1844 = vmatprep.mubr.f32.mxu0 0.0
        %1845 = vmatmul.mubr.f32.gmra.mxu0 %v1297
        %v1846 = vpop.f32.mrf.mxu0
        %v1847 = vadd.f32 0.0, %v1846
        %v1848 = vpop.f32.mrf.mxu0
        %v1849 = vadd.f32 0.0, %v1848
        %1850 = vmatprep.mubr.f32.mxu0 0.0
        %1851 = vmatmul.mubr.f32.gmra.mxu0 %v1300
        %v1852 = vpop.f32.mrf.mxu0
        %v1853 = vadd.f32 0.0, %v1852
        %v1854 = vpop.f32.mrf.mxu0
        %v1855 = vadd.f32 0.0, %v1854
        %1856 = vmatprep.mubr.f32.mxu0 0.0
        %1857 = vmatmul.mubr.f32.gmra.mxu0 %v1303
        %v1858 = vpop.f32.mrf.mxu0
        %v1859 = vadd.f32 0.0, %v1858
        %v1860 = vpop.f32.mrf.mxu0
        %v1861 = vadd.f32 0.0, %v1860
        %1862 = vmatprep.mubr.f32.mxu0 0.0
        %1863 = vmatmul.mubr.f32.gmra.mxu0 %v1306
        %v1864 = vpop.f32.mrf.mxu0
        %v1865 = vadd.f32 0.0, %v1864
        %v1866 = vpop.f32.mrf.mxu0
        %v1867 = vadd.f32 0.0, %v1866
        %1868 = vmatprep.mubr.f32.mxu0 0.0
        %1869 = vmatmul.mubr.f32.gmra.mxu0 %v1309
        %v1870 = vpop.f32.mrf.mxu0
        %v1871 = vadd.f32 0.0, %v1870
        %v1872 = vpop.f32.mrf.mxu0
        %v1873 = vadd.f32 0.0, %v1872
        %1874 = vmatprep.mubr.f32.mxu0 0.0
        %1875 = vmatmul.mubr.f32.gmra.mxu0 %v1312
        %v1876 = vpop.f32.mrf.mxu0
        %v1877 = vadd.f32 0.0, %v1876
        %v1878 = vpop.f32.mrf.mxu0
        %v1879 = vadd.f32 0.0, %v1878
        %1880 = vmatprep.mubr.f32.mxu0 0.0
        %1881 = vmatmul.mubr.f32.gmra.mxu0 %v1315
        %v1882 = vpop.f32.mrf.mxu0
        %v1883 = vadd.f32 0.0, %v1882
        %v1884 = vpop.f32.mrf.mxu0
        %v1885 = vadd.f32 0.0, %v1884
        %1886 = vmatprep.mubr.f32.mxu0 0.0
        %1887 = vmatmul.mubr.f32.gmra.mxu0 %v1318
        %v1888 = vpop.f32.mrf.mxu0
        %v1889 = vadd.f32 0.0, %v1888
        %v1890 = vpop.f32.mrf.mxu0
        %v1891 = vadd.f32 0.0, %v1890
        %1892 = vmatprep.mubr.f32.mxu0 0.0
        %1893 = vmatmul.mubr.f32.gmra.mxu0 %v1321
        %v1894 = vpop.f32.mrf.mxu0
        %v1895 = vadd.f32 0.0, %v1894
        %v1896 = vpop.f32.mrf.mxu0
        %v1897 = vadd.f32 0.0, %v1896
        %1898 = vmatprep.mubr.f32.mxu0 0.0
        %1899 = vmatmul.mubr.f32.gmra.mxu0 %v1324
        %v1900 = vpop.f32.mrf.mxu0
        %v1901 = vadd.f32 0.0, %v1900
        %v1902 = vpop.f32.mrf.mxu0
        %v1903 = vadd.f32 0.0, %v1902
        %1904 = vmatprep.mubr.f32.mxu0 0.0
        %1905 = vmatmul.mubr.f32.gmra.mxu0 %v1327
        %v1906 = vpop.f32.mrf.mxu0
        %v1907 = vadd.f32 0.0, %v1906
        %v1908 = vpop.f32.mrf.mxu0
        %v1909 = vadd.f32 0.0, %v1908
        %1910 = vmatprep.mubr.f32.mxu0 0.0
        %1911 = vmatmul.mubr.f32.gmra.mxu0 %v1330
        %v1912 = vpop.f32.mrf.mxu0
        %v1913 = vadd.f32 0.0, %v1912
        %v1914 = vpop.f32.mrf.mxu0
        %v1915 = vadd.f32 0.0, %v1914
        %1916 = vmatprep.mubr.f32.mxu0 0.0
        %1917 = vmatmul.mubr.f32.gmra.mxu0 %v1333
        %v1918 = vpop.f32.mrf.mxu0
        %v1919 = vadd.f32 0.0, %v1918
        %v1920 = vpop.f32.mrf.mxu0
        %v1921 = vadd.f32 0.0, %v1920
        %1922 = vmatprep.mubr.f32.mxu0 0.0
        %1923 = vmatmul.mubr.f32.gmra.mxu0 %v1336
        %v1924 = vpop.f32.mrf.mxu0
        %v1925 = vadd.f32 0.0, %v1924
        %v1926 = vpop.f32.mrf.mxu0
        %v1927 = vadd.f32 0.0, %v1926
        %1928 = vmatprep.mubr.f32.mxu0 0.0
        %1929 = vmatmul.mubr.f32.gmra.mxu0 %v1339
        %v1930 = vpop.f32.mrf.mxu0
        %v1931 = vadd.f32 0.0, %v1930
        %v1932 = vpop.f32.mrf.mxu0
        %v1933 = vadd.f32 0.0, %v1932
        %1934 = vmatprep.mubr.f32.mxu0 0.0
        %1935 = vmatmul.mubr.f32.gmra.mxu0 %v1342
        %v1936 = vpop.f32.mrf.mxu0
        %v1937 = vadd.f32 0.0, %v1936
        %v1938 = vpop.f32.mrf.mxu0
        %v1939 = vadd.f32 0.0, %v1938
        %1940 = vmatprep.mubr.f32.mxu0 0.0
        %1941 = vmatmul.mubr.f32.gmra.mxu0 %v1345
        %v1942 = vpop.f32.mrf.mxu0
        %v1943 = vadd.f32 0.0, %v1942
        %v1944 = vpop.f32.mrf.mxu0
        %v1945 = vadd.f32 0.0, %v1944
        %1946 = vmatprep.mubr.f32.mxu0 0.0
        %1947 = vmatmul.mubr.f32.gmra.mxu0 %v1348
        %v1948 = vpop.f32.mrf.mxu0
        %v1949 = vadd.f32 0.0, %v1948
        %v1950 = vpop.f32.mrf.mxu0
        %v1951 = vadd.f32 0.0, %v1950
        %1952 = vmatprep.mubr.f32.mxu0 0.0
        %1953 = vmatmul.mubr.f32.gmra.mxu0 %v1351
        %v1954 = vpop.f32.mrf.mxu0
        %v1955 = vadd.f32 0.0, %v1954
        %v1956 = vpop.f32.mrf.mxu0
        %v1957 = vadd.f32 0.0, %v1956
        %1958 = vmatprep.mubr.f32.mxu0 0.0
        %1959 = vmatmul.mubr.f32.gmra.mxu0 %v1354
        %v1960 = vpop.f32.mrf.mxu0
        %v1961 = vadd.f32 0.0, %v1960
        %v1962 = vpop.f32.mrf.mxu0
        %v1963 = vadd.f32 0.0, %v1962
        %1964 = vmatprep.mubr.f32.mxu0 0.0
        %1965 = vmatmul.mubr.f32.gmra.mxu0 %v1357
        %v1966 = vpop.f32.mrf.mxu0
        %v1967 = vadd.f32 0.0, %v1966
        %v1968 = vpop.f32.mrf.mxu0
        %v1969 = vadd.f32 0.0, %v1968
        %1970 = vmatprep.mubr.f32.mxu0 0.0
        %1971 = vmatmul.mubr.f32.gmra.mxu0 %v1360
        %v1972 = vpop.f32.mrf.mxu0
        %v1973 = vadd.f32 0.0, %v1972
        %v1974 = vpop.f32.mrf.mxu0
        %v1975 = vadd.f32 0.0, %v1974
        %1976 = vmatprep.mubr.f32.mxu0 0.0
        %1977 = vmatmul.mubr.f32.gmra.mxu0 %v1363
        %v1978 = vpop.f32.mrf.mxu0
        %v1979 = vadd.f32 0.0, %v1978
        %v1980 = vpop.f32.mrf.mxu0
        %v1981 = vadd.f32 0.0, %v1980
        %1982 = vmatprep.mubr.f32.mxu0 0.0
        %1983 = vmatmul.mubr.f32.gmra.mxu0 %v1366
        %v1984 = vpop.f32.mrf.mxu0
        %v1985 = vadd.f32 0.0, %v1984
        %v1986 = vpop.f32.mrf.mxu0
        %v1987 = vadd.f32 0.0, %v1986
        %1988 = vmatprep.mubr.f32.mxu0 0.0
        %1989 = vmatmul.mubr.f32.gmra.mxu0 %v1369
        %v1990 = vpop.f32.mrf.mxu0
        %v1991 = vadd.f32 0.0, %v1990
        %v1992 = vpop.f32.mrf.mxu0
        %v1993 = vadd.f32 0.0, %v1992
        %1994 = vmatprep.mubr.f32.mxu0 0.0
        %1995 = vmatmul.mubr.f32.gmra.mxu0 %v1372
        %v1996 = vpop.f32.mrf.mxu0
        %v1997 = vadd.f32 0.0, %v1996
        %v1998 = vpop.f32.mrf.mxu0
        %v1999 = vadd.f32 0.0, %v1998
        %2000 = vmatprep.mubr.f32.mxu0 0.0
        %2001 = vmatmul.mubr.f32.gmra.mxu0 %v1375
        %v2002 = vpop.f32.mrf.mxu0
        %v2003 = vadd.f32 0.0, %v2002
        %v2004 = vpop.f32.mrf.mxu0
        %v2005 = vadd.f32 0.0, %v2004
        %2006 = vmatprep.mubr.f32.mxu0 0.0
        %2007 = vmatmul.mubr.f32.gmra.mxu0 %v1378
        %v2008 = vpop.f32.mrf.mxu0
        %v2009 = vadd.f32 0.0, %v2008
        %v2010 = vpop.f32.mrf.mxu0
        %v2011 = vadd.f32 0.0, %v2010
        %2012 = vmatprep.mubr.f32.mxu0 0.0
        %2013 = vmatmul.mubr.f32.gmra.mxu0 %v1381
        %v2014 = vpop.f32.mrf.mxu0
        %v2015 = vadd.f32 0.0, %v2014
        %v2016 = vpop.f32.mrf.mxu0
        %v2017 = vadd.f32 0.0, %v2016
        %2018 = vmatprep.mubr.f32.mxu0 0.0
        %2019 = vmatmul.mubr.f32.gmra.mxu0 %v1384
        %v2020 = vpop.f32.mrf.mxu0
        %v2021 = vadd.f32 0.0, %v2020
        %v2022 = vpop.f32.mrf.mxu0
        %v2023 = vadd.f32 0.0, %v2022
        %2024 = vmatprep.mubr.f32.mxu0 0.0
        %2025 = vmatmul.mubr.f32.gmra.mxu0 %v1387
        %v2026 = vpop.f32.mrf.mxu0
        %v2027 = vadd.f32 0.0, %v2026
        %v2028 = vpop.f32.mrf.mxu0
        %v2029 = vadd.f32 0.0, %v2028
        %2030 = vmatprep.mubr.f32.mxu0 0.0
        %2031 = vmatmul.mubr.f32.gmra.mxu0 %v1390
        %v2032 = vpop.f32.mrf.mxu0
        %v2033 = vadd.f32 0.0, %v2032
        %v2034 = vpop.f32.mrf.mxu0
        %v2035 = vadd.f32 0.0, %v2034
        %2036 = vmatprep.mubr.f32.mxu0 0.0
        %2037 = vmatmul.mubr.f32.gmra.mxu0 %v1393
        %v2038 = vpop.f32.mrf.mxu0
        %v2039 = vadd.f32 0.0, %v2038
        %v2040 = vpop.f32.mrf.mxu0
        %v2041 = vadd.f32 0.0, %v2040
        %2042 = vdwg.mxu0
        %v2044 = vsel %vm1106, %v977, 0
        %v2047 = vsel %vm1106, %v978, 0
        %v2050 = vsel %vm1106, %v979, 0
        %v2053 = vsel %vm1106, %v980, 0
        %v2056 = vsel %vm1395, %v1095, 0
        %v2059 = vsel %vm1395, %v1096, 0
        %2061 = vmatprep.subr.mxu0 0.0
        %2062 = vmatpush1.msra.mxu0 0.0
        %2063 = vmatprep.subr.mxu0 0.0
        %2064 = vmatpush1.msra.mxu0 0.0
        %2065 = vmatprep.subr.mxu0 0.0
        %2066 = vmatpush1.msra.mxu0 0.0
        %2067 = vmatprep.subr.mxu0 0.0
        %2068 = vmatpush1.msra.mxu0 0.0
        %2069 = vmatprep.subr.mxu0 0.0
        %2070 = vmatpush1.msra.mxu0 0.0
        %2071 = vmatprep.subr.mxu0 0.0
        %2072 = vmatpush1.msra.mxu0 0.0
        %2073 = vmatprep.subr.mxu0 0.0
        %2074 = vmatpush1.msra.mxu0 0.0
        %2075 = vmatprep.subr.mxu0 0.0
        %2076 = vmatpush1.msra.mxu0 0.0
        %2077 = vmatprep.subr.mxu0 0.0
        %2078 = vmatpush1.msra.mxu0 0.0
        %2079 = vmatprep.subr.mxu0 0.0
        %2080 = vmatpush1.msra.mxu0 0.0
        %2081 = vmatprep.subr.mxu0 0.0
        %2082 = vmatpush1.msra.mxu0 0.0
        %2083 = vmatprep.subr.mxu0 0.0
        %2084 = vmatpush1.msra.mxu0 0.0
        %2085 = vmatprep.subr.mxu0 %v2059
        %2086 = vmatpush1.msra.mxu0 %v2056
        %2087 = vmatprep.subr.mxu0 %v1094
        %2088 = vmatpush1.msra.mxu0 %v1093
        %2089 = vmatprep.subr.mxu0 %v1092
        %2090 = vmatpush1.msra.mxu0 %v1091
        %2091 = vmatprep.subr.mxu0 %v1090
        %2092 = vmatpush1.msra.mxu0 %v1089
        %2093 = vmatprep.subr.mxu0 0.0
        %2094 = vmatpush2.msra.mxu0 0.0
        %2095 = vmatprep.subr.mxu0 0.0
        %2096 = vmatpush2.msra.mxu0 0.0
        %2097 = vmatprep.subr.mxu0 0.0
        %2098 = vmatpush2.msra.mxu0 0.0
        %2099 = vmatprep.subr.mxu0 0.0
        %2100 = vmatpush2.msra.mxu0 0.0
        %2101 = vmatprep.subr.mxu0 0.0
        %2102 = vmatpush2.msra.mxu0 0.0
        %2103 = vmatprep.subr.mxu0 0.0
        %2104 = vmatpush2.msra.mxu0 0.0
        %2105 = vmatprep.subr.mxu0 0.0
        %2106 = vmatpush2.msra.mxu0 0.0
        %2107 = vmatprep.subr.mxu0 0.0
        %2108 = vmatpush2.msra.mxu0 0.0
        %2109 = vmatprep.subr.mxu0 0.0
        %2110 = vmatpush2.msra.mxu0 0.0
        %2111 = vmatprep.subr.mxu0 0.0
        %2112 = vmatpush2.msra.mxu0 0.0
        %2113 = vmatprep.subr.mxu0 0.0
        %2114 = vmatpush2.msra.mxu0 0.0
        %2115 = vmatprep.subr.mxu0 0.0
        %2116 = vmatpush2.msra.mxu0 0.0
        %2117 = vmatprep.subr.mxu0 0.0
        %2118 = vmatpush2.msra.mxu0 0.0
        %2119 = vmatprep.subr.mxu0 0.0
        %2120 = vmatpush2.msra.mxu0 0.0
        %2121 = vmatprep.subr.mxu0 0.0
        %2122 = vmatpush2.msra.mxu0 0.0
        %2123 = vmatprep.subr.mxu0 0.0
        %2124 = vmatpush2.msra.mxu0 0.0
        %2125 = vmatprep.mubr.f32.mxu0 0.0
        %2126 = vmatmul.mubr.f32.gmra.mxu0 %v2044
        %v2127 = vpop.f32.mrf.mxu0
        %v2128 = vadd.f32 %v1469, %v2127
        %v2129 = vpop.f32.mrf.mxu0
        %v2130 = vadd.f32 %v1471, %v2129
        %2131 = vmatprep.mubr.f32.mxu0 0.0
        %2132 = vmatmul.mubr.f32.gmra.mxu0 %v2047
        %v2133 = vpop.f32.mrf.mxu0
        %v2134 = vadd.f32 %v1475, %v2133
        %v2135 = vpop.f32.mrf.mxu0
        %v2136 = vadd.f32 %v1477, %v2135
        %2137 = vmatprep.mubr.f32.mxu0 0.0
        %2138 = vmatmul.mubr.f32.gmra.mxu0 %v2050
        %v2139 = vpop.f32.mrf.mxu0
        %v2140 = vadd.f32 %v1481, %v2139
        %v2141 = vpop.f32.mrf.mxu0
        %v2142 = vadd.f32 %v1483, %v2141
        %2143 = vmatprep.mubr.f32.mxu0 0.0
        %2144 = vmatmul.mubr.f32.gmra.mxu0 %v2053
        %v2145 = vpop.f32.mrf.mxu0
        %v2146 = vadd.f32 %v1487, %v2145
        %v2147 = vpop.f32.mrf.mxu0
        %v2148 = vadd.f32 %v1489, %v2147
        %2149 = vmatprep.mubr.f32.mxu0 0.0
        %2150 = vmatmul.mubr.f32.gmra.mxu0 %v1108
        %v2151 = vpop.f32.mrf.mxu0
        %v2152 = vadd.f32 %v1493, %v2151
        %v2153 = vpop.f32.mrf.mxu0
        %v2154 = vadd.f32 %v1495, %v2153
        %2155 = vmatprep.mubr.f32.mxu0 0.0
        %2156 = vmatmul.mubr.f32.gmra.mxu0 %v1111
        %v2157 = vpop.f32.mrf.mxu0
        %v2158 = vadd.f32 %v1499, %v2157
        %v2159 = vpop.f32.mrf.mxu0
        %v2160 = vadd.f32 %v1501, %v2159
        %2161 = vmatprep.mubr.f32.mxu0 0.0
        %2162 = vmatmul.mubr.f32.gmra.mxu0 %v1114
        %v2163 = vpop.f32.mrf.mxu0
        %v2164 = vadd.f32 %v1505, %v2163
        %v2165 = vpop.f32.mrf.mxu0
        %v2166 = vadd.f32 %v1507, %v2165
        %2167 = vmatprep.mubr.f32.mxu0 0.0
        %2168 = vmatmul.mubr.f32.gmra.mxu0 %v1117
        %v2169 = vpop.f32.mrf.mxu0
        %v2170 = vadd.f32 %v1511, %v2169
        %v2171 = vpop.f32.mrf.mxu0
        %v2172 = vadd.f32 %v1513, %v2171
        %2173 = vmatprep.mubr.f32.mxu0 0.0
        %2174 = vmatmul.mubr.f32.gmra.mxu0 %v1120
        %v2175 = vpop.f32.mrf.mxu0
        %v2176 = vadd.f32 %v1517, %v2175
        %v2177 = vpop.f32.mrf.mxu0
        %v2178 = vadd.f32 %v1519, %v2177
        %2179 = vmatprep.mubr.f32.mxu0 0.0
        %2180 = vmatmul.mubr.f32.gmra.mxu0 %v1123
        %v2181 = vpop.f32.mrf.mxu0
        %v2182 = vadd.f32 %v1523, %v2181
        %v2183 = vpop.f32.mrf.mxu0
        %v2184 = vadd.f32 %v1525, %v2183
        %2185 = vmatprep.mubr.f32.mxu0 0.0
        %2186 = vmatmul.mubr.f32.gmra.mxu0 %v1126
        %v2187 = vpop.f32.mrf.mxu0
        %v2188 = vadd.f32 %v1529, %v2187
        %v2189 = vpop.f32.mrf.mxu0
        %v2190 = vadd.f32 %v1531, %v2189
        %2191 = vmatprep.mubr.f32.mxu0 0.0
        %2192 = vmatmul.mubr.f32.gmra.mxu0 %v1129
        %v2193 = vpop.f32.mrf.mxu0
        %v2194 = vadd.f32 %v1535, %v2193
        %v2195 = vpop.f32.mrf.mxu0
        %v2196 = vadd.f32 %v1537, %v2195
        %2197 = vmatprep.mubr.f32.mxu0 0.0
        %2198 = vmatmul.mubr.f32.gmra.mxu0 %v1132
        %v2199 = vpop.f32.mrf.mxu0
        %v2200 = vadd.f32 %v1541, %v2199
        %v2201 = vpop.f32.mrf.mxu0
        %v2202 = vadd.f32 %v1543, %v2201
        %2203 = vmatprep.mubr.f32.mxu0 0.0
        %2204 = vmatmul.mubr.f32.gmra.mxu0 %v1135
        %v2205 = vpop.f32.mrf.mxu0
        %v2206 = vadd.f32 %v1547, %v2205
        %v2207 = vpop.f32.mrf.mxu0
        %v2208 = vadd.f32 %v1549, %v2207
        %2209 = vmatprep.mubr.f32.mxu0 0.0
        %2210 = vmatmul.mubr.f32.gmra.mxu0 %v1138
        %v2211 = vpop.f32.mrf.mxu0
        %v2212 = vadd.f32 %v1553, %v2211
        %v2213 = vpop.f32.mrf.mxu0
        %v2214 = vadd.f32 %v1555, %v2213
        %2215 = vmatprep.mubr.f32.mxu0 0.0
        %2216 = vmatmul.mubr.f32.gmra.mxu0 %v1141
        %v2217 = vpop.f32.mrf.mxu0
        %v2218 = vadd.f32 %v1559, %v2217
        %v2219 = vpop.f32.mrf.mxu0
        %v2220 = vadd.f32 %v1561, %v2219
        %2221 = vmatprep.mubr.f32.mxu0 0.0
        %2222 = vmatmul.mubr.f32.gmra.mxu0 %v1144
        %v2223 = vpop.f32.mrf.mxu0
        %v2224 = vadd.f32 %v1565, %v2223
        %v2225 = vpop.f32.mrf.mxu0
        %v2226 = vadd.f32 %v1567, %v2225
        %2227 = vmatprep.mubr.f32.mxu0 0.0
        %2228 = vmatmul.mubr.f32.gmra.mxu0 %v1147
        %v2229 = vpop.f32.mrf.mxu0
        %v2230 = vadd.f32 %v1571, %v2229
        %v2231 = vpop.f32.mrf.mxu0
        %v2232 = vadd.f32 %v1573, %v2231
        %2233 = vmatprep.mubr.f32.mxu0 0.0
        %2234 = vmatmul.mubr.f32.gmra.mxu0 %v1150
        %v2235 = vpop.f32.mrf.mxu0
        %v2236 = vadd.f32 %v1577, %v2235
        %v2237 = vpop.f32.mrf.mxu0
        %v2238 = vadd.f32 %v1579, %v2237
        %2239 = vmatprep.mubr.f32.mxu0 0.0
        %2240 = vmatmul.mubr.f32.gmra.mxu0 %v1153
        %v2241 = vpop.f32.mrf.mxu0
        %v2242 = vadd.f32 %v1583, %v2241
        %v2243 = vpop.f32.mrf.mxu0
        %v2244 = vadd.f32 %v1585, %v2243
        %2245 = vmatprep.mubr.f32.mxu0 0.0
        %2246 = vmatmul.mubr.f32.gmra.mxu0 %v1156
        %v2247 = vpop.f32.mrf.mxu0
        %v2248 = vadd.f32 %v1589, %v2247
        %v2249 = vpop.f32.mrf.mxu0
        %v2250 = vadd.f32 %v1591, %v2249
        %2251 = vmatprep.mubr.f32.mxu0 0.0
        %2252 = vmatmul.mubr.f32.gmra.mxu0 %v1159
        %v2253 = vpop.f32.mrf.mxu0
        %v2254 = vadd.f32 %v1595, %v2253
        %v2255 = vpop.f32.mrf.mxu0
        %v2256 = vadd.f32 %v1597, %v2255
        %2257 = vmatprep.mubr.f32.mxu0 0.0
        %2258 = vmatmul.mubr.f32.gmra.mxu0 %v1162
        %v2259 = vpop.f32.mrf.mxu0
        %v2260 = vadd.f32 %v1601, %v2259
        %v2261 = vpop.f32.mrf.mxu0
        %v2262 = vadd.f32 %v1603, %v2261
        %2263 = vmatprep.mubr.f32.mxu0 0.0
        %2264 = vmatmul.mubr.f32.gmra.mxu0 %v1165
        %v2265 = vpop.f32.mrf.mxu0
        %v2266 = vadd.f32 %v1607, %v2265
        %v2267 = vpop.f32.mrf.mxu0
        %v2268 = vadd.f32 %v1609, %v2267
        %2269 = vmatprep.mubr.f32.mxu0 0.0
        %2270 = vmatmul.mubr.f32.gmra.mxu0 %v1168
        %v2271 = vpop.f32.mrf.mxu0
        %v2272 = vadd.f32 %v1613, %v2271
        %v2273 = vpop.f32.mrf.mxu0
        %v2274 = vadd.f32 %v1615, %v2273
        %2275 = vmatprep.mubr.f32.mxu0 0.0
        %2276 = vmatmul.mubr.f32.gmra.mxu0 %v1171
        %v2277 = vpop.f32.mrf.mxu0
        %v2278 = vadd.f32 %v1619, %v2277
        %v2279 = vpop.f32.mrf.mxu0
        %v2280 = vadd.f32 %v1621, %v2279
        %2281 = vmatprep.mubr.f32.mxu0 0.0
        %2282 = vmatmul.mubr.f32.gmra.mxu0 %v1174
        %v2283 = vpop.f32.mrf.mxu0
        %v2284 = vadd.f32 %v1625, %v2283
        %v2285 = vpop.f32.mrf.mxu0
        %v2286 = vadd.f32 %v1627, %v2285
        %2287 = vmatprep.mubr.f32.mxu0 0.0
        %2288 = vmatmul.mubr.f32.gmra.mxu0 %v1177
        %v2289 = vpop.f32.mrf.mxu0
        %v2290 = vadd.f32 %v1631, %v2289
        %v2291 = vpop.f32.mrf.mxu0
        %v2292 = vadd.f32 %v1633, %v2291
        %2293 = vmatprep.mubr.f32.mxu0 0.0
        %2294 = vmatmul.mubr.f32.gmra.mxu0 %v1180
        %v2295 = vpop.f32.mrf.mxu0
        %v2296 = vadd.f32 %v1637, %v2295
        %v2297 = vpop.f32.mrf.mxu0
        %v2298 = vadd.f32 %v1639, %v2297
        %2299 = vmatprep.mubr.f32.mxu0 0.0
        %2300 = vmatmul.mubr.f32.gmra.mxu0 %v1183
        %v2301 = vpop.f32.mrf.mxu0
        %v2302 = vadd.f32 %v1643, %v2301
        %v2303 = vpop.f32.mrf.mxu0
        %v2304 = vadd.f32 %v1645, %v2303
        %2305 = vmatprep.mubr.f32.mxu0 0.0
        %2306 = vmatmul.mubr.f32.gmra.mxu0 %v1186
        %v2307 = vpop.f32.mrf.mxu0
        %v2308 = vadd.f32 %v1649, %v2307
        %v2309 = vpop.f32.mrf.mxu0
        %v2310 = vadd.f32 %v1651, %v2309
        %2311 = vmatprep.mubr.f32.mxu0 0.0
        %2312 = vmatmul.mubr.f32.gmra.mxu0 %v1189
        %v2313 = vpop.f32.mrf.mxu0
        %v2314 = vadd.f32 %v1655, %v2313
        %v2315 = vpop.f32.mrf.mxu0
        %v2316 = vadd.f32 %v1657, %v2315
        %2317 = vmatprep.mubr.f32.mxu0 0.0
        %2318 = vmatmul.mubr.f32.gmra.mxu0 %v1192
        %v2319 = vpop.f32.mrf.mxu0
        %v2320 = vadd.f32 %v1661, %v2319
        %v2321 = vpop.f32.mrf.mxu0
        %v2322 = vadd.f32 %v1663, %v2321
        %2323 = vmatprep.mubr.f32.mxu0 0.0
        %2324 = vmatmul.mubr.f32.gmra.mxu0 %v1195
        %v2325 = vpop.f32.mrf.mxu0
        %v2326 = vadd.f32 %v1667, %v2325
        %v2327 = vpop.f32.mrf.mxu0
        %v2328 = vadd.f32 %v1669, %v2327
        %2329 = vmatprep.mubr.f32.mxu0 0.0
        %2330 = vmatmul.mubr.f32.gmra.mxu0 %v1198
        %v2331 = vpop.f32.mrf.mxu0
        %v2332 = vadd.f32 %v1673, %v2331
        %v2333 = vpop.f32.mrf.mxu0
        %v2334 = vadd.f32 %v1675, %v2333
        %2335 = vmatprep.mubr.f32.mxu0 0.0
        %2336 = vmatmul.mubr.f32.gmra.mxu0 %v1201
        %v2337 = vpop.f32.mrf.mxu0
        %v2338 = vadd.f32 %v1679, %v2337
        %v2339 = vpop.f32.mrf.mxu0
        %v2340 = vadd.f32 %v1681, %v2339
        %2341 = vmatprep.mubr.f32.mxu0 0.0
        %2342 = vmatmul.mubr.f32.gmra.mxu0 %v1204
        %v2343 = vpop.f32.mrf.mxu0
        %v2344 = vadd.f32 %v1685, %v2343
        %v2345 = vpop.f32.mrf.mxu0
        %v2346 = vadd.f32 %v1687, %v2345
        %2347 = vmatprep.mubr.f32.mxu0 0.0
        %2348 = vmatmul.mubr.f32.gmra.mxu0 %v1207
        %v2349 = vpop.f32.mrf.mxu0
        %v2350 = vadd.f32 %v1691, %v2349
        %v2351 = vpop.f32.mrf.mxu0
        %v2352 = vadd.f32 %v1693, %v2351
        %2353 = vmatprep.mubr.f32.mxu0 0.0
        %2354 = vmatmul.mubr.f32.gmra.mxu0 %v1210
        %v2355 = vpop.f32.mrf.mxu0
        %v2356 = vadd.f32 %v1697, %v2355
        %v2357 = vpop.f32.mrf.mxu0
        %v2358 = vadd.f32 %v1699, %v2357
        %2359 = vmatprep.mubr.f32.mxu0 0.0
        %2360 = vmatmul.mubr.f32.gmra.mxu0 %v1213
        %v2361 = vpop.f32.mrf.mxu0
        %v2362 = vadd.f32 %v1703, %v2361
        %v2363 = vpop.f32.mrf.mxu0
        %v2364 = vadd.f32 %v1705, %v2363
        %2365 = vmatprep.mubr.f32.mxu0 0.0
        %2366 = vmatmul.mubr.f32.gmra.mxu0 %v1216
        %v2367 = vpop.f32.mrf.mxu0
        %v2368 = vadd.f32 %v1709, %v2367
        %v2369 = vpop.f32.mrf.mxu0
        %v2370 = vadd.f32 %v1711, %v2369
        %2371 = vmatprep.mubr.f32.mxu0 0.0
        %2372 = vmatmul.mubr.f32.gmra.mxu0 %v1219
        %v2373 = vpop.f32.mrf.mxu0
        %v2374 = vadd.f32 %v1715, %v2373
        %v2375 = vpop.f32.mrf.mxu0
        %v2376 = vadd.f32 %v1717, %v2375
        %2377 = vmatprep.mubr.f32.mxu0 0.0
        %2378 = vmatmul.mubr.f32.gmra.mxu0 %v1222
        %v2379 = vpop.f32.mrf.mxu0
        %v2380 = vadd.f32 %v1721, %v2379
        %v2381 = vpop.f32.mrf.mxu0
        %v2382 = vadd.f32 %v1723, %v2381
        %2383 = vmatprep.mubr.f32.mxu0 0.0
        %2384 = vmatmul.mubr.f32.gmra.mxu0 %v1225
        %v2385 = vpop.f32.mrf.mxu0
        %v2386 = vadd.f32 %v1727, %v2385
        %v2387 = vpop.f32.mrf.mxu0
        %v2388 = vadd.f32 %v1729, %v2387
        %2389 = vmatprep.mubr.f32.mxu0 0.0
        %2390 = vmatmul.mubr.f32.gmra.mxu0 %v1228
        %v2391 = vpop.f32.mrf.mxu0
        %v2392 = vadd.f32 %v1733, %v2391
        %v2393 = vpop.f32.mrf.mxu0
        %v2394 = vadd.f32 %v1735, %v2393
        %2395 = vmatprep.mubr.f32.mxu0 0.0
        %2396 = vmatmul.mubr.f32.gmra.mxu0 %v1231
        %v2397 = vpop.f32.mrf.mxu0
        %v2398 = vadd.f32 %v1739, %v2397
        %v2399 = vpop.f32.mrf.mxu0
        %v2400 = vadd.f32 %v1741, %v2399
        %2401 = vmatprep.mubr.f32.mxu0 0.0
        %2402 = vmatmul.mubr.f32.gmra.mxu0 %v1234
        %v2403 = vpop.f32.mrf.mxu0
        %v2404 = vadd.f32 %v1745, %v2403
        %v2405 = vpop.f32.mrf.mxu0
        %v2406 = vadd.f32 %v1747, %v2405
        %2407 = vmatprep.mubr.f32.mxu0 0.0
        %2408 = vmatmul.mubr.f32.gmra.mxu0 %v1237
        %v2409 = vpop.f32.mrf.mxu0
        %v2410 = vadd.f32 %v1751, %v2409
        %v2411 = vpop.f32.mrf.mxu0
        %v2412 = vadd.f32 %v1753, %v2411
        %2413 = vmatprep.mubr.f32.mxu0 0.0
        %2414 = vmatmul.mubr.f32.gmra.mxu0 %v1240
        %v2415 = vpop.f32.mrf.mxu0
        %v2416 = vadd.f32 %v1757, %v2415
        %v2417 = vpop.f32.mrf.mxu0
        %v2418 = vadd.f32 %v1759, %v2417
        %2419 = vmatprep.mubr.f32.mxu0 0.0
        %2420 = vmatmul.mubr.f32.gmra.mxu0 %v1243
        %v2421 = vpop.f32.mrf.mxu0
        %v2422 = vadd.f32 %v1763, %v2421
        %v2423 = vpop.f32.mrf.mxu0
        %v2424 = vadd.f32 %v1765, %v2423
        %2425 = vmatprep.mubr.f32.mxu0 0.0
        %2426 = vmatmul.mubr.f32.gmra.mxu0 %v1246
        %v2427 = vpop.f32.mrf.mxu0
        %v2428 = vadd.f32 %v1769, %v2427
        %v2429 = vpop.f32.mrf.mxu0
        %v2430 = vadd.f32 %v1771, %v2429
        %2431 = vmatprep.mubr.f32.mxu0 0.0
        %2432 = vmatmul.mubr.f32.gmra.mxu0 %v1249
        %v2433 = vpop.f32.mrf.mxu0
        %v2434 = vadd.f32 %v1775, %v2433
        %v2435 = vpop.f32.mrf.mxu0
        %v2436 = vadd.f32 %v1777, %v2435
        %2437 = vmatprep.mubr.f32.mxu0 0.0
        %2438 = vmatmul.mubr.f32.gmra.mxu0 %v1252
        %v2439 = vpop.f32.mrf.mxu0
        %v2440 = vadd.f32 %v1781, %v2439
        %v2441 = vpop.f32.mrf.mxu0
        %v2442 = vadd.f32 %v1783, %v2441
        %2443 = vmatprep.mubr.f32.mxu0 0.0
        %2444 = vmatmul.mubr.f32.gmra.mxu0 %v1255
        %v2445 = vpop.f32.mrf.mxu0
        %v2446 = vadd.f32 %v1787, %v2445
        %v2447 = vpop.f32.mrf.mxu0
        %v2448 = vadd.f32 %v1789, %v2447
        %2449 = vmatprep.mubr.f32.mxu0 0.0
        %2450 = vmatmul.mubr.f32.gmra.mxu0 %v1258
        %v2451 = vpop.f32.mrf.mxu0
        %v2452 = vadd.f32 %v1793, %v2451
        %v2453 = vpop.f32.mrf.mxu0
        %v2454 = vadd.f32 %v1795, %v2453
        %2455 = vmatprep.mubr.f32.mxu0 0.0
        %2456 = vmatmul.mubr.f32.gmra.mxu0 %v1261
        %v2457 = vpop.f32.mrf.mxu0
        %v2458 = vadd.f32 %v1799, %v2457
        %v2459 = vpop.f32.mrf.mxu0
        %v2460 = vadd.f32 %v1801, %v2459
        %2461 = vmatprep.mubr.f32.mxu0 0.0
        %2462 = vmatmul.mubr.f32.gmra.mxu0 %v1264
        %v2463 = vpop.f32.mrf.mxu0
        %v2464 = vadd.f32 %v1805, %v2463
        %v2465 = vpop.f32.mrf.mxu0
        %v2466 = vadd.f32 %v1807, %v2465
        %2467 = vmatprep.mubr.f32.mxu0 0.0
        %2468 = vmatmul.mubr.f32.gmra.mxu0 %v1267
        %v2469 = vpop.f32.mrf.mxu0
        %v2470 = vadd.f32 %v1811, %v2469
        %v2471 = vpop.f32.mrf.mxu0
        %v2472 = vadd.f32 %v1813, %v2471
        %2473 = vmatprep.mubr.f32.mxu0 0.0
        %2474 = vmatmul.mubr.f32.gmra.mxu0 %v1270
        %v2475 = vpop.f32.mrf.mxu0
        %v2476 = vadd.f32 %v1817, %v2475
        %v2477 = vpop.f32.mrf.mxu0
        %v2478 = vadd.f32 %v1819, %v2477
        %2479 = vmatprep.mubr.f32.mxu0 0.0
        %2480 = vmatmul.mubr.f32.gmra.mxu0 %v1273
        %v2481 = vpop.f32.mrf.mxu0
        %v2482 = vadd.f32 %v1823, %v2481
        %v2483 = vpop.f32.mrf.mxu0
        %v2484 = vadd.f32 %v1825, %v2483
        %2485 = vmatprep.mubr.f32.mxu0 0.0
        %2486 = vmatmul.mubr.f32.gmra.mxu0 %v1276
        %v2487 = vpop.f32.mrf.mxu0
        %v2488 = vadd.f32 %v1829, %v2487
        %v2489 = vpop.f32.mrf.mxu0
        %v2490 = vadd.f32 %v1831, %v2489
        %2491 = vmatprep.mubr.f32.mxu0 0.0
        %2492 = vmatmul.mubr.f32.gmra.mxu0 %v1279
        %v2493 = vpop.f32.mrf.mxu0
        %v2494 = vadd.f32 %v1835, %v2493
        %v2495 = vpop.f32.mrf.mxu0
        %v2496 = vadd.f32 %v1837, %v2495
        %2497 = vmatprep.mubr.f32.mxu0 0.0
        %2498 = vmatmul.mubr.f32.gmra.mxu0 %v1282
        %v2499 = vpop.f32.mrf.mxu0
        %v2500 = vadd.f32 %v1841, %v2499
        %v2501 = vpop.f32.mrf.mxu0
        %v2502 = vadd.f32 %v1843, %v2501
        %2503 = vmatprep.mubr.f32.mxu0 0.0
        %2504 = vmatmul.mubr.f32.gmra.mxu0 %v1285
        %v2505 = vpop.f32.mrf.mxu0
        %v2506 = vadd.f32 %v1847, %v2505
        %v2507 = vpop.f32.mrf.mxu0
        %v2508 = vadd.f32 %v1849, %v2507
        %2509 = vmatprep.mubr.f32.mxu0 0.0
        %2510 = vmatmul.mubr.f32.gmra.mxu0 %v1288
        %v2511 = vpop.f32.mrf.mxu0
        %v2512 = vadd.f32 %v1853, %v2511
        %v2513 = vpop.f32.mrf.mxu0
        %v2514 = vadd.f32 %v1855, %v2513
        %2515 = vmatprep.mubr.f32.mxu0 0.0
        %2516 = vmatmul.mubr.f32.gmra.mxu0 %v1291
        %v2517 = vpop.f32.mrf.mxu0
        %v2518 = vadd.f32 %v1859, %v2517
        %v2519 = vpop.f32.mrf.mxu0
        %v2520 = vadd.f32 %v1861, %v2519
        %2521 = vmatprep.mubr.f32.mxu0 0.0
        %2522 = vmatmul.mubr.f32.gmra.mxu0 %v1294
        %v2523 = vpop.f32.mrf.mxu0
        %v2524 = vadd.f32 %v1865, %v2523
        %v2525 = vpop.f32.mrf.mxu0
        %v2526 = vadd.f32 %v1867, %v2525
        %2527 = vmatprep.mubr.f32.mxu0 0.0
        %2528 = vmatmul.mubr.f32.gmra.mxu0 %v1297
        %v2529 = vpop.f32.mrf.mxu0
        %v2530 = vadd.f32 %v1871, %v2529
        %v2531 = vpop.f32.mrf.mxu0
        %v2532 = vadd.f32 %v1873, %v2531
        %2533 = vmatprep.mubr.f32.mxu0 0.0
        %2534 = vmatmul.mubr.f32.gmra.mxu0 %v1300
        %v2535 = vpop.f32.mrf.mxu0
        %v2536 = vadd.f32 %v1877, %v2535
        %v2537 = vpop.f32.mrf.mxu0
        %v2538 = vadd.f32 %v1879, %v2537
        %2539 = vmatprep.mubr.f32.mxu0 0.0
        %2540 = vmatmul.mubr.f32.gmra.mxu0 %v1303
        %v2541 = vpop.f32.mrf.mxu0
        %v2542 = vadd.f32 %v1883, %v2541
        %v2543 = vpop.f32.mrf.mxu0
        %v2544 = vadd.f32 %v1885, %v2543
        %2545 = vmatprep.mubr.f32.mxu0 0.0
        %2546 = vmatmul.mubr.f32.gmra.mxu0 %v1306
        %v2547 = vpop.f32.mrf.mxu0
        %v2548 = vadd.f32 %v1889, %v2547
        %v2549 = vpop.f32.mrf.mxu0
        %v2550 = vadd.f32 %v1891, %v2549
        %2551 = vmatprep.mubr.f32.mxu0 0.0
        %2552 = vmatmul.mubr.f32.gmra.mxu0 %v1309
        %v2553 = vpop.f32.mrf.mxu0
        %v2554 = vadd.f32 %v1895, %v2553
        %v2555 = vpop.f32.mrf.mxu0
        %v2556 = vadd.f32 %v1897, %v2555
        %2557 = vmatprep.mubr.f32.mxu0 0.0
        %2558 = vmatmul.mubr.f32.gmra.mxu0 %v1312
        %v2559 = vpop.f32.mrf.mxu0
        %v2560 = vadd.f32 %v1901, %v2559
        %v2561 = vpop.f32.mrf.mxu0
        %v2562 = vadd.f32 %v1903, %v2561
        %2563 = vmatprep.mubr.f32.mxu0 0.0
        %2564 = vmatmul.mubr.f32.gmra.mxu0 %v1315
        %v2565 = vpop.f32.mrf.mxu0
        %v2566 = vadd.f32 %v1907, %v2565
        %v2567 = vpop.f32.mrf.mxu0
        %v2568 = vadd.f32 %v1909, %v2567
        %2569 = vmatprep.mubr.f32.mxu0 0.0
        %2570 = vmatmul.mubr.f32.gmra.mxu0 %v1318
        %v2571 = vpop.f32.mrf.mxu0
        %v2572 = vadd.f32 %v1913, %v2571
        %v2573 = vpop.f32.mrf.mxu0
        %v2574 = vadd.f32 %v1915, %v2573
        %2575 = vmatprep.mubr.f32.mxu0 0.0
        %2576 = vmatmul.mubr.f32.gmra.mxu0 %v1321
        %v2577 = vpop.f32.mrf.mxu0
        %v2578 = vadd.f32 %v1919, %v2577
        %v2579 = vpop.f32.mrf.mxu0
        %v2580 = vadd.f32 %v1921, %v2579
        %2581 = vmatprep.mubr.f32.mxu0 0.0
        %2582 = vmatmul.mubr.f32.gmra.mxu0 %v1324
        %v2583 = vpop.f32.mrf.mxu0
        %v2584 = vadd.f32 %v1925, %v2583
        %v2585 = vpop.f32.mrf.mxu0
        %v2586 = vadd.f32 %v1927, %v2585
        %2587 = vmatprep.mubr.f32.mxu0 0.0
        %2588 = vmatmul.mubr.f32.gmra.mxu0 %v1327
        %v2589 = vpop.f32.mrf.mxu0
        %v2590 = vadd.f32 %v1931, %v2589
        %v2591 = vpop.f32.mrf.mxu0
        %v2592 = vadd.f32 %v1933, %v2591
        %2593 = vmatprep.mubr.f32.mxu0 0.0
        %2594 = vmatmul.mubr.f32.gmra.mxu0 %v1330
        %v2595 = vpop.f32.mrf.mxu0
        %v2596 = vadd.f32 %v1937, %v2595
        %v2597 = vpop.f32.mrf.mxu0
        %v2598 = vadd.f32 %v1939, %v2597
        %2599 = vmatprep.mubr.f32.mxu0 0.0
        %2600 = vmatmul.mubr.f32.gmra.mxu0 %v1333
        %v2601 = vpop.f32.mrf.mxu0
        %v2602 = vadd.f32 %v1943, %v2601
        %v2603 = vpop.f32.mrf.mxu0
        %v2604 = vadd.f32 %v1945, %v2603
        %2605 = vmatprep.mubr.f32.mxu0 0.0
        %2606 = vmatmul.mubr.f32.gmra.mxu0 %v1336
        %v2607 = vpop.f32.mrf.mxu0
        %v2608 = vadd.f32 %v1949, %v2607
        %v2609 = vpop.f32.mrf.mxu0
        %v2610 = vadd.f32 %v1951, %v2609
        %2611 = vmatprep.mubr.f32.mxu0 0.0
        %2612 = vmatmul.mubr.f32.gmra.mxu0 %v1339
        %v2613 = vpop.f32.mrf.mxu0
        %v2614 = vadd.f32 %v1955, %v2613
        %v2615 = vpop.f32.mrf.mxu0
        %v2616 = vadd.f32 %v1957, %v2615
        %2617 = vmatprep.mubr.f32.mxu0 0.0
        %2618 = vmatmul.mubr.f32.gmra.mxu0 %v1342
        %v2619 = vpop.f32.mrf.mxu0
        %v2620 = vadd.f32 %v1961, %v2619
        %v2621 = vpop.f32.mrf.mxu0
        %v2622 = vadd.f32 %v1963, %v2621
        %2623 = vmatprep.mubr.f32.mxu0 0.0
        %2624 = vmatmul.mubr.f32.gmra.mxu0 %v1345
        %v2625 = vpop.f32.mrf.mxu0
        %v2626 = vadd.f32 %v1967, %v2625
        %v2627 = vpop.f32.mrf.mxu0
        %v2628 = vadd.f32 %v1969, %v2627
        %2629 = vmatprep.mubr.f32.mxu0 0.0
        %2630 = vmatmul.mubr.f32.gmra.mxu0 %v1348
        %v2631 = vpop.f32.mrf.mxu0
        %v2632 = vadd.f32 %v1973, %v2631
        %v2633 = vpop.f32.mrf.mxu0
        %v2634 = vadd.f32 %v1975, %v2633
        %2635 = vmatprep.mubr.f32.mxu0 0.0
        %2636 = vmatmul.mubr.f32.gmra.mxu0 %v1351
        %v2637 = vpop.f32.mrf.mxu0
        %v2638 = vadd.f32 %v1979, %v2637
        %v2639 = vpop.f32.mrf.mxu0
        %v2640 = vadd.f32 %v1981, %v2639
        %2641 = vmatprep.mubr.f32.mxu0 0.0
        %2642 = vmatmul.mubr.f32.gmra.mxu0 %v1354
        %v2643 = vpop.f32.mrf.mxu0
        %v2644 = vadd.f32 %v1985, %v2643
        %v2645 = vpop.f32.mrf.mxu0
        %v2646 = vadd.f32 %v1987, %v2645
        %2647 = vmatprep.mubr.f32.mxu0 0.0
        %2648 = vmatmul.mubr.f32.gmra.mxu0 %v1357
        %v2649 = vpop.f32.mrf.mxu0
        %v2650 = vadd.f32 %v1991, %v2649
        %v2651 = vpop.f32.mrf.mxu0
        %v2652 = vadd.f32 %v1993, %v2651
        %2653 = vmatprep.mubr.f32.mxu0 0.0
        %2654 = vmatmul.mubr.f32.gmra.mxu0 %v1360
        %v2655 = vpop.f32.mrf.mxu0
        %v2656 = vadd.f32 %v1997, %v2655
        %v2657 = vpop.f32.mrf.mxu0
        %v2658 = vadd.f32 %v1999, %v2657
        %2659 = vmatprep.mubr.f32.mxu0 0.0
        %2660 = vmatmul.mubr.f32.gmra.mxu0 %v1363
        %v2661 = vpop.f32.mrf.mxu0
        %v2662 = vadd.f32 %v2003, %v2661
        %v2663 = vpop.f32.mrf.mxu0
        %v2664 = vadd.f32 %v2005, %v2663
        %2665 = vmatprep.mubr.f32.mxu0 0.0
        %2666 = vmatmul.mubr.f32.gmra.mxu0 %v1366
        %v2667 = vpop.f32.mrf.mxu0
        %v2668 = vadd.f32 %v2009, %v2667
        %v2669 = vpop.f32.mrf.mxu0
        %v2670 = vadd.f32 %v2011, %v2669
        %2671 = vmatprep.mubr.f32.mxu0 0.0
        %2672 = vmatmul.mubr.f32.gmra.mxu0 %v1369
        %v2673 = vpop.f32.mrf.mxu0
        %v2674 = vadd.f32 %v2015, %v2673
        %v2675 = vpop.f32.mrf.mxu0
        %v2676 = vadd.f32 %v2017, %v2675
        %2677 = vmatprep.mubr.f32.mxu0 0.0
        %2678 = vmatmul.mubr.f32.gmra.mxu0 %v1372
        %v2679 = vpop.f32.mrf.mxu0
        %v2680 = vadd.f32 %v2021, %v2679
        %v2681 = vpop.f32.mrf.mxu0
        %v2682 = vadd.f32 %v2023, %v2681
        %2683 = vmatprep.mubr.f32.mxu0 0.0
        %2684 = vmatmul.mubr.f32.gmra.mxu0 %v1375
        %v2685 = vpop.f32.mrf.mxu0
        %v2686 = vadd.f32 %v2027, %v2685
        %v2687 = vpop.f32.mrf.mxu0
        %v2688 = vadd.f32 %v2029, %v2687
        %2689 = vmatprep.mubr.f32.mxu0 0.0
        %2690 = vmatmul.mubr.f32.gmra.mxu0 %v1378
        %v2691 = vpop.f32.mrf.mxu0
        %v2692 = vadd.f32 %v2033, %v2691
        %v2693 = vpop.f32.mrf.mxu0
        %v2694 = vadd.f32 %v2035, %v2693
        %2695 = vmatprep.mubr.f32.mxu0 0.0
        %2696 = vmatmul.mubr.f32.gmra.mxu0 %v1381
        %v2697 = vpop.f32.mrf.mxu0
        %v2698 = vadd.f32 %v2039, %v2697
        %v2699 = vpop.f32.mrf.mxu0
        %v2700 = vadd.f32 %v2041, %v2699
        %2701 = vdwg.mxu0
        %s2702 = scalar_lea.vmem %s1, 128
        %v2703 = vld [vmem:[%s2702] sm:$0xff]
        %v2704 = vld [vmem:[%s2702 + $0x8] sm:$0xff]
        %v2705 = vld [vmem:[%s2702 + $0x10] sm:$0xff]
        %v2706 = vld [vmem:[%s2702 + $0x18] sm:$0xff]
        %v2707 = vld [vmem:[%s2702 + $0x20] sm:$0xff]
        %v2708 = vld [vmem:[%s2702 + $0x28] sm:$0xff]
        %v2709 = vld [vmem:[%s2702 + $0x30] sm:$0xf]
        %v2710 = vld [vmem:[%s2702 + $0x38] sm:$0xf]
        %v2712 = vsel %vm1106, %v1077, 0
        %v2715 = vsel %vm1106, %v1078, 0
        %v2718 = vsel %vm1106, %v1079, 0
        %v2721 = vsel %vm1106, %v1080, 0
        %v2724 = vsel %vm1395, %v2709, 0
        %v2727 = vsel %vm1395, %v2710, 0
        %2729 = vmatprep.subr.mxu0 0.0
        %2730 = vmatpush1.msra.mxu0 0.0
        %2731 = vmatprep.subr.mxu0 0.0
        %2732 = vmatpush1.msra.mxu0 0.0
        %2733 = vmatprep.subr.mxu0 0.0
        %2734 = vmatpush1.msra.mxu0 0.0
        %2735 = vmatprep.subr.mxu0 0.0
        %2736 = vmatpush1.msra.mxu0 0.0
        %2737 = vmatprep.subr.mxu0 0.0
        %2738 = vmatpush1.msra.mxu0 0.0
        %2739 = vmatprep.subr.mxu0 0.0
        %2740 = vmatpush1.msra.mxu0 0.0
        %2741 = vmatprep.subr.mxu0 0.0
        %2742 = vmatpush1.msra.mxu0 0.0
        %2743 = vmatprep.subr.mxu0 0.0
        %2744 = vmatpush1.msra.mxu0 0.0
        %2745 = vmatprep.subr.mxu0 0.0
        %2746 = vmatpush1.msra.mxu0 0.0
        %2747 = vmatprep.subr.mxu0 0.0
        %2748 = vmatpush1.msra.mxu0 0.0
        %2749 = vmatprep.subr.mxu0 0.0
        %2750 = vmatpush1.msra.mxu0 0.0
        %2751 = vmatprep.subr.mxu0 0.0
        %2752 = vmatpush1.msra.mxu0 0.0
        %2753 = vmatprep.subr.mxu0 %v2727
        %2754 = vmatpush1.msra.mxu0 %v2724
        %2755 = vmatprep.subr.mxu0 %v2708
        %2756 = vmatpush1.msra.mxu0 %v2707
        %2757 = vmatprep.subr.mxu0 %v2706
        %2758 = vmatpush1.msra.mxu0 %v2705
        %2759 = vmatprep.subr.mxu0 %v2704
        %2760 = vmatpush1.msra.mxu0 %v2703
        %2761 = vmatprep.subr.mxu0 0.0
        %2762 = vmatpush2.msra.mxu0 0.0
        %2763 = vmatprep.subr.mxu0 0.0
        %2764 = vmatpush2.msra.mxu0 0.0
        %2765 = vmatprep.subr.mxu0 0.0
        %2766 = vmatpush2.msra.mxu0 0.0
        %2767 = vmatprep.subr.mxu0 0.0
        %2768 = vmatpush2.msra.mxu0 0.0
        %2769 = vmatprep.subr.mxu0 0.0
        %2770 = vmatpush2.msra.mxu0 0.0
        %2771 = vmatprep.subr.mxu0 0.0
        %2772 = vmatpush2.msra.mxu0 0.0
        %2773 = vmatprep.subr.mxu0 0.0
        %2774 = vmatpush2.msra.mxu0 0.0
        %2775 = vmatprep.subr.mxu0 0.0
        %2776 = vmatpush2.msra.mxu0 0.0
        %2777 = vmatprep.subr.mxu0 0.0
        %2778 = vmatpush2.msra.mxu0 0.0
        %2779 = vmatprep.subr.mxu0 0.0
        %2780 = vmatpush2.msra.mxu0 0.0
        %2781 = vmatprep.subr.mxu0 0.0
        %2782 = vmatpush2.msra.mxu0 0.0
        %2783 = vmatprep.subr.mxu0 0.0
        %2784 = vmatpush2.msra.mxu0 0.0
        %2785 = vmatprep.subr.mxu0 0.0
        %2786 = vmatpush2.msra.mxu0 0.0
        %2787 = vmatprep.subr.mxu0 0.0
        %2788 = vmatpush2.msra.mxu0 0.0
        %2789 = vmatprep.subr.mxu0 0.0
        %2790 = vmatpush2.msra.mxu0 0.0
        %2791 = vmatprep.subr.mxu0 0.0
        %2792 = vmatpush2.msra.mxu0 0.0
        %2793 = vmatprep.mubr.f32.mxu0 0.0
        %2794 = vmatmul.mubr.f32.gmra.mxu0 %v1120
        %v2795 = vpop.f32.mrf.mxu0
        %v2796 = vadd.f32 0.0, %v2795
        %v2797 = vpop.f32.mrf.mxu0
        %v2798 = vadd.f32 0.0, %v2797
        %2799 = vmatprep.mubr.f32.mxu0 0.0
        %2800 = vmatmul.mubr.f32.gmra.mxu0 %v1123
        %v2801 = vpop.f32.mrf.mxu0
        %v2802 = vadd.f32 0.0, %v2801
        %v2803 = vpop.f32.mrf.mxu0
        %v2804 = vadd.f32 0.0, %v2803
        %2805 = vmatprep.mubr.f32.mxu0 0.0
        %2806 = vmatmul.mubr.f32.gmra.mxu0 %v1126
        %v2807 = vpop.f32.mrf.mxu0
        %v2808 = vadd.f32 0.0, %v2807
        %v2809 = vpop.f32.mrf.mxu0
        %v2810 = vadd.f32 0.0, %v2809
        %2811 = vmatprep.mubr.f32.mxu0 0.0
        %2812 = vmatmul.mubr.f32.gmra.mxu0 %v1129
        %v2813 = vpop.f32.mrf.mxu0
        %v2814 = vadd.f32 0.0, %v2813
        %v2815 = vpop.f32.mrf.mxu0
        %v2816 = vadd.f32 0.0, %v2815
        %2817 = vmatprep.mubr.f32.mxu0 0.0
        %2818 = vmatmul.mubr.f32.gmra.mxu0 %v1132
        %v2819 = vpop.f32.mrf.mxu0
        %v2820 = vadd.f32 0.0, %v2819
        %v2821 = vpop.f32.mrf.mxu0
        %v2822 = vadd.f32 0.0, %v2821
        %2823 = vmatprep.mubr.f32.mxu0 0.0
        %2824 = vmatmul.mubr.f32.gmra.mxu0 %v1135
        %v2825 = vpop.f32.mrf.mxu0
        %v2826 = vadd.f32 0.0, %v2825
        %v2827 = vpop.f32.mrf.mxu0
        %v2828 = vadd.f32 0.0, %v2827
        %2829 = vmatprep.mubr.f32.mxu0 0.0
        %2830 = vmatmul.mubr.f32.gmra.mxu0 %v1138
        %v2831 = vpop.f32.mrf.mxu0
        %v2832 = vadd.f32 0.0, %v2831
        %v2833 = vpop.f32.mrf.mxu0
        %v2834 = vadd.f32 0.0, %v2833
        %2835 = vmatprep.mubr.f32.mxu0 0.0
        %2836 = vmatmul.mubr.f32.gmra.mxu0 %v1141
        %v2837 = vpop.f32.mrf.mxu0
        %v2838 = vadd.f32 0.0, %v2837
        %v2839 = vpop.f32.mrf.mxu0
        %v2840 = vadd.f32 0.0, %v2839
        %2841 = vmatprep.mubr.f32.mxu0 0.0
        %2842 = vmatmul.mubr.f32.gmra.mxu0 %v1144
        %v2843 = vpop.f32.mrf.mxu0
        %v2844 = vadd.f32 0.0, %v2843
        %v2845 = vpop.f32.mrf.mxu0
        %v2846 = vadd.f32 0.0, %v2845
        %2847 = vmatprep.mubr.f32.mxu0 0.0
        %2848 = vmatmul.mubr.f32.gmra.mxu0 %v1147
        %v2849 = vpop.f32.mrf.mxu0
        %v2850 = vadd.f32 0.0, %v2849
        %v2851 = vpop.f32.mrf.mxu0
        %v2852 = vadd.f32 0.0, %v2851
        %2853 = vmatprep.mubr.f32.mxu0 0.0
        %2854 = vmatmul.mubr.f32.gmra.mxu0 %v1150
        %v2855 = vpop.f32.mrf.mxu0
        %v2856 = vadd.f32 0.0, %v2855
        %v2857 = vpop.f32.mrf.mxu0
        %v2858 = vadd.f32 0.0, %v2857
        %2859 = vmatprep.mubr.f32.mxu0 0.0
        %2860 = vmatmul.mubr.f32.gmra.mxu0 %v1153
        %v2861 = vpop.f32.mrf.mxu0
        %v2862 = vadd.f32 0.0, %v2861
        %v2863 = vpop.f32.mrf.mxu0
        %v2864 = vadd.f32 0.0, %v2863
        %2865 = vmatprep.mubr.f32.mxu0 0.0
        %2866 = vmatmul.mubr.f32.gmra.mxu0 %v1156
        %v2867 = vpop.f32.mrf.mxu0
        %v2868 = vadd.f32 0.0, %v2867
        %v2869 = vpop.f32.mrf.mxu0
        %v2870 = vadd.f32 0.0, %v2869
        %2871 = vmatprep.mubr.f32.mxu0 0.0
        %2872 = vmatmul.mubr.f32.gmra.mxu0 %v1159
        %v2873 = vpop.f32.mrf.mxu0
        %v2874 = vadd.f32 0.0, %v2873
        %v2875 = vpop.f32.mrf.mxu0
        %v2876 = vadd.f32 0.0, %v2875
        %2877 = vmatprep.mubr.f32.mxu0 0.0
        %2878 = vmatmul.mubr.f32.gmra.mxu0 %v1162
        %v2879 = vpop.f32.mrf.mxu0
        %v2880 = vadd.f32 0.0, %v2879
        %v2881 = vpop.f32.mrf.mxu0
        %v2882 = vadd.f32 0.0, %v2881
        %2883 = vmatprep.mubr.f32.mxu0 0.0
        %2884 = vmatmul.mubr.f32.gmra.mxu0 %v1165
        %v2885 = vpop.f32.mrf.mxu0
        %v2886 = vadd.f32 0.0, %v2885
        %v2887 = vpop.f32.mrf.mxu0
        %v2888 = vadd.f32 0.0, %v2887
        %2889 = vmatprep.mubr.f32.mxu0 0.0
        %2890 = vmatmul.mubr.f32.gmra.mxu0 %v1168
        %v2891 = vpop.f32.mrf.mxu0
        %v2892 = vadd.f32 0.0, %v2891
        %v2893 = vpop.f32.mrf.mxu0
        %v2894 = vadd.f32 0.0, %v2893
        %2895 = vmatprep.mubr.f32.mxu0 0.0
        %2896 = vmatmul.mubr.f32.gmra.mxu0 %v1171
        %v2897 = vpop.f32.mrf.mxu0
        %v2898 = vadd.f32 0.0, %v2897
        %v2899 = vpop.f32.mrf.mxu0
        %v2900 = vadd.f32 0.0, %v2899
        %2901 = vmatprep.mubr.f32.mxu0 0.0
        %2902 = vmatmul.mubr.f32.gmra.mxu0 %v1174
        %v2903 = vpop.f32.mrf.mxu0
        %v2904 = vadd.f32 0.0, %v2903
        %v2905 = vpop.f32.mrf.mxu0
        %v2906 = vadd.f32 0.0, %v2905
        %2907 = vmatprep.mubr.f32.mxu0 0.0
        %2908 = vmatmul.mubr.f32.gmra.mxu0 %v1177
        %v2909 = vpop.f32.mrf.mxu0
        %v2910 = vadd.f32 0.0, %v2909
        %v2911 = vpop.f32.mrf.mxu0
        %v2912 = vadd.f32 0.0, %v2911
        %2913 = vmatprep.mubr.f32.mxu0 0.0
        %2914 = vmatmul.mubr.f32.gmra.mxu0 %v1180
        %v2915 = vpop.f32.mrf.mxu0
        %v2916 = vadd.f32 0.0, %v2915
        %v2917 = vpop.f32.mrf.mxu0
        %v2918 = vadd.f32 0.0, %v2917
        %2919 = vmatprep.mubr.f32.mxu0 0.0
        %2920 = vmatmul.mubr.f32.gmra.mxu0 %v1183
        %v2921 = vpop.f32.mrf.mxu0
        %v2922 = vadd.f32 0.0, %v2921
        %v2923 = vpop.f32.mrf.mxu0
        %v2924 = vadd.f32 0.0, %v2923
        %2925 = vmatprep.mubr.f32.mxu0 0.0
        %2926 = vmatmul.mubr.f32.gmra.mxu0 %v1186
        %v2927 = vpop.f32.mrf.mxu0
        %v2928 = vadd.f32 0.0, %v2927
        %v2929 = vpop.f32.mrf.mxu0
        %v2930 = vadd.f32 0.0, %v2929
        %2931 = vmatprep.mubr.f32.mxu0 0.0
        %2932 = vmatmul.mubr.f32.gmra.mxu0 %v1189
        %v2933 = vpop.f32.mrf.mxu0
        %v2934 = vadd.f32 0.0, %v2933
        %v2935 = vpop.f32.mrf.mxu0
        %v2936 = vadd.f32 0.0, %v2935
        %2937 = vmatprep.mubr.f32.mxu0 0.0
        %2938 = vmatmul.mubr.f32.gmra.mxu0 %v1192
        %v2939 = vpop.f32.mrf.mxu0
        %v2940 = vadd.f32 0.0, %v2939
        %v2941 = vpop.f32.mrf.mxu0
        %v2942 = vadd.f32 0.0, %v2941
        %2943 = vmatprep.mubr.f32.mxu0 0.0
        %2944 = vmatmul.mubr.f32.gmra.mxu0 %v1195
        %v2945 = vpop.f32.mrf.mxu0
        %v2946 = vadd.f32 0.0, %v2945
        %v2947 = vpop.f32.mrf.mxu0
        %v2948 = vadd.f32 0.0, %v2947
        %2949 = vmatprep.mubr.f32.mxu0 0.0
        %2950 = vmatmul.mubr.f32.gmra.mxu0 %v1198
        %v2951 = vpop.f32.mrf.mxu0
        %v2952 = vadd.f32 0.0, %v2951
        %v2953 = vpop.f32.mrf.mxu0
        %v2954 = vadd.f32 0.0, %v2953
        %2955 = vmatprep.mubr.f32.mxu0 0.0
        %2956 = vmatmul.mubr.f32.gmra.mxu0 %v1201
        %v2957 = vpop.f32.mrf.mxu0
        %v2958 = vadd.f32 0.0, %v2957
        %v2959 = vpop.f32.mrf.mxu0
        %v2960 = vadd.f32 0.0, %v2959
        %2961 = vmatprep.mubr.f32.mxu0 0.0
        %2962 = vmatmul.mubr.f32.gmra.mxu0 %v1204
        %v2963 = vpop.f32.mrf.mxu0
        %v2964 = vadd.f32 0.0, %v2963
        %v2965 = vpop.f32.mrf.mxu0
        %v2966 = vadd.f32 0.0, %v2965
        %2967 = vmatprep.mubr.f32.mxu0 0.0
        %2968 = vmatmul.mubr.f32.gmra.mxu0 %v1207
        %v2969 = vpop.f32.mrf.mxu0
        %v2970 = vadd.f32 0.0, %v2969
        %v2971 = vpop.f32.mrf.mxu0
        %v2972 = vadd.f32 0.0, %v2971
        %2973 = vmatprep.mubr.f32.mxu0 0.0
        %2974 = vmatmul.mubr.f32.gmra.mxu0 %v1210
        %v2975 = vpop.f32.mrf.mxu0
        %v2976 = vadd.f32 0.0, %v2975
        %v2977 = vpop.f32.mrf.mxu0
        %v2978 = vadd.f32 0.0, %v2977
        %2979 = vmatprep.mubr.f32.mxu0 0.0
        %2980 = vmatmul.mubr.f32.gmra.mxu0 %v1213
        %v2981 = vpop.f32.mrf.mxu0
        %v2982 = vadd.f32 0.0, %v2981
        %v2983 = vpop.f32.mrf.mxu0
        %v2984 = vadd.f32 0.0, %v2983
        %2985 = vmatprep.mubr.f32.mxu0 0.0
        %2986 = vmatmul.mubr.f32.gmra.mxu0 %v1216
        %v2987 = vpop.f32.mrf.mxu0
        %v2988 = vadd.f32 0.0, %v2987
        %v2989 = vpop.f32.mrf.mxu0
        %v2990 = vadd.f32 0.0, %v2989
        %2991 = vmatprep.mubr.f32.mxu0 0.0
        %2992 = vmatmul.mubr.f32.gmra.mxu0 %v1219
        %v2993 = vpop.f32.mrf.mxu0
        %v2994 = vadd.f32 0.0, %v2993
        %v2995 = vpop.f32.mrf.mxu0
        %v2996 = vadd.f32 0.0, %v2995
        %2997 = vmatprep.mubr.f32.mxu0 0.0
        %2998 = vmatmul.mubr.f32.gmra.mxu0 %v1222
        %v2999 = vpop.f32.mrf.mxu0
        %v3000 = vadd.f32 0.0, %v2999
        %v3001 = vpop.f32.mrf.mxu0
        %v3002 = vadd.f32 0.0, %v3001
        %3003 = vmatprep.mubr.f32.mxu0 0.0
        %3004 = vmatmul.mubr.f32.gmra.mxu0 %v1225
        %v3005 = vpop.f32.mrf.mxu0
        %v3006 = vadd.f32 0.0, %v3005
        %v3007 = vpop.f32.mrf.mxu0
        %v3008 = vadd.f32 0.0, %v3007
        %3009 = vmatprep.mubr.f32.mxu0 0.0
        %3010 = vmatmul.mubr.f32.gmra.mxu0 %v1228
        %v3011 = vpop.f32.mrf.mxu0
        %v3012 = vadd.f32 0.0, %v3011
        %v3013 = vpop.f32.mrf.mxu0
        %v3014 = vadd.f32 0.0, %v3013
        %3015 = vmatprep.mubr.f32.mxu0 0.0
        %3016 = vmatmul.mubr.f32.gmra.mxu0 %v1231
        %v3017 = vpop.f32.mrf.mxu0
        %v3018 = vadd.f32 0.0, %v3017
        %v3019 = vpop.f32.mrf.mxu0
        %v3020 = vadd.f32 0.0, %v3019
        %3021 = vmatprep.mubr.f32.mxu0 0.0
        %3022 = vmatmul.mubr.f32.gmra.mxu0 %v1234
        %v3023 = vpop.f32.mrf.mxu0
        %v3024 = vadd.f32 0.0, %v3023
        %v3025 = vpop.f32.mrf.mxu0
        %v3026 = vadd.f32 0.0, %v3025
        %3027 = vmatprep.mubr.f32.mxu0 0.0
        %3028 = vmatmul.mubr.f32.gmra.mxu0 %v1237
        %v3029 = vpop.f32.mrf.mxu0
        %v3030 = vadd.f32 0.0, %v3029
        %v3031 = vpop.f32.mrf.mxu0
        %v3032 = vadd.f32 0.0, %v3031
        %3033 = vmatprep.mubr.f32.mxu0 0.0
        %3034 = vmatmul.mubr.f32.gmra.mxu0 %v1240
        %v3035 = vpop.f32.mrf.mxu0
        %v3036 = vadd.f32 0.0, %v3035
        %v3037 = vpop.f32.mrf.mxu0
        %v3038 = vadd.f32 0.0, %v3037
        %3039 = vmatprep.mubr.f32.mxu0 0.0
        %3040 = vmatmul.mubr.f32.gmra.mxu0 %v1243
        %v3041 = vpop.f32.mrf.mxu0
        %v3042 = vadd.f32 0.0, %v3041
        %v3043 = vpop.f32.mrf.mxu0
        %v3044 = vadd.f32 0.0, %v3043
        %3045 = vmatprep.mubr.f32.mxu0 0.0
        %3046 = vmatmul.mubr.f32.gmra.mxu0 %v1246
        %v3047 = vpop.f32.mrf.mxu0
        %v3048 = vadd.f32 0.0, %v3047
        %v3049 = vpop.f32.mrf.mxu0
        %v3050 = vadd.f32 0.0, %v3049
        %3051 = vmatprep.mubr.f32.mxu0 0.0
        %3052 = vmatmul.mubr.f32.gmra.mxu0 %v1249
        %v3053 = vpop.f32.mrf.mxu0
        %v3054 = vadd.f32 0.0, %v3053
        %v3055 = vpop.f32.mrf.mxu0
        %v3056 = vadd.f32 0.0, %v3055
        %3057 = vmatprep.mubr.f32.mxu0 0.0
        %3058 = vmatmul.mubr.f32.gmra.mxu0 %v1252
        %v3059 = vpop.f32.mrf.mxu0
        %v3060 = vadd.f32 0.0, %v3059
        %v3061 = vpop.f32.mrf.mxu0
        %v3062 = vadd.f32 0.0, %v3061
        %3063 = vmatprep.mubr.f32.mxu0 0.0
        %3064 = vmatmul.mubr.f32.gmra.mxu0 %v1255
        %v3065 = vpop.f32.mrf.mxu0
        %v3066 = vadd.f32 0.0, %v3065
        %v3067 = vpop.f32.mrf.mxu0
        %v3068 = vadd.f32 0.0, %v3067
        %3069 = vmatprep.mubr.f32.mxu0 0.0
        %3070 = vmatmul.mubr.f32.gmra.mxu0 %v1258
        %v3071 = vpop.f32.mrf.mxu0
        %v3072 = vadd.f32 0.0, %v3071
        %v3073 = vpop.f32.mrf.mxu0
        %v3074 = vadd.f32 0.0, %v3073
        %3075 = vmatprep.mubr.f32.mxu0 0.0
        %3076 = vmatmul.mubr.f32.gmra.mxu0 %v1261
        %v3077 = vpop.f32.mrf.mxu0
        %v3078 = vadd.f32 0.0, %v3077
        %v3079 = vpop.f32.mrf.mxu0
        %v3080 = vadd.f32 0.0, %v3079
        %3081 = vmatprep.mubr.f32.mxu0 0.0
        %3082 = vmatmul.mubr.f32.gmra.mxu0 %v1264
        %v3083 = vpop.f32.mrf.mxu0
        %v3084 = vadd.f32 0.0, %v3083
        %v3085 = vpop.f32.mrf.mxu0
        %v3086 = vadd.f32 0.0, %v3085
        %3087 = vmatprep.mubr.f32.mxu0 0.0
        %3088 = vmatmul.mubr.f32.gmra.mxu0 %v1267
        %v3089 = vpop.f32.mrf.mxu0
        %v3090 = vadd.f32 0.0, %v3089
        %v3091 = vpop.f32.mrf.mxu0
        %v3092 = vadd.f32 0.0, %v3091
        %3093 = vmatprep.mubr.f32.mxu0 0.0
        %3094 = vmatmul.mubr.f32.gmra.mxu0 %v1270
        %v3095 = vpop.f32.mrf.mxu0
        %v3096 = vadd.f32 0.0, %v3095
        %v3097 = vpop.f32.mrf.mxu0
        %v3098 = vadd.f32 0.0, %v3097
        %3099 = vmatprep.mubr.f32.mxu0 0.0
        %3100 = vmatmul.mubr.f32.gmra.mxu0 %v1273
        %v3101 = vpop.f32.mrf.mxu0
        %v3102 = vadd.f32 0.0, %v3101
        %v3103 = vpop.f32.mrf.mxu0
        %v3104 = vadd.f32 0.0, %v3103
        %3105 = vmatprep.mubr.f32.mxu0 0.0
        %3106 = vmatmul.mubr.f32.gmra.mxu0 %v1276
        %v3107 = vpop.f32.mrf.mxu0
        %v3108 = vadd.f32 0.0, %v3107
        %v3109 = vpop.f32.mrf.mxu0
        %v3110 = vadd.f32 0.0, %v3109
        %3111 = vmatprep.mubr.f32.mxu0 0.0
        %3112 = vmatmul.mubr.f32.gmra.mxu0 %v1279
        %v3113 = vpop.f32.mrf.mxu0
        %v3114 = vadd.f32 0.0, %v3113
        %v3115 = vpop.f32.mrf.mxu0
        %v3116 = vadd.f32 0.0, %v3115
        %3117 = vmatprep.mubr.f32.mxu0 0.0
        %3118 = vmatmul.mubr.f32.gmra.mxu0 %v1282
        %v3119 = vpop.f32.mrf.mxu0
        %v3120 = vadd.f32 0.0, %v3119
        %v3121 = vpop.f32.mrf.mxu0
        %v3122 = vadd.f32 0.0, %v3121
        %3123 = vmatprep.mubr.f32.mxu0 0.0
        %3124 = vmatmul.mubr.f32.gmra.mxu0 %v1285
        %v3125 = vpop.f32.mrf.mxu0
        %v3126 = vadd.f32 0.0, %v3125
        %v3127 = vpop.f32.mrf.mxu0
        %v3128 = vadd.f32 0.0, %v3127
        %3129 = vmatprep.mubr.f32.mxu0 0.0
        %3130 = vmatmul.mubr.f32.gmra.mxu0 %v1288
        %v3131 = vpop.f32.mrf.mxu0
        %v3132 = vadd.f32 0.0, %v3131
        %v3133 = vpop.f32.mrf.mxu0
        %v3134 = vadd.f32 0.0, %v3133
        %3135 = vmatprep.mubr.f32.mxu0 0.0
        %3136 = vmatmul.mubr.f32.gmra.mxu0 %v1291
        %v3137 = vpop.f32.mrf.mxu0
        %v3138 = vadd.f32 0.0, %v3137
        %v3139 = vpop.f32.mrf.mxu0
        %v3140 = vadd.f32 0.0, %v3139
        %3141 = vmatprep.mubr.f32.mxu0 0.0
        %3142 = vmatmul.mubr.f32.gmra.mxu0 %v1294
        %v3143 = vpop.f32.mrf.mxu0
        %v3144 = vadd.f32 0.0, %v3143
        %v3145 = vpop.f32.mrf.mxu0
        %v3146 = vadd.f32 0.0, %v3145
        %3147 = vmatprep.mubr.f32.mxu0 0.0
        %3148 = vmatmul.mubr.f32.gmra.mxu0 %v1297
        %v3149 = vpop.f32.mrf.mxu0
        %v3150 = vadd.f32 0.0, %v3149
        %v3151 = vpop.f32.mrf.mxu0
        %v3152 = vadd.f32 0.0, %v3151
        %3153 = vmatprep.mubr.f32.mxu0 0.0
        %3154 = vmatmul.mubr.f32.gmra.mxu0 %v1300
        %v3155 = vpop.f32.mrf.mxu0
        %v3156 = vadd.f32 0.0, %v3155
        %v3157 = vpop.f32.mrf.mxu0
        %v3158 = vadd.f32 0.0, %v3157
        %3159 = vmatprep.mubr.f32.mxu0 0.0
        %3160 = vmatmul.mubr.f32.gmra.mxu0 %v1303
        %v3161 = vpop.f32.mrf.mxu0
        %v3162 = vadd.f32 0.0, %v3161
        %v3163 = vpop.f32.mrf.mxu0
        %v3164 = vadd.f32 0.0, %v3163
        %3165 = vmatprep.mubr.f32.mxu0 0.0
        %3166 = vmatmul.mubr.f32.gmra.mxu0 %v1306
        %v3167 = vpop.f32.mrf.mxu0
        %v3168 = vadd.f32 0.0, %v3167
        %v3169 = vpop.f32.mrf.mxu0
        %v3170 = vadd.f32 0.0, %v3169
        %3171 = vmatprep.mubr.f32.mxu0 0.0
        %3172 = vmatmul.mubr.f32.gmra.mxu0 %v1309
        %v3173 = vpop.f32.mrf.mxu0
        %v3174 = vadd.f32 0.0, %v3173
        %v3175 = vpop.f32.mrf.mxu0
        %v3176 = vadd.f32 0.0, %v3175
        %3177 = vmatprep.mubr.f32.mxu0 0.0
        %3178 = vmatmul.mubr.f32.gmra.mxu0 %v1312
        %v3179 = vpop.f32.mrf.mxu0
        %v3180 = vadd.f32 0.0, %v3179
        %v3181 = vpop.f32.mrf.mxu0
        %v3182 = vadd.f32 0.0, %v3181
        %3183 = vmatprep.mubr.f32.mxu0 0.0
        %3184 = vmatmul.mubr.f32.gmra.mxu0 %v1315
        %v3185 = vpop.f32.mrf.mxu0
        %v3186 = vadd.f32 0.0, %v3185
        %v3187 = vpop.f32.mrf.mxu0
        %v3188 = vadd.f32 0.0, %v3187
        %3189 = vmatprep.mubr.f32.mxu0 0.0
        %3190 = vmatmul.mubr.f32.gmra.mxu0 %v1318
        %v3191 = vpop.f32.mrf.mxu0
        %v3192 = vadd.f32 0.0, %v3191
        %v3193 = vpop.f32.mrf.mxu0
        %v3194 = vadd.f32 0.0, %v3193
        %3195 = vmatprep.mubr.f32.mxu0 0.0
        %3196 = vmatmul.mubr.f32.gmra.mxu0 %v1321
        %v3197 = vpop.f32.mrf.mxu0
        %v3198 = vadd.f32 0.0, %v3197
        %v3199 = vpop.f32.mrf.mxu0
        %v3200 = vadd.f32 0.0, %v3199
        %3201 = vmatprep.mubr.f32.mxu0 0.0
        %3202 = vmatmul.mubr.f32.gmra.mxu0 %v1324
        %v3203 = vpop.f32.mrf.mxu0
        %v3204 = vadd.f32 0.0, %v3203
        %v3205 = vpop.f32.mrf.mxu0
        %v3206 = vadd.f32 0.0, %v3205
        %3207 = vmatprep.mubr.f32.mxu0 0.0
        %3208 = vmatmul.mubr.f32.gmra.mxu0 %v1327
        %v3209 = vpop.f32.mrf.mxu0
        %v3210 = vadd.f32 0.0, %v3209
        %v3211 = vpop.f32.mrf.mxu0
        %v3212 = vadd.f32 0.0, %v3211
        %3213 = vmatprep.mubr.f32.mxu0 0.0
        %3214 = vmatmul.mubr.f32.gmra.mxu0 %v1330
        %v3215 = vpop.f32.mrf.mxu0
        %v3216 = vadd.f32 0.0, %v3215
        %v3217 = vpop.f32.mrf.mxu0
        %v3218 = vadd.f32 0.0, %v3217
        %3219 = vmatprep.mubr.f32.mxu0 0.0
        %3220 = vmatmul.mubr.f32.gmra.mxu0 %v1333
        %v3221 = vpop.f32.mrf.mxu0
        %v3222 = vadd.f32 0.0, %v3221
        %v3223 = vpop.f32.mrf.mxu0
        %v3224 = vadd.f32 0.0, %v3223
        %3225 = vmatprep.mubr.f32.mxu0 0.0
        %3226 = vmatmul.mubr.f32.gmra.mxu0 %v1336
        %v3227 = vpop.f32.mrf.mxu0
        %v3228 = vadd.f32 0.0, %v3227
        %v3229 = vpop.f32.mrf.mxu0
        %v3230 = vadd.f32 0.0, %v3229
        %3231 = vmatprep.mubr.f32.mxu0 0.0
        %3232 = vmatmul.mubr.f32.gmra.mxu0 %v1339
        %v3233 = vpop.f32.mrf.mxu0
        %v3234 = vadd.f32 0.0, %v3233
        %v3235 = vpop.f32.mrf.mxu0
        %v3236 = vadd.f32 0.0, %v3235
        %3237 = vmatprep.mubr.f32.mxu0 0.0
        %3238 = vmatmul.mubr.f32.gmra.mxu0 %v1342
        %v3239 = vpop.f32.mrf.mxu0
        %v3240 = vadd.f32 0.0, %v3239
        %v3241 = vpop.f32.mrf.mxu0
        %v3242 = vadd.f32 0.0, %v3241
        %3243 = vmatprep.mubr.f32.mxu0 0.0
        %3244 = vmatmul.mubr.f32.gmra.mxu0 %v1345
        %v3245 = vpop.f32.mrf.mxu0
        %v3246 = vadd.f32 0.0, %v3245
        %v3247 = vpop.f32.mrf.mxu0
        %v3248 = vadd.f32 0.0, %v3247
        %3249 = vmatprep.mubr.f32.mxu0 0.0
        %3250 = vmatmul.mubr.f32.gmra.mxu0 %v1348
        %v3251 = vpop.f32.mrf.mxu0
        %v3252 = vadd.f32 0.0, %v3251
        %v3253 = vpop.f32.mrf.mxu0
        %v3254 = vadd.f32 0.0, %v3253
        %3255 = vmatprep.mubr.f32.mxu0 0.0
        %3256 = vmatmul.mubr.f32.gmra.mxu0 %v1351
        %v3257 = vpop.f32.mrf.mxu0
        %v3258 = vadd.f32 0.0, %v3257
        %v3259 = vpop.f32.mrf.mxu0
        %v3260 = vadd.f32 0.0, %v3259
        %3261 = vmatprep.mubr.f32.mxu0 0.0
        %3262 = vmatmul.mubr.f32.gmra.mxu0 %v1354
        %v3263 = vpop.f32.mrf.mxu0
        %v3264 = vadd.f32 0.0, %v3263
        %v3265 = vpop.f32.mrf.mxu0
        %v3266 = vadd.f32 0.0, %v3265
        %3267 = vmatprep.mubr.f32.mxu0 0.0
        %3268 = vmatmul.mubr.f32.gmra.mxu0 %v1357
        %v3269 = vpop.f32.mrf.mxu0
        %v3270 = vadd.f32 0.0, %v3269
        %v3271 = vpop.f32.mrf.mxu0
        %v3272 = vadd.f32 0.0, %v3271
        %3273 = vmatprep.mubr.f32.mxu0 0.0
        %3274 = vmatmul.mubr.f32.gmra.mxu0 %v1360
        %v3275 = vpop.f32.mrf.mxu0
        %v3276 = vadd.f32 0.0, %v3275
        %v3277 = vpop.f32.mrf.mxu0
        %v3278 = vadd.f32 0.0, %v3277
        %3279 = vmatprep.mubr.f32.mxu0 0.0
        %3280 = vmatmul.mubr.f32.gmra.mxu0 %v1363
        %v3281 = vpop.f32.mrf.mxu0
        %v3282 = vadd.f32 0.0, %v3281
        %v3283 = vpop.f32.mrf.mxu0
        %v3284 = vadd.f32 0.0, %v3283
        %3285 = vmatprep.mubr.f32.mxu0 0.0
        %3286 = vmatmul.mubr.f32.gmra.mxu0 %v1366
        %v3287 = vpop.f32.mrf.mxu0
        %v3288 = vadd.f32 0.0, %v3287
        %v3289 = vpop.f32.mrf.mxu0
        %v3290 = vadd.f32 0.0, %v3289
        %3291 = vmatprep.mubr.f32.mxu0 0.0
        %3292 = vmatmul.mubr.f32.gmra.mxu0 %v1369
        %v3293 = vpop.f32.mrf.mxu0
        %v3294 = vadd.f32 0.0, %v3293
        %v3295 = vpop.f32.mrf.mxu0
        %v3296 = vadd.f32 0.0, %v3295
        %3297 = vmatprep.mubr.f32.mxu0 0.0
        %3298 = vmatmul.mubr.f32.gmra.mxu0 %v1372
        %v3299 = vpop.f32.mrf.mxu0
        %v3300 = vadd.f32 0.0, %v3299
        %v3301 = vpop.f32.mrf.mxu0
        %v3302 = vadd.f32 0.0, %v3301
        %3303 = vmatprep.mubr.f32.mxu0 0.0
        %3304 = vmatmul.mubr.f32.gmra.mxu0 %v1375
        %v3305 = vpop.f32.mrf.mxu0
        %v3306 = vadd.f32 0.0, %v3305
        %v3307 = vpop.f32.mrf.mxu0
        %v3308 = vadd.f32 0.0, %v3307
        %3309 = vmatprep.mubr.f32.mxu0 0.0
        %3310 = vmatmul.mubr.f32.gmra.mxu0 %v1378
        %v3311 = vpop.f32.mrf.mxu0
        %v3312 = vadd.f32 0.0, %v3311
        %v3313 = vpop.f32.mrf.mxu0
        %v3314 = vadd.f32 0.0, %v3313
        %3315 = vmatprep.mubr.f32.mxu0 0.0
        %3316 = vmatmul.mubr.f32.gmra.mxu0 %v1381
        %v3317 = vpop.f32.mrf.mxu0
        %v3318 = vadd.f32 0.0, %v3317
        %v3319 = vpop.f32.mrf.mxu0
        %v3320 = vadd.f32 0.0, %v3319
        %3321 = vmatprep.mubr.f32.mxu0 0.0
        %3322 = vmatmul.mubr.f32.gmra.mxu0 %v1384
        %v3323 = vpop.f32.mrf.mxu0
        %v3324 = vadd.f32 0.0, %v3323
        %v3325 = vpop.f32.mrf.mxu0
        %v3326 = vadd.f32 0.0, %v3325
        %3327 = vmatprep.mubr.f32.mxu0 0.0
        %3328 = vmatmul.mubr.f32.gmra.mxu0 %v1387
        %v3329 = vpop.f32.mrf.mxu0
        %v3330 = vadd.f32 0.0, %v3329
        %v3331 = vpop.f32.mrf.mxu0
        %v3332 = vadd.f32 0.0, %v3331
        %3333 = vmatprep.mubr.f32.mxu0 0.0
        %3334 = vmatmul.mubr.f32.gmra.mxu0 %v1390
        %v3335 = vpop.f32.mrf.mxu0
        %v3336 = vadd.f32 0.0, %v3335
        %v3337 = vpop.f32.mrf.mxu0
        %v3338 = vadd.f32 0.0, %v3337
        %3339 = vmatprep.mubr.f32.mxu0 0.0
        %3340 = vmatmul.mubr.f32.gmra.mxu0 %v1393
        %v3341 = vpop.f32.mrf.mxu0
        %v3342 = vadd.f32 0.0, %v3341
        %v3343 = vpop.f32.mrf.mxu0
        %v3344 = vadd.f32 0.0, %v3343
        %3345 = vmatprep.mubr.f32.mxu0 0.0
        %3346 = vmatmul.mubr.f32.gmra.mxu0 %v2712
        %v3347 = vpop.f32.mrf.mxu0
        %v3348 = vadd.f32 0.0, %v3347
        %v3349 = vpop.f32.mrf.mxu0
        %v3350 = vadd.f32 0.0, %v3349
        %3351 = vmatprep.mubr.f32.mxu0 0.0
        %3352 = vmatmul.mubr.f32.gmra.mxu0 %v2715
        %v3353 = vpop.f32.mrf.mxu0
        %v3354 = vadd.f32 0.0, %v3353
        %v3355 = vpop.f32.mrf.mxu0
        %v3356 = vadd.f32 0.0, %v3355
        %3357 = vmatprep.mubr.f32.mxu0 0.0
        %3358 = vmatmul.mubr.f32.gmra.mxu0 %v2718
        %v3359 = vpop.f32.mrf.mxu0
        %v3360 = vadd.f32 0.0, %v3359
        %v3361 = vpop.f32.mrf.mxu0
        %v3362 = vadd.f32 0.0, %v3361
        %3363 = vmatprep.mubr.f32.mxu0 0.0
        %3364 = vmatmul.mubr.f32.gmra.mxu0 %v2721
        %v3365 = vpop.f32.mrf.mxu0
        %v3366 = vadd.f32 0.0, %v3365
        %v3367 = vpop.f32.mrf.mxu0
        %v3368 = vadd.f32 0.0, %v3367
        %3369 = vdwg.mxu0
        %v3370 = vadd.f32 %v2128, %v2796
        %v3371 = vadd.f32 %v2130, %v2798
        %v3372 = vadd.f32 %v2134, %v2802
        %v3373 = vadd.f32 %v2136, %v2804
        %v3374 = vadd.f32 %v2140, %v2808
        %v3375 = vadd.f32 %v2142, %v2810
        %v3376 = vadd.f32 %v2146, %v2814
        %v3377 = vadd.f32 %v2148, %v2816
        %v3378 = vadd.f32 %v2152, %v2820
        %v3379 = vadd.f32 %v2154, %v2822
        %v3380 = vadd.f32 %v2158, %v2826
        %v3381 = vadd.f32 %v2160, %v2828
        %v3382 = vadd.f32 %v2164, %v2832
        %v3383 = vadd.f32 %v2166, %v2834
        %v3384 = vadd.f32 %v2170, %v2838
        %v3385 = vadd.f32 %v2172, %v2840
        %v3386 = vadd.f32 %v2176, %v2844
        %v3387 = vadd.f32 %v2178, %v2846
        %v3388 = vadd.f32 %v2182, %v2850
        %v3389 = vadd.f32 %v2184, %v2852
        %v3390 = vadd.f32 %v2188, %v2856
        %v3391 = vadd.f32 %v2190, %v2858
        %v3392 = vadd.f32 %v2194, %v2862
        %v3393 = vadd.f32 %v2196, %v2864
        %v3394 = vadd.f32 %v2200, %v2868
        %v3395 = vadd.f32 %v2202, %v2870
        %v3396 = vadd.f32 %v2206, %v2874
        %v3397 = vadd.f32 %v2208, %v2876
        %v3398 = vadd.f32 %v2212, %v2880
        %v3399 = vadd.f32 %v2214, %v2882
        %v3400 = vadd.f32 %v2218, %v2886
        %v3401 = vadd.f32 %v2220, %v2888
        %v3402 = vadd.f32 %v2224, %v2892
        %v3403 = vadd.f32 %v2226, %v2894
        %v3404 = vadd.f32 %v2230, %v2898
        %v3405 = vadd.f32 %v2232, %v2900
        %v3406 = vadd.f32 %v2236, %v2904
        %v3407 = vadd.f32 %v2238, %v2906
        %v3408 = vadd.f32 %v2242, %v2910
        %v3409 = vadd.f32 %v2244, %v2912
        %v3410 = vadd.f32 %v2248, %v2916
        %v3411 = vadd.f32 %v2250, %v2918
        %v3412 = vadd.f32 %v2254, %v2922
        %v3413 = vadd.f32 %v2256, %v2924
        %v3414 = vadd.f32 %v2260, %v2928
        %v3415 = vadd.f32 %v2262, %v2930
        %v3416 = vadd.f32 %v2266, %v2934
        %v3417 = vadd.f32 %v2268, %v2936
        %v3418 = vadd.f32 %v2272, %v2940
        %v3419 = vadd.f32 %v2274, %v2942
        %v3420 = vadd.f32 %v2278, %v2946
        %v3421 = vadd.f32 %v2280, %v2948
        %v3422 = vadd.f32 %v2284, %v2952
        %v3423 = vadd.f32 %v2286, %v2954
        %v3424 = vadd.f32 %v2290, %v2958
        %v3425 = vadd.f32 %v2292, %v2960
        %v3426 = vadd.f32 %v2296, %v2964
        %v3427 = vadd.f32 %v2298, %v2966
        %v3428 = vadd.f32 %v2302, %v2970
        %v3429 = vadd.f32 %v2304, %v2972
        %v3430 = vadd.f32 %v2308, %v2976
        %v3431 = vadd.f32 %v2310, %v2978
        %v3432 = vadd.f32 %v2314, %v2982
        %v3433 = vadd.f32 %v2316, %v2984
        %v3434 = vadd.f32 %v2320, %v2988
        %v3435 = vadd.f32 %v2322, %v2990
        %v3436 = vadd.f32 %v2326, %v2994
        %v3437 = vadd.f32 %v2328, %v2996
        %v3438 = vadd.f32 %v2332, %v3000
        %v3439 = vadd.f32 %v2334, %v3002
        %v3440 = vadd.f32 %v2338, %v3006
        %v3441 = vadd.f32 %v2340, %v3008
        %v3442 = vadd.f32 %v2344, %v3012
        %v3443 = vadd.f32 %v2346, %v3014
        %v3444 = vadd.f32 %v2350, %v3018
        %v3445 = vadd.f32 %v2352, %v3020
        %v3446 = vadd.f32 %v2356, %v3024
        %v3447 = vadd.f32 %v2358, %v3026
        %v3448 = vadd.f32 %v2362, %v3030
        %v3449 = vadd.f32 %v2364, %v3032
        %v3450 = vadd.f32 %v2368, %v3036
        %v3451 = vadd.f32 %v2370, %v3038
        %v3452 = vadd.f32 %v2374, %v3042
        %v3453 = vadd.f32 %v2376, %v3044
        %v3454 = vadd.f32 %v2380, %v3048
        %v3455 = vadd.f32 %v2382, %v3050
        %v3456 = vadd.f32 %v2386, %v3054
        %v3457 = vadd.f32 %v2388, %v3056
        %v3458 = vadd.f32 %v2392, %v3060
        %v3459 = vadd.f32 %v2394, %v3062
        %v3460 = vadd.f32 %v2398, %v3066
        %v3461 = vadd.f32 %v2400, %v3068
        %v3462 = vadd.f32 %v2404, %v3072
        %v3463 = vadd.f32 %v2406, %v3074
        %v3464 = vadd.f32 %v2410, %v3078
        %v3465 = vadd.f32 %v2412, %v3080
        %v3466 = vadd.f32 %v2416, %v3084
        %v3467 = vadd.f32 %v2418, %v3086
        %v3468 = vadd.f32 %v2422, %v3090
        %v3469 = vadd.f32 %v2424, %v3092
        %v3470 = vadd.f32 %v2428, %v3096
        %v3471 = vadd.f32 %v2430, %v3098
        %v3472 = vadd.f32 %v2434, %v3102
        %v3473 = vadd.f32 %v2436, %v3104
        %v3474 = vadd.f32 %v2440, %v3108
        %v3475 = vadd.f32 %v2442, %v3110
        %v3476 = vadd.f32 %v2446, %v3114
        %v3477 = vadd.f32 %v2448, %v3116
        %v3478 = vadd.f32 %v2452, %v3120
        %v3479 = vadd.f32 %v2454, %v3122
        %v3480 = vadd.f32 %v2458, %v3126
        %v3481 = vadd.f32 %v2460, %v3128
        %v3482 = vadd.f32 %v2464, %v3132
        %v3483 = vadd.f32 %v2466, %v3134
        %v3484 = vadd.f32 %v2470, %v3138
        %v3485 = vadd.f32 %v2472, %v3140
        %v3486 = vadd.f32 %v2476, %v3144
        %v3487 = vadd.f32 %v2478, %v3146
        %v3488 = vadd.f32 %v2482, %v3150
        %v3489 = vadd.f32 %v2484, %v3152
        %v3490 = vadd.f32 %v2488, %v3156
        %v3491 = vadd.f32 %v2490, %v3158
        %v3492 = vadd.f32 %v2494, %v3162
        %v3493 = vadd.f32 %v2496, %v3164
        %v3494 = vadd.f32 %v2500, %v3168
        %v3495 = vadd.f32 %v2502, %v3170
        %v3496 = vadd.f32 %v2506, %v3174
        %v3497 = vadd.f32 %v2508, %v3176
        %v3498 = vadd.f32 %v2512, %v3180
        %v3499 = vadd.f32 %v2514, %v3182
        %v3500 = vadd.f32 %v2518, %v3186
        %v3501 = vadd.f32 %v2520, %v3188
        %v3502 = vadd.f32 %v2524, %v3192
        %v3503 = vadd.f32 %v2526, %v3194
        %v3504 = vadd.f32 %v2530, %v3198
        %v3505 = vadd.f32 %v2532, %v3200
        %v3506 = vadd.f32 %v2536, %v3204
        %v3507 = vadd.f32 %v2538, %v3206
        %v3508 = vadd.f32 %v2542, %v3210
        %v3509 = vadd.f32 %v2544, %v3212
        %v3510 = vadd.f32 %v2548, %v3216
        %v3511 = vadd.f32 %v2550, %v3218
        %v3512 = vadd.f32 %v2554, %v3222
        %v3513 = vadd.f32 %v2556, %v3224
        %v3514 = vadd.f32 %v2560, %v3228
        %v3515 = vadd.f32 %v2562, %v3230
        %v3516 = vadd.f32 %v2566, %v3234
        %v3517 = vadd.f32 %v2568, %v3236
        %v3518 = vadd.f32 %v2572, %v3240
        %v3519 = vadd.f32 %v2574, %v3242
        %v3520 = vadd.f32 %v2578, %v3246
        %v3521 = vadd.f32 %v2580, %v3248
        %v3522 = vadd.f32 %v2584, %v3252
        %v3523 = vadd.f32 %v2586, %v3254
        %v3524 = vadd.f32 %v2590, %v3258
        %v3525 = vadd.f32 %v2592, %v3260
        %v3526 = vadd.f32 %v2596, %v3264
        %v3527 = vadd.f32 %v2598, %v3266
        %v3528 = vadd.f32 %v2602, %v3270
        %v3529 = vadd.f32 %v2604, %v3272
        %v3530 = vadd.f32 %v2608, %v3276
        %v3531 = vadd.f32 %v2610, %v3278
        %v3532 = vadd.f32 %v2614, %v3282
        %v3533 = vadd.f32 %v2616, %v3284
        %v3534 = vadd.f32 %v2620, %v3288
        %v3535 = vadd.f32 %v2622, %v3290
        %v3536 = vadd.f32 %v2626, %v3294
        %v3537 = vadd.f32 %v2628, %v3296
        %v3538 = vadd.f32 %v2632, %v3300
        %v3539 = vadd.f32 %v2634, %v3302
        %v3540 = vadd.f32 %v2638, %v3306
        %v3541 = vadd.f32 %v2640, %v3308
        %v3542 = vadd.f32 %v2644, %v3312
        %v3543 = vadd.f32 %v2646, %v3314
        %v3544 = vadd.f32 %v2650, %v3318
        %v3545 = vadd.f32 %v2652, %v3320
        %v3546 = vadd.f32 %v2656, %v3324
        %v3547 = vadd.f32 %v2658, %v3326
        %v3548 = vadd.f32 %v2662, %v3330
        %v3549 = vadd.f32 %v2664, %v3332
        %v3550 = vadd.f32 %v2668, %v3336
        %v3551 = vadd.f32 %v2670, %v3338
        %v3552 = vadd.f32 %v2674, %v3342
        %v3553 = vadd.f32 %v2676, %v3344
        %v3554 = vadd.f32 %v2680, %v3348
        %v3555 = vadd.f32 %v2682, %v3350
        %v3556 = vadd.f32 %v2686, %v3354
        %v3557 = vadd.f32 %v2688, %v3356
        %v3558 = vadd.f32 %v2692, %v3360
        %v3559 = vadd.f32 %v2694, %v3362
        %v3560 = vadd.f32 %v2698, %v3366
        %v3561 = vadd.f32 %v2700, %v3368
        %s3562 = scalar_lea.vmem %s1, 192
        %v3563 = vld [vmem:[%s3562] sm:$0xff]
        %v3564 = vld [vmem:[%s3562 + $0x8] sm:$0xff]
        %v3565 = vld [vmem:[%s3562 + $0x10] sm:$0xff]
        %v3566 = vld [vmem:[%s3562 + $0x18] sm:$0xff]
        %v3567 = vld [vmem:[%s3562 + $0x20] sm:$0xff]
        %v3568 = vld [vmem:[%s3562 + $0x28] sm:$0xff]
        %v3569 = vld [vmem:[%s3562 + $0x30] sm:$0xf]
        %v3570 = vld [vmem:[%s3562 + $0x38] sm:$0xf]
        %v3572 = vsel %vm1106, %v1081, 0
        %v3575 = vsel %vm1106, %v1082, 0
        %v3578 = vsel %vm1106, %v1083, 0
        %v3581 = vsel %vm1106, %v1084, 0
        %v3584 = vsel %vm1395, %v3569, 0
        %v3587 = vsel %vm1395, %v3570, 0
        %3589 = vmatprep.subr.mxu0 0.0
        %3590 = vmatpush1.msra.mxu0 0.0
        %3591 = vmatprep.subr.mxu0 0.0
        %3592 = vmatpush1.msra.mxu0 0.0
        %3593 = vmatprep.subr.mxu0 0.0
        %3594 = vmatpush1.msra.mxu0 0.0
        %3595 = vmatprep.subr.mxu0 0.0
        %3596 = vmatpush1.msra.mxu0 0.0
        %3597 = vmatprep.subr.mxu0 0.0
        %3598 = vmatpush1.msra.mxu0 0.0
        %3599 = vmatprep.subr.mxu0 0.0
        %3600 = vmatpush1.msra.mxu0 0.0
        %3601 = vmatprep.subr.mxu0 0.0
        %3602 = vmatpush1.msra.mxu0 0.0
        %3603 = vmatprep.subr.mxu0 0.0
        %3604 = vmatpush1.msra.mxu0 0.0
        %3605 = vmatprep.subr.mxu0 0.0
        %3606 = vmatpush1.msra.mxu0 0.0
        %3607 = vmatprep.subr.mxu0 0.0
        %3608 = vmatpush1.msra.mxu0 0.0
        %3609 = vmatprep.subr.mxu0 0.0
        %3610 = vmatpush1.msra.mxu0 0.0
        %3611 = vmatprep.subr.mxu0 0.0
        %3612 = vmatpush1.msra.mxu0 0.0
        %3613 = vmatprep.subr.mxu0 %v3587
        %3614 = vmatpush1.msra.mxu0 %v3584
        %3615 = vmatprep.subr.mxu0 %v3568
        %3616 = vmatpush1.msra.mxu0 %v3567
        %3617 = vmatprep.subr.mxu0 %v3566
        %3618 = vmatpush1.msra.mxu0 %v3565
        %3619 = vmatprep.subr.mxu0 %v3564
        %3620 = vmatpush1.msra.mxu0 %v3563
        %3621 = vmatprep.subr.mxu0 0.0
        %3622 = vmatpush2.msra.mxu0 0.0
        %3623 = vmatprep.subr.mxu0 0.0
        %3624 = vmatpush2.msra.mxu0 0.0
        %3625 = vmatprep.subr.mxu0 0.0
        %3626 = vmatpush2.msra.mxu0 0.0
        %3627 = vmatprep.subr.mxu0 0.0
        %3628 = vmatpush2.msra.mxu0 0.0
        %3629 = vmatprep.subr.mxu0 0.0
        %3630 = vmatpush2.msra.mxu0 0.0
        %3631 = vmatprep.subr.mxu0 0.0
        %3632 = vmatpush2.msra.mxu0 0.0
        %3633 = vmatprep.subr.mxu0 0.0
        %3634 = vmatpush2.msra.mxu0 0.0
        %3635 = vmatprep.subr.mxu0 0.0
        %3636 = vmatpush2.msra.mxu0 0.0
        %3637 = vmatprep.subr.mxu0 0.0
        %3638 = vmatpush2.msra.mxu0 0.0
        %3639 = vmatprep.subr.mxu0 0.0
        %3640 = vmatpush2.msra.mxu0 0.0
        %3641 = vmatprep.subr.mxu0 0.0
        %3642 = vmatpush2.msra.mxu0 0.0
        %3643 = vmatprep.subr.mxu0 0.0
        %3644 = vmatpush2.msra.mxu0 0.0
        %3645 = vmatprep.subr.mxu0 0.0
        %3646 = vmatpush2.msra.mxu0 0.0
        %3647 = vmatprep.subr.mxu0 0.0
        %3648 = vmatpush2.msra.mxu0 0.0
        %3649 = vmatprep.subr.mxu0 0.0
        %3650 = vmatpush2.msra.mxu0 0.0
        %3651 = vmatprep.subr.mxu0 0.0
        %3652 = vmatpush2.msra.mxu0 0.0
        %3653 = vmatprep.mubr.f32.mxu0 0.0
        %3654 = vmatmul.mubr.f32.gmra.mxu0 %v1132
        %v3655 = vpop.f32.mrf.mxu0
        %v3656 = vadd.f32 0.0, %v3655
        %v3657 = vpop.f32.mrf.mxu0
        %v3658 = vadd.f32 0.0, %v3657
        %3659 = vmatprep.mubr.f32.mxu0 0.0
        %3660 = vmatmul.mubr.f32.gmra.mxu0 %v1135
        %v3661 = vpop.f32.mrf.mxu0
        %v3662 = vadd.f32 0.0, %v3661
        %v3663 = vpop.f32.mrf.mxu0
        %v3664 = vadd.f32 0.0, %v3663
        %3665 = vmatprep.mubr.f32.mxu0 0.0
        %3666 = vmatmul.mubr.f32.gmra.mxu0 %v1138
        %v3667 = vpop.f32.mrf.mxu0
        %v3668 = vadd.f32 0.0, %v3667
        %v3669 = vpop.f32.mrf.mxu0
        %v3670 = vadd.f32 0.0, %v3669
        %3671 = vmatprep.mubr.f32.mxu0 0.0
        %3672 = vmatmul.mubr.f32.gmra.mxu0 %v1141
        %v3673 = vpop.f32.mrf.mxu0
        %v3674 = vadd.f32 0.0, %v3673
        %v3675 = vpop.f32.mrf.mxu0
        %v3676 = vadd.f32 0.0, %v3675
        %3677 = vmatprep.mubr.f32.mxu0 0.0
        %3678 = vmatmul.mubr.f32.gmra.mxu0 %v1144
        %v3679 = vpop.f32.mrf.mxu0
        %v3680 = vadd.f32 0.0, %v3679
        %v3681 = vpop.f32.mrf.mxu0
        %v3682 = vadd.f32 0.0, %v3681
        %3683 = vmatprep.mubr.f32.mxu0 0.0
        %3684 = vmatmul.mubr.f32.gmra.mxu0 %v1147
        %v3685 = vpop.f32.mrf.mxu0
        %v3686 = vadd.f32 0.0, %v3685
        %v3687 = vpop.f32.mrf.mxu0
        %v3688 = vadd.f32 0.0, %v3687
        %3689 = vmatprep.mubr.f32.mxu0 0.0
        %3690 = vmatmul.mubr.f32.gmra.mxu0 %v1150
        %v3691 = vpop.f32.mrf.mxu0
        %v3692 = vadd.f32 0.0, %v3691
        %v3693 = vpop.f32.mrf.mxu0
        %v3694 = vadd.f32 0.0, %v3693
        %3695 = vmatprep.mubr.f32.mxu0 0.0
        %3696 = vmatmul.mubr.f32.gmra.mxu0 %v1153
        %v3697 = vpop.f32.mrf.mxu0
        %v3698 = vadd.f32 0.0, %v3697
        %v3699 = vpop.f32.mrf.mxu0
        %v3700 = vadd.f32 0.0, %v3699
        %3701 = vmatprep.mubr.f32.mxu0 0.0
        %3702 = vmatmul.mubr.f32.gmra.mxu0 %v1156
        %v3703 = vpop.f32.mrf.mxu0
        %v3704 = vadd.f32 0.0, %v3703
        %v3705 = vpop.f32.mrf.mxu0
        %v3706 = vadd.f32 0.0, %v3705
        %3707 = vmatprep.mubr.f32.mxu0 0.0
        %3708 = vmatmul.mubr.f32.gmra.mxu0 %v1159
        %v3709 = vpop.f32.mrf.mxu0
        %v3710 = vadd.f32 0.0, %v3709
        %v3711 = vpop.f32.mrf.mxu0
        %v3712 = vadd.f32 0.0, %v3711
        %3713 = vmatprep.mubr.f32.mxu0 0.0
        %3714 = vmatmul.mubr.f32.gmra.mxu0 %v1162
        %v3715 = vpop.f32.mrf.mxu0
        %v3716 = vadd.f32 0.0, %v3715
        %v3717 = vpop.f32.mrf.mxu0
        %v3718 = vadd.f32 0.0, %v3717
        %3719 = vmatprep.mubr.f32.mxu0 0.0
        %3720 = vmatmul.mubr.f32.gmra.mxu0 %v1165
        %v3721 = vpop.f32.mrf.mxu0
        %v3722 = vadd.f32 0.0, %v3721
        %v3723 = vpop.f32.mrf.mxu0
        %v3724 = vadd.f32 0.0, %v3723
        %3725 = vmatprep.mubr.f32.mxu0 0.0
        %3726 = vmatmul.mubr.f32.gmra.mxu0 %v1168
        %v3727 = vpop.f32.mrf.mxu0
        %v3728 = vadd.f32 0.0, %v3727
        %v3729 = vpop.f32.mrf.mxu0
        %v3730 = vadd.f32 0.0, %v3729
        %3731 = vmatprep.mubr.f32.mxu0 0.0
        %3732 = vmatmul.mubr.f32.gmra.mxu0 %v1171
        %v3733 = vpop.f32.mrf.mxu0
        %v3734 = vadd.f32 0.0, %v3733
        %v3735 = vpop.f32.mrf.mxu0
        %v3736 = vadd.f32 0.0, %v3735
        %3737 = vmatprep.mubr.f32.mxu0 0.0
        %3738 = vmatmul.mubr.f32.gmra.mxu0 %v1174
        %v3739 = vpop.f32.mrf.mxu0
        %v3740 = vadd.f32 0.0, %v3739
        %v3741 = vpop.f32.mrf.mxu0
        %v3742 = vadd.f32 0.0, %v3741
        %3743 = vmatprep.mubr.f32.mxu0 0.0
        %3744 = vmatmul.mubr.f32.gmra.mxu0 %v1177
        %v3745 = vpop.f32.mrf.mxu0
        %v3746 = vadd.f32 0.0, %v3745
        %v3747 = vpop.f32.mrf.mxu0
        %v3748 = vadd.f32 0.0, %v3747
        %3749 = vmatprep.mubr.f32.mxu0 0.0
        %3750 = vmatmul.mubr.f32.gmra.mxu0 %v1180
        %v3751 = vpop.f32.mrf.mxu0
        %v3752 = vadd.f32 0.0, %v3751
        %v3753 = vpop.f32.mrf.mxu0
        %v3754 = vadd.f32 0.0, %v3753
        %3755 = vmatprep.mubr.f32.mxu0 0.0
        %3756 = vmatmul.mubr.f32.gmra.mxu0 %v1183
        %v3757 = vpop.f32.mrf.mxu0
        %v3758 = vadd.f32 0.0, %v3757
        %v3759 = vpop.f32.mrf.mxu0
        %v3760 = vadd.f32 0.0, %v3759
        %3761 = vmatprep.mubr.f32.mxu0 0.0
        %3762 = vmatmul.mubr.f32.gmra.mxu0 %v1186
        %v3763 = vpop.f32.mrf.mxu0
        %v3764 = vadd.f32 0.0, %v3763
        %v3765 = vpop.f32.mrf.mxu0
        %v3766 = vadd.f32 0.0, %v3765
        %3767 = vmatprep.mubr.f32.mxu0 0.0
        %3768 = vmatmul.mubr.f32.gmra.mxu0 %v1189
        %v3769 = vpop.f32.mrf.mxu0
        %v3770 = vadd.f32 0.0, %v3769
        %v3771 = vpop.f32.mrf.mxu0
        %v3772 = vadd.f32 0.0, %v3771
        %3773 = vmatprep.mubr.f32.mxu0 0.0
        %3774 = vmatmul.mubr.f32.gmra.mxu0 %v1192
        %v3775 = vpop.f32.mrf.mxu0
        %v3776 = vadd.f32 0.0, %v3775
        %v3777 = vpop.f32.mrf.mxu0
        %v3778 = vadd.f32 0.0, %v3777
        %3779 = vmatprep.mubr.f32.mxu0 0.0
        %3780 = vmatmul.mubr.f32.gmra.mxu0 %v1195
        %v3781 = vpop.f32.mrf.mxu0
        %v3782 = vadd.f32 0.0, %v3781
        %v3783 = vpop.f32.mrf.mxu0
        %v3784 = vadd.f32 0.0, %v3783
        %3785 = vmatprep.mubr.f32.mxu0 0.0
        %3786 = vmatmul.mubr.f32.gmra.mxu0 %v1198
        %v3787 = vpop.f32.mrf.mxu0
        %v3788 = vadd.f32 0.0, %v3787
        %v3789 = vpop.f32.mrf.mxu0
        %v3790 = vadd.f32 0.0, %v3789
        %3791 = vmatprep.mubr.f32.mxu0 0.0
        %3792 = vmatmul.mubr.f32.gmra.mxu0 %v1201
        %v3793 = vpop.f32.mrf.mxu0
        %v3794 = vadd.f32 0.0, %v3793
        %v3795 = vpop.f32.mrf.mxu0
        %v3796 = vadd.f32 0.0, %v3795
        %3797 = vmatprep.mubr.f32.mxu0 0.0
        %3798 = vmatmul.mubr.f32.gmra.mxu0 %v1204
        %v3799 = vpop.f32.mrf.mxu0
        %v3800 = vadd.f32 0.0, %v3799
        %v3801 = vpop.f32.mrf.mxu0
        %v3802 = vadd.f32 0.0, %v3801
        %3803 = vmatprep.mubr.f32.mxu0 0.0
        %3804 = vmatmul.mubr.f32.gmra.mxu0 %v1207
        %v3805 = vpop.f32.mrf.mxu0
        %v3806 = vadd.f32 0.0, %v3805
        %v3807 = vpop.f32.mrf.mxu0
        %v3808 = vadd.f32 0.0, %v3807
        %3809 = vmatprep.mubr.f32.mxu0 0.0
        %3810 = vmatmul.mubr.f32.gmra.mxu0 %v1210
        %v3811 = vpop.f32.mrf.mxu0
        %v3812 = vadd.f32 0.0, %v3811
        %v3813 = vpop.f32.mrf.mxu0
        %v3814 = vadd.f32 0.0, %v3813
        %3815 = vmatprep.mubr.f32.mxu0 0.0
        %3816 = vmatmul.mubr.f32.gmra.mxu0 %v1213
        %v3817 = vpop.f32.mrf.mxu0
        %v3818 = vadd.f32 0.0, %v3817
        %v3819 = vpop.f32.mrf.mxu0
        %v3820 = vadd.f32 0.0, %v3819
        %3821 = vmatprep.mubr.f32.mxu0 0.0
        %3822 = vmatmul.mubr.f32.gmra.mxu0 %v1216
        %v3823 = vpop.f32.mrf.mxu0
        %v3824 = vadd.f32 0.0, %v3823
        %v3825 = vpop.f32.mrf.mxu0
        %v3826 = vadd.f32 0.0, %v3825
        %3827 = vmatprep.mubr.f32.mxu0 0.0
        %3828 = vmatmul.mubr.f32.gmra.mxu0 %v1219
        %v3829 = vpop.f32.mrf.mxu0
        %v3830 = vadd.f32 0.0, %v3829
        %v3831 = vpop.f32.mrf.mxu0
        %v3832 = vadd.f32 0.0, %v3831
        %3833 = vmatprep.mubr.f32.mxu0 0.0
        %3834 = vmatmul.mubr.f32.gmra.mxu0 %v1222
        %v3835 = vpop.f32.mrf.mxu0
        %v3836 = vadd.f32 0.0, %v3835
        %v3837 = vpop.f32.mrf.mxu0
        %v3838 = vadd.f32 0.0, %v3837
        %3839 = vmatprep.mubr.f32.mxu0 0.0
        %3840 = vmatmul.mubr.f32.gmra.mxu0 %v1225
        %v3841 = vpop.f32.mrf.mxu0
        %v3842 = vadd.f32 0.0, %v3841
        %v3843 = vpop.f32.mrf.mxu0
        %v3844 = vadd.f32 0.0, %v3843
        %3845 = vmatprep.mubr.f32.mxu0 0.0
        %3846 = vmatmul.mubr.f32.gmra.mxu0 %v1228
        %v3847 = vpop.f32.mrf.mxu0
        %v3848 = vadd.f32 0.0, %v3847
        %v3849 = vpop.f32.mrf.mxu0
        %v3850 = vadd.f32 0.0, %v3849
        %3851 = vmatprep.mubr.f32.mxu0 0.0
        %3852 = vmatmul.mubr.f32.gmra.mxu0 %v1231
        %v3853 = vpop.f32.mrf.mxu0
        %v3854 = vadd.f32 0.0, %v3853
        %v3855 = vpop.f32.mrf.mxu0
        %v3856 = vadd.f32 0.0, %v3855
        %3857 = vmatprep.mubr.f32.mxu0 0.0
        %3858 = vmatmul.mubr.f32.gmra.mxu0 %v1234
        %v3859 = vpop.f32.mrf.mxu0
        %v3860 = vadd.f32 0.0, %v3859
        %v3861 = vpop.f32.mrf.mxu0
        %v3862 = vadd.f32 0.0, %v3861
        %3863 = vmatprep.mubr.f32.mxu0 0.0
        %3864 = vmatmul.mubr.f32.gmra.mxu0 %v1237
        %v3865 = vpop.f32.mrf.mxu0
        %v3866 = vadd.f32 0.0, %v3865
        %v3867 = vpop.f32.mrf.mxu0
        %v3868 = vadd.f32 0.0, %v3867
        %3869 = vmatprep.mubr.f32.mxu0 0.0
        %3870 = vmatmul.mubr.f32.gmra.mxu0 %v1240
        %v3871 = vpop.f32.mrf.mxu0
        %v3872 = vadd.f32 0.0, %v3871
        %v3873 = vpop.f32.mrf.mxu0
        %v3874 = vadd.f32 0.0, %v3873
        %3875 = vmatprep.mubr.f32.mxu0 0.0
        %3876 = vmatmul.mubr.f32.gmra.mxu0 %v1243
        %v3877 = vpop.f32.mrf.mxu0
        %v3878 = vadd.f32 0.0, %v3877
        %v3879 = vpop.f32.mrf.mxu0
        %v3880 = vadd.f32 0.0, %v3879
        %3881 = vmatprep.mubr.f32.mxu0 0.0
        %3882 = vmatmul.mubr.f32.gmra.mxu0 %v1246
        %v3883 = vpop.f32.mrf.mxu0
        %v3884 = vadd.f32 0.0, %v3883
        %v3885 = vpop.f32.mrf.mxu0
        %v3886 = vadd.f32 0.0, %v3885
        %3887 = vmatprep.mubr.f32.mxu0 0.0
        %3888 = vmatmul.mubr.f32.gmra.mxu0 %v1249
        %v3889 = vpop.f32.mrf.mxu0
        %v3890 = vadd.f32 0.0, %v3889
        %v3891 = vpop.f32.mrf.mxu0
        %v3892 = vadd.f32 0.0, %v3891
        %3893 = vmatprep.mubr.f32.mxu0 0.0
        %3894 = vmatmul.mubr.f32.gmra.mxu0 %v1252
        %v3895 = vpop.f32.mrf.mxu0
        %v3896 = vadd.f32 0.0, %v3895
        %v3897 = vpop.f32.mrf.mxu0
        %v3898 = vadd.f32 0.0, %v3897
        %3899 = vmatprep.mubr.f32.mxu0 0.0
        %3900 = vmatmul.mubr.f32.gmra.mxu0 %v1255
        %v3901 = vpop.f32.mrf.mxu0
        %v3902 = vadd.f32 0.0, %v3901
        %v3903 = vpop.f32.mrf.mxu0
        %v3904 = vadd.f32 0.0, %v3903
        %3905 = vmatprep.mubr.f32.mxu0 0.0
        %3906 = vmatmul.mubr.f32.gmra.mxu0 %v1258
        %v3907 = vpop.f32.mrf.mxu0
        %v3908 = vadd.f32 0.0, %v3907
        %v3909 = vpop.f32.mrf.mxu0
        %v3910 = vadd.f32 0.0, %v3909
        %3911 = vmatprep.mubr.f32.mxu0 0.0
        %3912 = vmatmul.mubr.f32.gmra.mxu0 %v1261
        %v3913 = vpop.f32.mrf.mxu0
        %v3914 = vadd.f32 0.0, %v3913
        %v3915 = vpop.f32.mrf.mxu0
        %v3916 = vadd.f32 0.0, %v3915
        %3917 = vmatprep.mubr.f32.mxu0 0.0
        %3918 = vmatmul.mubr.f32.gmra.mxu0 %v1264
        %v3919 = vpop.f32.mrf.mxu0
        %v3920 = vadd.f32 0.0, %v3919
        %v3921 = vpop.f32.mrf.mxu0
        %v3922 = vadd.f32 0.0, %v3921
        %3923 = vmatprep.mubr.f32.mxu0 0.0
        %3924 = vmatmul.mubr.f32.gmra.mxu0 %v1267
        %v3925 = vpop.f32.mrf.mxu0
        %v3926 = vadd.f32 0.0, %v3925
        %v3927 = vpop.f32.mrf.mxu0
        %v3928 = vadd.f32 0.0, %v3927
        %3929 = vmatprep.mubr.f32.mxu0 0.0
        %3930 = vmatmul.mubr.f32.gmra.mxu0 %v1270
        %v3931 = vpop.f32.mrf.mxu0
        %v3932 = vadd.f32 0.0, %v3931
        %v3933 = vpop.f32.mrf.mxu0
        %v3934 = vadd.f32 0.0, %v3933
        %3935 = vmatprep.mubr.f32.mxu0 0.0
        %3936 = vmatmul.mubr.f32.gmra.mxu0 %v1273
        %v3937 = vpop.f32.mrf.mxu0
        %v3938 = vadd.f32 0.0, %v3937
        %v3939 = vpop.f32.mrf.mxu0
        %v3940 = vadd.f32 0.0, %v3939
        %3941 = vmatprep.mubr.f32.mxu0 0.0
        %3942 = vmatmul.mubr.f32.gmra.mxu0 %v1276
        %v3943 = vpop.f32.mrf.mxu0
        %v3944 = vadd.f32 0.0, %v3943
        %v3945 = vpop.f32.mrf.mxu0
        %v3946 = vadd.f32 0.0, %v3945
        %3947 = vmatprep.mubr.f32.mxu0 0.0
        %3948 = vmatmul.mubr.f32.gmra.mxu0 %v1279
        %v3949 = vpop.f32.mrf.mxu0
        %v3950 = vadd.f32 0.0, %v3949
        %v3951 = vpop.f32.mrf.mxu0
        %v3952 = vadd.f32 0.0, %v3951
        %3953 = vmatprep.mubr.f32.mxu0 0.0
        %3954 = vmatmul.mubr.f32.gmra.mxu0 %v1282
        %v3955 = vpop.f32.mrf.mxu0
        %v3956 = vadd.f32 0.0, %v3955
        %v3957 = vpop.f32.mrf.mxu0
        %v3958 = vadd.f32 0.0, %v3957
        %3959 = vmatprep.mubr.f32.mxu0 0.0
        %3960 = vmatmul.mubr.f32.gmra.mxu0 %v1285
        %v3961 = vpop.f32.mrf.mxu0
        %v3962 = vadd.f32 0.0, %v3961
        %v3963 = vpop.f32.mrf.mxu0
        %v3964 = vadd.f32 0.0, %v3963
        %3965 = vmatprep.mubr.f32.mxu0 0.0
        %3966 = vmatmul.mubr.f32.gmra.mxu0 %v1288
        %v3967 = vpop.f32.mrf.mxu0
        %v3968 = vadd.f32 0.0, %v3967
        %v3969 = vpop.f32.mrf.mxu0
        %v3970 = vadd.f32 0.0, %v3969
        %3971 = vmatprep.mubr.f32.mxu0 0.0
        %3972 = vmatmul.mubr.f32.gmra.mxu0 %v1291
        %v3973 = vpop.f32.mrf.mxu0
        %v3974 = vadd.f32 0.0, %v3973
        %v3975 = vpop.f32.mrf.mxu0
        %v3976 = vadd.f32 0.0, %v3975
        %3977 = vmatprep.mubr.f32.mxu0 0.0
        %3978 = vmatmul.mubr.f32.gmra.mxu0 %v1294
        %v3979 = vpop.f32.mrf.mxu0
        %v3980 = vadd.f32 0.0, %v3979
        %v3981 = vpop.f32.mrf.mxu0
        %v3982 = vadd.f32 0.0, %v3981
        %3983 = vmatprep.mubr.f32.mxu0 0.0
        %3984 = vmatmul.mubr.f32.gmra.mxu0 %v1297
        %v3985 = vpop.f32.mrf.mxu0
        %v3986 = vadd.f32 0.0, %v3985
        %v3987 = vpop.f32.mrf.mxu0
        %v3988 = vadd.f32 0.0, %v3987
        %3989 = vmatprep.mubr.f32.mxu0 0.0
        %3990 = vmatmul.mubr.f32.gmra.mxu0 %v1300
        %v3991 = vpop.f32.mrf.mxu0
        %v3992 = vadd.f32 0.0, %v3991
        %v3993 = vpop.f32.mrf.mxu0
        %v3994 = vadd.f32 0.0, %v3993
        %3995 = vmatprep.mubr.f32.mxu0 0.0
        %3996 = vmatmul.mubr.f32.gmra.mxu0 %v1303
        %v3997 = vpop.f32.mrf.mxu0
        %v3998 = vadd.f32 0.0, %v3997
        %v3999 = vpop.f32.mrf.mxu0
        %v4000 = vadd.f32 0.0, %v3999
        %4001 = vmatprep.mubr.f32.mxu0 0.0
        %4002 = vmatmul.mubr.f32.gmra.mxu0 %v1306
        %v4003 = vpop.f32.mrf.mxu0
        %v4004 = vadd.f32 0.0, %v4003
        %v4005 = vpop.f32.mrf.mxu0
        %v4006 = vadd.f32 0.0, %v4005
        %4007 = vmatprep.mubr.f32.mxu0 0.0
        %4008 = vmatmul.mubr.f32.gmra.mxu0 %v1309
        %v4009 = vpop.f32.mrf.mxu0
        %v4010 = vadd.f32 0.0, %v4009
        %v4011 = vpop.f32.mrf.mxu0
        %v4012 = vadd.f32 0.0, %v4011
        %4013 = vmatprep.mubr.f32.mxu0 0.0
        %4014 = vmatmul.mubr.f32.gmra.mxu0 %v1312
        %v4015 = vpop.f32.mrf.mxu0
        %v4016 = vadd.f32 0.0, %v4015
        %v4017 = vpop.f32.mrf.mxu0
        %v4018 = vadd.f32 0.0, %v4017
        %4019 = vmatprep.mubr.f32.mxu0 0.0
        %4020 = vmatmul.mubr.f32.gmra.mxu0 %v1315
        %v4021 = vpop.f32.mrf.mxu0
        %v4022 = vadd.f32 0.0, %v4021
        %v4023 = vpop.f32.mrf.mxu0
        %v4024 = vadd.f32 0.0, %v4023
        %4025 = vmatprep.mubr.f32.mxu0 0.0
        %4026 = vmatmul.mubr.f32.gmra.mxu0 %v1318
        %v4027 = vpop.f32.mrf.mxu0
        %v4028 = vadd.f32 0.0, %v4027
        %v4029 = vpop.f32.mrf.mxu0
        %v4030 = vadd.f32 0.0, %v4029
        %4031 = vmatprep.mubr.f32.mxu0 0.0
        %4032 = vmatmul.mubr.f32.gmra.mxu0 %v1321
        %v4033 = vpop.f32.mrf.mxu0
        %v4034 = vadd.f32 0.0, %v4033
        %v4035 = vpop.f32.mrf.mxu0
        %v4036 = vadd.f32 0.0, %v4035
        %4037 = vmatprep.mubr.f32.mxu0 0.0
        %4038 = vmatmul.mubr.f32.gmra.mxu0 %v1324
        %v4039 = vpop.f32.mrf.mxu0
        %v4040 = vadd.f32 0.0, %v4039
        %v4041 = vpop.f32.mrf.mxu0
        %v4042 = vadd.f32 0.0, %v4041
        %4043 = vmatprep.mubr.f32.mxu0 0.0
        %4044 = vmatmul.mubr.f32.gmra.mxu0 %v1327
        %v4045 = vpop.f32.mrf.mxu0
        %v4046 = vadd.f32 0.0, %v4045
        %v4047 = vpop.f32.mrf.mxu0
        %v4048 = vadd.f32 0.0, %v4047
        %4049 = vmatprep.mubr.f32.mxu0 0.0
        %4050 = vmatmul.mubr.f32.gmra.mxu0 %v1330
        %v4051 = vpop.f32.mrf.mxu0
        %v4052 = vadd.f32 0.0, %v4051
        %v4053 = vpop.f32.mrf.mxu0
        %v4054 = vadd.f32 0.0, %v4053
        %4055 = vmatprep.mubr.f32.mxu0 0.0
        %4056 = vmatmul.mubr.f32.gmra.mxu0 %v1333
        %v4057 = vpop.f32.mrf.mxu0
        %v4058 = vadd.f32 0.0, %v4057
        %v4059 = vpop.f32.mrf.mxu0
        %v4060 = vadd.f32 0.0, %v4059
        %4061 = vmatprep.mubr.f32.mxu0 0.0
        %4062 = vmatmul.mubr.f32.gmra.mxu0 %v1336
        %v4063 = vpop.f32.mrf.mxu0
        %v4064 = vadd.f32 0.0, %v4063
        %v4065 = vpop.f32.mrf.mxu0
        %v4066 = vadd.f32 0.0, %v4065
        %4067 = vmatprep.mubr.f32.mxu0 0.0
        %4068 = vmatmul.mubr.f32.gmra.mxu0 %v1339
        %v4069 = vpop.f32.mrf.mxu0
        %v4070 = vadd.f32 0.0, %v4069
        %v4071 = vpop.f32.mrf.mxu0
        %v4072 = vadd.f32 0.0, %v4071
        %4073 = vmatprep.mubr.f32.mxu0 0.0
        %4074 = vmatmul.mubr.f32.gmra.mxu0 %v1342
        %v4075 = vpop.f32.mrf.mxu0
        %v4076 = vadd.f32 0.0, %v4075
        %v4077 = vpop.f32.mrf.mxu0
        %v4078 = vadd.f32 0.0, %v4077
        %4079 = vmatprep.mubr.f32.mxu0 0.0
        %4080 = vmatmul.mubr.f32.gmra.mxu0 %v1345
        %v4081 = vpop.f32.mrf.mxu0
        %v4082 = vadd.f32 0.0, %v4081
        %v4083 = vpop.f32.mrf.mxu0
        %v4084 = vadd.f32 0.0, %v4083
        %4085 = vmatprep.mubr.f32.mxu0 0.0
        %4086 = vmatmul.mubr.f32.gmra.mxu0 %v1348
        %v4087 = vpop.f32.mrf.mxu0
        %v4088 = vadd.f32 0.0, %v4087
        %v4089 = vpop.f32.mrf.mxu0
        %v4090 = vadd.f32 0.0, %v4089
        %4091 = vmatprep.mubr.f32.mxu0 0.0
        %4092 = vmatmul.mubr.f32.gmra.mxu0 %v1351
        %v4093 = vpop.f32.mrf.mxu0
        %v4094 = vadd.f32 0.0, %v4093
        %v4095 = vpop.f32.mrf.mxu0
        %v4096 = vadd.f32 0.0, %v4095
        %4097 = vmatprep.mubr.f32.mxu0 0.0
        %4098 = vmatmul.mubr.f32.gmra.mxu0 %v1354
        %v4099 = vpop.f32.mrf.mxu0
        %v4100 = vadd.f32 0.0, %v4099
        %v4101 = vpop.f32.mrf.mxu0
        %v4102 = vadd.f32 0.0, %v4101
        %4103 = vmatprep.mubr.f32.mxu0 0.0
        %4104 = vmatmul.mubr.f32.gmra.mxu0 %v1357
        %v4105 = vpop.f32.mrf.mxu0
        %v4106 = vadd.f32 0.0, %v4105
        %v4107 = vpop.f32.mrf.mxu0
        %v4108 = vadd.f32 0.0, %v4107
        %4109 = vmatprep.mubr.f32.mxu0 0.0
        %4110 = vmatmul.mubr.f32.gmra.mxu0 %v1360
        %v4111 = vpop.f32.mrf.mxu0
        %v4112 = vadd.f32 0.0, %v4111
        %v4113 = vpop.f32.mrf.mxu0
        %v4114 = vadd.f32 0.0, %v4113
        %4115 = vmatprep.mubr.f32.mxu0 0.0
        %4116 = vmatmul.mubr.f32.gmra.mxu0 %v1363
        %v4117 = vpop.f32.mrf.mxu0
        %v4118 = vadd.f32 0.0, %v4117
        %v4119 = vpop.f32.mrf.mxu0
        %v4120 = vadd.f32 0.0, %v4119
        %4121 = vmatprep.mubr.f32.mxu0 0.0
        %4122 = vmatmul.mubr.f32.gmra.mxu0 %v1366
        %v4123 = vpop.f32.mrf.mxu0
        %v4124 = vadd.f32 0.0, %v4123
        %v4125 = vpop.f32.mrf.mxu0
        %v4126 = vadd.f32 0.0, %v4125
        %4127 = vmatprep.mubr.f32.mxu0 0.0
        %4128 = vmatmul.mubr.f32.gmra.mxu0 %v1369
        %v4129 = vpop.f32.mrf.mxu0
        %v4130 = vadd.f32 0.0, %v4129
        %v4131 = vpop.f32.mrf.mxu0
        %v4132 = vadd.f32 0.0, %v4131
        %4133 = vmatprep.mubr.f32.mxu0 0.0
        %4134 = vmatmul.mubr.f32.gmra.mxu0 %v1372
        %v4135 = vpop.f32.mrf.mxu0
        %v4136 = vadd.f32 0.0, %v4135
        %v4137 = vpop.f32.mrf.mxu0
        %v4138 = vadd.f32 0.0, %v4137
        %4139 = vmatprep.mubr.f32.mxu0 0.0
        %4140 = vmatmul.mubr.f32.gmra.mxu0 %v1375
        %v4141 = vpop.f32.mrf.mxu0
        %v4142 = vadd.f32 0.0, %v4141
        %v4143 = vpop.f32.mrf.mxu0
        %v4144 = vadd.f32 0.0, %v4143
        %4145 = vmatprep.mubr.f32.mxu0 0.0
        %4146 = vmatmul.mubr.f32.gmra.mxu0 %v1378
        %v4147 = vpop.f32.mrf.mxu0
        %v4148 = vadd.f32 0.0, %v4147
        %v4149 = vpop.f32.mrf.mxu0
        %v4150 = vadd.f32 0.0, %v4149
        %4151 = vmatprep.mubr.f32.mxu0 0.0
        %4152 = vmatmul.mubr.f32.gmra.mxu0 %v1381
        %v4153 = vpop.f32.mrf.mxu0
        %v4154 = vadd.f32 0.0, %v4153
        %v4155 = vpop.f32.mrf.mxu0
        %v4156 = vadd.f32 0.0, %v4155
        %4157 = vmatprep.mubr.f32.mxu0 0.0
        %4158 = vmatmul.mubr.f32.gmra.mxu0 %v1384
        %v4159 = vpop.f32.mrf.mxu0
        %v4160 = vadd.f32 0.0, %v4159
        %v4161 = vpop.f32.mrf.mxu0
        %v4162 = vadd.f32 0.0, %v4161
        %4163 = vmatprep.mubr.f32.mxu0 0.0
        %4164 = vmatmul.mubr.f32.gmra.mxu0 %v1387
        %v4165 = vpop.f32.mrf.mxu0
        %v4166 = vadd.f32 0.0, %v4165
        %v4167 = vpop.f32.mrf.mxu0
        %v4168 = vadd.f32 0.0, %v4167
        %4169 = vmatprep.mubr.f32.mxu0 0.0
        %4170 = vmatmul.mubr.f32.gmra.mxu0 %v1390
        %v4171 = vpop.f32.mrf.mxu0
        %v4172 = vadd.f32 0.0, %v4171
        %v4173 = vpop.f32.mrf.mxu0
        %v4174 = vadd.f32 0.0, %v4173
        %4175 = vmatprep.mubr.f32.mxu0 0.0
        %4176 = vmatmul.mubr.f32.gmra.mxu0 %v1393
        %v4177 = vpop.f32.mrf.mxu0
        %v4178 = vadd.f32 0.0, %v4177
        %v4179 = vpop.f32.mrf.mxu0
        %v4180 = vadd.f32 0.0, %v4179
        %4181 = vmatprep.mubr.f32.mxu0 0.0
        %4182 = vmatmul.mubr.f32.gmra.mxu0 %v2712
        %v4183 = vpop.f32.mrf.mxu0
        %v4184 = vadd.f32 0.0, %v4183
        %v4185 = vpop.f32.mrf.mxu0
        %v4186 = vadd.f32 0.0, %v4185
        %4187 = vmatprep.mubr.f32.mxu0 0.0
        %4188 = vmatmul.mubr.f32.gmra.mxu0 %v2715
        %v4189 = vpop.f32.mrf.mxu0
        %v4190 = vadd.f32 0.0, %v4189
        %v4191 = vpop.f32.mrf.mxu0
        %v4192 = vadd.f32 0.0, %v4191
        %4193 = vmatprep.mubr.f32.mxu0 0.0
        %4194 = vmatmul.mubr.f32.gmra.mxu0 %v2718
        %v4195 = vpop.f32.mrf.mxu0
        %v4196 = vadd.f32 0.0, %v4195
        %v4197 = vpop.f32.mrf.mxu0
        %v4198 = vadd.f32 0.0, %v4197
        %4199 = vmatprep.mubr.f32.mxu0 0.0
        %4200 = vmatmul.mubr.f32.gmra.mxu0 %v2721
        %v4201 = vpop.f32.mrf.mxu0
        %v4202 = vadd.f32 0.0, %v4201
        %v4203 = vpop.f32.mrf.mxu0
        %v4204 = vadd.f32 0.0, %v4203
        %4205 = vmatprep.mubr.f32.mxu0 0.0
        %4206 = vmatmul.mubr.f32.gmra.mxu0 %v3572
        %v4207 = vpop.f32.mrf.mxu0
        %v4208 = vadd.f32 0.0, %v4207
        %v4209 = vpop.f32.mrf.mxu0
        %v4210 = vadd.f32 0.0, %v4209
        %4211 = vmatprep.mubr.f32.mxu0 0.0
        %4212 = vmatmul.mubr.f32.gmra.mxu0 %v3575
        %v4213 = vpop.f32.mrf.mxu0
        %v4214 = vadd.f32 0.0, %v4213
        %v4215 = vpop.f32.mrf.mxu0
        %v4216 = vadd.f32 0.0, %v4215
        %4217 = vmatprep.mubr.f32.mxu0 0.0
        %4218 = vmatmul.mubr.f32.gmra.mxu0 %v3578
        %v4219 = vpop.f32.mrf.mxu0
        %v4220 = vadd.f32 0.0, %v4219
        %v4221 = vpop.f32.mrf.mxu0
        %v4222 = vadd.f32 0.0, %v4221
        %4223 = vmatprep.mubr.f32.mxu0 0.0
        %4224 = vmatmul.mubr.f32.gmra.mxu0 %v3581
        %v4225 = vpop.f32.mrf.mxu0
        %v4226 = vadd.f32 0.0, %v4225
        %v4227 = vpop.f32.mrf.mxu0
        %v4228 = vadd.f32 0.0, %v4227
        %4229 = vdwg.mxu0
        %v4230 = vadd.f32 %v3370, %v3656
        %v4231 = vadd.f32 %v3371, %v3658
        %v4232 = vadd.f32 %v3372, %v3662
        %v4233 = vadd.f32 %v3373, %v3664
        %v4234 = vadd.f32 %v3374, %v3668
        %v4235 = vadd.f32 %v3375, %v3670
        %v4236 = vadd.f32 %v3376, %v3674
        %v4237 = vadd.f32 %v3377, %v3676
        %v4238 = vadd.f32 %v3378, %v3680
        %v4239 = vadd.f32 %v3379, %v3682
        %v4240 = vadd.f32 %v3380, %v3686
        %v4241 = vadd.f32 %v3381, %v3688
        %v4242 = vadd.f32 %v3382, %v3692
        %v4243 = vadd.f32 %v3383, %v3694
        %v4244 = vadd.f32 %v3384, %v3698
        %v4245 = vadd.f32 %v3385, %v3700
        %v4246 = vadd.f32 %v3386, %v3704
        %v4247 = vadd.f32 %v3387, %v3706
        %v4248 = vadd.f32 %v3388, %v3710
        %v4249 = vadd.f32 %v3389, %v3712
        %v4250 = vadd.f32 %v3390, %v3716
        %v4251 = vadd.f32 %v3391, %v3718
        %v4252 = vadd.f32 %v3392, %v3722
        %v4253 = vadd.f32 %v3393, %v3724
        %v4254 = vadd.f32 %v3394, %v3728
        %v4255 = vadd.f32 %v3395, %v3730
        %v4256 = vadd.f32 %v3396, %v3734
        %v4257 = vadd.f32 %v3397, %v3736
        %v4258 = vadd.f32 %v3398, %v3740
        %v4259 = vadd.f32 %v3399, %v3742
        %v4260 = vadd.f32 %v3400, %v3746
        %v4261 = vadd.f32 %v3401, %v3748
        %v4262 = vadd.f32 %v3402, %v3752
        %v4263 = vadd.f32 %v3403, %v3754
        %v4264 = vadd.f32 %v3404, %v3758
        %v4265 = vadd.f32 %v3405, %v3760
        %v4266 = vadd.f32 %v3406, %v3764
        %v4267 = vadd.f32 %v3407, %v3766
        %v4268 = vadd.f32 %v3408, %v3770
        %v4269 = vadd.f32 %v3409, %v3772
        %v4270 = vadd.f32 %v3410, %v3776
        %v4271 = vadd.f32 %v3411, %v3778
        %v4272 = vadd.f32 %v3412, %v3782
        %v4273 = vadd.f32 %v3413, %v3784
        %v4274 = vadd.f32 %v3414, %v3788
        %v4275 = vadd.f32 %v3415, %v3790
        %v4276 = vadd.f32 %v3416, %v3794
        %v4277 = vadd.f32 %v3417, %v3796
        %v4278 = vadd.f32 %v3418, %v3800
        %v4279 = vadd.f32 %v3419, %v3802
        %v4280 = vadd.f32 %v3420, %v3806
        %v4281 = vadd.f32 %v3421, %v3808
        %v4282 = vadd.f32 %v3422, %v3812
        %v4283 = vadd.f32 %v3423, %v3814
        %v4284 = vadd.f32 %v3424, %v3818
        %v4285 = vadd.f32 %v3425, %v3820
        %v4286 = vadd.f32 %v3426, %v3824
        %v4287 = vadd.f32 %v3427, %v3826
        %v4288 = vadd.f32 %v3428, %v3830
        %v4289 = vadd.f32 %v3429, %v3832
        %v4290 = vadd.f32 %v3430, %v3836
        %v4291 = vadd.f32 %v3431, %v3838
        %v4292 = vadd.f32 %v3432, %v3842
        %v4293 = vadd.f32 %v3433, %v3844
        %v4294 = vadd.f32 %v3434, %v3848
        %v4295 = vadd.f32 %v3435, %v3850
        %v4296 = vadd.f32 %v3436, %v3854
        %v4297 = vadd.f32 %v3437, %v3856
        %v4298 = vadd.f32 %v3438, %v3860
        %v4299 = vadd.f32 %v3439, %v3862
        %v4300 = vadd.f32 %v3440, %v3866
        %v4301 = vadd.f32 %v3441, %v3868
        %v4302 = vadd.f32 %v3442, %v3872
        %v4303 = vadd.f32 %v3443, %v3874
        %v4304 = vadd.f32 %v3444, %v3878
        %v4305 = vadd.f32 %v3445, %v3880
        %v4306 = vadd.f32 %v3446, %v3884
        %v4307 = vadd.f32 %v3447, %v3886
        %v4308 = vadd.f32 %v3448, %v3890
        %v4309 = vadd.f32 %v3449, %v3892
        %v4310 = vadd.f32 %v3450, %v3896
        %v4311 = vadd.f32 %v3451, %v3898
        %v4312 = vadd.f32 %v3452, %v3902
        %v4313 = vadd.f32 %v3453, %v3904
        %v4314 = vadd.f32 %v3454, %v3908
        %v4315 = vadd.f32 %v3455, %v3910
        %v4316 = vadd.f32 %v3456, %v3914
        %v4317 = vadd.f32 %v3457, %v3916
        %v4318 = vadd.f32 %v3458, %v3920
        %v4319 = vadd.f32 %v3459, %v3922
        %v4320 = vadd.f32 %v3460, %v3926
        %v4321 = vadd.f32 %v3461, %v3928
        %v4322 = vadd.f32 %v3462, %v3932
        %v4323 = vadd.f32 %v3463, %v3934
        %v4324 = vadd.f32 %v3464, %v3938
        %v4325 = vadd.f32 %v3465, %v3940
        %v4326 = vadd.f32 %v3466, %v3944
        %v4327 = vadd.f32 %v3467, %v3946
        %v4328 = vadd.f32 %v3468, %v3950
        %v4329 = vadd.f32 %v3469, %v3952
        %v4330 = vadd.f32 %v3470, %v3956
        %v4331 = vadd.f32 %v3471, %v3958
        %v4332 = vadd.f32 %v3472, %v3962
        %v4333 = vadd.f32 %v3473, %v3964
        %v4334 = vadd.f32 %v3474, %v3968
        %v4335 = vadd.f32 %v3475, %v3970
        %v4336 = vadd.f32 %v3476, %v3974
        %v4337 = vadd.f32 %v3477, %v3976
        %v4338 = vadd.f32 %v3478, %v3980
        %v4339 = vadd.f32 %v3479, %v3982
        %v4340 = vadd.f32 %v3480, %v3986
        %v4341 = vadd.f32 %v3481, %v3988
        %v4342 = vadd.f32 %v3482, %v3992
        %v4343 = vadd.f32 %v3483, %v3994
        %v4344 = vadd.f32 %v3484, %v3998
        %v4345 = vadd.f32 %v3485, %v4000
        %v4346 = vadd.f32 %v3486, %v4004
        %v4347 = vadd.f32 %v3487, %v4006
        %v4348 = vadd.f32 %v3488, %v4010
        %v4349 = vadd.f32 %v3489, %v4012
        %v4350 = vadd.f32 %v3490, %v4016
        %v4351 = vadd.f32 %v3491, %v4018
        %v4352 = vadd.f32 %v3492, %v4022
        %v4353 = vadd.f32 %v3493, %v4024
        %v4354 = vadd.f32 %v3494, %v4028
        %v4355 = vadd.f32 %v3495, %v4030
        %v4356 = vadd.f32 %v3496, %v4034
        %v4357 = vadd.f32 %v3497, %v4036
        %v4358 = vadd.f32 %v3498, %v4040
        %v4359 = vadd.f32 %v3499, %v4042
        %v4360 = vadd.f32 %v3500, %v4046
        %v4361 = vadd.f32 %v3501, %v4048
        %v4362 = vadd.f32 %v3502, %v4052
        %v4363 = vadd.f32 %v3503, %v4054
        %v4364 = vadd.f32 %v3504, %v4058
        %v4365 = vadd.f32 %v3505, %v4060
        %v4366 = vadd.f32 %v3506, %v4064
        %v4367 = vadd.f32 %v3507, %v4066
        %v4368 = vadd.f32 %v3508, %v4070
        %v4369 = vadd.f32 %v3509, %v4072
        %v4370 = vadd.f32 %v3510, %v4076
        %v4371 = vadd.f32 %v3511, %v4078
        %v4372 = vadd.f32 %v3512, %v4082
        %v4373 = vadd.f32 %v3513, %v4084
        %v4374 = vadd.f32 %v3514, %v4088
        %v4375 = vadd.f32 %v3515, %v4090
        %v4376 = vadd.f32 %v3516, %v4094
        %v4377 = vadd.f32 %v3517, %v4096
        %v4378 = vadd.f32 %v3518, %v4100
        %v4379 = vadd.f32 %v3519, %v4102
        %v4380 = vadd.f32 %v3520, %v4106
        %v4381 = vadd.f32 %v3521, %v4108
        %v4382 = vadd.f32 %v3522, %v4112
        %v4383 = vadd.f32 %v3523, %v4114
        %v4384 = vadd.f32 %v3524, %v4118
        %v4385 = vadd.f32 %v3525, %v4120
        %v4386 = vadd.f32 %v3526, %v4124
        %v4387 = vadd.f32 %v3527, %v4126
        %v4388 = vadd.f32 %v3528, %v4130
        %v4389 = vadd.f32 %v3529, %v4132
        %v4390 = vadd.f32 %v3530, %v4136
        %v4391 = vadd.f32 %v3531, %v4138
        %v4392 = vadd.f32 %v3532, %v4142
        %v4393 = vadd.f32 %v3533, %v4144
        %v4394 = vadd.f32 %v3534, %v4148
        %v4395 = vadd.f32 %v3535, %v4150
        %v4396 = vadd.f32 %v3536, %v4154
        %v4397 = vadd.f32 %v3537, %v4156
        %v4398 = vadd.f32 %v3538, %v4160
        %v4399 = vadd.f32 %v3539, %v4162
        %v4400 = vadd.f32 %v3540, %v4166
        %v4401 = vadd.f32 %v3541, %v4168
        %v4402 = vadd.f32 %v3542, %v4172
        %v4403 = vadd.f32 %v3543, %v4174
        %v4404 = vadd.f32 %v3544, %v4178
        %v4405 = vadd.f32 %v3545, %v4180
        %v4406 = vadd.f32 %v3546, %v4184
        %v4407 = vadd.f32 %v3547, %v4186
        %v4408 = vadd.f32 %v3548, %v4190
        %v4409 = vadd.f32 %v3549, %v4192
        %v4410 = vadd.f32 %v3550, %v4196
        %v4411 = vadd.f32 %v3551, %v4198
        %v4412 = vadd.f32 %v3552, %v4202
        %v4413 = vadd.f32 %v3553, %v4204
        %v4414 = vadd.f32 %v3554, %v4208
        %v4415 = vadd.f32 %v3555, %v4210
        %v4416 = vadd.f32 %v3556, %v4214
        %v4417 = vadd.f32 %v3557, %v4216
        %v4418 = vadd.f32 %v3558, %v4220
        %v4419 = vadd.f32 %v3559, %v4222
        %v4420 = vadd.f32 %v3560, %v4226
        %v4421 = vadd.f32 %v3561, %v4228
        %s4422 = scalar_lea.vmem %s1, 256
        %v4423 = vld [vmem:[%s4422] sm:$0xff]
        %v4424 = vld [vmem:[%s4422 + $0x8] sm:$0xff]
        %v4425 = vld [vmem:[%s4422 + $0x10] sm:$0xff]
        %v4426 = vld [vmem:[%s4422 + $0x18] sm:$0xff]
        %v4427 = vld [vmem:[%s4422 + $0x20] sm:$0xff]
        %v4428 = vld [vmem:[%s4422 + $0x28] sm:$0xff]
        %v4429 = vld [vmem:[%s4422 + $0x30] sm:$0xf]
        %v4430 = vld [vmem:[%s4422 + $0x38] sm:$0xf]
        %v4432 = vsel %vm1106, %v1085, 0
        %v4435 = vsel %vm1106, %v1086, 0
        %v4438 = vsel %vm1106, %v1087, 0
        %v4441 = vsel %vm1106, %v1088, 0
        %v4444 = vsel %vm1395, %v4429, 0
        %v4447 = vsel %vm1395, %v4430, 0
        %4449 = vmatprep.subr.mxu0 0.0
        %4450 = vmatpush1.msra.mxu0 0.0
        %4451 = vmatprep.subr.mxu0 0.0
        %4452 = vmatpush1.msra.mxu0 0.0
        %4453 = vmatprep.subr.mxu0 0.0
        %4454 = vmatpush1.msra.mxu0 0.0
        %4455 = vmatprep.subr.mxu0 0.0
        %4456 = vmatpush1.msra.mxu0 0.0
        %4457 = vmatprep.subr.mxu0 0.0
        %4458 = vmatpush1.msra.mxu0 0.0
        %4459 = vmatprep.subr.mxu0 0.0
        %4460 = vmatpush1.msra.mxu0 0.0
        %4461 = vmatprep.subr.mxu0 0.0
        %4462 = vmatpush1.msra.mxu0 0.0
        %4463 = vmatprep.subr.mxu0 0.0
        %4464 = vmatpush1.msra.mxu0 0.0
        %4465 = vmatprep.subr.mxu0 0.0
        %4466 = vmatpush1.msra.mxu0 0.0
        %4467 = vmatprep.subr.mxu0 0.0
        %4468 = vmatpush1.msra.mxu0 0.0
        %4469 = vmatprep.subr.mxu0 0.0
        %4470 = vmatpush1.msra.mxu0 0.0
        %4471 = vmatprep.subr.mxu0 0.0
        %4472 = vmatpush1.msra.mxu0 0.0
        %4473 = vmatprep.subr.mxu0 %v4447
        %4474 = vmatpush1.msra.mxu0 %v4444
        %4475 = vmatprep.subr.mxu0 %v4428
        %4476 = vmatpush1.msra.mxu0 %v4427
        %4477 = vmatprep.subr.mxu0 %v4426
        %4478 = vmatpush1.msra.mxu0 %v4425
        %4479 = vmatprep.subr.mxu0 %v4424
        %4480 = vmatpush1.msra.mxu0 %v4423
        %4481 = vmatprep.subr.mxu0 0.0
        %4482 = vmatpush2.msra.mxu0 0.0
        %4483 = vmatprep.subr.mxu0 0.0
        %4484 = vmatpush2.msra.mxu0 0.0
        %4485 = vmatprep.subr.mxu0 0.0
        %4486 = vmatpush2.msra.mxu0 0.0
        %4487 = vmatprep.subr.mxu0 0.0
        %4488 = vmatpush2.msra.mxu0 0.0
        %4489 = vmatprep.subr.mxu0 0.0
        %4490 = vmatpush2.msra.mxu0 0.0
        %4491 = vmatprep.subr.mxu0 0.0
        %4492 = vmatpush2.msra.mxu0 0.0
        %4493 = vmatprep.subr.mxu0 0.0
        %4494 = vmatpush2.msra.mxu0 0.0
        %4495 = vmatprep.subr.mxu0 0.0
        %4496 = vmatpush2.msra.mxu0 0.0
        %4497 = vmatprep.subr.mxu0 0.0
        %4498 = vmatpush2.msra.mxu0 0.0
        %4499 = vmatprep.subr.mxu0 0.0
        %4500 = vmatpush2.msra.mxu0 0.0
        %4501 = vmatprep.subr.mxu0 0.0
        %4502 = vmatpush2.msra.mxu0 0.0
        %4503 = vmatprep.subr.mxu0 0.0
        %4504 = vmatpush2.msra.mxu0 0.0
        %4505 = vmatprep.subr.mxu0 0.0
        %4506 = vmatpush2.msra.mxu0 0.0
        %4507 = vmatprep.subr.mxu0 0.0
        %4508 = vmatpush2.msra.mxu0 0.0
        %4509 = vmatprep.subr.mxu0 0.0
        %4510 = vmatpush2.msra.mxu0 0.0
        %4511 = vmatprep.subr.mxu0 0.0
        %4512 = vmatpush2.msra.mxu0 0.0
        %4513 = vmatprep.mubr.f32.mxu0 0.0
        %4514 = vmatmul.mubr.f32.gmra.mxu0 %v1144
        %v4515 = vpop.f32.mrf.mxu0
        %v4516 = vadd.f32 0.0, %v4515
        %v4517 = vpop.f32.mrf.mxu0
        %v4518 = vadd.f32 0.0, %v4517
        %4519 = vmatprep.mubr.f32.mxu0 0.0
        %4520 = vmatmul.mubr.f32.gmra.mxu0 %v1147
        %v4521 = vpop.f32.mrf.mxu0
        %v4522 = vadd.f32 0.0, %v4521
        %v4523 = vpop.f32.mrf.mxu0
        %v4524 = vadd.f32 0.0, %v4523
        %4525 = vmatprep.mubr.f32.mxu0 0.0
        %4526 = vmatmul.mubr.f32.gmra.mxu0 %v1150
        %v4527 = vpop.f32.mrf.mxu0
        %v4528 = vadd.f32 0.0, %v4527
        %v4529 = vpop.f32.mrf.mxu0
        %v4530 = vadd.f32 0.0, %v4529
        %4531 = vmatprep.mubr.f32.mxu0 0.0
        %4532 = vmatmul.mubr.f32.gmra.mxu0 %v1153
        %v4533 = vpop.f32.mrf.mxu0
        %v4534 = vadd.f32 0.0, %v4533
        %v4535 = vpop.f32.mrf.mxu0
        %v4536 = vadd.f32 0.0, %v4535
        %4537 = vmatprep.mubr.f32.mxu0 0.0
        %4538 = vmatmul.mubr.f32.gmra.mxu0 %v1156
        %v4539 = vpop.f32.mrf.mxu0
        %v4540 = vadd.f32 0.0, %v4539
        %v4541 = vpop.f32.mrf.mxu0
        %v4542 = vadd.f32 0.0, %v4541
        %4543 = vmatprep.mubr.f32.mxu0 0.0
        %4544 = vmatmul.mubr.f32.gmra.mxu0 %v1159
        %v4545 = vpop.f32.mrf.mxu0
        %v4546 = vadd.f32 0.0, %v4545
        %v4547 = vpop.f32.mrf.mxu0
        %v4548 = vadd.f32 0.0, %v4547
        %4549 = vmatprep.mubr.f32.mxu0 0.0
        %4550 = vmatmul.mubr.f32.gmra.mxu0 %v1162
        %v4551 = vpop.f32.mrf.mxu0
        %v4552 = vadd.f32 0.0, %v4551
        %v4553 = vpop.f32.mrf.mxu0
        %v4554 = vadd.f32 0.0, %v4553
        %4555 = vmatprep.mubr.f32.mxu0 0.0
        %4556 = vmatmul.mubr.f32.gmra.mxu0 %v1165
        %v4557 = vpop.f32.mrf.mxu0
        %v4558 = vadd.f32 0.0, %v4557
        %v4559 = vpop.f32.mrf.mxu0
        %v4560 = vadd.f32 0.0, %v4559
        %4561 = vmatprep.mubr.f32.mxu0 0.0
        %4562 = vmatmul.mubr.f32.gmra.mxu0 %v1168
        %v4563 = vpop.f32.mrf.mxu0
        %v4564 = vadd.f32 0.0, %v4563
        %v4565 = vpop.f32.mrf.mxu0
        %v4566 = vadd.f32 0.0, %v4565
        %4567 = vmatprep.mubr.f32.mxu0 0.0
        %4568 = vmatmul.mubr.f32.gmra.mxu0 %v1171
        %v4569 = vpop.f32.mrf.mxu0
        %v4570 = vadd.f32 0.0, %v4569
        %v4571 = vpop.f32.mrf.mxu0
        %v4572 = vadd.f32 0.0, %v4571
        %4573 = vmatprep.mubr.f32.mxu0 0.0
        %4574 = vmatmul.mubr.f32.gmra.mxu0 %v1174
        %v4575 = vpop.f32.mrf.mxu0
        %v4576 = vadd.f32 0.0, %v4575
        %v4577 = vpop.f32.mrf.mxu0
        %v4578 = vadd.f32 0.0, %v4577
        %4579 = vmatprep.mubr.f32.mxu0 0.0
        %4580 = vmatmul.mubr.f32.gmra.mxu0 %v1177
        %v4581 = vpop.f32.mrf.mxu0
        %v4582 = vadd.f32 0.0, %v4581
        %v4583 = vpop.f32.mrf.mxu0
        %v4584 = vadd.f32 0.0, %v4583
        %4585 = vmatprep.mubr.f32.mxu0 0.0
        %4586 = vmatmul.mubr.f32.gmra.mxu0 %v1180
        %v4587 = vpop.f32.mrf.mxu0
        %v4588 = vadd.f32 0.0, %v4587
        %v4589 = vpop.f32.mrf.mxu0
        %v4590 = vadd.f32 0.0, %v4589
        %4591 = vmatprep.mubr.f32.mxu0 0.0
        %4592 = vmatmul.mubr.f32.gmra.mxu0 %v1183
        %v4593 = vpop.f32.mrf.mxu0
        %v4594 = vadd.f32 0.0, %v4593
        %v4595 = vpop.f32.mrf.mxu0
        %v4596 = vadd.f32 0.0, %v4595
        %4597 = vmatprep.mubr.f32.mxu0 0.0
        %4598 = vmatmul.mubr.f32.gmra.mxu0 %v1186
        %v4599 = vpop.f32.mrf.mxu0
        %v4600 = vadd.f32 0.0, %v4599
        %v4601 = vpop.f32.mrf.mxu0
        %v4602 = vadd.f32 0.0, %v4601
        %4603 = vmatprep.mubr.f32.mxu0 0.0
        %4604 = vmatmul.mubr.f32.gmra.mxu0 %v1189
        %v4605 = vpop.f32.mrf.mxu0
        %v4606 = vadd.f32 0.0, %v4605
        %v4607 = vpop.f32.mrf.mxu0
        %v4608 = vadd.f32 0.0, %v4607
        %4609 = vmatprep.mubr.f32.mxu0 0.0
        %4610 = vmatmul.mubr.f32.gmra.mxu0 %v1192
        %v4611 = vpop.f32.mrf.mxu0
        %v4612 = vadd.f32 0.0, %v4611
        %v4613 = vpop.f32.mrf.mxu0
        %v4614 = vadd.f32 0.0, %v4613
        %4615 = vmatprep.mubr.f32.mxu0 0.0
        %4616 = vmatmul.mubr.f32.gmra.mxu0 %v1195
        %v4617 = vpop.f32.mrf.mxu0
        %v4618 = vadd.f32 0.0, %v4617
        %v4619 = vpop.f32.mrf.mxu0
        %v4620 = vadd.f32 0.0, %v4619
        %4621 = vmatprep.mubr.f32.mxu0 0.0
        %4622 = vmatmul.mubr.f32.gmra.mxu0 %v1198
        %v4623 = vpop.f32.mrf.mxu0
        %v4624 = vadd.f32 0.0, %v4623
        %v4625 = vpop.f32.mrf.mxu0
        %v4626 = vadd.f32 0.0, %v4625
        %4627 = vmatprep.mubr.f32.mxu0 0.0
        %4628 = vmatmul.mubr.f32.gmra.mxu0 %v1201
        %v4629 = vpop.f32.mrf.mxu0
        %v4630 = vadd.f32 0.0, %v4629
        %v4631 = vpop.f32.mrf.mxu0
        %v4632 = vadd.f32 0.0, %v4631
        %4633 = vmatprep.mubr.f32.mxu0 0.0
        %4634 = vmatmul.mubr.f32.gmra.mxu0 %v1204
        %v4635 = vpop.f32.mrf.mxu0
        %v4636 = vadd.f32 0.0, %v4635
        %v4637 = vpop.f32.mrf.mxu0
        %v4638 = vadd.f32 0.0, %v4637
        %4639 = vmatprep.mubr.f32.mxu0 0.0
        %4640 = vmatmul.mubr.f32.gmra.mxu0 %v1207
        %v4641 = vpop.f32.mrf.mxu0
        %v4642 = vadd.f32 0.0, %v4641
        %v4643 = vpop.f32.mrf.mxu0
        %v4644 = vadd.f32 0.0, %v4643
        %4645 = vmatprep.mubr.f32.mxu0 0.0
        %4646 = vmatmul.mubr.f32.gmra.mxu0 %v1210
        %v4647 = vpop.f32.mrf.mxu0
        %v4648 = vadd.f32 0.0, %v4647
        %v4649 = vpop.f32.mrf.mxu0
        %v4650 = vadd.f32 0.0, %v4649
        %4651 = vmatprep.mubr.f32.mxu0 0.0
        %4652 = vmatmul.mubr.f32.gmra.mxu0 %v1213
        %v4653 = vpop.f32.mrf.mxu0
        %v4654 = vadd.f32 0.0, %v4653
        %v4655 = vpop.f32.mrf.mxu0
        %v4656 = vadd.f32 0.0, %v4655
        %4657 = vmatprep.mubr.f32.mxu0 0.0
        %4658 = vmatmul.mubr.f32.gmra.mxu0 %v1216
        %v4659 = vpop.f32.mrf.mxu0
        %v4660 = vadd.f32 0.0, %v4659
        %v4661 = vpop.f32.mrf.mxu0
        %v4662 = vadd.f32 0.0, %v4661
        %4663 = vmatprep.mubr.f32.mxu0 0.0
        %4664 = vmatmul.mubr.f32.gmra.mxu0 %v1219
        %v4665 = vpop.f32.mrf.mxu0
        %v4666 = vadd.f32 0.0, %v4665
        %v4667 = vpop.f32.mrf.mxu0
        %v4668 = vadd.f32 0.0, %v4667
        %4669 = vmatprep.mubr.f32.mxu0 0.0
        %4670 = vmatmul.mubr.f32.gmra.mxu0 %v1222
        %v4671 = vpop.f32.mrf.mxu0
        %v4672 = vadd.f32 0.0, %v4671
        %v4673 = vpop.f32.mrf.mxu0
        %v4674 = vadd.f32 0.0, %v4673
        %4675 = vmatprep.mubr.f32.mxu0 0.0
        %4676 = vmatmul.mubr.f32.gmra.mxu0 %v1225
        %v4677 = vpop.f32.mrf.mxu0
        %v4678 = vadd.f32 0.0, %v4677
        %v4679 = vpop.f32.mrf.mxu0
        %v4680 = vadd.f32 0.0, %v4679
        %4681 = vmatprep.mubr.f32.mxu0 0.0
        %4682 = vmatmul.mubr.f32.gmra.mxu0 %v1228
        %v4683 = vpop.f32.mrf.mxu0
        %v4684 = vadd.f32 0.0, %v4683
        %v4685 = vpop.f32.mrf.mxu0
        %v4686 = vadd.f32 0.0, %v4685
        %4687 = vmatprep.mubr.f32.mxu0 0.0
        %4688 = vmatmul.mubr.f32.gmra.mxu0 %v1231
        %v4689 = vpop.f32.mrf.mxu0
        %v4690 = vadd.f32 0.0, %v4689
        %v4691 = vpop.f32.mrf.mxu0
        %v4692 = vadd.f32 0.0, %v4691
        %4693 = vmatprep.mubr.f32.mxu0 0.0
        %4694 = vmatmul.mubr.f32.gmra.mxu0 %v1234
        %v4695 = vpop.f32.mrf.mxu0
        %v4696 = vadd.f32 0.0, %v4695
        %v4697 = vpop.f32.mrf.mxu0
        %v4698 = vadd.f32 0.0, %v4697
        %4699 = vmatprep.mubr.f32.mxu0 0.0
        %4700 = vmatmul.mubr.f32.gmra.mxu0 %v1237
        %v4701 = vpop.f32.mrf.mxu0
        %v4702 = vadd.f32 0.0, %v4701
        %v4703 = vpop.f32.mrf.mxu0
        %v4704 = vadd.f32 0.0, %v4703
        %4705 = vmatprep.mubr.f32.mxu0 0.0
        %4706 = vmatmul.mubr.f32.gmra.mxu0 %v1240
        %v4707 = vpop.f32.mrf.mxu0
        %v4708 = vadd.f32 0.0, %v4707
        %v4709 = vpop.f32.mrf.mxu0
        %v4710 = vadd.f32 0.0, %v4709
        %4711 = vmatprep.mubr.f32.mxu0 0.0
        %4712 = vmatmul.mubr.f32.gmra.mxu0 %v1243
        %v4713 = vpop.f32.mrf.mxu0
        %v4714 = vadd.f32 0.0, %v4713
        %v4715 = vpop.f32.mrf.mxu0
        %v4716 = vadd.f32 0.0, %v4715
        %4717 = vmatprep.mubr.f32.mxu0 0.0
        %4718 = vmatmul.mubr.f32.gmra.mxu0 %v1246
        %v4719 = vpop.f32.mrf.mxu0
        %v4720 = vadd.f32 0.0, %v4719
        %v4721 = vpop.f32.mrf.mxu0
        %v4722 = vadd.f32 0.0, %v4721
        %4723 = vmatprep.mubr.f32.mxu0 0.0
        %4724 = vmatmul.mubr.f32.gmra.mxu0 %v1249
        %v4725 = vpop.f32.mrf.mxu0
        %v4726 = vadd.f32 0.0, %v4725
        %v4727 = vpop.f32.mrf.mxu0
        %v4728 = vadd.f32 0.0, %v4727
        %4729 = vmatprep.mubr.f32.mxu0 0.0
        %4730 = vmatmul.mubr.f32.gmra.mxu0 %v1252
        %v4731 = vpop.f32.mrf.mxu0
        %v4732 = vadd.f32 0.0, %v4731
        %v4733 = vpop.f32.mrf.mxu0
        %v4734 = vadd.f32 0.0, %v4733
        %4735 = vmatprep.mubr.f32.mxu0 0.0
        %4736 = vmatmul.mubr.f32.gmra.mxu0 %v1255
        %v4737 = vpop.f32.mrf.mxu0
        %v4738 = vadd.f32 0.0, %v4737
        %v4739 = vpop.f32.mrf.mxu0
        %v4740 = vadd.f32 0.0, %v4739
        %4741 = vmatprep.mubr.f32.mxu0 0.0
        %4742 = vmatmul.mubr.f32.gmra.mxu0 %v1258
        %v4743 = vpop.f32.mrf.mxu0
        %v4744 = vadd.f32 0.0, %v4743
        %v4745 = vpop.f32.mrf.mxu0
        %v4746 = vadd.f32 0.0, %v4745
        %4747 = vmatprep.mubr.f32.mxu0 0.0
        %4748 = vmatmul.mubr.f32.gmra.mxu0 %v1261
        %v4749 = vpop.f32.mrf.mxu0
        %v4750 = vadd.f32 0.0, %v4749
        %v4751 = vpop.f32.mrf.mxu0
        %v4752 = vadd.f32 0.0, %v4751
        %4753 = vmatprep.mubr.f32.mxu0 0.0
        %4754 = vmatmul.mubr.f32.gmra.mxu0 %v1264
        %v4755 = vpop.f32.mrf.mxu0
        %v4756 = vadd.f32 0.0, %v4755
        %v4757 = vpop.f32.mrf.mxu0
        %v4758 = vadd.f32 0.0, %v4757
        %4759 = vmatprep.mubr.f32.mxu0 0.0
        %4760 = vmatmul.mubr.f32.gmra.mxu0 %v1267
        %v4761 = vpop.f32.mrf.mxu0
        %v4762 = vadd.f32 0.0, %v4761
        %v4763 = vpop.f32.mrf.mxu0
        %v4764 = vadd.f32 0.0, %v4763
        %4765 = vmatprep.mubr.f32.mxu0 0.0
        %4766 = vmatmul.mubr.f32.gmra.mxu0 %v1270
        %v4767 = vpop.f32.mrf.mxu0
        %v4768 = vadd.f32 0.0, %v4767
        %v4769 = vpop.f32.mrf.mxu0
        %v4770 = vadd.f32 0.0, %v4769
        %4771 = vmatprep.mubr.f32.mxu0 0.0
        %4772 = vmatmul.mubr.f32.gmra.mxu0 %v1273
        %v4773 = vpop.f32.mrf.mxu0
        %v4774 = vadd.f32 0.0, %v4773
        %v4775 = vpop.f32.mrf.mxu0
        %v4776 = vadd.f32 0.0, %v4775
        %4777 = vmatprep.mubr.f32.mxu0 0.0
        %4778 = vmatmul.mubr.f32.gmra.mxu0 %v1276
        %v4779 = vpop.f32.mrf.mxu0
        %v4780 = vadd.f32 0.0, %v4779
        %v4781 = vpop.f32.mrf.mxu0
        %v4782 = vadd.f32 0.0, %v4781
        %4783 = vmatprep.mubr.f32.mxu0 0.0
        %4784 = vmatmul.mubr.f32.gmra.mxu0 %v1279
        %v4785 = vpop.f32.mrf.mxu0
        %v4786 = vadd.f32 0.0, %v4785
        %v4787 = vpop.f32.mrf.mxu0
        %v4788 = vadd.f32 0.0, %v4787
        %4789 = vmatprep.mubr.f32.mxu0 0.0
        %4790 = vmatmul.mubr.f32.gmra.mxu0 %v1282
        %v4791 = vpop.f32.mrf.mxu0
        %v4792 = vadd.f32 0.0, %v4791
        %v4793 = vpop.f32.mrf.mxu0
        %v4794 = vadd.f32 0.0, %v4793
        %4795 = vmatprep.mubr.f32.mxu0 0.0
        %4796 = vmatmul.mubr.f32.gmra.mxu0 %v1285
        %v4797 = vpop.f32.mrf.mxu0
        %v4798 = vadd.f32 0.0, %v4797
        %v4799 = vpop.f32.mrf.mxu0
        %v4800 = vadd.f32 0.0, %v4799
        %4801 = vmatprep.mubr.f32.mxu0 0.0
        %4802 = vmatmul.mubr.f32.gmra.mxu0 %v1288
        %v4803 = vpop.f32.mrf.mxu0
        %v4804 = vadd.f32 0.0, %v4803
        %v4805 = vpop.f32.mrf.mxu0
        %v4806 = vadd.f32 0.0, %v4805
        %4807 = vmatprep.mubr.f32.mxu0 0.0
        %4808 = vmatmul.mubr.f32.gmra.mxu0 %v1291
        %v4809 = vpop.f32.mrf.mxu0
        %v4810 = vadd.f32 0.0, %v4809
        %v4811 = vpop.f32.mrf.mxu0
        %v4812 = vadd.f32 0.0, %v4811
        %4813 = vmatprep.mubr.f32.mxu0 0.0
        %4814 = vmatmul.mubr.f32.gmra.mxu0 %v1294
        %v4815 = vpop.f32.mrf.mxu0
        %v4816 = vadd.f32 0.0, %v4815
        %v4817 = vpop.f32.mrf.mxu0
        %v4818 = vadd.f32 0.0, %v4817
        %4819 = vmatprep.mubr.f32.mxu0 0.0
        %4820 = vmatmul.mubr.f32.gmra.mxu0 %v1297
        %v4821 = vpop.f32.mrf.mxu0
        %v4822 = vadd.f32 0.0, %v4821
        %v4823 = vpop.f32.mrf.mxu0
        %v4824 = vadd.f32 0.0, %v4823
        %4825 = vmatprep.mubr.f32.mxu0 0.0
        %4826 = vmatmul.mubr.f32.gmra.mxu0 %v1300
        %v4827 = vpop.f32.mrf.mxu0
        %v4828 = vadd.f32 0.0, %v4827
        %v4829 = vpop.f32.mrf.mxu0
        %v4830 = vadd.f32 0.0, %v4829
        %4831 = vmatprep.mubr.f32.mxu0 0.0
        %4832 = vmatmul.mubr.f32.gmra.mxu0 %v1303
        %v4833 = vpop.f32.mrf.mxu0
        %v4834 = vadd.f32 0.0, %v4833
        %v4835 = vpop.f32.mrf.mxu0
        %v4836 = vadd.f32 0.0, %v4835
        %4837 = vmatprep.mubr.f32.mxu0 0.0
        %4838 = vmatmul.mubr.f32.gmra.mxu0 %v1306
        %v4839 = vpop.f32.mrf.mxu0
        %v4840 = vadd.f32 0.0, %v4839
        %v4841 = vpop.f32.mrf.mxu0
        %v4842 = vadd.f32 0.0, %v4841
        %4843 = vmatprep.mubr.f32.mxu0 0.0
        %4844 = vmatmul.mubr.f32.gmra.mxu0 %v1309
        %v4845 = vpop.f32.mrf.mxu0
        %v4846 = vadd.f32 0.0, %v4845
        %v4847 = vpop.f32.mrf.mxu0
        %v4848 = vadd.f32 0.0, %v4847
        %4849 = vmatprep.mubr.f32.mxu0 0.0
        %4850 = vmatmul.mubr.f32.gmra.mxu0 %v1312
        %v4851 = vpop.f32.mrf.mxu0
        %v4852 = vadd.f32 0.0, %v4851
        %v4853 = vpop.f32.mrf.mxu0
        %v4854 = vadd.f32 0.0, %v4853
        %4855 = vmatprep.mubr.f32.mxu0 0.0
        %4856 = vmatmul.mubr.f32.gmra.mxu0 %v1315
        %v4857 = vpop.f32.mrf.mxu0
        %v4858 = vadd.f32 0.0, %v4857
        %v4859 = vpop.f32.mrf.mxu0
        %v4860 = vadd.f32 0.0, %v4859
        %4861 = vmatprep.mubr.f32.mxu0 0.0
        %4862 = vmatmul.mubr.f32.gmra.mxu0 %v1318
        %v4863 = vpop.f32.mrf.mxu0
        %v4864 = vadd.f32 0.0, %v4863
        %v4865 = vpop.f32.mrf.mxu0
        %v4866 = vadd.f32 0.0, %v4865
        %4867 = vmatprep.mubr.f32.mxu0 0.0
        %4868 = vmatmul.mubr.f32.gmra.mxu0 %v1321
        %v4869 = vpop.f32.mrf.mxu0
        %v4870 = vadd.f32 0.0, %v4869
        %v4871 = vpop.f32.mrf.mxu0
        %v4872 = vadd.f32 0.0, %v4871
        %4873 = vmatprep.mubr.f32.mxu0 0.0
        %4874 = vmatmul.mubr.f32.gmra.mxu0 %v1324
        %v4875 = vpop.f32.mrf.mxu0
        %v4876 = vadd.f32 0.0, %v4875
        %v4877 = vpop.f32.mrf.mxu0
        %v4878 = vadd.f32 0.0, %v4877
        %4879 = vmatprep.mubr.f32.mxu0 0.0
        %4880 = vmatmul.mubr.f32.gmra.mxu0 %v1327
        %v4881 = vpop.f32.mrf.mxu0
        %v4882 = vadd.f32 0.0, %v4881
        %v4883 = vpop.f32.mrf.mxu0
        %v4884 = vadd.f32 0.0, %v4883
        %4885 = vmatprep.mubr.f32.mxu0 0.0
        %4886 = vmatmul.mubr.f32.gmra.mxu0 %v1330
        %v4887 = vpop.f32.mrf.mxu0
        %v4888 = vadd.f32 0.0, %v4887
        %v4889 = vpop.f32.mrf.mxu0
        %v4890 = vadd.f32 0.0, %v4889
        %4891 = vmatprep.mubr.f32.mxu0 0.0
        %4892 = vmatmul.mubr.f32.gmra.mxu0 %v1333
        %v4893 = vpop.f32.mrf.mxu0
        %v4894 = vadd.f32 0.0, %v4893
        %v4895 = vpop.f32.mrf.mxu0
        %v4896 = vadd.f32 0.0, %v4895
        %4897 = vmatprep.mubr.f32.mxu0 0.0
        %4898 = vmatmul.mubr.f32.gmra.mxu0 %v1336
        %v4899 = vpop.f32.mrf.mxu0
        %v4900 = vadd.f32 0.0, %v4899
        %v4901 = vpop.f32.mrf.mxu0
        %v4902 = vadd.f32 0.0, %v4901
        %4903 = vmatprep.mubr.f32.mxu0 0.0
        %4904 = vmatmul.mubr.f32.gmra.mxu0 %v1339
        %v4905 = vpop.f32.mrf.mxu0
        %v4906 = vadd.f32 0.0, %v4905
        %v4907 = vpop.f32.mrf.mxu0
        %v4908 = vadd.f32 0.0, %v4907
        %4909 = vmatprep.mubr.f32.mxu0 0.0
        %4910 = vmatmul.mubr.f32.gmra.mxu0 %v1342
        %v4911 = vpop.f32.mrf.mxu0
        %v4912 = vadd.f32 0.0, %v4911
        %v4913 = vpop.f32.mrf.mxu0
        %v4914 = vadd.f32 0.0, %v4913
        %4915 = vmatprep.mubr.f32.mxu0 0.0
        %4916 = vmatmul.mubr.f32.gmra.mxu0 %v1345
        %v4917 = vpop.f32.mrf.mxu0
        %v4918 = vadd.f32 0.0, %v4917
        %v4919 = vpop.f32.mrf.mxu0
        %v4920 = vadd.f32 0.0, %v4919
        %4921 = vmatprep.mubr.f32.mxu0 0.0
        %4922 = vmatmul.mubr.f32.gmra.mxu0 %v1348
        %v4923 = vpop.f32.mrf.mxu0
        %v4924 = vadd.f32 0.0, %v4923
        %v4925 = vpop.f32.mrf.mxu0
        %v4926 = vadd.f32 0.0, %v4925
        %4927 = vmatprep.mubr.f32.mxu0 0.0
        %4928 = vmatmul.mubr.f32.gmra.mxu0 %v1351
        %v4929 = vpop.f32.mrf.mxu0
        %v4930 = vadd.f32 0.0, %v4929
        %v4931 = vpop.f32.mrf.mxu0
        %v4932 = vadd.f32 0.0, %v4931
        %4933 = vmatprep.mubr.f32.mxu0 0.0
        %4934 = vmatmul.mubr.f32.gmra.mxu0 %v1354
        %v4935 = vpop.f32.mrf.mxu0
        %v4936 = vadd.f32 0.0, %v4935
        %v4937 = vpop.f32.mrf.mxu0
        %v4938 = vadd.f32 0.0, %v4937
        %4939 = vmatprep.mubr.f32.mxu0 0.0
        %4940 = vmatmul.mubr.f32.gmra.mxu0 %v1357
        %v4941 = vpop.f32.mrf.mxu0
        %v4942 = vadd.f32 0.0, %v4941
        %v4943 = vpop.f32.mrf.mxu0
        %v4944 = vadd.f32 0.0, %v4943
        %4945 = vmatprep.mubr.f32.mxu0 0.0
        %4946 = vmatmul.mubr.f32.gmra.mxu0 %v1360
        %v4947 = vpop.f32.mrf.mxu0
        %v4948 = vadd.f32 0.0, %v4947
        %v4949 = vpop.f32.mrf.mxu0
        %v4950 = vadd.f32 0.0, %v4949
        %4951 = vmatprep.mubr.f32.mxu0 0.0
        %4952 = vmatmul.mubr.f32.gmra.mxu0 %v1363
        %v4953 = vpop.f32.mrf.mxu0
        %v4954 = vadd.f32 0.0, %v4953
        %v4955 = vpop.f32.mrf.mxu0
        %v4956 = vadd.f32 0.0, %v4955
        %4957 = vmatprep.mubr.f32.mxu0 0.0
        %4958 = vmatmul.mubr.f32.gmra.mxu0 %v1366
        %v4959 = vpop.f32.mrf.mxu0
        %v4960 = vadd.f32 0.0, %v4959
        %v4961 = vpop.f32.mrf.mxu0
        %v4962 = vadd.f32 0.0, %v4961
        %4963 = vmatprep.mubr.f32.mxu0 0.0
        %4964 = vmatmul.mubr.f32.gmra.mxu0 %v1369
        %v4965 = vpop.f32.mrf.mxu0
        %v4966 = vadd.f32 0.0, %v4965
        %v4967 = vpop.f32.mrf.mxu0
        %v4968 = vadd.f32 0.0, %v4967
        %4969 = vmatprep.mubr.f32.mxu0 0.0
        %4970 = vmatmul.mubr.f32.gmra.mxu0 %v1372
        %v4971 = vpop.f32.mrf.mxu0
        %v4972 = vadd.f32 0.0, %v4971
        %v4973 = vpop.f32.mrf.mxu0
        %v4974 = vadd.f32 0.0, %v4973
        %4975 = vmatprep.mubr.f32.mxu0 0.0
        %4976 = vmatmul.mubr.f32.gmra.mxu0 %v1375
        %v4977 = vpop.f32.mrf.mxu0
        %v4978 = vadd.f32 0.0, %v4977
        %v4979 = vpop.f32.mrf.mxu0
        %v4980 = vadd.f32 0.0, %v4979
        %4981 = vmatprep.mubr.f32.mxu0 0.0
        %4982 = vmatmul.mubr.f32.gmra.mxu0 %v1378
        %v4983 = vpop.f32.mrf.mxu0
        %v4984 = vadd.f32 0.0, %v4983
        %v4985 = vpop.f32.mrf.mxu0
        %v4986 = vadd.f32 0.0, %v4985
        %4987 = vmatprep.mubr.f32.mxu0 0.0
        %4988 = vmatmul.mubr.f32.gmra.mxu0 %v1381
        %v4989 = vpop.f32.mrf.mxu0
        %v4990 = vadd.f32 0.0, %v4989
        %v4991 = vpop.f32.mrf.mxu0
        %v4992 = vadd.f32 0.0, %v4991
        %4993 = vmatprep.mubr.f32.mxu0 0.0
        %4994 = vmatmul.mubr.f32.gmra.mxu0 %v1384
        %v4995 = vpop.f32.mrf.mxu0
        %v4996 = vadd.f32 0.0, %v4995
        %v4997 = vpop.f32.mrf.mxu0
        %v4998 = vadd.f32 0.0, %v4997
        %4999 = vmatprep.mubr.f32.mxu0 0.0
        %5000 = vmatmul.mubr.f32.gmra.mxu0 %v1387
        %v5001 = vpop.f32.mrf.mxu0
        %v5002 = vadd.f32 0.0, %v5001
        %v5003 = vpop.f32.mrf.mxu0
        %v5004 = vadd.f32 0.0, %v5003
        %5005 = vmatprep.mubr.f32.mxu0 0.0
        %5006 = vmatmul.mubr.f32.gmra.mxu0 %v1390
        %v5007 = vpop.f32.mrf.mxu0
        %v5008 = vadd.f32 0.0, %v5007
        %v5009 = vpop.f32.mrf.mxu0
        %v5010 = vadd.f32 0.0, %v5009
        %5011 = vmatprep.mubr.f32.mxu0 0.0
        %5012 = vmatmul.mubr.f32.gmra.mxu0 %v1393
        %v5013 = vpop.f32.mrf.mxu0
        %v5014 = vadd.f32 0.0, %v5013
        %v5015 = vpop.f32.mrf.mxu0
        %v5016 = vadd.f32 0.0, %v5015
        %5017 = vmatprep.mubr.f32.mxu0 0.0
        %5018 = vmatmul.mubr.f32.gmra.mxu0 %v2712
        %v5019 = vpop.f32.mrf.mxu0
        %v5020 = vadd.f32 0.0, %v5019
        %v5021 = vpop.f32.mrf.mxu0
        %v5022 = vadd.f32 0.0, %v5021
        %5023 = vmatprep.mubr.f32.mxu0 0.0
        %5024 = vmatmul.mubr.f32.gmra.mxu0 %v2715
        %v5025 = vpop.f32.mrf.mxu0
        %v5026 = vadd.f32 0.0, %v5025
        %v5027 = vpop.f32.mrf.mxu0
        %v5028 = vadd.f32 0.0, %v5027
        %5029 = vmatprep.mubr.f32.mxu0 0.0
        %5030 = vmatmul.mubr.f32.gmra.mxu0 %v2718
        %v5031 = vpop.f32.mrf.mxu0
        %v5032 = vadd.f32 0.0, %v5031
        %v5033 = vpop.f32.mrf.mxu0
        %v5034 = vadd.f32 0.0, %v5033
        %5035 = vmatprep.mubr.f32.mxu0 0.0
        %5036 = vmatmul.mubr.f32.gmra.mxu0 %v2721
        %v5037 = vpop.f32.mrf.mxu0
        %v5038 = vadd.f32 0.0, %v5037
        %v5039 = vpop.f32.mrf.mxu0
        %v5040 = vadd.f32 0.0, %v5039
        %5041 = vmatprep.mubr.f32.mxu0 0.0
        %5042 = vmatmul.mubr.f32.gmra.mxu0 %v3572
        %v5043 = vpop.f32.mrf.mxu0
        %v5044 = vadd.f32 0.0, %v5043
        %v5045 = vpop.f32.mrf.mxu0
        %v5046 = vadd.f32 0.0, %v5045
        %5047 = vmatprep.mubr.f32.mxu0 0.0
        %5048 = vmatmul.mubr.f32.gmra.mxu0 %v3575
        %v5049 = vpop.f32.mrf.mxu0
        %v5050 = vadd.f32 0.0, %v5049
        %v5051 = vpop.f32.mrf.mxu0
        %v5052 = vadd.f32 0.0, %v5051
        %5053 = vmatprep.mubr.f32.mxu0 0.0
        %5054 = vmatmul.mubr.f32.gmra.mxu0 %v3578
        %v5055 = vpop.f32.mrf.mxu0
        %v5056 = vadd.f32 0.0, %v5055
        %v5057 = vpop.f32.mrf.mxu0
        %v5058 = vadd.f32 0.0, %v5057
        %5059 = vmatprep.mubr.f32.mxu0 0.0
        %5060 = vmatmul.mubr.f32.gmra.mxu0 %v3581
        %v5061 = vpop.f32.mrf.mxu0
        %v5062 = vadd.f32 0.0, %v5061
        %v5063 = vpop.f32.mrf.mxu0
        %v5064 = vadd.f32 0.0, %v5063
        %5065 = vmatprep.mubr.f32.mxu0 0.0
        %5066 = vmatmul.mubr.f32.gmra.mxu0 %v4432
        %v5067 = vpop.f32.mrf.mxu0
        %v5068 = vadd.f32 0.0, %v5067
        %v5069 = vpop.f32.mrf.mxu0
        %v5070 = vadd.f32 0.0, %v5069
        %5071 = vmatprep.mubr.f32.mxu0 0.0
        %5072 = vmatmul.mubr.f32.gmra.mxu0 %v4435
        %v5073 = vpop.f32.mrf.mxu0
        %v5074 = vadd.f32 0.0, %v5073
        %v5075 = vpop.f32.mrf.mxu0
        %v5076 = vadd.f32 0.0, %v5075
        %5077 = vmatprep.mubr.f32.mxu0 0.0
        %5078 = vmatmul.mubr.f32.gmra.mxu0 %v4438
        %v5079 = vpop.f32.mrf.mxu0
        %v5080 = vadd.f32 0.0, %v5079
        %v5081 = vpop.f32.mrf.mxu0
        %v5082 = vadd.f32 0.0, %v5081
        %5083 = vmatprep.mubr.f32.mxu0 0.0
        %5084 = vmatmul.mubr.f32.gmra.mxu0 %v4441
        %v5085 = vpop.f32.mrf.mxu0
        %v5086 = vadd.f32 0.0, %v5085
        %v5087 = vpop.f32.mrf.mxu0
        %v5088 = vadd.f32 0.0, %v5087
        %5089 = vdwg.mxu0
        %v5090 = vadd.f32 %v4230, %v4516
        %v5091 = vadd.f32 %v4231, %v4518
        %v5092 = vadd.f32 %v4232, %v4522
        %v5093 = vadd.f32 %v4233, %v4524
        %v5094 = vadd.f32 %v4234, %v4528
        %v5095 = vadd.f32 %v4235, %v4530
        %v5096 = vadd.f32 %v4236, %v4534
        %v5097 = vadd.f32 %v4237, %v4536
        %v5098 = vadd.f32 %v4238, %v4540
        %v5099 = vadd.f32 %v4239, %v4542
        %v5100 = vadd.f32 %v4240, %v4546
        %v5101 = vadd.f32 %v4241, %v4548
        %v5102 = vadd.f32 %v4242, %v4552
        %v5103 = vadd.f32 %v4243, %v4554
        %v5104 = vadd.f32 %v4244, %v4558
        %v5105 = vadd.f32 %v4245, %v4560
        %v5106 = vadd.f32 %v4246, %v4564
        %v5107 = vadd.f32 %v4247, %v4566
        %v5108 = vadd.f32 %v4248, %v4570
        %v5109 = vadd.f32 %v4249, %v4572
        %v5110 = vadd.f32 %v4250, %v4576
        %v5111 = vadd.f32 %v4251, %v4578
        %v5112 = vadd.f32 %v4252, %v4582
        %v5113 = vadd.f32 %v4253, %v4584
        %v5114 = vadd.f32 %v4254, %v4588
        %v5115 = vadd.f32 %v4255, %v4590
        %v5116 = vadd.f32 %v4256, %v4594
        %v5117 = vadd.f32 %v4257, %v4596
        %v5118 = vadd.f32 %v4258, %v4600
        %v5119 = vadd.f32 %v4259, %v4602
        %v5120 = vadd.f32 %v4260, %v4606
        %v5121 = vadd.f32 %v4261, %v4608
        %v5122 = vadd.f32 %v4262, %v4612
        %v5123 = vadd.f32 %v4263, %v4614
        %v5124 = vadd.f32 %v4264, %v4618
        %v5125 = vadd.f32 %v4265, %v4620
        %v5126 = vadd.f32 %v4266, %v4624
        %v5127 = vadd.f32 %v4267, %v4626
        %v5128 = vadd.f32 %v4268, %v4630
        %v5129 = vadd.f32 %v4269, %v4632
        %v5130 = vadd.f32 %v4270, %v4636
        %v5131 = vadd.f32 %v4271, %v4638
        %v5132 = vadd.f32 %v4272, %v4642
        %v5133 = vadd.f32 %v4273, %v4644
        %v5134 = vadd.f32 %v4274, %v4648
        %v5135 = vadd.f32 %v4275, %v4650
        %v5136 = vadd.f32 %v4276, %v4654
        %v5137 = vadd.f32 %v4277, %v4656
        %v5138 = vadd.f32 %v4278, %v4660
        %v5139 = vadd.f32 %v4279, %v4662
        %v5140 = vadd.f32 %v4280, %v4666
        %v5141 = vadd.f32 %v4281, %v4668
        %v5142 = vadd.f32 %v4282, %v4672
        %v5143 = vadd.f32 %v4283, %v4674
        %v5144 = vadd.f32 %v4284, %v4678
        %v5145 = vadd.f32 %v4285, %v4680
        %v5146 = vadd.f32 %v4286, %v4684
        %v5147 = vadd.f32 %v4287, %v4686
        %v5148 = vadd.f32 %v4288, %v4690
        %v5149 = vadd.f32 %v4289, %v4692
        %v5150 = vadd.f32 %v4290, %v4696
        %v5151 = vadd.f32 %v4291, %v4698
        %v5152 = vadd.f32 %v4292, %v4702
        %v5153 = vadd.f32 %v4293, %v4704
        %v5154 = vadd.f32 %v4294, %v4708
        %v5155 = vadd.f32 %v4295, %v4710
        %v5156 = vadd.f32 %v4296, %v4714
        %v5157 = vadd.f32 %v4297, %v4716
        %v5158 = vadd.f32 %v4298, %v4720
        %v5159 = vadd.f32 %v4299, %v4722
        %v5160 = vadd.f32 %v4300, %v4726
        %v5161 = vadd.f32 %v4301, %v4728
        %v5162 = vadd.f32 %v4302, %v4732
        %v5163 = vadd.f32 %v4303, %v4734
        %v5164 = vadd.f32 %v4304, %v4738
        %v5165 = vadd.f32 %v4305, %v4740
        %v5166 = vadd.f32 %v4306, %v4744
        %v5167 = vadd.f32 %v4307, %v4746
        %v5168 = vadd.f32 %v4308, %v4750
        %v5169 = vadd.f32 %v4309, %v4752
        %v5170 = vadd.f32 %v4310, %v4756
        %v5171 = vadd.f32 %v4311, %v4758
        %v5172 = vadd.f32 %v4312, %v4762
        %v5173 = vadd.f32 %v4313, %v4764
        %v5174 = vadd.f32 %v4314, %v4768
        %v5175 = vadd.f32 %v4315, %v4770
        %v5176 = vadd.f32 %v4316, %v4774
        %v5177 = vadd.f32 %v4317, %v4776
        %v5178 = vadd.f32 %v4318, %v4780
        %v5179 = vadd.f32 %v4319, %v4782
        %v5180 = vadd.f32 %v4320, %v4786
        %v5181 = vadd.f32 %v4321, %v4788
        %v5182 = vadd.f32 %v4322, %v4792
        %v5183 = vadd.f32 %v4323, %v4794
        %v5184 = vadd.f32 %v4324, %v4798
        %v5185 = vadd.f32 %v4325, %v4800
        %v5186 = vadd.f32 %v4326, %v4804
        %v5187 = vadd.f32 %v4327, %v4806
        %v5188 = vadd.f32 %v4328, %v4810
        %v5189 = vadd.f32 %v4329, %v4812
        %v5190 = vadd.f32 %v4330, %v4816
        %v5191 = vadd.f32 %v4331, %v4818
        %v5192 = vadd.f32 %v4332, %v4822
        %v5193 = vadd.f32 %v4333, %v4824
        %v5194 = vadd.f32 %v4334, %v4828
        %v5195 = vadd.f32 %v4335, %v4830
        %v5196 = vadd.f32 %v4336, %v4834
        %v5197 = vadd.f32 %v4337, %v4836
        %v5198 = vadd.f32 %v4338, %v4840
        %v5199 = vadd.f32 %v4339, %v4842
        %v5200 = vadd.f32 %v4340, %v4846
        %v5201 = vadd.f32 %v4341, %v4848
        %v5202 = vadd.f32 %v4342, %v4852
        %v5203 = vadd.f32 %v4343, %v4854
        %v5204 = vadd.f32 %v4344, %v4858
        %v5205 = vadd.f32 %v4345, %v4860
        %v5206 = vadd.f32 %v4346, %v4864
        %v5207 = vadd.f32 %v4347, %v4866
        %v5208 = vadd.f32 %v4348, %v4870
        %v5209 = vadd.f32 %v4349, %v4872
        %v5210 = vadd.f32 %v4350, %v4876
        %v5211 = vadd.f32 %v4351, %v4878
        %v5212 = vadd.f32 %v4352, %v4882
        %v5213 = vadd.f32 %v4353, %v4884
        %v5214 = vadd.f32 %v4354, %v4888
        %v5215 = vadd.f32 %v4355, %v4890
        %v5216 = vadd.f32 %v4356, %v4894
        %v5217 = vadd.f32 %v4357, %v4896
        %v5218 = vadd.f32 %v4358, %v4900
        %v5219 = vadd.f32 %v4359, %v4902
        %v5220 = vadd.f32 %v4360, %v4906
        %v5221 = vadd.f32 %v4361, %v4908
        %v5222 = vadd.f32 %v4362, %v4912
        %v5223 = vadd.f32 %v4363, %v4914
        %v5224 = vadd.f32 %v4364, %v4918
        %v5225 = vadd.f32 %v4365, %v4920
        %v5226 = vadd.f32 %v4366, %v4924
        %v5227 = vadd.f32 %v4367, %v4926
        %v5228 = vadd.f32 %v4368, %v4930
        %v5229 = vadd.f32 %v4369, %v4932
        %v5230 = vadd.f32 %v4370, %v4936
        %v5231 = vadd.f32 %v4371, %v4938
        %v5232 = vadd.f32 %v4372, %v4942
        %v5233 = vadd.f32 %v4373, %v4944
        %v5234 = vadd.f32 %v4374, %v4948
        %v5235 = vadd.f32 %v4375, %v4950
        %v5236 = vadd.f32 %v4376, %v4954
        %v5237 = vadd.f32 %v4377, %v4956
        %v5238 = vadd.f32 %v4378, %v4960
        %v5239 = vadd.f32 %v4379, %v4962
        %v5240 = vadd.f32 %v4380, %v4966
        %v5241 = vadd.f32 %v4381, %v4968
        %v5242 = vadd.f32 %v4382, %v4972
        %v5243 = vadd.f32 %v4383, %v4974
        %v5244 = vadd.f32 %v4384, %v4978
        %v5245 = vadd.f32 %v4385, %v4980
        %v5246 = vadd.f32 %v4386, %v4984
        %v5247 = vadd.f32 %v4387, %v4986
        %v5248 = vadd.f32 %v4388, %v4990
        %v5249 = vadd.f32 %v4389, %v4992
        %v5250 = vadd.f32 %v4390, %v4996
        %v5251 = vadd.f32 %v4391, %v4998
        %v5252 = vadd.f32 %v4392, %v5002
        %v5253 = vadd.f32 %v4393, %v5004
        %v5254 = vadd.f32 %v4394, %v5008
        %v5255 = vadd.f32 %v4395, %v5010
        %v5256 = vadd.f32 %v4396, %v5014
        %v5257 = vadd.f32 %v4397, %v5016
        %v5258 = vadd.f32 %v4398, %v5020
        %v5259 = vadd.f32 %v4399, %v5022
        %v5260 = vadd.f32 %v4400, %v5026
        %v5261 = vadd.f32 %v4401, %v5028
        %v5262 = vadd.f32 %v4402, %v5032
        %v5263 = vadd.f32 %v4403, %v5034
        %v5264 = vadd.f32 %v4404, %v5038
        %v5265 = vadd.f32 %v4405, %v5040
        %v5266 = vadd.f32 %v4406, %v5044
        %v5267 = vadd.f32 %v4407, %v5046
        %v5268 = vadd.f32 %v4408, %v5050
        %v5269 = vadd.f32 %v4409, %v5052
        %v5270 = vadd.f32 %v4410, %v5056
        %v5271 = vadd.f32 %v4411, %v5058
        %v5272 = vadd.f32 %v4412, %v5062
        %v5273 = vadd.f32 %v4413, %v5064
        %v5274 = vadd.f32 %v4414, %v5068
        %v5275 = vadd.f32 %v4415, %v5070
        %v5276 = vadd.f32 %v4416, %v5074
        %v5277 = vadd.f32 %v4417, %v5076
        %v5278 = vadd.f32 %v4418, %v5080
        %v5279 = vadd.f32 %v4419, %v5082
        %v5280 = vadd.f32 %v4420, %v5086
        %v5281 = vadd.f32 %v4421, %v5088
        %v5282 = vld [vmem:[%s2] sm:$0x3]
        %v5284 = vlaneseq
        %v5285 = vshrl.u32 %v5284, 7
        %v5286 = vsub.s32 0, %v5285
        %v5287 = vrot.slane %v5282, %v5286
        %v5288 = vlaneseq
        %v5289 = vshrl.u32 %v5288, 7
        %v5290 = vsub.s32 1, %v5289
        %v5291 = vrot.slane %v5282, %v5290
        %v5294 = vadd.f32 %v5090, %v5287
        %v5295 = vadd.f32 %v5091, %v5291
        %v5296 = vadd.f32 %v5092, %v5287
        %v5297 = vadd.f32 %v5093, %v5291
        %v5298 = vadd.f32 %v5094, %v5287
        %v5299 = vadd.f32 %v5095, %v5291
        %v5300 = vadd.f32 %v5096, %v5287
        %v5301 = vadd.f32 %v5097, %v5291
        %v5302 = vadd.f32 %v5098, %v5287
        %v5303 = vadd.f32 %v5099, %v5291
        %v5304 = vadd.f32 %v5100, %v5287
        %v5305 = vadd.f32 %v5101, %v5291
        %v5306 = vadd.f32 %v5102, %v5287
        %v5307 = vadd.f32 %v5103, %v5291
        %v5308 = vadd.f32 %v5104, %v5287
        %v5309 = vadd.f32 %v5105, %v5291
        %v5310 = vadd.f32 %v5106, %v5287
        %v5311 = vadd.f32 %v5107, %v5291
        %v5312 = vadd.f32 %v5108, %v5287
        %v5313 = vadd.f32 %v5109, %v5291
        %v5314 = vadd.f32 %v5110, %v5287
        %v5315 = vadd.f32 %v5111, %v5291
        %v5316 = vadd.f32 %v5112, %v5287
        %v5317 = vadd.f32 %v5113, %v5291
        %v5318 = vadd.f32 %v5114, %v5287
        %v5319 = vadd.f32 %v5115, %v5291
        %v5320 = vadd.f32 %v5116, %v5287
        %v5321 = vadd.f32 %v5117, %v5291
        %v5322 = vadd.f32 %v5118, %v5287
        %v5323 = vadd.f32 %v5119, %v5291
        %v5324 = vadd.f32 %v5120, %v5287
        %v5325 = vadd.f32 %v5121, %v5291
        %v5326 = vadd.f32 %v5122, %v5287
        %v5327 = vadd.f32 %v5123, %v5291
        %v5328 = vadd.f32 %v5124, %v5287
        %v5329 = vadd.f32 %v5125, %v5291
        %v5330 = vadd.f32 %v5126, %v5287
        %v5331 = vadd.f32 %v5127, %v5291
        %v5332 = vadd.f32 %v5128, %v5287
        %v5333 = vadd.f32 %v5129, %v5291
        %v5334 = vadd.f32 %v5130, %v5287
        %v5335 = vadd.f32 %v5131, %v5291
        %v5336 = vadd.f32 %v5132, %v5287
        %v5337 = vadd.f32 %v5133, %v5291
        %v5338 = vadd.f32 %v5134, %v5287
        %v5339 = vadd.f32 %v5135, %v5291
        %v5340 = vadd.f32 %v5136, %v5287
        %v5341 = vadd.f32 %v5137, %v5291
        %v5342 = vadd.f32 %v5138, %v5287
        %v5343 = vadd.f32 %v5139, %v5291
        %v5344 = vadd.f32 %v5140, %v5287
        %v5345 = vadd.f32 %v5141, %v5291
        %v5346 = vadd.f32 %v5142, %v5287
        %v5347 = vadd.f32 %v5143, %v5291
        %v5348 = vadd.f32 %v5144, %v5287
        %v5349 = vadd.f32 %v5145, %v5291
        %v5350 = vadd.f32 %v5146, %v5287
        %v5351 = vadd.f32 %v5147, %v5291
        %v5352 = vadd.f32 %v5148, %v5287
        %v5353 = vadd.f32 %v5149, %v5291
        %v5354 = vadd.f32 %v5150, %v5287
        %v5355 = vadd.f32 %v5151, %v5291
        %v5356 = vadd.f32 %v5152, %v5287
        %v5357 = vadd.f32 %v5153, %v5291
        %v5358 = vadd.f32 %v5154, %v5287
        %v5359 = vadd.f32 %v5155, %v5291
        %v5360 = vadd.f32 %v5156, %v5287
        %v5361 = vadd.f32 %v5157, %v5291
        %v5362 = vadd.f32 %v5158, %v5287
        %v5363 = vadd.f32 %v5159, %v5291
        %v5364 = vadd.f32 %v5160, %v5287
        %v5365 = vadd.f32 %v5161, %v5291
        %v5366 = vadd.f32 %v5162, %v5287
        %v5367 = vadd.f32 %v5163, %v5291
        %v5368 = vadd.f32 %v5164, %v5287
        %v5369 = vadd.f32 %v5165, %v5291
        %v5370 = vadd.f32 %v5166, %v5287
        %v5371 = vadd.f32 %v5167, %v5291
        %v5372 = vadd.f32 %v5168, %v5287
        %v5373 = vadd.f32 %v5169, %v5291
        %v5374 = vadd.f32 %v5170, %v5287
        %v5375 = vadd.f32 %v5171, %v5291
        %v5376 = vadd.f32 %v5172, %v5287
        %v5377 = vadd.f32 %v5173, %v5291
        %v5378 = vadd.f32 %v5174, %v5287
        %v5379 = vadd.f32 %v5175, %v5291
        %v5380 = vadd.f32 %v5176, %v5287
        %v5381 = vadd.f32 %v5177, %v5291
        %v5382 = vadd.f32 %v5178, %v5287
        %v5383 = vadd.f32 %v5179, %v5291
        %v5384 = vadd.f32 %v5180, %v5287
        %v5385 = vadd.f32 %v5181, %v5291
        %v5386 = vadd.f32 %v5182, %v5287
        %v5387 = vadd.f32 %v5183, %v5291
        %v5388 = vadd.f32 %v5184, %v5287
        %v5389 = vadd.f32 %v5185, %v5291
        %v5390 = vadd.f32 %v5186, %v5287
        %v5391 = vadd.f32 %v5187, %v5291
        %v5392 = vadd.f32 %v5188, %v5287
        %v5393 = vadd.f32 %v5189, %v5291
        %v5394 = vadd.f32 %v5190, %v5287
        %v5395 = vadd.f32 %v5191, %v5291
        %v5396 = vadd.f32 %v5192, %v5287
        %v5397 = vadd.f32 %v5193, %v5291
        %v5398 = vadd.f32 %v5194, %v5287
        %v5399 = vadd.f32 %v5195, %v5291
        %v5400 = vadd.f32 %v5196, %v5287
        %v5401 = vadd.f32 %v5197, %v5291
        %v5402 = vadd.f32 %v5198, %v5287
        %v5403 = vadd.f32 %v5199, %v5291
        %v5404 = vadd.f32 %v5200, %v5287
        %v5405 = vadd.f32 %v5201, %v5291
        %v5406 = vadd.f32 %v5202, %v5287
        %v5407 = vadd.f32 %v5203, %v5291
        %v5408 = vadd.f32 %v5204, %v5287
        %v5409 = vadd.f32 %v5205, %v5291
        %v5410 = vadd.f32 %v5206, %v5287
        %v5411 = vadd.f32 %v5207, %v5291
        %v5412 = vadd.f32 %v5208, %v5287
        %v5413 = vadd.f32 %v5209, %v5291
        %v5414 = vadd.f32 %v5210, %v5287
        %v5415 = vadd.f32 %v5211, %v5291
        %v5416 = vadd.f32 %v5212, %v5287
        %v5417 = vadd.f32 %v5213, %v5291
        %v5418 = vadd.f32 %v5214, %v5287
        %v5419 = vadd.f32 %v5215, %v5291
        %v5420 = vadd.f32 %v5216, %v5287
        %v5421 = vadd.f32 %v5217, %v5291
        %v5422 = vadd.f32 %v5218, %v5287
        %v5423 = vadd.f32 %v5219, %v5291
        %v5424 = vadd.f32 %v5220, %v5287
        %v5425 = vadd.f32 %v5221, %v5291
        %v5426 = vadd.f32 %v5222, %v5287
        %v5427 = vadd.f32 %v5223, %v5291
        %v5428 = vadd.f32 %v5224, %v5287
        %v5429 = vadd.f32 %v5225, %v5291
        %v5430 = vadd.f32 %v5226, %v5287
        %v5431 = vadd.f32 %v5227, %v5291
        %v5432 = vadd.f32 %v5228, %v5287
        %v5433 = vadd.f32 %v5229, %v5291
        %v5434 = vadd.f32 %v5230, %v5287
        %v5435 = vadd.f32 %v5231, %v5291
        %v5436 = vadd.f32 %v5232, %v5287
        %v5437 = vadd.f32 %v5233, %v5291
        %v5438 = vadd.f32 %v5234, %v5287
        %v5439 = vadd.f32 %v5235, %v5291
        %v5440 = vadd.f32 %v5236, %v5287
        %v5441 = vadd.f32 %v5237, %v5291
        %v5442 = vadd.f32 %v5238, %v5287
        %v5443 = vadd.f32 %v5239, %v5291
        %v5444 = vadd.f32 %v5240, %v5287
        %v5445 = vadd.f32 %v5241, %v5291
        %v5446 = vadd.f32 %v5242, %v5287
        %v5447 = vadd.f32 %v5243, %v5291
        %v5448 = vadd.f32 %v5244, %v5287
        %v5449 = vadd.f32 %v5245, %v5291
        %v5450 = vadd.f32 %v5246, %v5287
        %v5451 = vadd.f32 %v5247, %v5291
        %v5452 = vadd.f32 %v5248, %v5287
        %v5453 = vadd.f32 %v5249, %v5291
        %v5454 = vadd.f32 %v5250, %v5287
        %v5455 = vadd.f32 %v5251, %v5291
        %v5456 = vadd.f32 %v5252, %v5287
        %v5457 = vadd.f32 %v5253, %v5291
        %v5458 = vadd.f32 %v5254, %v5287
        %v5459 = vadd.f32 %v5255, %v5291
        %v5460 = vadd.f32 %v5256, %v5287
        %v5461 = vadd.f32 %v5257, %v5291
        %v5462 = vadd.f32 %v5258, %v5287
        %v5463 = vadd.f32 %v5259, %v5291
        %v5464 = vadd.f32 %v5260, %v5287
        %v5465 = vadd.f32 %v5261, %v5291
        %v5466 = vadd.f32 %v5262, %v5287
        %v5467 = vadd.f32 %v5263, %v5291
        %v5468 = vadd.f32 %v5264, %v5287
        %v5469 = vadd.f32 %v5265, %v5291
        %v5470 = vadd.f32 %v5266, %v5287
        %v5471 = vadd.f32 %v5267, %v5291
        %v5472 = vadd.f32 %v5268, %v5287
        %v5473 = vadd.f32 %v5269, %v5291
        %v5474 = vadd.f32 %v5270, %v5287
        %v5475 = vadd.f32 %v5271, %v5291
        %v5476 = vadd.f32 %v5272, %v5287
        %v5477 = vadd.f32 %v5273, %v5291
        %v5478 = vadd.f32 %v5274, %v5287
        %v5479 = vadd.f32 %v5275, %v5291
        %v5480 = vadd.f32 %v5276, %v5287
        %v5481 = vadd.f32 %v5277, %v5291
        %v5482 = vadd.f32 %v5278, %v5287
        %v5483 = vadd.f32 %v5279, %v5291
        %v5484 = vadd.f32 %v5280, %v5287
        %v5485 = vadd.f32 %v5281, %v5291
        %v5486 = vmax.f32 %v5294, 0.0
        %v5487 = vmax.f32 %v5295, 0.0
        %v5488 = vmax.f32 %v5296, 0.0
        %v5489 = vmax.f32 %v5297, 0.0
        %v5490 = vmax.f32 %v5298, 0.0
        %v5491 = vmax.f32 %v5299, 0.0
        %v5492 = vmax.f32 %v5300, 0.0
        %v5493 = vmax.f32 %v5301, 0.0
        %v5494 = vmax.f32 %v5302, 0.0
        %v5495 = vmax.f32 %v5303, 0.0
        %v5496 = vmax.f32 %v5304, 0.0
        %v5497 = vmax.f32 %v5305, 0.0
        %v5498 = vmax.f32 %v5306, 0.0
        %v5499 = vmax.f32 %v5307, 0.0
        %v5500 = vmax.f32 %v5308, 0.0
        %v5501 = vmax.f32 %v5309, 0.0
        %v5502 = vmax.f32 %v5310, 0.0
        %v5503 = vmax.f32 %v5311, 0.0
        %v5504 = vmax.f32 %v5312, 0.0
        %v5505 = vmax.f32 %v5313, 0.0
        %v5506 = vmax.f32 %v5314, 0.0
        %v5507 = vmax.f32 %v5315, 0.0
        %v5508 = vmax.f32 %v5316, 0.0
        %v5509 = vmax.f32 %v5317, 0.0
        %v5510 = vmax.f32 %v5318, 0.0
        %v5511 = vmax.f32 %v5319, 0.0
        %v5512 = vmax.f32 %v5320, 0.0
        %v5513 = vmax.f32 %v5321, 0.0
        %v5514 = vmax.f32 %v5322, 0.0
        %v5515 = vmax.f32 %v5323, 0.0
        %v5516 = vmax.f32 %v5324, 0.0
        %v5517 = vmax.f32 %v5325, 0.0
        %v5518 = vmax.f32 %v5326, 0.0
        %v5519 = vmax.f32 %v5327, 0.0
        %v5520 = vmax.f32 %v5328, 0.0
        %v5521 = vmax.f32 %v5329, 0.0
        %v5522 = vmax.f32 %v5330, 0.0
        %v5523 = vmax.f32 %v5331, 0.0
        %v5524 = vmax.f32 %v5332, 0.0
        %v5525 = vmax.f32 %v5333, 0.0
        %v5526 = vmax.f32 %v5334, 0.0
        %v5527 = vmax.f32 %v5335, 0.0
        %v5528 = vmax.f32 %v5336, 0.0
        %v5529 = vmax.f32 %v5337, 0.0
        %v5530 = vmax.f32 %v5338, 0.0
        %v5531 = vmax.f32 %v5339, 0.0
        %v5532 = vmax.f32 %v5340, 0.0
        %v5533 = vmax.f32 %v5341, 0.0
        %v5534 = vmax.f32 %v5342, 0.0
        %v5535 = vmax.f32 %v5343, 0.0
        %v5536 = vmax.f32 %v5344, 0.0
        %v5537 = vmax.f32 %v5345, 0.0
        %v5538 = vmax.f32 %v5346, 0.0
        %v5539 = vmax.f32 %v5347, 0.0
        %v5540 = vmax.f32 %v5348, 0.0
        %v5541 = vmax.f32 %v5349, 0.0
        %v5542 = vmax.f32 %v5350, 0.0
        %v5543 = vmax.f32 %v5351, 0.0
        %v5544 = vmax.f32 %v5352, 0.0
        %v5545 = vmax.f32 %v5353, 0.0
        %v5546 = vmax.f32 %v5354, 0.0
        %v5547 = vmax.f32 %v5355, 0.0
        %v5548 = vmax.f32 %v5356, 0.0
        %v5549 = vmax.f32 %v5357, 0.0
        %v5550 = vmax.f32 %v5358, 0.0
        %v5551 = vmax.f32 %v5359, 0.0
        %v5552 = vmax.f32 %v5360, 0.0
        %v5553 = vmax.f32 %v5361, 0.0
        %v5554 = vmax.f32 %v5362, 0.0
        %v5555 = vmax.f32 %v5363, 0.0
        %v5556 = vmax.f32 %v5364, 0.0
        %v5557 = vmax.f32 %v5365, 0.0
        %v5558 = vmax.f32 %v5366, 0.0
        %v5559 = vmax.f32 %v5367, 0.0
        %v5560 = vmax.f32 %v5368, 0.0
        %v5561 = vmax.f32 %v5369, 0.0
        %v5562 = vmax.f32 %v5370, 0.0
        %v5563 = vmax.f32 %v5371, 0.0
        %v5564 = vmax.f32 %v5372, 0.0
        %v5565 = vmax.f32 %v5373, 0.0
        %v5566 = vmax.f32 %v5374, 0.0
        %v5567 = vmax.f32 %v5375, 0.0
        %v5568 = vmax.f32 %v5376, 0.0
        %v5569 = vmax.f32 %v5377, 0.0
        %v5570 = vmax.f32 %v5378, 0.0
        %v5571 = vmax.f32 %v5379, 0.0
        %v5572 = vmax.f32 %v5380, 0.0
        %v5573 = vmax.f32 %v5381, 0.0
        %v5574 = vmax.f32 %v5382, 0.0
        %v5575 = vmax.f32 %v5383, 0.0
        %v5576 = vmax.f32 %v5384, 0.0
        %v5577 = vmax.f32 %v5385, 0.0
        %v5578 = vmax.f32 %v5386, 0.0
        %v5579 = vmax.f32 %v5387, 0.0
        %v5580 = vmax.f32 %v5388, 0.0
        %v5581 = vmax.f32 %v5389, 0.0
        %v5582 = vmax.f32 %v5390, 0.0
        %v5583 = vmax.f32 %v5391, 0.0
        %v5584 = vmax.f32 %v5392, 0.0
        %v5585 = vmax.f32 %v5393, 0.0
        %v5586 = vmax.f32 %v5394, 0.0
        %v5587 = vmax.f32 %v5395, 0.0
        %v5588 = vmax.f32 %v5396, 0.0
        %v5589 = vmax.f32 %v5397, 0.0
        %v5590 = vmax.f32 %v5398, 0.0
        %v5591 = vmax.f32 %v5399, 0.0
        %v5592 = vmax.f32 %v5400, 0.0
        %v5593 = vmax.f32 %v5401, 0.0
        %v5594 = vmax.f32 %v5402, 0.0
        %v5595 = vmax.f32 %v5403, 0.0
        %v5596 = vmax.f32 %v5404, 0.0
        %v5597 = vmax.f32 %v5405, 0.0
        %v5598 = vmax.f32 %v5406, 0.0
        %v5599 = vmax.f32 %v5407, 0.0
        %v5600 = vmax.f32 %v5408, 0.0
        %v5601 = vmax.f32 %v5409, 0.0
        %v5602 = vmax.f32 %v5410, 0.0
        %v5603 = vmax.f32 %v5411, 0.0
        %v5604 = vmax.f32 %v5412, 0.0
        %v5605 = vmax.f32 %v5413, 0.0
        %v5606 = vmax.f32 %v5414, 0.0
        %v5607 = vmax.f32 %v5415, 0.0
        %v5608 = vmax.f32 %v5416, 0.0
        %v5609 = vmax.f32 %v5417, 0.0
        %v5610 = vmax.f32 %v5418, 0.0
        %v5611 = vmax.f32 %v5419, 0.0
        %v5612 = vmax.f32 %v5420, 0.0
        %v5613 = vmax.f32 %v5421, 0.0
        %v5614 = vmax.f32 %v5422, 0.0
        %v5615 = vmax.f32 %v5423, 0.0
        %v5616 = vmax.f32 %v5424, 0.0
        %v5617 = vmax.f32 %v5425, 0.0
        %v5618 = vmax.f32 %v5426, 0.0
        %v5619 = vmax.f32 %v5427, 0.0
        %v5620 = vmax.f32 %v5428, 0.0
        %v5621 = vmax.f32 %v5429, 0.0
        %v5622 = vmax.f32 %v5430, 0.0
        %v5623 = vmax.f32 %v5431, 0.0
        %v5624 = vmax.f32 %v5432, 0.0
        %v5625 = vmax.f32 %v5433, 0.0
        %v5626 = vmax.f32 %v5434, 0.0
        %v5627 = vmax.f32 %v5435, 0.0
        %v5628 = vmax.f32 %v5436, 0.0
        %v5629 = vmax.f32 %v5437, 0.0
        %v5630 = vmax.f32 %v5438, 0.0
        %v5631 = vmax.f32 %v5439, 0.0
        %v5632 = vmax.f32 %v5440, 0.0
        %v5633 = vmax.f32 %v5441, 0.0
        %v5634 = vmax.f32 %v5442, 0.0
        %v5635 = vmax.f32 %v5443, 0.0
        %v5636 = vmax.f32 %v5444, 0.0
        %v5637 = vmax.f32 %v5445, 0.0
        %v5638 = vmax.f32 %v5446, 0.0
        %v5639 = vmax.f32 %v5447, 0.0
        %v5640 = vmax.f32 %v5448, 0.0
        %v5641 = vmax.f32 %v5449, 0.0
        %v5642 = vmax.f32 %v5450, 0.0
        %v5643 = vmax.f32 %v5451, 0.0
        %v5644 = vmax.f32 %v5452, 0.0
        %v5645 = vmax.f32 %v5453, 0.0
        %v5646 = vmax.f32 %v5454, 0.0
        %v5647 = vmax.f32 %v5455, 0.0
        %v5648 = vmax.f32 %v5456, 0.0
        %v5649 = vmax.f32 %v5457, 0.0
        %v5650 = vmax.f32 %v5458, 0.0
        %v5651 = vmax.f32 %v5459, 0.0
        %v5652 = vmax.f32 %v5460, 0.0
        %v5653 = vmax.f32 %v5461, 0.0
        %v5654 = vmax.f32 %v5462, 0.0
        %v5655 = vmax.f32 %v5463, 0.0
        %v5656 = vmax.f32 %v5464, 0.0
        %v5657 = vmax.f32 %v5465, 0.0
        %v5658 = vmax.f32 %v5466, 0.0
        %v5659 = vmax.f32 %v5467, 0.0
        %v5660 = vmax.f32 %v5468, 0.0
        %v5661 = vmax.f32 %v5469, 0.0
        %v5662 = vmax.f32 %v5470, 0.0
        %v5663 = vmax.f32 %v5471, 0.0
        %v5664 = vmax.f32 %v5472, 0.0
        %v5665 = vmax.f32 %v5473, 0.0
        %v5666 = vmax.f32 %v5474, 0.0
        %v5667 = vmax.f32 %v5475, 0.0
        %v5668 = vmax.f32 %v5476, 0.0
        %v5669 = vmax.f32 %v5477, 0.0
        %v5670 = vmax.f32 %v5478, 0.0
        %v5671 = vmax.f32 %v5479, 0.0
        %v5672 = vmax.f32 %v5480, 0.0
        %v5673 = vmax.f32 %v5481, 0.0
        %v5674 = vmax.f32 %v5482, 0.0
        %v5675 = vmax.f32 %v5483, 0.0
        %v5676 = vmax.f32 %v5484, 0.0
        %v5677 = vmax.f32 %v5485, 0.0
        %v5678 = vld [vmem:[%s5] sm:$0xff]
        %v5679 = vld [vmem:[%s5 + $0x8] sm:$0xff]
        %v5680 = vld [vmem:[%s5 + $0x10] sm:$0xff]
        %v5681 = vld [vmem:[%s5 + $0x18] sm:$0xff]
        %v5682 = vld [vmem:[%s5 + $0x20] sm:$0xff]
        %v5683 = vld [vmem:[%s5 + $0x28] sm:$0xff]
        %v5684 = vld [vmem:[%s5 + $0x30] sm:$0xff]
        %v5685 = vld [vmem:[%s5 + $0x38] sm:$0xff]
        %v5686 = vld [vmem:[%s5 + $0x40] sm:$0xff]
        %v5687 = vld [vmem:[%s5 + $0x48] sm:$0xff]
        %v5688 = vld [vmem:[%s5 + $0x50] sm:$0xff]
        %v5689 = vld [vmem:[%s5 + $0x58] sm:$0xff]
        %v5690 = vld [vmem:[%s5 + $0x60] sm:$0xff]
        %v5691 = vld [vmem:[%s5 + $0x68] sm:$0xff]
        %v5692 = vld [vmem:[%s5 + $0x70] sm:$0xff]
        %v5693 = vld [vmem:[%s5 + $0x78] sm:$0xff]
        %v5694 = vld [vmem:[%s5 + $0x80] sm:$0xff]
        %v5695 = vld [vmem:[%s5 + $0x88] sm:$0xff]
        %vm5696 = vcmask 130048
        %v5698 = vsel %vm5696, %v5487, 0
        %v5701 = vsel %vm5696, %v5489, 0
        %v5704 = vsel %vm5696, %v5491, 0
        %v5707 = vsel %vm5696, %v5493, 0
        %v5710 = vsel %vm5696, %v5495, 0
        %v5713 = vsel %vm5696, %v5497, 0
        %v5716 = vsel %vm5696, %v5499, 0
        %v5719 = vsel %vm5696, %v5501, 0
        %v5722 = vsel %vm5696, %v5503, 0
        %v5725 = vsel %vm5696, %v5505, 0
        %v5728 = vsel %vm5696, %v5507, 0
        %v5731 = vsel %vm5696, %v5509, 0
        %v5734 = vsel %vm5696, %v5511, 0
        %v5737 = vsel %vm5696, %v5513, 0
        %v5740 = vsel %vm5696, %v5515, 0
        %v5743 = vsel %vm5696, %v5517, 0
        %v5746 = vsel %vm5696, %v5519, 0
        %v5749 = vsel %vm5696, %v5521, 0
        %v5752 = vsel %vm5696, %v5523, 0
        %v5755 = vsel %vm5696, %v5525, 0
        %v5758 = vsel %vm5696, %v5527, 0
        %v5761 = vsel %vm5696, %v5529, 0
        %v5764 = vsel %vm5696, %v5531, 0
        %v5767 = vsel %vm5696, %v5533, 0
        %v5770 = vsel %vm5696, %v5535, 0
        %v5773 = vsel %vm5696, %v5537, 0
        %v5776 = vsel %vm5696, %v5539, 0
        %v5779 = vsel %vm5696, %v5541, 0
        %v5782 = vsel %vm5696, %v5543, 0
        %v5785 = vsel %vm5696, %v5545, 0
        %v5788 = vsel %vm5696, %v5547, 0
        %v5791 = vsel %vm5696, %v5549, 0
        %v5794 = vsel %vm5696, %v5551, 0
        %v5797 = vsel %vm5696, %v5553, 0
        %v5800 = vsel %vm5696, %v5555, 0
        %v5803 = vsel %vm5696, %v5557, 0
        %v5806 = vsel %vm5696, %v5559, 0
        %v5809 = vsel %vm5696, %v5561, 0
        %v5812 = vsel %vm5696, %v5563, 0
        %v5815 = vsel %vm5696, %v5565, 0
        %v5818 = vsel %vm5696, %v5567, 0
        %v5821 = vsel %vm5696, %v5569, 0
        %v5824 = vsel %vm5696, %v5571, 0
        %v5827 = vsel %vm5696, %v5573, 0
        %v5830 = vsel %vm5696, %v5575, 0
        %v5833 = vsel %vm5696, %v5577, 0
        %v5836 = vsel %vm5696, %v5579, 0
        %v5839 = vsel %vm5696, %v5581, 0
        %v5842 = vsel %vm5696, %v5583, 0
        %v5845 = vsel %vm5696, %v5585, 0
        %v5848 = vsel %vm5696, %v5587, 0
        %v5851 = vsel %vm5696, %v5589, 0
        %v5854 = vsel %vm5696, %v5591, 0
        %v5857 = vsel %vm5696, %v5593, 0
        %v5860 = vsel %vm5696, %v5595, 0
        %v5863 = vsel %vm5696, %v5597, 0
        %v5866 = vsel %vm5696, %v5599, 0
        %v5869 = vsel %vm5696, %v5601, 0
        %v5872 = vsel %vm5696, %v5603, 0
        %v5875 = vsel %vm5696, %v5605, 0
        %v5878 = vsel %vm5696, %v5607, 0
        %v5881 = vsel %vm5696, %v5609, 0
        %v5884 = vsel %vm5696, %v5611, 0
        %v5887 = vsel %vm5696, %v5613, 0
        %v5890 = vsel %vm5696, %v5615, 0
        %v5893 = vsel %vm5696, %v5617, 0
        %v5896 = vsel %vm5696, %v5619, 0
        %v5899 = vsel %vm5696, %v5621, 0
        %v5902 = vsel %vm5696, %v5623, 0
        %v5905 = vsel %vm5696, %v5625, 0
        %v5908 = vsel %vm5696, %v5627, 0
        %v5911 = vsel %vm5696, %v5629, 0
        %v5914 = vsel %vm5696, %v5631, 0
        %v5917 = vsel %vm5696, %v5633, 0
        %v5920 = vsel %vm5696, %v5635, 0
        %v5923 = vsel %vm5696, %v5637, 0
        %v5926 = vsel %vm5696, %v5639, 0
        %v5929 = vsel %vm5696, %v5641, 0
        %v5932 = vsel %vm5696, %v5643, 0
        %v5935 = vsel %vm5696, %v5645, 0
        %v5938 = vsel %vm5696, %v5647, 0
        %v5941 = vsel %vm5696, %v5649, 0
        %v5944 = vsel %vm5696, %v5651, 0
        %v5947 = vsel %vm5696, %v5653, 0
        %v5950 = vsel %vm5696, %v5655, 0
        %v5953 = vsel %vm5696, %v5657, 0
        %v5956 = vsel %vm5696, %v5659, 0
        %v5959 = vsel %vm5696, %v5661, 0
        %v5962 = vsel %vm5696, %v5663, 0
        %v5965 = vsel %vm5696, %v5665, 0
        %v5968 = vsel %vm5696, %v5667, 0
        %v5971 = vsel %vm5696, %v5669, 0
        %v5974 = vsel %vm5696, %v5671, 0
        %v5977 = vsel %vm5696, %v5673, 0
        %v5980 = vsel %vm5696, %v5675, 0
        %v5983 = vsel %vm5696, %v5677, 0
        %5985 = vmatprep.subr.mxu0 0.0
        %5986 = vmatpush1.msra.mxu0 %v5693
        %5987 = vmatprep.subr.mxu0 0.0
        %5988 = vmatpush1.msra.mxu0 %v5692
        %5989 = vmatprep.subr.mxu0 0.0
        %5990 = vmatpush1.msra.mxu0 %v5691
        %5991 = vmatprep.subr.mxu0 0.0
        %5992 = vmatpush1.msra.mxu0 %v5690
        %5993 = vmatprep.subr.mxu0 0.0
        %5994 = vmatpush1.msra.mxu0 %v5689
        %5995 = vmatprep.subr.mxu0 0.0
        %5996 = vmatpush1.msra.mxu0 %v5688
        %5997 = vmatprep.subr.mxu0 0.0
        %5998 = vmatpush1.msra.mxu0 %v5687
        %5999 = vmatprep.subr.mxu0 0.0
        %6000 = vmatpush1.msra.mxu0 %v5686
        %6001 = vmatprep.subr.mxu0 0.0
        %6002 = vmatpush1.msra.mxu0 %v5685
        %6003 = vmatprep.subr.mxu0 0.0
        %6004 = vmatpush1.msra.mxu0 %v5684
        %6005 = vmatprep.subr.mxu0 0.0
        %6006 = vmatpush1.msra.mxu0 %v5683
        %6007 = vmatprep.subr.mxu0 0.0
        %6008 = vmatpush1.msra.mxu0 %v5682
        %6009 = vmatprep.subr.mxu0 0.0
        %6010 = vmatpush1.msra.mxu0 %v5681
        %6011 = vmatprep.subr.mxu0 0.0
        %6012 = vmatpush1.msra.mxu0 %v5680
        %6013 = vmatprep.subr.mxu0 0.0
        %6014 = vmatpush1.msra.mxu0 %v5679
        %6015 = vmatprep.subr.mxu0 0.0
        %6016 = vmatpush1.msra.mxu0 %v5678
        %6017 = vmatprep.subr.mxu0 0.0
        %6018 = vmatpush2.msra.mxu0 0.0
        %6019 = vmatprep.subr.mxu0 0.0
        %6020 = vmatpush2.msra.mxu0 0.0
        %6021 = vmatprep.subr.mxu0 0.0
        %6022 = vmatpush2.msra.mxu0 0.0
        %6023 = vmatprep.subr.mxu0 0.0
        %6024 = vmatpush2.msra.mxu0 0.0
        %6025 = vmatprep.subr.mxu0 0.0
        %6026 = vmatpush2.msra.mxu0 0.0
        %6027 = vmatprep.subr.mxu0 0.0
        %6028 = vmatpush2.msra.mxu0 0.0
        %6029 = vmatprep.subr.mxu0 0.0
        %6030 = vmatpush2.msra.mxu0 0.0
        %6031 = vmatprep.subr.mxu0 0.0
        %6032 = vmatpush2.msra.mxu0 0.0
        %6033 = vmatprep.subr.mxu0 0.0
        %6034 = vmatpush2.msra.mxu0 0.0
        %6035 = vmatprep.subr.mxu0 0.0
        %6036 = vmatpush2.msra.mxu0 0.0
        %6037 = vmatprep.subr.mxu0 0.0
        %6038 = vmatpush2.msra.mxu0 0.0
        %6039 = vmatprep.subr.mxu0 0.0
        %6040 = vmatpush2.msra.mxu0 0.0
        %6041 = vmatprep.subr.mxu0 0.0
        %6042 = vmatpush2.msra.mxu0 0.0
        %6043 = vmatprep.subr.mxu0 0.0
        %6044 = vmatpush2.msra.mxu0 0.0
        %6045 = vmatprep.subr.mxu0 0.0
        %6046 = vmatpush2.msra.mxu0 %v5695
        %6047 = vmatprep.subr.mxu0 0.0
        %6048 = vmatpush2.msra.mxu0 %v5694
        %6049 = vmatprep.mubr.f32.mxu0 %v5698
        %6050 = vmatmul.mubr.f32.gmra.mxu0 %v5486
        %v6051 = vpop.f32.mrf.mxu0
        %v6052 = vadd.f32 0.0, %v6051
        %v6053 = vpop.f32.mrf.mxu0
        %6054 = vmatprep.mubr.f32.mxu0 %v5701
        %6055 = vmatmul.mubr.f32.gmra.mxu0 %v5488
        %v6056 = vpop.f32.mrf.mxu0
        %v6057 = vadd.f32 0.0, %v6056
        %v6058 = vpop.f32.mrf.mxu0
        %6059 = vmatprep.mubr.f32.mxu0 %v5704
        %6060 = vmatmul.mubr.f32.gmra.mxu0 %v5490
        %v6061 = vpop.f32.mrf.mxu0
        %v6062 = vadd.f32 0.0, %v6061
        %v6063 = vpop.f32.mrf.mxu0
        %6064 = vmatprep.mubr.f32.mxu0 %v5707
        %6065 = vmatmul.mubr.f32.gmra.mxu0 %v5492
        %v6066 = vpop.f32.mrf.mxu0
        %v6067 = vadd.f32 0.0, %v6066
        %v6068 = vpop.f32.mrf.mxu0
        %6069 = vmatprep.mubr.f32.mxu0 %v5710
        %6070 = vmatmul.mubr.f32.gmra.mxu0 %v5494
        %v6071 = vpop.f32.mrf.mxu0
        %v6072 = vadd.f32 0.0, %v6071
        %v6073 = vpop.f32.mrf.mxu0
        %6074 = vmatprep.mubr.f32.mxu0 %v5713
        %6075 = vmatmul.mubr.f32.gmra.mxu0 %v5496
        %v6076 = vpop.f32.mrf.mxu0
        %v6077 = vadd.f32 0.0, %v6076
        %v6078 = vpop.f32.mrf.mxu0
        %6079 = vmatprep.mubr.f32.mxu0 %v5716
        %6080 = vmatmul.mubr.f32.gmra.mxu0 %v5498
        %v6081 = vpop.f32.mrf.mxu0
        %v6082 = vadd.f32 0.0, %v6081
        %v6083 = vpop.f32.mrf.mxu0
        %6084 = vmatprep.mubr.f32.mxu0 %v5719
        %6085 = vmatmul.mubr.f32.gmra.mxu0 %v5500
        %v6086 = vpop.f32.mrf.mxu0
        %v6087 = vadd.f32 0.0, %v6086
        %v6088 = vpop.f32.mrf.mxu0
        %6089 = vmatprep.mubr.f32.mxu0 %v5722
        %6090 = vmatmul.mubr.f32.gmra.mxu0 %v5502
        %v6091 = vpop.f32.mrf.mxu0
        %v6092 = vadd.f32 0.0, %v6091
        %v6093 = vpop.f32.mrf.mxu0
        %6094 = vmatprep.mubr.f32.mxu0 %v5725
        %6095 = vmatmul.mubr.f32.gmra.mxu0 %v5504
        %v6096 = vpop.f32.mrf.mxu0
        %v6097 = vadd.f32 0.0, %v6096
        %v6098 = vpop.f32.mrf.mxu0
        %6099 = vmatprep.mubr.f32.mxu0 %v5728
        %6100 = vmatmul.mubr.f32.gmra.mxu0 %v5506
        %v6101 = vpop.f32.mrf.mxu0
        %v6102 = vadd.f32 0.0, %v6101
        %v6103 = vpop.f32.mrf.mxu0
        %6104 = vmatprep.mubr.f32.mxu0 %v5731
        %6105 = vmatmul.mubr.f32.gmra.mxu0 %v5508
        %v6106 = vpop.f32.mrf.mxu0
        %v6107 = vadd.f32 0.0, %v6106
        %v6108 = vpop.f32.mrf.mxu0
        %6109 = vmatprep.mubr.f32.mxu0 %v5734
        %6110 = vmatmul.mubr.f32.gmra.mxu0 %v5510
        %v6111 = vpop.f32.mrf.mxu0
        %v6112 = vadd.f32 0.0, %v6111
        %v6113 = vpop.f32.mrf.mxu0
        %6114 = vmatprep.mubr.f32.mxu0 %v5737
        %6115 = vmatmul.mubr.f32.gmra.mxu0 %v5512
        %v6116 = vpop.f32.mrf.mxu0
        %v6117 = vadd.f32 0.0, %v6116
        %v6118 = vpop.f32.mrf.mxu0
        %6119 = vmatprep.mubr.f32.mxu0 %v5740
        %6120 = vmatmul.mubr.f32.gmra.mxu0 %v5514
        %v6121 = vpop.f32.mrf.mxu0
        %v6122 = vadd.f32 0.0, %v6121
        %v6123 = vpop.f32.mrf.mxu0
        %6124 = vmatprep.mubr.f32.mxu0 %v5743
        %6125 = vmatmul.mubr.f32.gmra.mxu0 %v5516
        %v6126 = vpop.f32.mrf.mxu0
        %v6127 = vadd.f32 0.0, %v6126
        %v6128 = vpop.f32.mrf.mxu0
        %6129 = vmatprep.mubr.f32.mxu0 %v5746
        %6130 = vmatmul.mubr.f32.gmra.mxu0 %v5518
        %v6131 = vpop.f32.mrf.mxu0
        %v6132 = vadd.f32 0.0, %v6131
        %v6133 = vpop.f32.mrf.mxu0
        %6134 = vmatprep.mubr.f32.mxu0 %v5749
        %6135 = vmatmul.mubr.f32.gmra.mxu0 %v5520
        %v6136 = vpop.f32.mrf.mxu0
        %v6137 = vadd.f32 0.0, %v6136
        %v6138 = vpop.f32.mrf.mxu0
        %6139 = vmatprep.mubr.f32.mxu0 %v5752
        %6140 = vmatmul.mubr.f32.gmra.mxu0 %v5522
        %v6141 = vpop.f32.mrf.mxu0
        %v6142 = vadd.f32 0.0, %v6141
        %v6143 = vpop.f32.mrf.mxu0
        %6144 = vmatprep.mubr.f32.mxu0 %v5755
        %6145 = vmatmul.mubr.f32.gmra.mxu0 %v5524
        %v6146 = vpop.f32.mrf.mxu0
        %v6147 = vadd.f32 0.0, %v6146
        %v6148 = vpop.f32.mrf.mxu0
        %6149 = vmatprep.mubr.f32.mxu0 %v5758
        %6150 = vmatmul.mubr.f32.gmra.mxu0 %v5526
        %v6151 = vpop.f32.mrf.mxu0
        %v6152 = vadd.f32 0.0, %v6151
        %v6153 = vpop.f32.mrf.mxu0
        %6154 = vmatprep.mubr.f32.mxu0 %v5761
        %6155 = vmatmul.mubr.f32.gmra.mxu0 %v5528
        %v6156 = vpop.f32.mrf.mxu0
        %v6157 = vadd.f32 0.0, %v6156
        %v6158 = vpop.f32.mrf.mxu0
        %6159 = vmatprep.mubr.f32.mxu0 %v5764
        %6160 = vmatmul.mubr.f32.gmra.mxu0 %v5530
        %v6161 = vpop.f32.mrf.mxu0
        %v6162 = vadd.f32 0.0, %v6161
        %v6163 = vpop.f32.mrf.mxu0
        %6164 = vmatprep.mubr.f32.mxu0 %v5767
        %6165 = vmatmul.mubr.f32.gmra.mxu0 %v5532
        %v6166 = vpop.f32.mrf.mxu0
        %v6167 = vadd.f32 0.0, %v6166
        %v6168 = vpop.f32.mrf.mxu0
        %6169 = vmatprep.mubr.f32.mxu0 %v5770
        %6170 = vmatmul.mubr.f32.gmra.mxu0 %v5534
        %v6171 = vpop.f32.mrf.mxu0
        %v6172 = vadd.f32 0.0, %v6171
        %v6173 = vpop.f32.mrf.mxu0
        %6174 = vmatprep.mubr.f32.mxu0 %v5773
        %6175 = vmatmul.mubr.f32.gmra.mxu0 %v5536
        %v6176 = vpop.f32.mrf.mxu0
        %v6177 = vadd.f32 0.0, %v6176
        %v6178 = vpop.f32.mrf.mxu0
        %6179 = vmatprep.mubr.f32.mxu0 %v5776
        %6180 = vmatmul.mubr.f32.gmra.mxu0 %v5538
        %v6181 = vpop.f32.mrf.mxu0
        %v6182 = vadd.f32 0.0, %v6181
        %v6183 = vpop.f32.mrf.mxu0
        %6184 = vmatprep.mubr.f32.mxu0 %v5779
        %6185 = vmatmul.mubr.f32.gmra.mxu0 %v5540
        %v6186 = vpop.f32.mrf.mxu0
        %v6187 = vadd.f32 0.0, %v6186
        %v6188 = vpop.f32.mrf.mxu0
        %6189 = vmatprep.mubr.f32.mxu0 %v5782
        %6190 = vmatmul.mubr.f32.gmra.mxu0 %v5542
        %v6191 = vpop.f32.mrf.mxu0
        %v6192 = vadd.f32 0.0, %v6191
        %v6193 = vpop.f32.mrf.mxu0
        %6194 = vmatprep.mubr.f32.mxu0 %v5785
        %6195 = vmatmul.mubr.f32.gmra.mxu0 %v5544
        %v6196 = vpop.f32.mrf.mxu0
        %v6197 = vadd.f32 0.0, %v6196
        %v6198 = vpop.f32.mrf.mxu0
        %6199 = vmatprep.mubr.f32.mxu0 %v5788
        %6200 = vmatmul.mubr.f32.gmra.mxu0 %v5546
        %v6201 = vpop.f32.mrf.mxu0
        %v6202 = vadd.f32 0.0, %v6201
        %v6203 = vpop.f32.mrf.mxu0
        %6204 = vmatprep.mubr.f32.mxu0 %v5791
        %6205 = vmatmul.mubr.f32.gmra.mxu0 %v5548
        %v6206 = vpop.f32.mrf.mxu0
        %v6207 = vadd.f32 0.0, %v6206
        %v6208 = vpop.f32.mrf.mxu0
        %6209 = vmatprep.mubr.f32.mxu0 %v5794
        %6210 = vmatmul.mubr.f32.gmra.mxu0 %v5550
        %v6211 = vpop.f32.mrf.mxu0
        %v6212 = vadd.f32 0.0, %v6211
        %v6213 = vpop.f32.mrf.mxu0
        %6214 = vmatprep.mubr.f32.mxu0 %v5797
        %6215 = vmatmul.mubr.f32.gmra.mxu0 %v5552
        %v6216 = vpop.f32.mrf.mxu0
        %v6217 = vadd.f32 0.0, %v6216
        %v6218 = vpop.f32.mrf.mxu0
        %6219 = vmatprep.mubr.f32.mxu0 %v5800
        %6220 = vmatmul.mubr.f32.gmra.mxu0 %v5554
        %v6221 = vpop.f32.mrf.mxu0
        %v6222 = vadd.f32 0.0, %v6221
        %v6223 = vpop.f32.mrf.mxu0
        %6224 = vmatprep.mubr.f32.mxu0 %v5803
        %6225 = vmatmul.mubr.f32.gmra.mxu0 %v5556
        %v6226 = vpop.f32.mrf.mxu0
        %v6227 = vadd.f32 0.0, %v6226
        %v6228 = vpop.f32.mrf.mxu0
        %6229 = vmatprep.mubr.f32.mxu0 %v5806
        %6230 = vmatmul.mubr.f32.gmra.mxu0 %v5558
        %v6231 = vpop.f32.mrf.mxu0
        %v6232 = vadd.f32 0.0, %v6231
        %v6233 = vpop.f32.mrf.mxu0
        %6234 = vmatprep.mubr.f32.mxu0 %v5809
        %6235 = vmatmul.mubr.f32.gmra.mxu0 %v5560
        %v6236 = vpop.f32.mrf.mxu0
        %v6237 = vadd.f32 0.0, %v6236
        %v6238 = vpop.f32.mrf.mxu0
        %6239 = vmatprep.mubr.f32.mxu0 %v5812
        %6240 = vmatmul.mubr.f32.gmra.mxu0 %v5562
        %v6241 = vpop.f32.mrf.mxu0
        %v6242 = vadd.f32 0.0, %v6241
        %v6243 = vpop.f32.mrf.mxu0
        %6244 = vmatprep.mubr.f32.mxu0 %v5815
        %6245 = vmatmul.mubr.f32.gmra.mxu0 %v5564
        %v6246 = vpop.f32.mrf.mxu0
        %v6247 = vadd.f32 0.0, %v6246
        %v6248 = vpop.f32.mrf.mxu0
        %6249 = vmatprep.mubr.f32.mxu0 %v5818
        %6250 = vmatmul.mubr.f32.gmra.mxu0 %v5566
        %v6251 = vpop.f32.mrf.mxu0
        %v6252 = vadd.f32 0.0, %v6251
        %v6253 = vpop.f32.mrf.mxu0
        %6254 = vmatprep.mubr.f32.mxu0 %v5821
        %6255 = vmatmul.mubr.f32.gmra.mxu0 %v5568
        %v6256 = vpop.f32.mrf.mxu0
        %v6257 = vadd.f32 0.0, %v6256
        %v6258 = vpop.f32.mrf.mxu0
        %6259 = vmatprep.mubr.f32.mxu0 %v5824
        %6260 = vmatmul.mubr.f32.gmra.mxu0 %v5570
        %v6261 = vpop.f32.mrf.mxu0
        %v6262 = vadd.f32 0.0, %v6261
        %v6263 = vpop.f32.mrf.mxu0
        %6264 = vmatprep.mubr.f32.mxu0 %v5827
        %6265 = vmatmul.mubr.f32.gmra.mxu0 %v5572
        %v6266 = vpop.f32.mrf.mxu0
        %v6267 = vadd.f32 0.0, %v6266
        %v6268 = vpop.f32.mrf.mxu0
        %6269 = vmatprep.mubr.f32.mxu0 %v5830
        %6270 = vmatmul.mubr.f32.gmra.mxu0 %v5574
        %v6271 = vpop.f32.mrf.mxu0
        %v6272 = vadd.f32 0.0, %v6271
        %v6273 = vpop.f32.mrf.mxu0
        %6274 = vmatprep.mubr.f32.mxu0 %v5833
        %6275 = vmatmul.mubr.f32.gmra.mxu0 %v5576
        %v6276 = vpop.f32.mrf.mxu0
        %v6277 = vadd.f32 0.0, %v6276
        %v6278 = vpop.f32.mrf.mxu0
        %6279 = vmatprep.mubr.f32.mxu0 %v5836
        %6280 = vmatmul.mubr.f32.gmra.mxu0 %v5578
        %v6281 = vpop.f32.mrf.mxu0
        %v6282 = vadd.f32 0.0, %v6281
        %v6283 = vpop.f32.mrf.mxu0
        %6284 = vmatprep.mubr.f32.mxu0 %v5839
        %6285 = vmatmul.mubr.f32.gmra.mxu0 %v5580
        %v6286 = vpop.f32.mrf.mxu0
        %v6287 = vadd.f32 0.0, %v6286
        %v6288 = vpop.f32.mrf.mxu0
        %6289 = vmatprep.mubr.f32.mxu0 %v5842
        %6290 = vmatmul.mubr.f32.gmra.mxu0 %v5582
        %v6291 = vpop.f32.mrf.mxu0
        %v6292 = vadd.f32 0.0, %v6291
        %v6293 = vpop.f32.mrf.mxu0
        %6294 = vmatprep.mubr.f32.mxu0 %v5845
        %6295 = vmatmul.mubr.f32.gmra.mxu0 %v5584
        %v6296 = vpop.f32.mrf.mxu0
        %v6297 = vadd.f32 0.0, %v6296
        %v6298 = vpop.f32.mrf.mxu0
        %6299 = vmatprep.mubr.f32.mxu0 %v5848
        %6300 = vmatmul.mubr.f32.gmra.mxu0 %v5586
        %v6301 = vpop.f32.mrf.mxu0
        %v6302 = vadd.f32 0.0, %v6301
        %v6303 = vpop.f32.mrf.mxu0
        %6304 = vmatprep.mubr.f32.mxu0 %v5851
        %6305 = vmatmul.mubr.f32.gmra.mxu0 %v5588
        %v6306 = vpop.f32.mrf.mxu0
        %v6307 = vadd.f32 0.0, %v6306
        %v6308 = vpop.f32.mrf.mxu0
        %6309 = vmatprep.mubr.f32.mxu0 %v5854
        %6310 = vmatmul.mubr.f32.gmra.mxu0 %v5590
        %v6311 = vpop.f32.mrf.mxu0
        %v6312 = vadd.f32 0.0, %v6311
        %v6313 = vpop.f32.mrf.mxu0
        %6314 = vmatprep.mubr.f32.mxu0 %v5857
        %6315 = vmatmul.mubr.f32.gmra.mxu0 %v5592
        %v6316 = vpop.f32.mrf.mxu0
        %v6317 = vadd.f32 0.0, %v6316
        %v6318 = vpop.f32.mrf.mxu0
        %6319 = vmatprep.mubr.f32.mxu0 %v5860
        %6320 = vmatmul.mubr.f32.gmra.mxu0 %v5594
        %v6321 = vpop.f32.mrf.mxu0
        %v6322 = vadd.f32 0.0, %v6321
        %v6323 = vpop.f32.mrf.mxu0
        %6324 = vmatprep.mubr.f32.mxu0 %v5863
        %6325 = vmatmul.mubr.f32.gmra.mxu0 %v5596
        %v6326 = vpop.f32.mrf.mxu0
        %v6327 = vadd.f32 0.0, %v6326
        %v6328 = vpop.f32.mrf.mxu0
        %6329 = vmatprep.mubr.f32.mxu0 %v5866
        %6330 = vmatmul.mubr.f32.gmra.mxu0 %v5598
        %v6331 = vpop.f32.mrf.mxu0
        %v6332 = vadd.f32 0.0, %v6331
        %v6333 = vpop.f32.mrf.mxu0
        %6334 = vmatprep.mubr.f32.mxu0 %v5869
        %6335 = vmatmul.mubr.f32.gmra.mxu0 %v5600
        %v6336 = vpop.f32.mrf.mxu0
        %v6337 = vadd.f32 0.0, %v6336
        %v6338 = vpop.f32.mrf.mxu0
        %6339 = vmatprep.mubr.f32.mxu0 %v5872
        %6340 = vmatmul.mubr.f32.gmra.mxu0 %v5602
        %v6341 = vpop.f32.mrf.mxu0
        %v6342 = vadd.f32 0.0, %v6341
        %v6343 = vpop.f32.mrf.mxu0
        %6344 = vmatprep.mubr.f32.mxu0 %v5875
        %6345 = vmatmul.mubr.f32.gmra.mxu0 %v5604
        %v6346 = vpop.f32.mrf.mxu0
        %v6347 = vadd.f32 0.0, %v6346
        %v6348 = vpop.f32.mrf.mxu0
        %6349 = vmatprep.mubr.f32.mxu0 %v5878
        %6350 = vmatmul.mubr.f32.gmra.mxu0 %v5606
        %v6351 = vpop.f32.mrf.mxu0
        %v6352 = vadd.f32 0.0, %v6351
        %v6353 = vpop.f32.mrf.mxu0
        %6354 = vmatprep.mubr.f32.mxu0 %v5881
        %6355 = vmatmul.mubr.f32.gmra.mxu0 %v5608
        %v6356 = vpop.f32.mrf.mxu0
        %v6357 = vadd.f32 0.0, %v6356
        %v6358 = vpop.f32.mrf.mxu0
        %6359 = vmatprep.mubr.f32.mxu0 %v5884
        %6360 = vmatmul.mubr.f32.gmra.mxu0 %v5610
        %v6361 = vpop.f32.mrf.mxu0
        %v6362 = vadd.f32 0.0, %v6361
        %v6363 = vpop.f32.mrf.mxu0
        %6364 = vmatprep.mubr.f32.mxu0 %v5887
        %6365 = vmatmul.mubr.f32.gmra.mxu0 %v5612
        %v6366 = vpop.f32.mrf.mxu0
        %v6367 = vadd.f32 0.0, %v6366
        %v6368 = vpop.f32.mrf.mxu0
        %6369 = vmatprep.mubr.f32.mxu0 %v5890
        %6370 = vmatmul.mubr.f32.gmra.mxu0 %v5614
        %v6371 = vpop.f32.mrf.mxu0
        %v6372 = vadd.f32 0.0, %v6371
        %v6373 = vpop.f32.mrf.mxu0
        %6374 = vmatprep.mubr.f32.mxu0 %v5893
        %6375 = vmatmul.mubr.f32.gmra.mxu0 %v5616
        %v6376 = vpop.f32.mrf.mxu0
        %v6377 = vadd.f32 0.0, %v6376
        %v6378 = vpop.f32.mrf.mxu0
        %6379 = vmatprep.mubr.f32.mxu0 %v5896
        %6380 = vmatmul.mubr.f32.gmra.mxu0 %v5618
        %v6381 = vpop.f32.mrf.mxu0
        %v6382 = vadd.f32 0.0, %v6381
        %v6383 = vpop.f32.mrf.mxu0
        %6384 = vmatprep.mubr.f32.mxu0 %v5899
        %6385 = vmatmul.mubr.f32.gmra.mxu0 %v5620
        %v6386 = vpop.f32.mrf.mxu0
        %v6387 = vadd.f32 0.0, %v6386
        %v6388 = vpop.f32.mrf.mxu0
        %6389 = vmatprep.mubr.f32.mxu0 %v5902
        %6390 = vmatmul.mubr.f32.gmra.mxu0 %v5622
        %v6391 = vpop.f32.mrf.mxu0
        %v6392 = vadd.f32 0.0, %v6391
        %v6393 = vpop.f32.mrf.mxu0
        %6394 = vmatprep.mubr.f32.mxu0 %v5905
        %6395 = vmatmul.mubr.f32.gmra.mxu0 %v5624
        %v6396 = vpop.f32.mrf.mxu0
        %v6397 = vadd.f32 0.0, %v6396
        %v6398 = vpop.f32.mrf.mxu0
        %6399 = vmatprep.mubr.f32.mxu0 %v5908
        %6400 = vmatmul.mubr.f32.gmra.mxu0 %v5626
        %v6401 = vpop.f32.mrf.mxu0
        %v6402 = vadd.f32 0.0, %v6401
        %v6403 = vpop.f32.mrf.mxu0
        %6404 = vmatprep.mubr.f32.mxu0 %v5911
        %6405 = vmatmul.mubr.f32.gmra.mxu0 %v5628
        %v6406 = vpop.f32.mrf.mxu0
        %v6407 = vadd.f32 0.0, %v6406
        %v6408 = vpop.f32.mrf.mxu0
        %6409 = vmatprep.mubr.f32.mxu0 %v5914
        %6410 = vmatmul.mubr.f32.gmra.mxu0 %v5630
        %v6411 = vpop.f32.mrf.mxu0
        %v6412 = vadd.f32 0.0, %v6411
        %v6413 = vpop.f32.mrf.mxu0
        %6414 = vmatprep.mubr.f32.mxu0 %v5917
        %6415 = vmatmul.mubr.f32.gmra.mxu0 %v5632
        %v6416 = vpop.f32.mrf.mxu0
        %v6417 = vadd.f32 0.0, %v6416
        %v6418 = vpop.f32.mrf.mxu0
        %6419 = vmatprep.mubr.f32.mxu0 %v5920
        %6420 = vmatmul.mubr.f32.gmra.mxu0 %v5634
        %v6421 = vpop.f32.mrf.mxu0
        %v6422 = vadd.f32 0.0, %v6421
        %v6423 = vpop.f32.mrf.mxu0
        %6424 = vmatprep.mubr.f32.mxu0 %v5923
        %6425 = vmatmul.mubr.f32.gmra.mxu0 %v5636
        %v6426 = vpop.f32.mrf.mxu0
        %v6427 = vadd.f32 0.0, %v6426
        %v6428 = vpop.f32.mrf.mxu0
        %6429 = vmatprep.mubr.f32.mxu0 %v5926
        %6430 = vmatmul.mubr.f32.gmra.mxu0 %v5638
        %v6431 = vpop.f32.mrf.mxu0
        %v6432 = vadd.f32 0.0, %v6431
        %v6433 = vpop.f32.mrf.mxu0
        %6434 = vmatprep.mubr.f32.mxu0 %v5929
        %6435 = vmatmul.mubr.f32.gmra.mxu0 %v5640
        %v6436 = vpop.f32.mrf.mxu0
        %v6437 = vadd.f32 0.0, %v6436
        %v6438 = vpop.f32.mrf.mxu0
        %6439 = vmatprep.mubr.f32.mxu0 %v5932
        %6440 = vmatmul.mubr.f32.gmra.mxu0 %v5642
        %v6441 = vpop.f32.mrf.mxu0
        %v6442 = vadd.f32 0.0, %v6441
        %v6443 = vpop.f32.mrf.mxu0
        %6444 = vmatprep.mubr.f32.mxu0 %v5935
        %6445 = vmatmul.mubr.f32.gmra.mxu0 %v5644
        %v6446 = vpop.f32.mrf.mxu0
        %v6447 = vadd.f32 0.0, %v6446
        %v6448 = vpop.f32.mrf.mxu0
        %6449 = vmatprep.mubr.f32.mxu0 %v5938
        %6450 = vmatmul.mubr.f32.gmra.mxu0 %v5646
        %v6451 = vpop.f32.mrf.mxu0
        %v6452 = vadd.f32 0.0, %v6451
        %v6453 = vpop.f32.mrf.mxu0
        %6454 = vmatprep.mubr.f32.mxu0 %v5941
        %6455 = vmatmul.mubr.f32.gmra.mxu0 %v5648
        %v6456 = vpop.f32.mrf.mxu0
        %v6457 = vadd.f32 0.0, %v6456
        %v6458 = vpop.f32.mrf.mxu0
        %6459 = vmatprep.mubr.f32.mxu0 %v5944
        %6460 = vmatmul.mubr.f32.gmra.mxu0 %v5650
        %v6461 = vpop.f32.mrf.mxu0
        %v6462 = vadd.f32 0.0, %v6461
        %v6463 = vpop.f32.mrf.mxu0
        %6464 = vmatprep.mubr.f32.mxu0 %v5947
        %6465 = vmatmul.mubr.f32.gmra.mxu0 %v5652
        %v6466 = vpop.f32.mrf.mxu0
        %v6467 = vadd.f32 0.0, %v6466
        %v6468 = vpop.f32.mrf.mxu0
        %6469 = vmatprep.mubr.f32.mxu0 %v5950
        %6470 = vmatmul.mubr.f32.gmra.mxu0 %v5654
        %v6471 = vpop.f32.mrf.mxu0
        %v6472 = vadd.f32 0.0, %v6471
        %v6473 = vpop.f32.mrf.mxu0
        %6474 = vmatprep.mubr.f32.mxu0 %v5953
        %6475 = vmatmul.mubr.f32.gmra.mxu0 %v5656
        %v6476 = vpop.f32.mrf.mxu0
        %v6477 = vadd.f32 0.0, %v6476
        %v6478 = vpop.f32.mrf.mxu0
        %6479 = vmatprep.mubr.f32.mxu0 %v5956
        %6480 = vmatmul.mubr.f32.gmra.mxu0 %v5658
        %v6481 = vpop.f32.mrf.mxu0
        %v6482 = vadd.f32 0.0, %v6481
        %v6483 = vpop.f32.mrf.mxu0
        %6484 = vmatprep.mubr.f32.mxu0 %v5959
        %6485 = vmatmul.mubr.f32.gmra.mxu0 %v5660
        %v6486 = vpop.f32.mrf.mxu0
        %v6487 = vadd.f32 0.0, %v6486
        %v6488 = vpop.f32.mrf.mxu0
        %6489 = vmatprep.mubr.f32.mxu0 %v5962
        %6490 = vmatmul.mubr.f32.gmra.mxu0 %v5662
        %v6491 = vpop.f32.mrf.mxu0
        %v6492 = vadd.f32 0.0, %v6491
        %v6493 = vpop.f32.mrf.mxu0
        %6494 = vmatprep.mubr.f32.mxu0 %v5965
        %6495 = vmatmul.mubr.f32.gmra.mxu0 %v5664
        %v6496 = vpop.f32.mrf.mxu0
        %v6497 = vadd.f32 0.0, %v6496
        %v6498 = vpop.f32.mrf.mxu0
        %6499 = vmatprep.mubr.f32.mxu0 %v5968
        %6500 = vmatmul.mubr.f32.gmra.mxu0 %v5666
        %v6501 = vpop.f32.mrf.mxu0
        %v6502 = vadd.f32 0.0, %v6501
        %v6503 = vpop.f32.mrf.mxu0
        %6504 = vmatprep.mubr.f32.mxu0 %v5971
        %6505 = vmatmul.mubr.f32.gmra.mxu0 %v5668
        %v6506 = vpop.f32.mrf.mxu0
        %v6507 = vadd.f32 0.0, %v6506
        %v6508 = vpop.f32.mrf.mxu0
        %6509 = vmatprep.mubr.f32.mxu0 %v5974
        %6510 = vmatmul.mubr.f32.gmra.mxu0 %v5670
        %v6511 = vpop.f32.mrf.mxu0
        %v6512 = vadd.f32 0.0, %v6511
        %v6513 = vpop.f32.mrf.mxu0
        %6514 = vmatprep.mubr.f32.mxu0 %v5977
        %6515 = vmatmul.mubr.f32.gmra.mxu0 %v5672
        %v6516 = vpop.f32.mrf.mxu0
        %v6517 = vadd.f32 0.0, %v6516
        %v6518 = vpop.f32.mrf.mxu0
        %6519 = vmatprep.mubr.f32.mxu0 %v5980
        %6520 = vmatmul.mubr.f32.gmra.mxu0 %v5674
        %v6521 = vpop.f32.mrf.mxu0
        %v6522 = vadd.f32 0.0, %v6521
        %v6523 = vpop.f32.mrf.mxu0
        %6524 = vmatprep.mubr.f32.mxu0 %v5983
        %6525 = vmatmul.mubr.f32.gmra.mxu0 %v5676
        %v6526 = vpop.f32.mrf.mxu0
        %v6527 = vadd.f32 0.0, %v6526
        %v6528 = vpop.f32.mrf.mxu0
        %6529 = vdwg.mxu0
        %v6530 = vld [vmem:[%s6] sm:$0xff]
        %v6531 = vld [vmem:[%s6 + $0x8] sm:$0xff]
        %v6532 = vld [vmem:[%s6 + $0x10] sm:$0xff]
        %v6533 = vld [vmem:[%s6 + $0x18] sm:$0xff]
        %v6534 = vld [vmem:[%s6 + $0x20] sm:$0xff]
        %v6535 = vld [vmem:[%s6 + $0x28] sm:$0xff]
        %v6536 = vld [vmem:[%s6 + $0x30] sm:$0xff]
        %v6537 = vld [vmem:[%s6 + $0x38] sm:$0xff]
        %v6538 = vld [vmem:[%s6 + $0x40] sm:$0xff]
        %v6539 = vld [vmem:[%s6 + $0x48] sm:$0xff]
        %v6540 = vld [vmem:[%s6 + $0x50] sm:$0xff]
        %v6541 = vld [vmem:[%s6 + $0x58] sm:$0xff]
        %v6542 = vld [vmem:[%s6 + $0x60] sm:$0xff]
        %v6543 = vld [vmem:[%s6 + $0x68] sm:$0xff]
        %v6544 = vld [vmem:[%s6 + $0x70] sm:$0xff]
        %v6545 = vld [vmem:[%s6 + $0x78] sm:$0xff]
        %v6546 = vld [vmem:[%s6 + $0x80] sm:$0xff]
        %v6547 = vld [vmem:[%s6 + $0x88] sm:$0xff]
        %6548 = vmatprep.subr.mxu0 0.0
        %6549 = vmatpush1.msra.mxu0 %v6545
        %6550 = vmatprep.subr.mxu0 0.0
        %6551 = vmatpush1.msra.mxu0 %v6544
        %6552 = vmatprep.subr.mxu0 0.0
        %6553 = vmatpush1.msra.mxu0 %v6543
        %6554 = vmatprep.subr.mxu0 0.0
        %6555 = vmatpush1.msra.mxu0 %v6542
        %6556 = vmatprep.subr.mxu0 0.0
        %6557 = vmatpush1.msra.mxu0 %v6541
        %6558 = vmatprep.subr.mxu0 0.0
        %6559 = vmatpush1.msra.mxu0 %v6540
        %6560 = vmatprep.subr.mxu0 0.0
        %6561 = vmatpush1.msra.mxu0 %v6539
        %6562 = vmatprep.subr.mxu0 0.0
        %6563 = vmatpush1.msra.mxu0 %v6538
        %6564 = vmatprep.subr.mxu0 0.0
        %6565 = vmatpush1.msra.mxu0 %v6537
        %6566 = vmatprep.subr.mxu0 0.0
        %6567 = vmatpush1.msra.mxu0 %v6536
        %6568 = vmatprep.subr.mxu0 0.0
        %6569 = vmatpush1.msra.mxu0 %v6535
        %6570 = vmatprep.subr.mxu0 0.0
        %6571 = vmatpush1.msra.mxu0 %v6534
        %6572 = vmatprep.subr.mxu0 0.0
        %6573 = vmatpush1.msra.mxu0 %v6533
        %6574 = vmatprep.subr.mxu0 0.0
        %6575 = vmatpush1.msra.mxu0 %v6532
        %6576 = vmatprep.subr.mxu0 0.0
        %6577 = vmatpush1.msra.mxu0 %v6531
        %6578 = vmatprep.subr.mxu0 0.0
        %6579 = vmatpush1.msra.mxu0 %v6530
        %6580 = vmatprep.subr.mxu0 0.0
        %6581 = vmatpush2.msra.mxu0 0.0
        %6582 = vmatprep.subr.mxu0 0.0
        %6583 = vmatpush2.msra.mxu0 0.0
        %6584 = vmatprep.subr.mxu0 0.0
        %6585 = vmatpush2.msra.mxu0 0.0
        %6586 = vmatprep.subr.mxu0 0.0
        %6587 = vmatpush2.msra.mxu0 0.0
        %6588 = vmatprep.subr.mxu0 0.0
        %6589 = vmatpush2.msra.mxu0 0.0
        %6590 = vmatprep.subr.mxu0 0.0
        %6591 = vmatpush2.msra.mxu0 0.0
        %6592 = vmatprep.subr.mxu0 0.0
        %6593 = vmatpush2.msra.mxu0 0.0
        %6594 = vmatprep.subr.mxu0 0.0
        %6595 = vmatpush2.msra.mxu0 0.0
        %6596 = vmatprep.subr.mxu0 0.0
        %6597 = vmatpush2.msra.mxu0 0.0
        %6598 = vmatprep.subr.mxu0 0.0
        %6599 = vmatpush2.msra.mxu0 0.0
        %6600 = vmatprep.subr.mxu0 0.0
        %6601 = vmatpush2.msra.mxu0 0.0
        %6602 = vmatprep.subr.mxu0 0.0
        %6603 = vmatpush2.msra.mxu0 0.0
        %6604 = vmatprep.subr.mxu0 0.0
        %6605 = vmatpush2.msra.mxu0 0.0
        %6606 = vmatprep.subr.mxu0 0.0
        %6607 = vmatpush2.msra.mxu0 0.0
        %6608 = vmatprep.subr.mxu0 0.0
        %6609 = vmatpush2.msra.mxu0 %v6547
        %6610 = vmatprep.subr.mxu0 0.0
        %6611 = vmatpush2.msra.mxu0 %v6546
        %6612 = vmatprep.mubr.f32.mxu0 %v5698
        %6613 = vmatmul.mubr.f32.gmra.mxu0 %v5486
        %v6614 = vpop.f32.mrf.mxu0
        %v6615 = vadd.f32 0.0, %v6614
        %v6616 = vpop.f32.mrf.mxu0
        %6617 = vmatprep.mubr.f32.mxu0 %v5701
        %6618 = vmatmul.mubr.f32.gmra.mxu0 %v5488
        %v6619 = vpop.f32.mrf.mxu0
        %v6620 = vadd.f32 0.0, %v6619
        %v6621 = vpop.f32.mrf.mxu0
        %6622 = vmatprep.mubr.f32.mxu0 %v5704
        %6623 = vmatmul.mubr.f32.gmra.mxu0 %v5490
        %v6624 = vpop.f32.mrf.mxu0
        %v6625 = vadd.f32 0.0, %v6624
        %v6626 = vpop.f32.mrf.mxu0
        %6627 = vmatprep.mubr.f32.mxu0 %v5707
        %6628 = vmatmul.mubr.f32.gmra.mxu0 %v5492
        %v6629 = vpop.f32.mrf.mxu0
        %v6630 = vadd.f32 0.0, %v6629
        %v6631 = vpop.f32.mrf.mxu0
        %6632 = vmatprep.mubr.f32.mxu0 %v5710
        %6633 = vmatmul.mubr.f32.gmra.mxu0 %v5494
        %v6634 = vpop.f32.mrf.mxu0
        %v6635 = vadd.f32 0.0, %v6634
        %v6636 = vpop.f32.mrf.mxu0
        %6637 = vmatprep.mubr.f32.mxu0 %v5713
        %6638 = vmatmul.mubr.f32.gmra.mxu0 %v5496
        %v6639 = vpop.f32.mrf.mxu0
        %v6640 = vadd.f32 0.0, %v6639
        %v6641 = vpop.f32.mrf.mxu0
        %6642 = vmatprep.mubr.f32.mxu0 %v5716
        %6643 = vmatmul.mubr.f32.gmra.mxu0 %v5498
        %v6644 = vpop.f32.mrf.mxu0
        %v6645 = vadd.f32 0.0, %v6644
        %v6646 = vpop.f32.mrf.mxu0
        %6647 = vmatprep.mubr.f32.mxu0 %v5719
        %6648 = vmatmul.mubr.f32.gmra.mxu0 %v5500
        %v6649 = vpop.f32.mrf.mxu0
        %v6650 = vadd.f32 0.0, %v6649
        %v6651 = vpop.f32.mrf.mxu0
        %6652 = vmatprep.mubr.f32.mxu0 %v5722
        %6653 = vmatmul.mubr.f32.gmra.mxu0 %v5502
        %v6654 = vpop.f32.mrf.mxu0
        %v6655 = vadd.f32 0.0, %v6654
        %v6656 = vpop.f32.mrf.mxu0
        %6657 = vmatprep.mubr.f32.mxu0 %v5725
        %6658 = vmatmul.mubr.f32.gmra.mxu0 %v5504
        %v6659 = vpop.f32.mrf.mxu0
        %v6660 = vadd.f32 0.0, %v6659
        %v6661 = vpop.f32.mrf.mxu0
        %6662 = vmatprep.mubr.f32.mxu0 %v5728
        %6663 = vmatmul.mubr.f32.gmra.mxu0 %v5506
        %v6664 = vpop.f32.mrf.mxu0
        %v6665 = vadd.f32 0.0, %v6664
        %v6666 = vpop.f32.mrf.mxu0
        %6667 = vmatprep.mubr.f32.mxu0 %v5731
        %6668 = vmatmul.mubr.f32.gmra.mxu0 %v5508
        %v6669 = vpop.f32.mrf.mxu0
        %v6670 = vadd.f32 0.0, %v6669
        %v6671 = vpop.f32.mrf.mxu0
        %6672 = vmatprep.mubr.f32.mxu0 %v5734
        %6673 = vmatmul.mubr.f32.gmra.mxu0 %v5510
        %v6674 = vpop.f32.mrf.mxu0
        %v6675 = vadd.f32 0.0, %v6674
        %v6676 = vpop.f32.mrf.mxu0
        %6677 = vmatprep.mubr.f32.mxu0 %v5737
        %6678 = vmatmul.mubr.f32.gmra.mxu0 %v5512
        %v6679 = vpop.f32.mrf.mxu0
        %v6680 = vadd.f32 0.0, %v6679
        %v6681 = vpop.f32.mrf.mxu0
        %6682 = vmatprep.mubr.f32.mxu0 %v5740
        %6683 = vmatmul.mubr.f32.gmra.mxu0 %v5514
        %v6684 = vpop.f32.mrf.mxu0
        %v6685 = vadd.f32 0.0, %v6684
        %v6686 = vpop.f32.mrf.mxu0
        %6687 = vmatprep.mubr.f32.mxu0 %v5743
        %6688 = vmatmul.mubr.f32.gmra.mxu0 %v5516
        %v6689 = vpop.f32.mrf.mxu0
        %v6690 = vadd.f32 0.0, %v6689
        %v6691 = vpop.f32.mrf.mxu0
        %6692 = vmatprep.mubr.f32.mxu0 %v5746
        %6693 = vmatmul.mubr.f32.gmra.mxu0 %v5518
        %v6694 = vpop.f32.mrf.mxu0
        %v6695 = vadd.f32 0.0, %v6694
        %v6696 = vpop.f32.mrf.mxu0
        %6697 = vmatprep.mubr.f32.mxu0 %v5749
        %6698 = vmatmul.mubr.f32.gmra.mxu0 %v5520
        %v6699 = vpop.f32.mrf.mxu0
        %v6700 = vadd.f32 0.0, %v6699
        %v6701 = vpop.f32.mrf.mxu0
        %6702 = vmatprep.mubr.f32.mxu0 %v5752
        %6703 = vmatmul.mubr.f32.gmra.mxu0 %v5522
        %v6704 = vpop.f32.mrf.mxu0
        %v6705 = vadd.f32 0.0, %v6704
        %v6706 = vpop.f32.mrf.mxu0
        %6707 = vmatprep.mubr.f32.mxu0 %v5755
        %6708 = vmatmul.mubr.f32.gmra.mxu0 %v5524
        %v6709 = vpop.f32.mrf.mxu0
        %v6710 = vadd.f32 0.0, %v6709
        %v6711 = vpop.f32.mrf.mxu0
        %6712 = vmatprep.mubr.f32.mxu0 %v5758
        %6713 = vmatmul.mubr.f32.gmra.mxu0 %v5526
        %v6714 = vpop.f32.mrf.mxu0
        %v6715 = vadd.f32 0.0, %v6714
        %v6716 = vpop.f32.mrf.mxu0
        %6717 = vmatprep.mubr.f32.mxu0 %v5761
        %6718 = vmatmul.mubr.f32.gmra.mxu0 %v5528
        %v6719 = vpop.f32.mrf.mxu0
        %v6720 = vadd.f32 0.0, %v6719
        %v6721 = vpop.f32.mrf.mxu0
        %6722 = vmatprep.mubr.f32.mxu0 %v5764
        %6723 = vmatmul.mubr.f32.gmra.mxu0 %v5530
        %v6724 = vpop.f32.mrf.mxu0
        %v6725 = vadd.f32 0.0, %v6724
        %v6726 = vpop.f32.mrf.mxu0
        %6727 = vmatprep.mubr.f32.mxu0 %v5767
        %6728 = vmatmul.mubr.f32.gmra.mxu0 %v5532
        %v6729 = vpop.f32.mrf.mxu0
        %v6730 = vadd.f32 0.0, %v6729
        %v6731 = vpop.f32.mrf.mxu0
        %6732 = vmatprep.mubr.f32.mxu0 %v5770
        %6733 = vmatmul.mubr.f32.gmra.mxu0 %v5534
        %v6734 = vpop.f32.mrf.mxu0
        %v6735 = vadd.f32 0.0, %v6734
        %v6736 = vpop.f32.mrf.mxu0
        %6737 = vmatprep.mubr.f32.mxu0 %v5773
        %6738 = vmatmul.mubr.f32.gmra.mxu0 %v5536
        %v6739 = vpop.f32.mrf.mxu0
        %v6740 = vadd.f32 0.0, %v6739
        %v6741 = vpop.f32.mrf.mxu0
        %6742 = vmatprep.mubr.f32.mxu0 %v5776
        %6743 = vmatmul.mubr.f32.gmra.mxu0 %v5538
        %v6744 = vpop.f32.mrf.mxu0
        %v6745 = vadd.f32 0.0, %v6744
        %v6746 = vpop.f32.mrf.mxu0
        %6747 = vmatprep.mubr.f32.mxu0 %v5779
        %6748 = vmatmul.mubr.f32.gmra.mxu0 %v5540
        %v6749 = vpop.f32.mrf.mxu0
        %v6750 = vadd.f32 0.0, %v6749
        %v6751 = vpop.f32.mrf.mxu0
        %6752 = vmatprep.mubr.f32.mxu0 %v5782
        %6753 = vmatmul.mubr.f32.gmra.mxu0 %v5542
        %v6754 = vpop.f32.mrf.mxu0
        %v6755 = vadd.f32 0.0, %v6754
        %v6756 = vpop.f32.mrf.mxu0
        %6757 = vmatprep.mubr.f32.mxu0 %v5785
        %6758 = vmatmul.mubr.f32.gmra.mxu0 %v5544
        %v6759 = vpop.f32.mrf.mxu0
        %v6760 = vadd.f32 0.0, %v6759
        %v6761 = vpop.f32.mrf.mxu0
        %6762 = vmatprep.mubr.f32.mxu0 %v5788
        %6763 = vmatmul.mubr.f32.gmra.mxu0 %v5546
        %v6764 = vpop.f32.mrf.mxu0
        %v6765 = vadd.f32 0.0, %v6764
        %v6766 = vpop.f32.mrf.mxu0
        %6767 = vmatprep.mubr.f32.mxu0 %v5791
        %6768 = vmatmul.mubr.f32.gmra.mxu0 %v5548
        %v6769 = vpop.f32.mrf.mxu0
        %v6770 = vadd.f32 0.0, %v6769
        %v6771 = vpop.f32.mrf.mxu0
        %6772 = vmatprep.mubr.f32.mxu0 %v5794
        %6773 = vmatmul.mubr.f32.gmra.mxu0 %v5550
        %v6774 = vpop.f32.mrf.mxu0
        %v6775 = vadd.f32 0.0, %v6774
        %v6776 = vpop.f32.mrf.mxu0
        %6777 = vmatprep.mubr.f32.mxu0 %v5797
        %6778 = vmatmul.mubr.f32.gmra.mxu0 %v5552
        %v6779 = vpop.f32.mrf.mxu0
        %v6780 = vadd.f32 0.0, %v6779
        %v6781 = vpop.f32.mrf.mxu0
        %6782 = vmatprep.mubr.f32.mxu0 %v5800
        %6783 = vmatmul.mubr.f32.gmra.mxu0 %v5554
        %v6784 = vpop.f32.mrf.mxu0
        %v6785 = vadd.f32 0.0, %v6784
        %v6786 = vpop.f32.mrf.mxu0
        %6787 = vmatprep.mubr.f32.mxu0 %v5803
        %6788 = vmatmul.mubr.f32.gmra.mxu0 %v5556
        %v6789 = vpop.f32.mrf.mxu0
        %v6790 = vadd.f32 0.0, %v6789
        %v6791 = vpop.f32.mrf.mxu0
        %6792 = vmatprep.mubr.f32.mxu0 %v5806
        %6793 = vmatmul.mubr.f32.gmra.mxu0 %v5558
        %v6794 = vpop.f32.mrf.mxu0
        %v6795 = vadd.f32 0.0, %v6794
        %v6796 = vpop.f32.mrf.mxu0
        %6797 = vmatprep.mubr.f32.mxu0 %v5809
        %6798 = vmatmul.mubr.f32.gmra.mxu0 %v5560
        %v6799 = vpop.f32.mrf.mxu0
        %v6800 = vadd.f32 0.0, %v6799
        %v6801 = vpop.f32.mrf.mxu0
        %6802 = vmatprep.mubr.f32.mxu0 %v5812
        %6803 = vmatmul.mubr.f32.gmra.mxu0 %v5562
        %v6804 = vpop.f32.mrf.mxu0
        %v6805 = vadd.f32 0.0, %v6804
        %v6806 = vpop.f32.mrf.mxu0
        %6807 = vmatprep.mubr.f32.mxu0 %v5815
        %6808 = vmatmul.mubr.f32.gmra.mxu0 %v5564
        %v6809 = vpop.f32.mrf.mxu0
        %v6810 = vadd.f32 0.0, %v6809
        %v6811 = vpop.f32.mrf.mxu0
        %6812 = vmatprep.mubr.f32.mxu0 %v5818
        %6813 = vmatmul.mubr.f32.gmra.mxu0 %v5566
        %v6814 = vpop.f32.mrf.mxu0
        %v6815 = vadd.f32 0.0, %v6814
        %v6816 = vpop.f32.mrf.mxu0
        %6817 = vmatprep.mubr.f32.mxu0 %v5821
        %6818 = vmatmul.mubr.f32.gmra.mxu0 %v5568
        %v6819 = vpop.f32.mrf.mxu0
        %v6820 = vadd.f32 0.0, %v6819
        %v6821 = vpop.f32.mrf.mxu0
        %6822 = vmatprep.mubr.f32.mxu0 %v5824
        %6823 = vmatmul.mubr.f32.gmra.mxu0 %v5570
        %v6824 = vpop.f32.mrf.mxu0
        %v6825 = vadd.f32 0.0, %v6824
        %v6826 = vpop.f32.mrf.mxu0
        %6827 = vmatprep.mubr.f32.mxu0 %v5827
        %6828 = vmatmul.mubr.f32.gmra.mxu0 %v5572
        %v6829 = vpop.f32.mrf.mxu0
        %v6830 = vadd.f32 0.0, %v6829
        %v6831 = vpop.f32.mrf.mxu0
        %6832 = vmatprep.mubr.f32.mxu0 %v5830
        %6833 = vmatmul.mubr.f32.gmra.mxu0 %v5574
        %v6834 = vpop.f32.mrf.mxu0
        %v6835 = vadd.f32 0.0, %v6834
        %v6836 = vpop.f32.mrf.mxu0
        %6837 = vmatprep.mubr.f32.mxu0 %v5833
        %6838 = vmatmul.mubr.f32.gmra.mxu0 %v5576
        %v6839 = vpop.f32.mrf.mxu0
        %v6840 = vadd.f32 0.0, %v6839
        %v6841 = vpop.f32.mrf.mxu0
        %6842 = vmatprep.mubr.f32.mxu0 %v5836
        %6843 = vmatmul.mubr.f32.gmra.mxu0 %v5578
        %v6844 = vpop.f32.mrf.mxu0
        %v6845 = vadd.f32 0.0, %v6844
        %v6846 = vpop.f32.mrf.mxu0
        %6847 = vmatprep.mubr.f32.mxu0 %v5839
        %6848 = vmatmul.mubr.f32.gmra.mxu0 %v5580
        %v6849 = vpop.f32.mrf.mxu0
        %v6850 = vadd.f32 0.0, %v6849
        %v6851 = vpop.f32.mrf.mxu0
        %6852 = vmatprep.mubr.f32.mxu0 %v5842
        %6853 = vmatmul.mubr.f32.gmra.mxu0 %v5582
        %v6854 = vpop.f32.mrf.mxu0
        %v6855 = vadd.f32 0.0, %v6854
        %v6856 = vpop.f32.mrf.mxu0
        %6857 = vmatprep.mubr.f32.mxu0 %v5845
        %6858 = vmatmul.mubr.f32.gmra.mxu0 %v5584
        %v6859 = vpop.f32.mrf.mxu0
        %v6860 = vadd.f32 0.0, %v6859
        %v6861 = vpop.f32.mrf.mxu0
        %6862 = vmatprep.mubr.f32.mxu0 %v5848
        %6863 = vmatmul.mubr.f32.gmra.mxu0 %v5586
        %v6864 = vpop.f32.mrf.mxu0
        %v6865 = vadd.f32 0.0, %v6864
        %v6866 = vpop.f32.mrf.mxu0
        %6867 = vmatprep.mubr.f32.mxu0 %v5851
        %6868 = vmatmul.mubr.f32.gmra.mxu0 %v5588
        %v6869 = vpop.f32.mrf.mxu0
        %v6870 = vadd.f32 0.0, %v6869
        %v6871 = vpop.f32.mrf.mxu0
        %6872 = vmatprep.mubr.f32.mxu0 %v5854
        %6873 = vmatmul.mubr.f32.gmra.mxu0 %v5590
        %v6874 = vpop.f32.mrf.mxu0
        %v6875 = vadd.f32 0.0, %v6874
        %v6876 = vpop.f32.mrf.mxu0
        %6877 = vmatprep.mubr.f32.mxu0 %v5857
        %6878 = vmatmul.mubr.f32.gmra.mxu0 %v5592
        %v6879 = vpop.f32.mrf.mxu0
        %v6880 = vadd.f32 0.0, %v6879
        %v6881 = vpop.f32.mrf.mxu0
        %6882 = vmatprep.mubr.f32.mxu0 %v5860
        %6883 = vmatmul.mubr.f32.gmra.mxu0 %v5594
        %v6884 = vpop.f32.mrf.mxu0
        %v6885 = vadd.f32 0.0, %v6884
        %v6886 = vpop.f32.mrf.mxu0
        %6887 = vmatprep.mubr.f32.mxu0 %v5863
        %6888 = vmatmul.mubr.f32.gmra.mxu0 %v5596
        %v6889 = vpop.f32.mrf.mxu0
        %v6890 = vadd.f32 0.0, %v6889
        %v6891 = vpop.f32.mrf.mxu0
        %6892 = vmatprep.mubr.f32.mxu0 %v5866
        %6893 = vmatmul.mubr.f32.gmra.mxu0 %v5598
        %v6894 = vpop.f32.mrf.mxu0
        %v6895 = vadd.f32 0.0, %v6894
        %v6896 = vpop.f32.mrf.mxu0
        %6897 = vmatprep.mubr.f32.mxu0 %v5869
        %6898 = vmatmul.mubr.f32.gmra.mxu0 %v5600
        %v6899 = vpop.f32.mrf.mxu0
        %v6900 = vadd.f32 0.0, %v6899
        %v6901 = vpop.f32.mrf.mxu0
        %6902 = vmatprep.mubr.f32.mxu0 %v5872
        %6903 = vmatmul.mubr.f32.gmra.mxu0 %v5602
        %v6904 = vpop.f32.mrf.mxu0
        %v6905 = vadd.f32 0.0, %v6904
        %v6906 = vpop.f32.mrf.mxu0
        %6907 = vmatprep.mubr.f32.mxu0 %v5875
        %6908 = vmatmul.mubr.f32.gmra.mxu0 %v5604
        %v6909 = vpop.f32.mrf.mxu0
        %v6910 = vadd.f32 0.0, %v6909
        %v6911 = vpop.f32.mrf.mxu0
        %6912 = vmatprep.mubr.f32.mxu0 %v5878
        %6913 = vmatmul.mubr.f32.gmra.mxu0 %v5606
        %v6914 = vpop.f32.mrf.mxu0
        %v6915 = vadd.f32 0.0, %v6914
        %v6916 = vpop.f32.mrf.mxu0
        %6917 = vmatprep.mubr.f32.mxu0 %v5881
        %6918 = vmatmul.mubr.f32.gmra.mxu0 %v5608
        %v6919 = vpop.f32.mrf.mxu0
        %v6920 = vadd.f32 0.0, %v6919
        %v6921 = vpop.f32.mrf.mxu0
        %6922 = vmatprep.mubr.f32.mxu0 %v5884
        %6923 = vmatmul.mubr.f32.gmra.mxu0 %v5610
        %v6924 = vpop.f32.mrf.mxu0
        %v6925 = vadd.f32 0.0, %v6924
        %v6926 = vpop.f32.mrf.mxu0
        %6927 = vmatprep.mubr.f32.mxu0 %v5887
        %6928 = vmatmul.mubr.f32.gmra.mxu0 %v5612
        %v6929 = vpop.f32.mrf.mxu0
        %v6930 = vadd.f32 0.0, %v6929
        %v6931 = vpop.f32.mrf.mxu0
        %6932 = vmatprep.mubr.f32.mxu0 %v5890
        %6933 = vmatmul.mubr.f32.gmra.mxu0 %v5614
        %v6934 = vpop.f32.mrf.mxu0
        %v6935 = vadd.f32 0.0, %v6934
        %v6936 = vpop.f32.mrf.mxu0
        %6937 = vmatprep.mubr.f32.mxu0 %v5893
        %6938 = vmatmul.mubr.f32.gmra.mxu0 %v5616
        %v6939 = vpop.f32.mrf.mxu0
        %v6940 = vadd.f32 0.0, %v6939
        %v6941 = vpop.f32.mrf.mxu0
        %6942 = vmatprep.mubr.f32.mxu0 %v5896
        %6943 = vmatmul.mubr.f32.gmra.mxu0 %v5618
        %v6944 = vpop.f32.mrf.mxu0
        %v6945 = vadd.f32 0.0, %v6944
        %v6946 = vpop.f32.mrf.mxu0
        %6947 = vmatprep.mubr.f32.mxu0 %v5899
        %6948 = vmatmul.mubr.f32.gmra.mxu0 %v5620
        %v6949 = vpop.f32.mrf.mxu0
        %v6950 = vadd.f32 0.0, %v6949
        %v6951 = vpop.f32.mrf.mxu0
        %6952 = vmatprep.mubr.f32.mxu0 %v5902
        %6953 = vmatmul.mubr.f32.gmra.mxu0 %v5622
        %v6954 = vpop.f32.mrf.mxu0
        %v6955 = vadd.f32 0.0, %v6954
        %v6956 = vpop.f32.mrf.mxu0
        %6957 = vmatprep.mubr.f32.mxu0 %v5905
        %6958 = vmatmul.mubr.f32.gmra.mxu0 %v5624
        %v6959 = vpop.f32.mrf.mxu0
        %v6960 = vadd.f32 0.0, %v6959
        %v6961 = vpop.f32.mrf.mxu0
        %6962 = vmatprep.mubr.f32.mxu0 %v5908
        %6963 = vmatmul.mubr.f32.gmra.mxu0 %v5626
        %v6964 = vpop.f32.mrf.mxu0
        %v6965 = vadd.f32 0.0, %v6964
        %v6966 = vpop.f32.mrf.mxu0
        %6967 = vmatprep.mubr.f32.mxu0 %v5911
        %6968 = vmatmul.mubr.f32.gmra.mxu0 %v5628
        %v6969 = vpop.f32.mrf.mxu0
        %v6970 = vadd.f32 0.0, %v6969
        %v6971 = vpop.f32.mrf.mxu0
        %6972 = vmatprep.mubr.f32.mxu0 %v5914
        %6973 = vmatmul.mubr.f32.gmra.mxu0 %v5630
        %v6974 = vpop.f32.mrf.mxu0
        %v6975 = vadd.f32 0.0, %v6974
        %v6976 = vpop.f32.mrf.mxu0
        %6977 = vmatprep.mubr.f32.mxu0 %v5917
        %6978 = vmatmul.mubr.f32.gmra.mxu0 %v5632
        %v6979 = vpop.f32.mrf.mxu0
        %v6980 = vadd.f32 0.0, %v6979
        %v6981 = vpop.f32.mrf.mxu0
        %6982 = vmatprep.mubr.f32.mxu0 %v5920
        %6983 = vmatmul.mubr.f32.gmra.mxu0 %v5634
        %v6984 = vpop.f32.mrf.mxu0
        %v6985 = vadd.f32 0.0, %v6984
        %v6986 = vpop.f32.mrf.mxu0
        %6987 = vmatprep.mubr.f32.mxu0 %v5923
        %6988 = vmatmul.mubr.f32.gmra.mxu0 %v5636
        %v6989 = vpop.f32.mrf.mxu0
        %v6990 = vadd.f32 0.0, %v6989
        %v6991 = vpop.f32.mrf.mxu0
        %6992 = vmatprep.mubr.f32.mxu0 %v5926
        %6993 = vmatmul.mubr.f32.gmra.mxu0 %v5638
        %v6994 = vpop.f32.mrf.mxu0
        %v6995 = vadd.f32 0.0, %v6994
        %v6996 = vpop.f32.mrf.mxu0
        %6997 = vmatprep.mubr.f32.mxu0 %v5929
        %6998 = vmatmul.mubr.f32.gmra.mxu0 %v5640
        %v6999 = vpop.f32.mrf.mxu0
        %v7000 = vadd.f32 0.0, %v6999
        %v7001 = vpop.f32.mrf.mxu0
        %7002 = vmatprep.mubr.f32.mxu0 %v5932
        %7003 = vmatmul.mubr.f32.gmra.mxu0 %v5642
        %v7004 = vpop.f32.mrf.mxu0
        %v7005 = vadd.f32 0.0, %v7004
        %v7006 = vpop.f32.mrf.mxu0
        %7007 = vmatprep.mubr.f32.mxu0 %v5935
        %7008 = vmatmul.mubr.f32.gmra.mxu0 %v5644
        %v7009 = vpop.f32.mrf.mxu0
        %v7010 = vadd.f32 0.0, %v7009
        %v7011 = vpop.f32.mrf.mxu0
        %7012 = vmatprep.mubr.f32.mxu0 %v5938
        %7013 = vmatmul.mubr.f32.gmra.mxu0 %v5646
        %v7014 = vpop.f32.mrf.mxu0
        %v7015 = vadd.f32 0.0, %v7014
        %v7016 = vpop.f32.mrf.mxu0
        %7017 = vmatprep.mubr.f32.mxu0 %v5941
        %7018 = vmatmul.mubr.f32.gmra.mxu0 %v5648
        %v7019 = vpop.f32.mrf.mxu0
        %v7020 = vadd.f32 0.0, %v7019
        %v7021 = vpop.f32.mrf.mxu0
        %7022 = vmatprep.mubr.f32.mxu0 %v5944
        %7023 = vmatmul.mubr.f32.gmra.mxu0 %v5650
        %v7024 = vpop.f32.mrf.mxu0
        %v7025 = vadd.f32 0.0, %v7024
        %v7026 = vpop.f32.mrf.mxu0
        %7027 = vmatprep.mubr.f32.mxu0 %v5947
        %7028 = vmatmul.mubr.f32.gmra.mxu0 %v5652
        %v7029 = vpop.f32.mrf.mxu0
        %v7030 = vadd.f32 0.0, %v7029
        %v7031 = vpop.f32.mrf.mxu0
        %7032 = vmatprep.mubr.f32.mxu0 %v5950
        %7033 = vmatmul.mubr.f32.gmra.mxu0 %v5654
        %v7034 = vpop.f32.mrf.mxu0
        %v7035 = vadd.f32 0.0, %v7034
        %v7036 = vpop.f32.mrf.mxu0
        %7037 = vmatprep.mubr.f32.mxu0 %v5953
        %7038 = vmatmul.mubr.f32.gmra.mxu0 %v5656
        %v7039 = vpop.f32.mrf.mxu0
        %v7040 = vadd.f32 0.0, %v7039
        %v7041 = vpop.f32.mrf.mxu0
        %7042 = vmatprep.mubr.f32.mxu0 %v5956
        %7043 = vmatmul.mubr.f32.gmra.mxu0 %v5658
        %v7044 = vpop.f32.mrf.mxu0
        %v7045 = vadd.f32 0.0, %v7044
        %v7046 = vpop.f32.mrf.mxu0
        %7047 = vmatprep.mubr.f32.mxu0 %v5959
        %7048 = vmatmul.mubr.f32.gmra.mxu0 %v5660
        %v7049 = vpop.f32.mrf.mxu0
        %v7050 = vadd.f32 0.0, %v7049
        %v7051 = vpop.f32.mrf.mxu0
        %7052 = vmatprep.mubr.f32.mxu0 %v5962
        %7053 = vmatmul.mubr.f32.gmra.mxu0 %v5662
        %v7054 = vpop.f32.mrf.mxu0
        %v7055 = vadd.f32 0.0, %v7054
        %v7056 = vpop.f32.mrf.mxu0
        %7057 = vmatprep.mubr.f32.mxu0 %v5965
        %7058 = vmatmul.mubr.f32.gmra.mxu0 %v5664
        %v7059 = vpop.f32.mrf.mxu0
        %v7060 = vadd.f32 0.0, %v7059
        %v7061 = vpop.f32.mrf.mxu0
        %7062 = vmatprep.mubr.f32.mxu0 %v5968
        %7063 = vmatmul.mubr.f32.gmra.mxu0 %v5666
        %v7064 = vpop.f32.mrf.mxu0
        %v7065 = vadd.f32 0.0, %v7064
        %v7066 = vpop.f32.mrf.mxu0
        %7067 = vmatprep.mubr.f32.mxu0 %v5971
        %7068 = vmatmul.mubr.f32.gmra.mxu0 %v5668
        %v7069 = vpop.f32.mrf.mxu0
        %v7070 = vadd.f32 0.0, %v7069
        %v7071 = vpop.f32.mrf.mxu0
        %7072 = vmatprep.mubr.f32.mxu0 %v5974
        %7073 = vmatmul.mubr.f32.gmra.mxu0 %v5670
        %v7074 = vpop.f32.mrf.mxu0
        %v7075 = vadd.f32 0.0, %v7074
        %v7076 = vpop.f32.mrf.mxu0
        %7077 = vmatprep.mubr.f32.mxu0 %v5977
        %7078 = vmatmul.mubr.f32.gmra.mxu0 %v5672
        %v7079 = vpop.f32.mrf.mxu0
        %v7080 = vadd.f32 0.0, %v7079
        %v7081 = vpop.f32.mrf.mxu0
        %7082 = vmatprep.mubr.f32.mxu0 %v5980
        %7083 = vmatmul.mubr.f32.gmra.mxu0 %v5674
        %v7084 = vpop.f32.mrf.mxu0
        %v7085 = vadd.f32 0.0, %v7084
        %v7086 = vpop.f32.mrf.mxu0
        %7087 = vmatprep.mubr.f32.mxu0 %v5983
        %7088 = vmatmul.mubr.f32.gmra.mxu0 %v5676
        %v7089 = vpop.f32.mrf.mxu0
        %v7090 = vadd.f32 0.0, %v7089
        %v7091 = vpop.f32.mrf.mxu0
        %7092 = vdwg.mxu0
        %v7093 = vmax.f32 %v6052, %v6615
        %v7094 = vmax.f32 %v6057, %v6620
        %v7095 = vmax.f32 %v6062, %v6625
        %v7096 = vmax.f32 %v6067, %v6630
        %v7097 = vmax.f32 %v6072, %v6635
        %v7098 = vmax.f32 %v6077, %v6640
        %v7099 = vmax.f32 %v6082, %v6645
        %v7100 = vmax.f32 %v6087, %v6650
        %v7101 = vmax.f32 %v6092, %v6655
        %v7102 = vmax.f32 %v6097, %v6660
        %v7103 = vmax.f32 %v6102, %v6665
        %v7104 = vmax.f32 %v6107, %v6670
        %v7105 = vmax.f32 %v6112, %v6675
        %v7106 = vmax.f32 %v6117, %v6680
        %v7107 = vmax.f32 %v6122, %v6685
        %v7108 = vmax.f32 %v6127, %v6690
        %v7109 = vmax.f32 %v6132, %v6695
        %v7110 = vmax.f32 %v6137, %v6700
        %v7111 = vmax.f32 %v6142, %v6705
        %v7112 = vmax.f32 %v6147, %v6710
        %v7113 = vmax.f32 %v6152, %v6715
        %v7114 = vmax.f32 %v6157, %v6720
        %v7115 = vmax.f32 %v6162, %v6725
        %v7116 = vmax.f32 %v6167, %v6730
        %v7117 = vmax.f32 %v6172, %v6735
        %v7118 = vmax.f32 %v6177, %v6740
        %v7119 = vmax.f32 %v6182, %v6745
        %v7120 = vmax.f32 %v6187, %v6750
        %v7121 = vmax.f32 %v6192, %v6755
        %v7122 = vmax.f32 %v6197, %v6760
        %v7123 = vmax.f32 %v6202, %v6765
        %v7124 = vmax.f32 %v6207, %v6770
        %v7125 = vmax.f32 %v6212, %v6775
        %v7126 = vmax.f32 %v6217, %v6780
        %v7127 = vmax.f32 %v6222, %v6785
        %v7128 = vmax.f32 %v6227, %v6790
        %v7129 = vmax.f32 %v6232, %v6795
        %v7130 = vmax.f32 %v6237, %v6800
        %v7131 = vmax.f32 %v6242, %v6805
        %v7132 = vmax.f32 %v6247, %v6810
        %v7133 = vmax.f32 %v6252, %v6815
        %v7134 = vmax.f32 %v6257, %v6820
        %v7135 = vmax.f32 %v6262, %v6825
        %v7136 = vmax.f32 %v6267, %v6830
        %v7137 = vmax.f32 %v6272, %v6835
        %v7138 = vmax.f32 %v6277, %v6840
        %v7139 = vmax.f32 %v6282, %v6845
        %v7140 = vmax.f32 %v6287, %v6850
        %v7141 = vmax.f32 %v6292, %v6855
        %v7142 = vmax.f32 %v6297, %v6860
        %v7143 = vmax.f32 %v6302, %v6865
        %v7144 = vmax.f32 %v6307, %v6870
        %v7145 = vmax.f32 %v6312, %v6875
        %v7146 = vmax.f32 %v6317, %v6880
        %v7147 = vmax.f32 %v6322, %v6885
        %v7148 = vmax.f32 %v6327, %v6890
        %v7149 = vmax.f32 %v6332, %v6895
        %v7150 = vmax.f32 %v6337, %v6900
        %v7151 = vmax.f32 %v6342, %v6905
        %v7152 = vmax.f32 %v6347, %v6910
        %v7153 = vmax.f32 %v6352, %v6915
        %v7154 = vmax.f32 %v6357, %v6920
        %v7155 = vmax.f32 %v6362, %v6925
        %v7156 = vmax.f32 %v6367, %v6930
        %v7157 = vmax.f32 %v6372, %v6935
        %v7158 = vmax.f32 %v6377, %v6940
        %v7159 = vmax.f32 %v6382, %v6945
        %v7160 = vmax.f32 %v6387, %v6950
        %v7161 = vmax.f32 %v6392, %v6955
        %v7162 = vmax.f32 %v6397, %v6960
        %v7163 = vmax.f32 %v6402, %v6965
        %v7164 = vmax.f32 %v6407, %v6970
        %v7165 = vmax.f32 %v6412, %v6975
        %v7166 = vmax.f32 %v6417, %v6980
        %v7167 = vmax.f32 %v6422, %v6985
        %v7168 = vmax.f32 %v6427, %v6990
        %v7169 = vmax.f32 %v6432, %v6995
        %v7170 = vmax.f32 %v6437, %v7000
        %v7171 = vmax.f32 %v6442, %v7005
        %v7172 = vmax.f32 %v6447, %v7010
        %v7173 = vmax.f32 %v6452, %v7015
        %v7174 = vmax.f32 %v6457, %v7020
        %v7175 = vmax.f32 %v6462, %v7025
        %v7176 = vmax.f32 %v6467, %v7030
        %v7177 = vmax.f32 %v6472, %v7035
        %v7178 = vmax.f32 %v6477, %v7040
        %v7179 = vmax.f32 %v6482, %v7045
        %v7180 = vmax.f32 %v6487, %v7050
        %v7181 = vmax.f32 %v6492, %v7055
        %v7182 = vmax.f32 %v6497, %v7060
        %v7183 = vmax.f32 %v6502, %v7065
        %v7184 = vmax.f32 %v6507, %v7070
        %v7185 = vmax.f32 %v6512, %v7075
        %v7186 = vmax.f32 %v6517, %v7080
        %v7187 = vmax.f32 %v6522, %v7085
        %v7188 = vmax.f32 %v6527, %v7090
        %v7189 = vmax.f32 %v7093, %v7097
        %v7190 = vmax.f32 %v7094, %v7098
        %v7191 = vmax.f32 %v7095, %v7099
        %v7192 = vmax.f32 %v7096, %v7100
        %v7193 = vmax.f32 %v7101, %v7105
        %v7194 = vmax.f32 %v7102, %v7106
        %v7195 = vmax.f32 %v7103, %v7107
        %v7196 = vmax.f32 %v7104, %v7108
        %v7197 = vmax.f32 %v7109, %v7113
        %v7198 = vmax.f32 %v7110, %v7114
        %v7199 = vmax.f32 %v7111, %v7115
        %v7200 = vmax.f32 %v7112, %v7116
        %v7201 = vmax.f32 %v7117, %v7121
        %v7202 = vmax.f32 %v7118, %v7122
        %v7203 = vmax.f32 %v7119, %v7123
        %v7204 = vmax.f32 %v7120, %v7124
        %v7205 = vmax.f32 %v7125, %v7129
        %v7206 = vmax.f32 %v7126, %v7130
        %v7207 = vmax.f32 %v7127, %v7131
        %v7208 = vmax.f32 %v7128, %v7132
        %v7209 = vmax.f32 %v7133, %v7137
        %v7210 = vmax.f32 %v7134, %v7138
        %v7211 = vmax.f32 %v7135, %v7139
        %v7212 = vmax.f32 %v7136, %v7140
        %v7213 = vmax.f32 %v7141, %v7145
        %v7214 = vmax.f32 %v7142, %v7146
        %v7215 = vmax.f32 %v7143, %v7147
        %v7216 = vmax.f32 %v7144, %v7148
        %v7217 = vmax.f32 %v7149, %v7153
        %v7218 = vmax.f32 %v7150, %v7154
        %v7219 = vmax.f32 %v7151, %v7155
        %v7220 = vmax.f32 %v7152, %v7156
        %v7221 = vmax.f32 %v7157, %v7161
        %v7222 = vmax.f32 %v7158, %v7162
        %v7223 = vmax.f32 %v7159, %v7163
        %v7224 = vmax.f32 %v7160, %v7164
        %v7225 = vmax.f32 %v7165, %v7169
        %v7226 = vmax.f32 %v7166, %v7170
        %v7227 = vmax.f32 %v7167, %v7171
        %v7228 = vmax.f32 %v7168, %v7172
        %v7229 = vmax.f32 %v7173, %v7177
        %v7230 = vmax.f32 %v7174, %v7178
        %v7231 = vmax.f32 %v7175, %v7179
        %v7232 = vmax.f32 %v7176, %v7180
        %v7233 = vmax.f32 %v7181, %v7185
        %v7234 = vmax.f32 %v7182, %v7186
        %v7235 = vmax.f32 %v7183, %v7187
        %v7236 = vmax.f32 %v7184, %v7188
        %v7237 = vld [vmem:[%s3] sm:$0xff]
        %v7238 = vld [vmem:[%s3 + $0x8] sm:$0xff]
        %v7239 = vld [vmem:[%s3 + $0x10] sm:$0xff]
        %v7240 = vld [vmem:[%s3 + $0x18] sm:$0xff]
        %v7241 = vld [vmem:[%s3 + $0x20] sm:$0xff]
        %v7242 = vld [vmem:[%s3 + $0x28] sm:$0xff]
        %v7243 = vld [vmem:[%s3 + $0x30] sm:$0xff]
        %v7244 = vld [vmem:[%s3 + $0x38] sm:$0xff]
        %v7245 = vld [vmem:[%s3 + $0x40] sm:$0xff]
        %s7246 = scalar_lea.vmem %s3, 72
        %v7247 = vld [vmem:[%s7246] sm:$0xff]
        %v7248 = vld [vmem:[%s7246 + $0x8] sm:$0xff]
        %v7249 = vld [vmem:[%s7246 + $0x10] sm:$0xff]
        %v7250 = vld [vmem:[%s7246 + $0x18] sm:$0xff]
        %v7251 = vld [vmem:[%s7246 + $0x20] sm:$0xff]
        %v7252 = vld [vmem:[%s7246 + $0x28] sm:$0xff]
        %v7253 = vld [vmem:[%s7246 + $0x30] sm:$0xff]
        %v7254 = vld [vmem:[%s7246 + $0x38] sm:$0xff]
        %v7255 = vld [vmem:[%s7246 + $0x40] sm:$0xff]
        %vm7256 = vcmask 588800
        %v7258 = vsel %vm7256, %v7193, 0
        %v7261 = vsel %vm7256, %v7194, 0
        %v7264 = vsel %vm7256, %v7195, 0
        %v7267 = vsel %vm7256, %v7196, 0
        %v7270 = vsel %vm7256, %v7197, 0
        %v7273 = vsel %vm7256, %v7198, 0
        %v7276 = vsel %vm7256, %v7199, 0
        %v7279 = vsel %vm7256, %v7200, 0
        %v7282 = vsel %vm7256, %v7201, 0
        %v7285 = vsel %vm7256, %v7202, 0
        %v7288 = vsel %vm7256, %v7203, 0
        %v7291 = vsel %vm7256, %v7204, 0
        %v7294 = vsel %vm7256, %v7205, 0
        %v7297 = vsel %vm7256, %v7206, 0
        %v7300 = vsel %vm7256, %v7207, 0
        %v7303 = vsel %vm7256, %v7208, 0
        %v7306 = vsel %vm7256, %v7209, 0
        %v7309 = vsel %vm7256, %v7210, 0
        %v7312 = vsel %vm7256, %v7211, 0
        %v7315 = vsel %vm7256, %v7212, 0
        %v7318 = vsel %vm7256, %v7213, 0
        %v7321 = vsel %vm7256, %v7214, 0
        %v7324 = vsel %vm7256, %v7215, 0
        %v7327 = vsel %vm7256, %v7216, 0
        %v7330 = vsel %vm7256, %v7217, 0
        %v7333 = vsel %vm7256, %v7218, 0
        %v7336 = vsel %vm7256, %v7219, 0
        %v7339 = vsel %vm7256, %v7220, 0
        %v7342 = vsel %vm7256, %v7221, 0
        %v7345 = vsel %vm7256, %v7222, 0
        %v7348 = vsel %vm7256, %v7223, 0
        %v7351 = vsel %vm7256, %v7224, 0
        %7353 = vmatprep.subr.mxu0 0.0
        %7354 = vmatpush1.msra.mxu0 0.0
        %7355 = vmatprep.subr.mxu0 0.0
        %7356 = vmatpush1.msra.mxu0 0.0
        %7357 = vmatprep.subr.mxu0 0.0
        %7358 = vmatpush1.msra.mxu0 0.0
        %7359 = vmatprep.subr.mxu0 0.0
        %7360 = vmatpush1.msra.mxu0 0.0
        %7361 = vmatprep.subr.mxu0 0.0
        %7362 = vmatpush1.msra.mxu0 0.0
        %7363 = vmatprep.subr.mxu0 0.0
        %7364 = vmatpush1.msra.mxu0 0.0
        %7365 = vmatprep.subr.mxu0 0.0
        %7366 = vmatpush1.msra.mxu0 0.0
        %7367 = vmatprep.subr.mxu0 0.0
        %7368 = vmatpush1.msra.mxu0 %v7255
        %7369 = vmatprep.subr.mxu0 0.0
        %7370 = vmatpush1.msra.mxu0 %v7254
        %7371 = vmatprep.subr.mxu0 0.0
        %7372 = vmatpush1.msra.mxu0 %v7253
        %7373 = vmatprep.subr.mxu0 0.0
        %7374 = vmatpush1.msra.mxu0 %v7252
        %7375 = vmatprep.subr.mxu0 0.0
        %7376 = vmatpush1.msra.mxu0 %v7251
        %7377 = vmatprep.subr.mxu0 0.0
        %7378 = vmatpush1.msra.mxu0 %v7250
        %7379 = vmatprep.subr.mxu0 0.0
        %7380 = vmatpush1.msra.mxu0 %v7249
        %7381 = vmatprep.subr.mxu0 0.0
        %7382 = vmatpush1.msra.mxu0 %v7248
        %7383 = vmatprep.subr.mxu0 0.0
        %7384 = vmatpush1.msra.mxu0 %v7247
        %7385 = vmatprep.subr.mxu0 0.0
        %7386 = vmatpush2.msra.mxu0 0.0
        %7387 = vmatprep.subr.mxu0 0.0
        %7388 = vmatpush2.msra.mxu0 0.0
        %7389 = vmatprep.subr.mxu0 0.0
        %7390 = vmatpush2.msra.mxu0 0.0
        %7391 = vmatprep.subr.mxu0 0.0
        %7392 = vmatpush2.msra.mxu0 0.0
        %7393 = vmatprep.subr.mxu0 0.0
        %7394 = vmatpush2.msra.mxu0 0.0
        %7395 = vmatprep.subr.mxu0 0.0
        %7396 = vmatpush2.msra.mxu0 0.0
        %7397 = vmatprep.subr.mxu0 0.0
        %7398 = vmatpush2.msra.mxu0 0.0
        %7399 = vmatprep.subr.mxu0 0.0
        %7400 = vmatpush2.msra.mxu0 0.0
        %7401 = vmatprep.subr.mxu0 0.0
        %7402 = vmatpush2.msra.mxu0 0.0
        %7403 = vmatprep.subr.mxu0 0.0
        %7404 = vmatpush2.msra.mxu0 0.0
        %7405 = vmatprep.subr.mxu0 0.0
        %7406 = vmatpush2.msra.mxu0 0.0
        %7407 = vmatprep.subr.mxu0 0.0
        %7408 = vmatpush2.msra.mxu0 0.0
        %7409 = vmatprep.subr.mxu0 0.0
        %7410 = vmatpush2.msra.mxu0 0.0
        %7411 = vmatprep.subr.mxu0 0.0
        %7412 = vmatpush2.msra.mxu0 0.0
        %7413 = vmatprep.subr.mxu0 0.0
        %7414 = vmatpush2.msra.mxu0 0.0
        %7415 = vmatprep.subr.mxu0 0.0
        %7416 = vmatpush2.msra.mxu0 0.0
        %7417 = vmatprep.mubr.f32.mxu0 0.0
        %7418 = vmatmul.mubr.f32.gmra.mxu0 %v7258
        %v7419 = vpop.f32.mrf.mxu0
        %v7420 = vadd.f32 0.0, %v7419
        %v7421 = vpop.f32.mrf.mxu0
        %7422 = vmatprep.mubr.f32.mxu0 0.0
        %7423 = vmatmul.mubr.f32.gmra.mxu0 %v7261
        %v7424 = vpop.f32.mrf.mxu0
        %v7425 = vadd.f32 0.0, %v7424
        %v7426 = vpop.f32.mrf.mxu0
        %7427 = vmatprep.mubr.f32.mxu0 0.0
        %7428 = vmatmul.mubr.f32.gmra.mxu0 %v7264
        %v7429 = vpop.f32.mrf.mxu0
        %v7430 = vadd.f32 0.0, %v7429
        %v7431 = vpop.f32.mrf.mxu0
        %7432 = vmatprep.mubr.f32.mxu0 0.0
        %7433 = vmatmul.mubr.f32.gmra.mxu0 %v7267
        %v7434 = vpop.f32.mrf.mxu0
        %v7435 = vadd.f32 0.0, %v7434
        %v7436 = vpop.f32.mrf.mxu0
        %7437 = vmatprep.mubr.f32.mxu0 0.0
        %7438 = vmatmul.mubr.f32.gmra.mxu0 %v7270
        %v7439 = vpop.f32.mrf.mxu0
        %v7440 = vadd.f32 0.0, %v7439
        %v7441 = vpop.f32.mrf.mxu0
        %7442 = vmatprep.mubr.f32.mxu0 0.0
        %7443 = vmatmul.mubr.f32.gmra.mxu0 %v7273
        %v7444 = vpop.f32.mrf.mxu0
        %v7445 = vadd.f32 0.0, %v7444
        %v7446 = vpop.f32.mrf.mxu0
        %7447 = vmatprep.mubr.f32.mxu0 0.0
        %7448 = vmatmul.mubr.f32.gmra.mxu0 %v7276
        %v7449 = vpop.f32.mrf.mxu0
        %v7450 = vadd.f32 0.0, %v7449
        %v7451 = vpop.f32.mrf.mxu0
        %7452 = vmatprep.mubr.f32.mxu0 0.0
        %7453 = vmatmul.mubr.f32.gmra.mxu0 %v7279
        %v7454 = vpop.f32.mrf.mxu0
        %v7455 = vadd.f32 0.0, %v7454
        %v7456 = vpop.f32.mrf.mxu0
        %7457 = vmatprep.mubr.f32.mxu0 0.0
        %7458 = vmatmul.mubr.f32.gmra.mxu0 %v7282
        %v7459 = vpop.f32.mrf.mxu0
        %v7460 = vadd.f32 0.0, %v7459
        %v7461 = vpop.f32.mrf.mxu0
        %7462 = vmatprep.mubr.f32.mxu0 0.0
        %7463 = vmatmul.mubr.f32.gmra.mxu0 %v7285
        %v7464 = vpop.f32.mrf.mxu0
        %v7465 = vadd.f32 0.0, %v7464
        %v7466 = vpop.f32.mrf.mxu0
        %7467 = vmatprep.mubr.f32.mxu0 0.0
        %7468 = vmatmul.mubr.f32.gmra.mxu0 %v7288
        %v7469 = vpop.f32.mrf.mxu0
        %v7470 = vadd.f32 0.0, %v7469
        %v7471 = vpop.f32.mrf.mxu0
        %7472 = vmatprep.mubr.f32.mxu0 0.0
        %7473 = vmatmul.mubr.f32.gmra.mxu0 %v7291
        %v7474 = vpop.f32.mrf.mxu0
        %v7475 = vadd.f32 0.0, %v7474
        %v7476 = vpop.f32.mrf.mxu0
        %7477 = vmatprep.mubr.f32.mxu0 0.0
        %7478 = vmatmul.mubr.f32.gmra.mxu0 %v7294
        %v7479 = vpop.f32.mrf.mxu0
        %v7480 = vadd.f32 0.0, %v7479
        %v7481 = vpop.f32.mrf.mxu0
        %7482 = vmatprep.mubr.f32.mxu0 0.0
        %7483 = vmatmul.mubr.f32.gmra.mxu0 %v7297
        %v7484 = vpop.f32.mrf.mxu0
        %v7485 = vadd.f32 0.0, %v7484
        %v7486 = vpop.f32.mrf.mxu0
        %7487 = vmatprep.mubr.f32.mxu0 0.0
        %7488 = vmatmul.mubr.f32.gmra.mxu0 %v7300
        %v7489 = vpop.f32.mrf.mxu0
        %v7490 = vadd.f32 0.0, %v7489
        %v7491 = vpop.f32.mrf.mxu0
        %7492 = vmatprep.mubr.f32.mxu0 0.0
        %7493 = vmatmul.mubr.f32.gmra.mxu0 %v7303
        %v7494 = vpop.f32.mrf.mxu0
        %v7495 = vadd.f32 0.0, %v7494
        %v7496 = vpop.f32.mrf.mxu0
        %7497 = vmatprep.mubr.f32.mxu0 0.0
        %7498 = vmatmul.mubr.f32.gmra.mxu0 %v7306
        %v7499 = vpop.f32.mrf.mxu0
        %v7500 = vadd.f32 0.0, %v7499
        %v7501 = vpop.f32.mrf.mxu0
        %7502 = vmatprep.mubr.f32.mxu0 0.0
        %7503 = vmatmul.mubr.f32.gmra.mxu0 %v7309
        %v7504 = vpop.f32.mrf.mxu0
        %v7505 = vadd.f32 0.0, %v7504
        %v7506 = vpop.f32.mrf.mxu0
        %7507 = vmatprep.mubr.f32.mxu0 0.0
        %7508 = vmatmul.mubr.f32.gmra.mxu0 %v7312
        %v7509 = vpop.f32.mrf.mxu0
        %v7510 = vadd.f32 0.0, %v7509
        %v7511 = vpop.f32.mrf.mxu0
        %7512 = vmatprep.mubr.f32.mxu0 0.0
        %7513 = vmatmul.mubr.f32.gmra.mxu0 %v7315
        %v7514 = vpop.f32.mrf.mxu0
        %v7515 = vadd.f32 0.0, %v7514
        %v7516 = vpop.f32.mrf.mxu0
        %7517 = vmatprep.mubr.f32.mxu0 0.0
        %7518 = vmatmul.mubr.f32.gmra.mxu0 %v7318
        %v7519 = vpop.f32.mrf.mxu0
        %v7520 = vadd.f32 0.0, %v7519
        %v7521 = vpop.f32.mrf.mxu0
        %7522 = vmatprep.mubr.f32.mxu0 0.0
        %7523 = vmatmul.mubr.f32.gmra.mxu0 %v7321
        %v7524 = vpop.f32.mrf.mxu0
        %v7525 = vadd.f32 0.0, %v7524
        %v7526 = vpop.f32.mrf.mxu0
        %7527 = vmatprep.mubr.f32.mxu0 0.0
        %7528 = vmatmul.mubr.f32.gmra.mxu0 %v7324
        %v7529 = vpop.f32.mrf.mxu0
        %v7530 = vadd.f32 0.0, %v7529
        %v7531 = vpop.f32.mrf.mxu0
        %7532 = vmatprep.mubr.f32.mxu0 0.0
        %7533 = vmatmul.mubr.f32.gmra.mxu0 %v7327
        %v7534 = vpop.f32.mrf.mxu0
        %v7535 = vadd.f32 0.0, %v7534
        %v7536 = vpop.f32.mrf.mxu0
        %7537 = vmatprep.mubr.f32.mxu0 0.0
        %7538 = vmatmul.mubr.f32.gmra.mxu0 %v7330
        %v7539 = vpop.f32.mrf.mxu0
        %v7540 = vadd.f32 0.0, %v7539
        %v7541 = vpop.f32.mrf.mxu0
        %7542 = vmatprep.mubr.f32.mxu0 0.0
        %7543 = vmatmul.mubr.f32.gmra.mxu0 %v7333
        %v7544 = vpop.f32.mrf.mxu0
        %v7545 = vadd.f32 0.0, %v7544
        %v7546 = vpop.f32.mrf.mxu0
        %7547 = vmatprep.mubr.f32.mxu0 0.0
        %7548 = vmatmul.mubr.f32.gmra.mxu0 %v7336
        %v7549 = vpop.f32.mrf.mxu0
        %v7550 = vadd.f32 0.0, %v7549
        %v7551 = vpop.f32.mrf.mxu0
        %7552 = vmatprep.mubr.f32.mxu0 0.0
        %7553 = vmatmul.mubr.f32.gmra.mxu0 %v7339
        %v7554 = vpop.f32.mrf.mxu0
        %v7555 = vadd.f32 0.0, %v7554
        %v7556 = vpop.f32.mrf.mxu0
        %7557 = vmatprep.mubr.f32.mxu0 0.0
        %7558 = vmatmul.mubr.f32.gmra.mxu0 %v7342
        %v7559 = vpop.f32.mrf.mxu0
        %v7560 = vadd.f32 0.0, %v7559
        %v7561 = vpop.f32.mrf.mxu0
        %7562 = vmatprep.mubr.f32.mxu0 0.0
        %7563 = vmatmul.mubr.f32.gmra.mxu0 %v7345
        %v7564 = vpop.f32.mrf.mxu0
        %v7565 = vadd.f32 0.0, %v7564
        %v7566 = vpop.f32.mrf.mxu0
        %7567 = vmatprep.mubr.f32.mxu0 0.0
        %7568 = vmatmul.mubr.f32.gmra.mxu0 %v7348
        %v7569 = vpop.f32.mrf.mxu0
        %v7570 = vadd.f32 0.0, %v7569
        %v7571 = vpop.f32.mrf.mxu0
        %7572 = vmatprep.mubr.f32.mxu0 0.0
        %7573 = vmatmul.mubr.f32.gmra.mxu0 %v7351
        %v7574 = vpop.f32.mrf.mxu0
        %v7575 = vadd.f32 0.0, %v7574
        %v7576 = vpop.f32.mrf.mxu0
        %7577 = vdwg.mxu0
        %v7579 = vsel %vm7256, %v7189, 0
        %v7582 = vsel %vm7256, %v7190, 0
        %v7585 = vsel %vm7256, %v7191, 0
        %v7588 = vsel %vm7256, %v7192, 0
        %7590 = vmatprep.subr.mxu0 0.0
        %7591 = vmatpush1.msra.mxu0 0.0
        %7592 = vmatprep.subr.mxu0 0.0
        %7593 = vmatpush1.msra.mxu0 0.0
        %7594 = vmatprep.subr.mxu0 0.0
        %7595 = vmatpush1.msra.mxu0 0.0
        %7596 = vmatprep.subr.mxu0 0.0
        %7597 = vmatpush1.msra.mxu0 0.0
        %7598 = vmatprep.subr.mxu0 0.0
        %7599 = vmatpush1.msra.mxu0 0.0
        %7600 = vmatprep.subr.mxu0 0.0
        %7601 = vmatpush1.msra.mxu0 0.0
        %7602 = vmatprep.subr.mxu0 0.0
        %7603 = vmatpush1.msra.mxu0 0.0
        %7604 = vmatprep.subr.mxu0 0.0
        %7605 = vmatpush1.msra.mxu0 %v7245
        %7606 = vmatprep.subr.mxu0 0.0
        %7607 = vmatpush1.msra.mxu0 %v7244
        %7608 = vmatprep.subr.mxu0 0.0
        %7609 = vmatpush1.msra.mxu0 %v7243
        %7610 = vmatprep.subr.mxu0 0.0
        %7611 = vmatpush1.msra.mxu0 %v7242
        %7612 = vmatprep.subr.mxu0 0.0
        %7613 = vmatpush1.msra.mxu0 %v7241
        %7614 = vmatprep.subr.mxu0 0.0
        %7615 = vmatpush1.msra.mxu0 %v7240
        %7616 = vmatprep.subr.mxu0 0.0
        %7617 = vmatpush1.msra.mxu0 %v7239
        %7618 = vmatprep.subr.mxu0 0.0
        %7619 = vmatpush1.msra.mxu0 %v7238
        %7620 = vmatprep.subr.mxu0 0.0
        %7621 = vmatpush1.msra.mxu0 %v7237
        %7622 = vmatprep.subr.mxu0 0.0
        %7623 = vmatpush2.msra.mxu0 0.0
        %7624 = vmatprep.subr.mxu0 0.0
        %7625 = vmatpush2.msra.mxu0 0.0
        %7626 = vmatprep.subr.mxu0 0.0
        %7627 = vmatpush2.msra.mxu0 0.0
        %7628 = vmatprep.subr.mxu0 0.0
        %7629 = vmatpush2.msra.mxu0 0.0
        %7630 = vmatprep.subr.mxu0 0.0
        %7631 = vmatpush2.msra.mxu0 0.0
        %7632 = vmatprep.subr.mxu0 0.0
        %7633 = vmatpush2.msra.mxu0 0.0
        %7634 = vmatprep.subr.mxu0 0.0
        %7635 = vmatpush2.msra.mxu0 0.0
        %7636 = vmatprep.subr.mxu0 0.0
        %7637 = vmatpush2.msra.mxu0 0.0
        %7638 = vmatprep.subr.mxu0 0.0
        %7639 = vmatpush2.msra.mxu0 0.0
        %7640 = vmatprep.subr.mxu0 0.0
        %7641 = vmatpush2.msra.mxu0 0.0
        %7642 = vmatprep.subr.mxu0 0.0
        %7643 = vmatpush2.msra.mxu0 0.0
        %7644 = vmatprep.subr.mxu0 0.0
        %7645 = vmatpush2.msra.mxu0 0.0
        %7646 = vmatprep.subr.mxu0 0.0
        %7647 = vmatpush2.msra.mxu0 0.0
        %7648 = vmatprep.subr.mxu0 0.0
        %7649 = vmatpush2.msra.mxu0 0.0
        %7650 = vmatprep.subr.mxu0 0.0
        %7651 = vmatpush2.msra.mxu0 0.0
        %7652 = vmatprep.subr.mxu0 0.0
        %7653 = vmatpush2.msra.mxu0 0.0
        %7654 = vmatprep.mubr.f32.mxu0 0.0
        %7655 = vmatmul.mubr.f32.gmra.mxu0 %v7579
        %v7656 = vpop.f32.mrf.mxu0
        %v7657 = vadd.f32 %v7420, %v7656
        %v7658 = vpop.f32.mrf.mxu0
        %7659 = vmatprep.mubr.f32.mxu0 0.0
        %7660 = vmatmul.mubr.f32.gmra.mxu0 %v7582
        %v7661 = vpop.f32.mrf.mxu0
        %v7662 = vadd.f32 %v7425, %v7661
        %v7663 = vpop.f32.mrf.mxu0
        %7664 = vmatprep.mubr.f32.mxu0 0.0
        %7665 = vmatmul.mubr.f32.gmra.mxu0 %v7585
        %v7666 = vpop.f32.mrf.mxu0
        %v7667 = vadd.f32 %v7430, %v7666
        %v7668 = vpop.f32.mrf.mxu0
        %7669 = vmatprep.mubr.f32.mxu0 0.0
        %7670 = vmatmul.mubr.f32.gmra.mxu0 %v7588
        %v7671 = vpop.f32.mrf.mxu0
        %v7672 = vadd.f32 %v7435, %v7671
        %v7673 = vpop.f32.mrf.mxu0
        %7674 = vmatprep.mubr.f32.mxu0 0.0
        %7675 = vmatmul.mubr.f32.gmra.mxu0 %v7258
        %v7676 = vpop.f32.mrf.mxu0
        %v7677 = vadd.f32 %v7440, %v7676
        %v7678 = vpop.f32.mrf.mxu0
        %7679 = vmatprep.mubr.f32.mxu0 0.0
        %7680 = vmatmul.mubr.f32.gmra.mxu0 %v7261
        %v7681 = vpop.f32.mrf.mxu0
        %v7682 = vadd.f32 %v7445, %v7681
        %v7683 = vpop.f32.mrf.mxu0
        %7684 = vmatprep.mubr.f32.mxu0 0.0
        %7685 = vmatmul.mubr.f32.gmra.mxu0 %v7264
        %v7686 = vpop.f32.mrf.mxu0
        %v7687 = vadd.f32 %v7450, %v7686
        %v7688 = vpop.f32.mrf.mxu0
        %7689 = vmatprep.mubr.f32.mxu0 0.0
        %7690 = vmatmul.mubr.f32.gmra.mxu0 %v7267
        %v7691 = vpop.f32.mrf.mxu0
        %v7692 = vadd.f32 %v7455, %v7691
        %v7693 = vpop.f32.mrf.mxu0
        %7694 = vmatprep.mubr.f32.mxu0 0.0
        %7695 = vmatmul.mubr.f32.gmra.mxu0 %v7270
        %v7696 = vpop.f32.mrf.mxu0
        %v7697 = vadd.f32 %v7460, %v7696
        %v7698 = vpop.f32.mrf.mxu0
        %7699 = vmatprep.mubr.f32.mxu0 0.0
        %7700 = vmatmul.mubr.f32.gmra.mxu0 %v7273
        %v7701 = vpop.f32.mrf.mxu0
        %v7702 = vadd.f32 %v7465, %v7701
        %v7703 = vpop.f32.mrf.mxu0
        %7704 = vmatprep.mubr.f32.mxu0 0.0
        %7705 = vmatmul.mubr.f32.gmra.mxu0 %v7276
        %v7706 = vpop.f32.mrf.mxu0
        %v7707 = vadd.f32 %v7470, %v7706
        %v7708 = vpop.f32.mrf.mxu0
        %7709 = vmatprep.mubr.f32.mxu0 0.0
        %7710 = vmatmul.mubr.f32.gmra.mxu0 %v7279
        %v7711 = vpop.f32.mrf.mxu0
        %v7712 = vadd.f32 %v7475, %v7711
        %v7713 = vpop.f32.mrf.mxu0
        %7714 = vmatprep.mubr.f32.mxu0 0.0
        %7715 = vmatmul.mubr.f32.gmra.mxu0 %v7282
        %v7716 = vpop.f32.mrf.mxu0
        %v7717 = vadd.f32 %v7480, %v7716
        %v7718 = vpop.f32.mrf.mxu0
        %7719 = vmatprep.mubr.f32.mxu0 0.0
        %7720 = vmatmul.mubr.f32.gmra.mxu0 %v7285
        %v7721 = vpop.f32.mrf.mxu0
        %v7722 = vadd.f32 %v7485, %v7721
        %v7723 = vpop.f32.mrf.mxu0
        %7724 = vmatprep.mubr.f32.mxu0 0.0
        %7725 = vmatmul.mubr.f32.gmra.mxu0 %v7288
        %v7726 = vpop.f32.mrf.mxu0
        %v7727 = vadd.f32 %v7490, %v7726
        %v7728 = vpop.f32.mrf.mxu0
        %7729 = vmatprep.mubr.f32.mxu0 0.0
        %7730 = vmatmul.mubr.f32.gmra.mxu0 %v7291
        %v7731 = vpop.f32.mrf.mxu0
        %v7732 = vadd.f32 %v7495, %v7731
        %v7733 = vpop.f32.mrf.mxu0
        %7734 = vmatprep.mubr.f32.mxu0 0.0
        %7735 = vmatmul.mubr.f32.gmra.mxu0 %v7294
        %v7736 = vpop.f32.mrf.mxu0
        %v7737 = vadd.f32 %v7500, %v7736
        %v7738 = vpop.f32.mrf.mxu0
        %7739 = vmatprep.mubr.f32.mxu0 0.0
        %7740 = vmatmul.mubr.f32.gmra.mxu0 %v7297
        %v7741 = vpop.f32.mrf.mxu0
        %v7742 = vadd.f32 %v7505, %v7741
        %v7743 = vpop.f32.mrf.mxu0
        %7744 = vmatprep.mubr.f32.mxu0 0.0
        %7745 = vmatmul.mubr.f32.gmra.mxu0 %v7300
        %v7746 = vpop.f32.mrf.mxu0
        %v7747 = vadd.f32 %v7510, %v7746
        %v7748 = vpop.f32.mrf.mxu0
        %7749 = vmatprep.mubr.f32.mxu0 0.0
        %7750 = vmatmul.mubr.f32.gmra.mxu0 %v7303
        %v7751 = vpop.f32.mrf.mxu0
        %v7752 = vadd.f32 %v7515, %v7751
        %v7753 = vpop.f32.mrf.mxu0
        %7754 = vmatprep.mubr.f32.mxu0 0.0
        %7755 = vmatmul.mubr.f32.gmra.mxu0 %v7306
        %v7756 = vpop.f32.mrf.mxu0
        %v7757 = vadd.f32 %v7520, %v7756
        %v7758 = vpop.f32.mrf.mxu0
        %7759 = vmatprep.mubr.f32.mxu0 0.0
        %7760 = vmatmul.mubr.f32.gmra.mxu0 %v7309
        %v7761 = vpop.f32.mrf.mxu0
        %v7762 = vadd.f32 %v7525, %v7761
        %v7763 = vpop.f32.mrf.mxu0
        %7764 = vmatprep.mubr.f32.mxu0 0.0
        %7765 = vmatmul.mubr.f32.gmra.mxu0 %v7312
        %v7766 = vpop.f32.mrf.mxu0
        %v7767 = vadd.f32 %v7530, %v7766
        %v7768 = vpop.f32.mrf.mxu0
        %7769 = vmatprep.mubr.f32.mxu0 0.0
        %7770 = vmatmul.mubr.f32.gmra.mxu0 %v7315
        %v7771 = vpop.f32.mrf.mxu0
        %v7772 = vadd.f32 %v7535, %v7771
        %v7773 = vpop.f32.mrf.mxu0
        %7774 = vmatprep.mubr.f32.mxu0 0.0
        %7775 = vmatmul.mubr.f32.gmra.mxu0 %v7318
        %v7776 = vpop.f32.mrf.mxu0
        %v7777 = vadd.f32 %v7540, %v7776
        %v7778 = vpop.f32.mrf.mxu0
        %7779 = vmatprep.mubr.f32.mxu0 0.0
        %7780 = vmatmul.mubr.f32.gmra.mxu0 %v7321
        %v7781 = vpop.f32.mrf.mxu0
        %v7782 = vadd.f32 %v7545, %v7781
        %v7783 = vpop.f32.mrf.mxu0
        %7784 = vmatprep.mubr.f32.mxu0 0.0
        %7785 = vmatmul.mubr.f32.gmra.mxu0 %v7324
        %v7786 = vpop.f32.mrf.mxu0
        %v7787 = vadd.f32 %v7550, %v7786
        %v7788 = vpop.f32.mrf.mxu0
        %7789 = vmatprep.mubr.f32.mxu0 0.0
        %7790 = vmatmul.mubr.f32.gmra.mxu0 %v7327
        %v7791 = vpop.f32.mrf.mxu0
        %v7792 = vadd.f32 %v7555, %v7791
        %v7793 = vpop.f32.mrf.mxu0
        %7794 = vmatprep.mubr.f32.mxu0 0.0
        %7795 = vmatmul.mubr.f32.gmra.mxu0 %v7330
        %v7796 = vpop.f32.mrf.mxu0
        %v7797 = vadd.f32 %v7560, %v7796
        %v7798 = vpop.f32.mrf.mxu0
        %7799 = vmatprep.mubr.f32.mxu0 0.0
        %7800 = vmatmul.mubr.f32.gmra.mxu0 %v7333
        %v7801 = vpop.f32.mrf.mxu0
        %v7802 = vadd.f32 %v7565, %v7801
        %v7803 = vpop.f32.mrf.mxu0
        %7804 = vmatprep.mubr.f32.mxu0 0.0
        %7805 = vmatmul.mubr.f32.gmra.mxu0 %v7336
        %v7806 = vpop.f32.mrf.mxu0
        %v7807 = vadd.f32 %v7570, %v7806
        %v7808 = vpop.f32.mrf.mxu0
        %7809 = vmatprep.mubr.f32.mxu0 0.0
        %7810 = vmatmul.mubr.f32.gmra.mxu0 %v7339
        %v7811 = vpop.f32.mrf.mxu0
        %v7812 = vadd.f32 %v7575, %v7811
        %v7813 = vpop.f32.mrf.mxu0
        %7814 = vdwg.mxu0
        %s7815 = scalar_lea.vmem %s3, 144
        %v7816 = vld [vmem:[%s7815] sm:$0xff]
        %v7817 = vld [vmem:[%s7815 + $0x8] sm:$0xff]
        %v7818 = vld [vmem:[%s7815 + $0x10] sm:$0xff]
        %v7819 = vld [vmem:[%s7815 + $0x18] sm:$0xff]
        %v7820 = vld [vmem:[%s7815 + $0x20] sm:$0xff]
        %v7821 = vld [vmem:[%s7815 + $0x28] sm:$0xff]
        %v7822 = vld [vmem:[%s7815 + $0x30] sm:$0xff]
        %v7823 = vld [vmem:[%s7815 + $0x38] sm:$0xff]
        %v7824 = vld [vmem:[%s7815 + $0x40] sm:$0xff]
        %v7826 = vsel %vm7256, %v7225, 0
        %v7829 = vsel %vm7256, %v7226, 0
        %v7832 = vsel %vm7256, %v7227, 0
        %v7835 = vsel %vm7256, %v7228, 0
        %7837 = vmatprep.subr.mxu0 0.0
        %7838 = vmatpush1.msra.mxu0 0.0
        %7839 = vmatprep.subr.mxu0 0.0
        %7840 = vmatpush1.msra.mxu0 0.0
        %7841 = vmatprep.subr.mxu0 0.0
        %7842 = vmatpush1.msra.mxu0 0.0
        %7843 = vmatprep.subr.mxu0 0.0
        %7844 = vmatpush1.msra.mxu0 0.0
        %7845 = vmatprep.subr.mxu0 0.0
        %7846 = vmatpush1.msra.mxu0 0.0
        %7847 = vmatprep.subr.mxu0 0.0
        %7848 = vmatpush1.msra.mxu0 0.0
        %7849 = vmatprep.subr.mxu0 0.0
        %7850 = vmatpush1.msra.mxu0 0.0
        %7851 = vmatprep.subr.mxu0 0.0
        %7852 = vmatpush1.msra.mxu0 %v7824
        %7853 = vmatprep.subr.mxu0 0.0
        %7854 = vmatpush1.msra.mxu0 %v7823
        %7855 = vmatprep.subr.mxu0 0.0
        %7856 = vmatpush1.msra.mxu0 %v7822
        %7857 = vmatprep.subr.mxu0 0.0
        %7858 = vmatpush1.msra.mxu0 %v7821
        %7859 = vmatprep.subr.mxu0 0.0
        %7860 = vmatpush1.msra.mxu0 %v7820
        %7861 = vmatprep.subr.mxu0 0.0
        %7862 = vmatpush1.msra.mxu0 %v7819
        %7863 = vmatprep.subr.mxu0 0.0
        %7864 = vmatpush1.msra.mxu0 %v7818
        %7865 = vmatprep.subr.mxu0 0.0
        %7866 = vmatpush1.msra.mxu0 %v7817
        %7867 = vmatprep.subr.mxu0 0.0
        %7868 = vmatpush1.msra.mxu0 %v7816
        %7869 = vmatprep.subr.mxu0 0.0
        %7870 = vmatpush2.msra.mxu0 0.0
        %7871 = vmatprep.subr.mxu0 0.0
        %7872 = vmatpush2.msra.mxu0 0.0
        %7873 = vmatprep.subr.mxu0 0.0
        %7874 = vmatpush2.msra.mxu0 0.0
        %7875 = vmatprep.subr.mxu0 0.0
        %7876 = vmatpush2.msra.mxu0 0.0
        %7877 = vmatprep.subr.mxu0 0.0
        %7878 = vmatpush2.msra.mxu0 0.0
        %7879 = vmatprep.subr.mxu0 0.0
        %7880 = vmatpush2.msra.mxu0 0.0
        %7881 = vmatprep.subr.mxu0 0.0
        %7882 = vmatpush2.msra.mxu0 0.0
        %7883 = vmatprep.subr.mxu0 0.0
        %7884 = vmatpush2.msra.mxu0 0.0
        %7885 = vmatprep.subr.mxu0 0.0
        %7886 = vmatpush2.msra.mxu0 0.0
        %7887 = vmatprep.subr.mxu0 0.0
        %7888 = vmatpush2.msra.mxu0 0.0
        %7889 = vmatprep.subr.mxu0 0.0
        %7890 = vmatpush2.msra.mxu0 0.0
        %7891 = vmatprep.subr.mxu0 0.0
        %7892 = vmatpush2.msra.mxu0 0.0
        %7893 = vmatprep.subr.mxu0 0.0
        %7894 = vmatpush2.msra.mxu0 0.0
        %7895 = vmatprep.subr.mxu0 0.0
        %7896 = vmatpush2.msra.mxu0 0.0
        %7897 = vmatprep.subr.mxu0 0.0
        %7898 = vmatpush2.msra.mxu0 0.0
        %7899 = vmatprep.subr.mxu0 0.0
        %7900 = vmatpush2.msra.mxu0 0.0
        %7901 = vmatprep.mubr.f32.mxu0 0.0
        %7902 = vmatmul.mubr.f32.gmra.mxu0 %v7270
        %v7903 = vpop.f32.mrf.mxu0
        %v7904 = vadd.f32 0.0, %v7903
        %v7905 = vpop.f32.mrf.mxu0
        %7906 = vmatprep.mubr.f32.mxu0 0.0
        %7907 = vmatmul.mubr.f32.gmra.mxu0 %v7273
        %v7908 = vpop.f32.mrf.mxu0
        %v7909 = vadd.f32 0.0, %v7908
        %v7910 = vpop.f32.mrf.mxu0
        %7911 = vmatprep.mubr.f32.mxu0 0.0
        %7912 = vmatmul.mubr.f32.gmra.mxu0 %v7276
        %v7913 = vpop.f32.mrf.mxu0
        %v7914 = vadd.f32 0.0, %v7913
        %v7915 = vpop.f32.mrf.mxu0
        %7916 = vmatprep.mubr.f32.mxu0 0.0
        %7917 = vmatmul.mubr.f32.gmra.mxu0 %v7279
        %v7918 = vpop.f32.mrf.mxu0
        %v7919 = vadd.f32 0.0, %v7918
        %v7920 = vpop.f32.mrf.mxu0
        %7921 = vmatprep.mubr.f32.mxu0 0.0
        %7922 = vmatmul.mubr.f32.gmra.mxu0 %v7282
        %v7923 = vpop.f32.mrf.mxu0
        %v7924 = vadd.f32 0.0, %v7923
        %v7925 = vpop.f32.mrf.mxu0
        %7926 = vmatprep.mubr.f32.mxu0 0.0
        %7927 = vmatmul.mubr.f32.gmra.mxu0 %v7285
        %v7928 = vpop.f32.mrf.mxu0
        %v7929 = vadd.f32 0.0, %v7928
        %v7930 = vpop.f32.mrf.mxu0
        %7931 = vmatprep.mubr.f32.mxu0 0.0
        %7932 = vmatmul.mubr.f32.gmra.mxu0 %v7288
        %v7933 = vpop.f32.mrf.mxu0
        %v7934 = vadd.f32 0.0, %v7933
        %v7935 = vpop.f32.mrf.mxu0
        %7936 = vmatprep.mubr.f32.mxu0 0.0
        %7937 = vmatmul.mubr.f32.gmra.mxu0 %v7291
        %v7938 = vpop.f32.mrf.mxu0
        %v7939 = vadd.f32 0.0, %v7938
        %v7940 = vpop.f32.mrf.mxu0
        %7941 = vmatprep.mubr.f32.mxu0 0.0
        %7942 = vmatmul.mubr.f32.gmra.mxu0 %v7294
        %v7943 = vpop.f32.mrf.mxu0
        %v7944 = vadd.f32 0.0, %v7943
        %v7945 = vpop.f32.mrf.mxu0
        %7946 = vmatprep.mubr.f32.mxu0 0.0
        %7947 = vmatmul.mubr.f32.gmra.mxu0 %v7297
        %v7948 = vpop.f32.mrf.mxu0
        %v7949 = vadd.f32 0.0, %v7948
        %v7950 = vpop.f32.mrf.mxu0
        %7951 = vmatprep.mubr.f32.mxu0 0.0
        %7952 = vmatmul.mubr.f32.gmra.mxu0 %v7300
        %v7953 = vpop.f32.mrf.mxu0
        %v7954 = vadd.f32 0.0, %v7953
        %v7955 = vpop.f32.mrf.mxu0
        %7956 = vmatprep.mubr.f32.mxu0 0.0
        %7957 = vmatmul.mubr.f32.gmra.mxu0 %v7303
        %v7958 = vpop.f32.mrf.mxu0
        %v7959 = vadd.f32 0.0, %v7958
        %v7960 = vpop.f32.mrf.mxu0
        %7961 = vmatprep.mubr.f32.mxu0 0.0
        %7962 = vmatmul.mubr.f32.gmra.mxu0 %v7306
        %v7963 = vpop.f32.mrf.mxu0
        %v7964 = vadd.f32 0.0, %v7963
        %v7965 = vpop.f32.mrf.mxu0
        %7966 = vmatprep.mubr.f32.mxu0 0.0
        %7967 = vmatmul.mubr.f32.gmra.mxu0 %v7309
        %v7968 = vpop.f32.mrf.mxu0
        %v7969 = vadd.f32 0.0, %v7968
        %v7970 = vpop.f32.mrf.mxu0
        %7971 = vmatprep.mubr.f32.mxu0 0.0
        %7972 = vmatmul.mubr.f32.gmra.mxu0 %v7312
        %v7973 = vpop.f32.mrf.mxu0
        %v7974 = vadd.f32 0.0, %v7973
        %v7975 = vpop.f32.mrf.mxu0
        %7976 = vmatprep.mubr.f32.mxu0 0.0
        %7977 = vmatmul.mubr.f32.gmra.mxu0 %v7315
        %v7978 = vpop.f32.mrf.mxu0
        %v7979 = vadd.f32 0.0, %v7978
        %v7980 = vpop.f32.mrf.mxu0
        %7981 = vmatprep.mubr.f32.mxu0 0.0
        %7982 = vmatmul.mubr.f32.gmra.mxu0 %v7318
        %v7983 = vpop.f32.mrf.mxu0
        %v7984 = vadd.f32 0.0, %v7983
        %v7985 = vpop.f32.mrf.mxu0
        %7986 = vmatprep.mubr.f32.mxu0 0.0
        %7987 = vmatmul.mubr.f32.gmra.mxu0 %v7321
        %v7988 = vpop.f32.mrf.mxu0
        %v7989 = vadd.f32 0.0, %v7988
        %v7990 = vpop.f32.mrf.mxu0
        %7991 = vmatprep.mubr.f32.mxu0 0.0
        %7992 = vmatmul.mubr.f32.gmra.mxu0 %v7324
        %v7993 = vpop.f32.mrf.mxu0
        %v7994 = vadd.f32 0.0, %v7993
        %v7995 = vpop.f32.mrf.mxu0
        %7996 = vmatprep.mubr.f32.mxu0 0.0
        %7997 = vmatmul.mubr.f32.gmra.mxu0 %v7327
        %v7998 = vpop.f32.mrf.mxu0
        %v7999 = vadd.f32 0.0, %v7998
        %v8000 = vpop.f32.mrf.mxu0
        %8001 = vmatprep.mubr.f32.mxu0 0.0
        %8002 = vmatmul.mubr.f32.gmra.mxu0 %v7330
        %v8003 = vpop.f32.mrf.mxu0
        %v8004 = vadd.f32 0.0, %v8003
        %v8005 = vpop.f32.mrf.mxu0
        %8006 = vmatprep.mubr.f32.mxu0 0.0
        %8007 = vmatmul.mubr.f32.gmra.mxu0 %v7333
        %v8008 = vpop.f32.mrf.mxu0
        %v8009 = vadd.f32 0.0, %v8008
        %v8010 = vpop.f32.mrf.mxu0
        %8011 = vmatprep.mubr.f32.mxu0 0.0
        %8012 = vmatmul.mubr.f32.gmra.mxu0 %v7336
        %v8013 = vpop.f32.mrf.mxu0
        %v8014 = vadd.f32 0.0, %v8013
        %v8015 = vpop.f32.mrf.mxu0
        %8016 = vmatprep.mubr.f32.mxu0 0.0
        %8017 = vmatmul.mubr.f32.gmra.mxu0 %v7339
        %v8018 = vpop.f32.mrf.mxu0
        %v8019 = vadd.f32 0.0, %v8018
        %v8020 = vpop.f32.mrf.mxu0
        %8021 = vmatprep.mubr.f32.mxu0 0.0
        %8022 = vmatmul.mubr.f32.gmra.mxu0 %v7342
        %v8023 = vpop.f32.mrf.mxu0
        %v8024 = vadd.f32 0.0, %v8023
        %v8025 = vpop.f32.mrf.mxu0
        %8026 = vmatprep.mubr.f32.mxu0 0.0
        %8027 = vmatmul.mubr.f32.gmra.mxu0 %v7345
        %v8028 = vpop.f32.mrf.mxu0
        %v8029 = vadd.f32 0.0, %v8028
        %v8030 = vpop.f32.mrf.mxu0
        %8031 = vmatprep.mubr.f32.mxu0 0.0
        %8032 = vmatmul.mubr.f32.gmra.mxu0 %v7348
        %v8033 = vpop.f32.mrf.mxu0
        %v8034 = vadd.f32 0.0, %v8033
        %v8035 = vpop.f32.mrf.mxu0
        %8036 = vmatprep.mubr.f32.mxu0 0.0
        %8037 = vmatmul.mubr.f32.gmra.mxu0 %v7351
        %v8038 = vpop.f32.mrf.mxu0
        %v8039 = vadd.f32 0.0, %v8038
        %v8040 = vpop.f32.mrf.mxu0
        %8041 = vmatprep.mubr.f32.mxu0 0.0
        %8042 = vmatmul.mubr.f32.gmra.mxu0 %v7826
        %v8043 = vpop.f32.mrf.mxu0
        %v8044 = vadd.f32 0.0, %v8043
        %v8045 = vpop.f32.mrf.mxu0
        %8046 = vmatprep.mubr.f32.mxu0 0.0
        %8047 = vmatmul.mubr.f32.gmra.mxu0 %v7829
        %v8048 = vpop.f32.mrf.mxu0
        %v8049 = vadd.f32 0.0, %v8048
        %v8050 = vpop.f32.mrf.mxu0
        %8051 = vmatprep.mubr.f32.mxu0 0.0
        %8052 = vmatmul.mubr.f32.gmra.mxu0 %v7832
        %v8053 = vpop.f32.mrf.mxu0
        %v8054 = vadd.f32 0.0, %v8053
        %v8055 = vpop.f32.mrf.mxu0
        %8056 = vmatprep.mubr.f32.mxu0 0.0
        %8057 = vmatmul.mubr.f32.gmra.mxu0 %v7835
        %v8058 = vpop.f32.mrf.mxu0
        %v8059 = vadd.f32 0.0, %v8058
        %v8060 = vpop.f32.mrf.mxu0
        %8061 = vdwg.mxu0
        %v8062 = vadd.f32 %v7657, %v7904
        %v8063 = vadd.f32 %v7662, %v7909
        %v8064 = vadd.f32 %v7667, %v7914
        %v8065 = vadd.f32 %v7672, %v7919
        %v8066 = vadd.f32 %v7677, %v7924
        %v8067 = vadd.f32 %v7682, %v7929
        %v8068 = vadd.f32 %v7687, %v7934
        %v8069 = vadd.f32 %v7692, %v7939
        %v8070 = vadd.f32 %v7697, %v7944
        %v8071 = vadd.f32 %v7702, %v7949
        %v8072 = vadd.f32 %v7707, %v7954
        %v8073 = vadd.f32 %v7712, %v7959
        %v8074 = vadd.f32 %v7717, %v7964
        %v8075 = vadd.f32 %v7722, %v7969
        %v8076 = vadd.f32 %v7727, %v7974
        %v8077 = vadd.f32 %v7732, %v7979
        %v8078 = vadd.f32 %v7737, %v7984
        %v8079 = vadd.f32 %v7742, %v7989
        %v8080 = vadd.f32 %v7747, %v7994
        %v8081 = vadd.f32 %v7752, %v7999
        %v8082 = vadd.f32 %v7757, %v8004
        %v8083 = vadd.f32 %v7762, %v8009
        %v8084 = vadd.f32 %v7767, %v8014
        %v8085 = vadd.f32 %v7772, %v8019
        %v8086 = vadd.f32 %v7777, %v8024
        %v8087 = vadd.f32 %v7782, %v8029
        %v8088 = vadd.f32 %v7787, %v8034
        %v8089 = vadd.f32 %v7792, %v8039
        %v8090 = vadd.f32 %v7797, %v8044
        %v8091 = vadd.f32 %v7802, %v8049
        %v8092 = vadd.f32 %v7807, %v8054
        %v8093 = vadd.f32 %v7812, %v8059
        %s8094 = scalar_lea.vmem %s3, 216
        %v8095 = vld [vmem:[%s8094] sm:$0xff]
        %v8096 = vld [vmem:[%s8094 + $0x8] sm:$0xff]
        %v8097 = vld [vmem:[%s8094 + $0x10] sm:$0xff]
        %v8098 = vld [vmem:[%s8094 + $0x18] sm:$0xff]
        %v8099 = vld [vmem:[%s8094 + $0x20] sm:$0xff]
        %v8100 = vld [vmem:[%s8094 + $0x28] sm:$0xff]
        %v8101 = vld [vmem:[%s8094 + $0x30] sm:$0xff]
        %v8102 = vld [vmem:[%s8094 + $0x38] sm:$0xff]
        %v8103 = vld [vmem:[%s8094 + $0x40] sm:$0xff]
        %v8105 = vsel %vm7256, %v7229, 0
        %v8108 = vsel %vm7256, %v7230, 0
        %v8111 = vsel %vm7256, %v7231, 0
        %v8114 = vsel %vm7256, %v7232, 0
        %8116 = vmatprep.subr.mxu0 0.0
        %8117 = vmatpush1.msra.mxu0 0.0
        %8118 = vmatprep.subr.mxu0 0.0
        %8119 = vmatpush1.msra.mxu0 0.0
        %8120 = vmatprep.subr.mxu0 0.0
        %8121 = vmatpush1.msra.mxu0 0.0
        %8122 = vmatprep.subr.mxu0 0.0
        %8123 = vmatpush1.msra.mxu0 0.0
        %8124 = vmatprep.subr.mxu0 0.0
        %8125 = vmatpush1.msra.mxu0 0.0
        %8126 = vmatprep.subr.mxu0 0.0
        %8127 = vmatpush1.msra.mxu0 0.0
        %8128 = vmatprep.subr.mxu0 0.0
        %8129 = vmatpush1.msra.mxu0 0.0
        %8130 = vmatprep.subr.mxu0 0.0
        %8131 = vmatpush1.msra.mxu0 %v8103
        %8132 = vmatprep.subr.mxu0 0.0
        %8133 = vmatpush1.msra.mxu0 %v8102
        %8134 = vmatprep.subr.mxu0 0.0
        %8135 = vmatpush1.msra.mxu0 %v8101
        %8136 = vmatprep.subr.mxu0 0.0
        %8137 = vmatpush1.msra.mxu0 %v8100
        %8138 = vmatprep.subr.mxu0 0.0
        %8139 = vmatpush1.msra.mxu0 %v8099
        %8140 = vmatprep.subr.mxu0 0.0
        %8141 = vmatpush1.msra.mxu0 %v8098
        %8142 = vmatprep.subr.mxu0 0.0
        %8143 = vmatpush1.msra.mxu0 %v8097
        %8144 = vmatprep.subr.mxu0 0.0
        %8145 = vmatpush1.msra.mxu0 %v8096
        %8146 = vmatprep.subr.mxu0 0.0
        %8147 = vmatpush1.msra.mxu0 %v8095
        %8148 = vmatprep.subr.mxu0 0.0
        %8149 = vmatpush2.msra.mxu0 0.0
        %8150 = vmatprep.subr.mxu0 0.0
        %8151 = vmatpush2.msra.mxu0 0.0
        %8152 = vmatprep.subr.mxu0 0.0
        %8153 = vmatpush2.msra.mxu0 0.0
        %8154 = vmatprep.subr.mxu0 0.0
        %8155 = vmatpush2.msra.mxu0 0.0
        %8156 = vmatprep.subr.mxu0 0.0
        %8157 = vmatpush2.msra.mxu0 0.0
        %8158 = vmatprep.subr.mxu0 0.0
        %8159 = vmatpush2.msra.mxu0 0.0
        %8160 = vmatprep.subr.mxu0 0.0
        %8161 = vmatpush2.msra.mxu0 0.0
        %8162 = vmatprep.subr.mxu0 0.0
        %8163 = vmatpush2.msra.mxu0 0.0
        %8164 = vmatprep.subr.mxu0 0.0
        %8165 = vmatpush2.msra.mxu0 0.0
        %8166 = vmatprep.subr.mxu0 0.0
        %8167 = vmatpush2.msra.mxu0 0.0
        %8168 = vmatprep.subr.mxu0 0.0
        %8169 = vmatpush2.msra.mxu0 0.0
        %8170 = vmatprep.subr.mxu0 0.0
        %8171 = vmatpush2.msra.mxu0 0.0
        %8172 = vmatprep.subr.mxu0 0.0
        %8173 = vmatpush2.msra.mxu0 0.0
        %8174 = vmatprep.subr.mxu0 0.0
        %8175 = vmatpush2.msra.mxu0 0.0
        %8176 = vmatprep.subr.mxu0 0.0
        %8177 = vmatpush2.msra.mxu0 0.0
        %8178 = vmatprep.subr.mxu0 0.0
        %8179 = vmatpush2.msra.mxu0 0.0
        %8180 = vmatprep.mubr.f32.mxu0 0.0
        %8181 = vmatmul.mubr.f32.gmra.mxu0 %v7282
        %v8182 = vpop.f32.mrf.mxu0
        %v8183 = vadd.f32 0.0, %v8182
        %v8184 = vpop.f32.mrf.mxu0
        %8185 = vmatprep.mubr.f32.mxu0 0.0
        %8186 = vmatmul.mubr.f32.gmra.mxu0 %v7285
        %v8187 = vpop.f32.mrf.mxu0
        %v8188 = vadd.f32 0.0, %v8187
        %v8189 = vpop.f32.mrf.mxu0
        %8190 = vmatprep.mubr.f32.mxu0 0.0
        %8191 = vmatmul.mubr.f32.gmra.mxu0 %v7288
        %v8192 = vpop.f32.mrf.mxu0
        %v8193 = vadd.f32 0.0, %v8192
        %v8194 = vpop.f32.mrf.mxu0
        %8195 = vmatprep.mubr.f32.mxu0 0.0
        %8196 = vmatmul.mubr.f32.gmra.mxu0 %v7291
        %v8197 = vpop.f32.mrf.mxu0
        %v8198 = vadd.f32 0.0, %v8197
        %v8199 = vpop.f32.mrf.mxu0
        %8200 = vmatprep.mubr.f32.mxu0 0.0
        %8201 = vmatmul.mubr.f32.gmra.mxu0 %v7294
        %v8202 = vpop.f32.mrf.mxu0
        %v8203 = vadd.f32 0.0, %v8202
        %v8204 = vpop.f32.mrf.mxu0
        %8205 = vmatprep.mubr.f32.mxu0 0.0
        %8206 = vmatmul.mubr.f32.gmra.mxu0 %v7297
        %v8207 = vpop.f32.mrf.mxu0
        %v8208 = vadd.f32 0.0, %v8207
        %v8209 = vpop.f32.mrf.mxu0
        %8210 = vmatprep.mubr.f32.mxu0 0.0
        %8211 = vmatmul.mubr.f32.gmra.mxu0 %v7300
        %v8212 = vpop.f32.mrf.mxu0
        %v8213 = vadd.f32 0.0, %v8212
        %v8214 = vpop.f32.mrf.mxu0
        %8215 = vmatprep.mubr.f32.mxu0 0.0
        %8216 = vmatmul.mubr.f32.gmra.mxu0 %v7303
        %v8217 = vpop.f32.mrf.mxu0
        %v8218 = vadd.f32 0.0, %v8217
        %v8219 = vpop.f32.mrf.mxu0
        %8220 = vmatprep.mubr.f32.mxu0 0.0
        %8221 = vmatmul.mubr.f32.gmra.mxu0 %v7306
        %v8222 = vpop.f32.mrf.mxu0
        %v8223 = vadd.f32 0.0, %v8222
        %v8224 = vpop.f32.mrf.mxu0
        %8225 = vmatprep.mubr.f32.mxu0 0.0
        %8226 = vmatmul.mubr.f32.gmra.mxu0 %v7309
        %v8227 = vpop.f32.mrf.mxu0
        %v8228 = vadd.f32 0.0, %v8227
        %v8229 = vpop.f32.mrf.mxu0
        %8230 = vmatprep.mubr.f32.mxu0 0.0
        %8231 = vmatmul.mubr.f32.gmra.mxu0 %v7312
        %v8232 = vpop.f32.mrf.mxu0
        %v8233 = vadd.f32 0.0, %v8232
        %v8234 = vpop.f32.mrf.mxu0
        %8235 = vmatprep.mubr.f32.mxu0 0.0
        %8236 = vmatmul.mubr.f32.gmra.mxu0 %v7315
        %v8237 = vpop.f32.mrf.mxu0
        %v8238 = vadd.f32 0.0, %v8237
        %v8239 = vpop.f32.mrf.mxu0
        %8240 = vmatprep.mubr.f32.mxu0 0.0
        %8241 = vmatmul.mubr.f32.gmra.mxu0 %v7318
        %v8242 = vpop.f32.mrf.mxu0
        %v8243 = vadd.f32 0.0, %v8242
        %v8244 = vpop.f32.mrf.mxu0
        %8245 = vmatprep.mubr.f32.mxu0 0.0
        %8246 = vmatmul.mubr.f32.gmra.mxu0 %v7321
        %v8247 = vpop.f32.mrf.mxu0
        %v8248 = vadd.f32 0.0, %v8247
        %v8249 = vpop.f32.mrf.mxu0
        %8250 = vmatprep.mubr.f32.mxu0 0.0
        %8251 = vmatmul.mubr.f32.gmra.mxu0 %v7324
        %v8252 = vpop.f32.mrf.mxu0
        %v8253 = vadd.f32 0.0, %v8252
        %v8254 = vpop.f32.mrf.mxu0
        %8255 = vmatprep.mubr.f32.mxu0 0.0
        %8256 = vmatmul.mubr.f32.gmra.mxu0 %v7327
        %v8257 = vpop.f32.mrf.mxu0
        %v8258 = vadd.f32 0.0, %v8257
        %v8259 = vpop.f32.mrf.mxu0
        %8260 = vmatprep.mubr.f32.mxu0 0.0
        %8261 = vmatmul.mubr.f32.gmra.mxu0 %v7330
        %v8262 = vpop.f32.mrf.mxu0
        %v8263 = vadd.f32 0.0, %v8262
        %v8264 = vpop.f32.mrf.mxu0
        %8265 = vmatprep.mubr.f32.mxu0 0.0
        %8266 = vmatmul.mubr.f32.gmra.mxu0 %v7333
        %v8267 = vpop.f32.mrf.mxu0
        %v8268 = vadd.f32 0.0, %v8267
        %v8269 = vpop.f32.mrf.mxu0
        %8270 = vmatprep.mubr.f32.mxu0 0.0
        %8271 = vmatmul.mubr.f32.gmra.mxu0 %v7336
        %v8272 = vpop.f32.mrf.mxu0
        %v8273 = vadd.f32 0.0, %v8272
        %v8274 = vpop.f32.mrf.mxu0
        %8275 = vmatprep.mubr.f32.mxu0 0.0
        %8276 = vmatmul.mubr.f32.gmra.mxu0 %v7339
        %v8277 = vpop.f32.mrf.mxu0
        %v8278 = vadd.f32 0.0, %v8277
        %v8279 = vpop.f32.mrf.mxu0
        %8280 = vmatprep.mubr.f32.mxu0 0.0
        %8281 = vmatmul.mubr.f32.gmra.mxu0 %v7342
        %v8282 = vpop.f32.mrf.mxu0
        %v8283 = vadd.f32 0.0, %v8282
        %v8284 = vpop.f32.mrf.mxu0
        %8285 = vmatprep.mubr.f32.mxu0 0.0
        %8286 = vmatmul.mubr.f32.gmra.mxu0 %v7345
        %v8287 = vpop.f32.mrf.mxu0
        %v8288 = vadd.f32 0.0, %v8287
        %v8289 = vpop.f32.mrf.mxu0
        %8290 = vmatprep.mubr.f32.mxu0 0.0
        %8291 = vmatmul.mubr.f32.gmra.mxu0 %v7348
        %v8292 = vpop.f32.mrf.mxu0
        %v8293 = vadd.f32 0.0, %v8292
        %v8294 = vpop.f32.mrf.mxu0
        %8295 = vmatprep.mubr.f32.mxu0 0.0
        %8296 = vmatmul.mubr.f32.gmra.mxu0 %v7351
        %v8297 = vpop.f32.mrf.mxu0
        %v8298 = vadd.f32 0.0, %v8297
        %v8299 = vpop.f32.mrf.mxu0
        %8300 = vmatprep.mubr.f32.mxu0 0.0
        %8301 = vmatmul.mubr.f32.gmra.mxu0 %v7826
        %v8302 = vpop.f32.mrf.mxu0
        %v8303 = vadd.f32 0.0, %v8302
        %v8304 = vpop.f32.mrf.mxu0
        %8305 = vmatprep.mubr.f32.mxu0 0.0
        %8306 = vmatmul.mubr.f32.gmra.mxu0 %v7829
        %v8307 = vpop.f32.mrf.mxu0
        %v8308 = vadd.f32 0.0, %v8307
        %v8309 = vpop.f32.mrf.mxu0
        %8310 = vmatprep.mubr.f32.mxu0 0.0
        %8311 = vmatmul.mubr.f32.gmra.mxu0 %v7832
        %v8312 = vpop.f32.mrf.mxu0
        %v8313 = vadd.f32 0.0, %v8312
        %v8314 = vpop.f32.mrf.mxu0
        %8315 = vmatprep.mubr.f32.mxu0 0.0
        %8316 = vmatmul.mubr.f32.gmra.mxu0 %v7835
        %v8317 = vpop.f32.mrf.mxu0
        %v8318 = vadd.f32 0.0, %v8317
        %v8319 = vpop.f32.mrf.mxu0
        %8320 = vmatprep.mubr.f32.mxu0 0.0
        %8321 = vmatmul.mubr.f32.gmra.mxu0 %v8105
        %v8322 = vpop.f32.mrf.mxu0
        %v8323 = vadd.f32 0.0, %v8322
        %v8324 = vpop.f32.mrf.mxu0
        %8325 = vmatprep.mubr.f32.mxu0 0.0
        %8326 = vmatmul.mubr.f32.gmra.mxu0 %v8108
        %v8327 = vpop.f32.mrf.mxu0
        %v8328 = vadd.f32 0.0, %v8327
        %v8329 = vpop.f32.mrf.mxu0
        %8330 = vmatprep.mubr.f32.mxu0 0.0
        %8331 = vmatmul.mubr.f32.gmra.mxu0 %v8111
        %v8332 = vpop.f32.mrf.mxu0
        %v8333 = vadd.f32 0.0, %v8332
        %v8334 = vpop.f32.mrf.mxu0
        %8335 = vmatprep.mubr.f32.mxu0 0.0
        %8336 = vmatmul.mubr.f32.gmra.mxu0 %v8114
        %v8337 = vpop.f32.mrf.mxu0
        %v8338 = vadd.f32 0.0, %v8337
        %v8339 = vpop.f32.mrf.mxu0
        %8340 = vdwg.mxu0
        %v8341 = vadd.f32 %v8062, %v8183
        %v8342 = vadd.f32 %v8063, %v8188
        %v8343 = vadd.f32 %v8064, %v8193
        %v8344 = vadd.f32 %v8065, %v8198
        %v8345 = vadd.f32 %v8066, %v8203
        %v8346 = vadd.f32 %v8067, %v8208
        %v8347 = vadd.f32 %v8068, %v8213
        %v8348 = vadd.f32 %v8069, %v8218
        %v8349 = vadd.f32 %v8070, %v8223
        %v8350 = vadd.f32 %v8071, %v8228
        %v8351 = vadd.f32 %v8072, %v8233
        %v8352 = vadd.f32 %v8073, %v8238
        %v8353 = vadd.f32 %v8074, %v8243
        %v8354 = vadd.f32 %v8075, %v8248
        %v8355 = vadd.f32 %v8076, %v8253
        %v8356 = vadd.f32 %v8077, %v8258
        %v8357 = vadd.f32 %v8078, %v8263
        %v8358 = vadd.f32 %v8079, %v8268
        %v8359 = vadd.f32 %v8080, %v8273
        %v8360 = vadd.f32 %v8081, %v8278
        %v8361 = vadd.f32 %v8082, %v8283
        %v8362 = vadd.f32 %v8083, %v8288
        %v8363 = vadd.f32 %v8084, %v8293
        %v8364 = vadd.f32 %v8085, %v8298
        %v8365 = vadd.f32 %v8086, %v8303
        %v8366 = vadd.f32 %v8087, %v8308
        %v8367 = vadd.f32 %v8088, %v8313
        %v8368 = vadd.f32 %v8089, %v8318
        %v8369 = vadd.f32 %v8090, %v8323
        %v8370 = vadd.f32 %v8091, %v8328
        %v8371 = vadd.f32 %v8092, %v8333
        %v8372 = vadd.f32 %v8093, %v8338
        %s8373 = scalar_lea.vmem %s3, 288
        %v8374 = vld [vmem:[%s8373] sm:$0xff]
        %v8375 = vld [vmem:[%s8373 + $0x8] sm:$0xff]
        %v8376 = vld [vmem:[%s8373 + $0x10] sm:$0xff]
        %v8377 = vld [vmem:[%s8373 + $0x18] sm:$0xff]
        %v8378 = vld [vmem:[%s8373 + $0x20] sm:$0xff]
        %v8379 = vld [vmem:[%s8373 + $0x28] sm:$0xff]
        %v8380 = vld [vmem:[%s8373 + $0x30] sm:$0xff]
        %v8381 = vld [vmem:[%s8373 + $0x38] sm:$0xff]
        %v8382 = vld [vmem:[%s8373 + $0x40] sm:$0xff]
        %v8384 = vsel %vm7256, %v7233, 0
        %v8387 = vsel %vm7256, %v7234, 0
        %v8390 = vsel %vm7256, %v7235, 0
        %v8393 = vsel %vm7256, %v7236, 0
        %8395 = vmatprep.subr.mxu0 0.0
        %8396 = vmatpush1.msra.mxu0 0.0
        %8397 = vmatprep.subr.mxu0 0.0
        %8398 = vmatpush1.msra.mxu0 0.0
        %8399 = vmatprep.subr.mxu0 0.0
        %8400 = vmatpush1.msra.mxu0 0.0
        %8401 = vmatprep.subr.mxu0 0.0
        %8402 = vmatpush1.msra.mxu0 0.0
        %8403 = vmatprep.subr.mxu0 0.0
        %8404 = vmatpush1.msra.mxu0 0.0
        %8405 = vmatprep.subr.mxu0 0.0
        %8406 = vmatpush1.msra.mxu0 0.0
        %8407 = vmatprep.subr.mxu0 0.0
        %8408 = vmatpush1.msra.mxu0 0.0
        %8409 = vmatprep.subr.mxu0 0.0
        %8410 = vmatpush1.msra.mxu0 %v8382
        %8411 = vmatprep.subr.mxu0 0.0
        %8412 = vmatpush1.msra.mxu0 %v8381
        %8413 = vmatprep.subr.mxu0 0.0
        %8414 = vmatpush1.msra.mxu0 %v8380
        %8415 = vmatprep.subr.mxu0 0.0
        %8416 = vmatpush1.msra.mxu0 %v8379
        %8417 = vmatprep.subr.mxu0 0.0
        %8418 = vmatpush1.msra.mxu0 %v8378
        %8419 = vmatprep.subr.mxu0 0.0
        %8420 = vmatpush1.msra.mxu0 %v8377
        %8421 = vmatprep.subr.mxu0 0.0
        %8422 = vmatpush1.msra.mxu0 %v8376
        %8423 = vmatprep.subr.mxu0 0.0
        %8424 = vmatpush1.msra.mxu0 %v8375
        %8425 = vmatprep.subr.mxu0 0.0
        %8426 = vmatpush1.msra.mxu0 %v8374
        %8427 = vmatprep.subr.mxu0 0.0
        %8428 = vmatpush2.msra.mxu0 0.0
        %8429 = vmatprep.subr.mxu0 0.0
        %8430 = vmatpush2.msra.mxu0 0.0
        %8431 = vmatprep.subr.mxu0 0.0
        %8432 = vmatpush2.msra.mxu0 0.0
        %8433 = vmatprep.subr.mxu0 0.0
        %8434 = vmatpush2.msra.mxu0 0.0
        %8435 = vmatprep.subr.mxu0 0.0
        %8436 = vmatpush2.msra.mxu0 0.0
        %8437 = vmatprep.subr.mxu0 0.0
        %8438 = vmatpush2.msra.mxu0 0.0
        %8439 = vmatprep.subr.mxu0 0.0
        %8440 = vmatpush2.msra.mxu0 0.0
        %8441 = vmatprep.subr.mxu0 0.0
        %8442 = vmatpush2.msra.mxu0 0.0
        %8443 = vmatprep.subr.mxu0 0.0
        %8444 = vmatpush2.msra.mxu0 0.0
        %8445 = vmatprep.subr.mxu0 0.0
        %8446 = vmatpush2.msra.mxu0 0.0
        %8447 = vmatprep.subr.mxu0 0.0
        %8448 = vmatpush2.msra.mxu0 0.0
        %8449 = vmatprep.subr.mxu0 0.0
        %8450 = vmatpush2.msra.mxu0 0.0
        %8451 = vmatprep.subr.mxu0 0.0
        %8452 = vmatpush2.msra.mxu0 0.0
        %8453 = vmatprep.subr.mxu0 0.0
        %8454 = vmatpush2.msra.mxu0 0.0
        %8455 = vmatprep.subr.mxu0 0.0
        %8456 = vmatpush2.msra.mxu0 0.0
        %8457 = vmatprep.subr.mxu0 0.0
        %8458 = vmatpush2.msra.mxu0 0.0
        %8459 = vmatprep.mubr.f32.mxu0 0.0
        %8460 = vmatmul.mubr.f32.gmra.mxu0 %v7294
        %v8461 = vpop.f32.mrf.mxu0
        %v8462 = vadd.f32 0.0, %v8461
        %v8463 = vpop.f32.mrf.mxu0
        %8464 = vmatprep.mubr.f32.mxu0 0.0
        %8465 = vmatmul.mubr.f32.gmra.mxu0 %v7297
        %v8466 = vpop.f32.mrf.mxu0
        %v8467 = vadd.f32 0.0, %v8466
        %v8468 = vpop.f32.mrf.mxu0
        %8469 = vmatprep.mubr.f32.mxu0 0.0
        %8470 = vmatmul.mubr.f32.gmra.mxu0 %v7300
        %v8471 = vpop.f32.mrf.mxu0
        %v8472 = vadd.f32 0.0, %v8471
        %v8473 = vpop.f32.mrf.mxu0
        %8474 = vmatprep.mubr.f32.mxu0 0.0
        %8475 = vmatmul.mubr.f32.gmra.mxu0 %v7303
        %v8476 = vpop.f32.mrf.mxu0
        %v8477 = vadd.f32 0.0, %v8476
        %v8478 = vpop.f32.mrf.mxu0
        %8479 = vmatprep.mubr.f32.mxu0 0.0
        %8480 = vmatmul.mubr.f32.gmra.mxu0 %v7306
        %v8481 = vpop.f32.mrf.mxu0
        %v8482 = vadd.f32 0.0, %v8481
        %v8483 = vpop.f32.mrf.mxu0
        %8484 = vmatprep.mubr.f32.mxu0 0.0
        %8485 = vmatmul.mubr.f32.gmra.mxu0 %v7309
        %v8486 = vpop.f32.mrf.mxu0
        %v8487 = vadd.f32 0.0, %v8486
        %v8488 = vpop.f32.mrf.mxu0
        %8489 = vmatprep.mubr.f32.mxu0 0.0
        %8490 = vmatmul.mubr.f32.gmra.mxu0 %v7312
        %v8491 = vpop.f32.mrf.mxu0
        %v8492 = vadd.f32 0.0, %v8491
        %v8493 = vpop.f32.mrf.mxu0
        %8494 = vmatprep.mubr.f32.mxu0 0.0
        %8495 = vmatmul.mubr.f32.gmra.mxu0 %v7315
        %v8496 = vpop.f32.mrf.mxu0
        %v8497 = vadd.f32 0.0, %v8496
        %v8498 = vpop.f32.mrf.mxu0
        %8499 = vmatprep.mubr.f32.mxu0 0.0
        %8500 = vmatmul.mubr.f32.gmra.mxu0 %v7318
        %v8501 = vpop.f32.mrf.mxu0
        %v8502 = vadd.f32 0.0, %v8501
        %v8503 = vpop.f32.mrf.mxu0
        %8504 = vmatprep.mubr.f32.mxu0 0.0
        %8505 = vmatmul.mubr.f32.gmra.mxu0 %v7321
        %v8506 = vpop.f32.mrf.mxu0
        %v8507 = vadd.f32 0.0, %v8506
        %v8508 = vpop.f32.mrf.mxu0
        %8509 = vmatprep.mubr.f32.mxu0 0.0
        %8510 = vmatmul.mubr.f32.gmra.mxu0 %v7324
        %v8511 = vpop.f32.mrf.mxu0
        %v8512 = vadd.f32 0.0, %v8511
        %v8513 = vpop.f32.mrf.mxu0
        %8514 = vmatprep.mubr.f32.mxu0 0.0
        %8515 = vmatmul.mubr.f32.gmra.mxu0 %v7327
        %v8516 = vpop.f32.mrf.mxu0
        %v8517 = vadd.f32 0.0, %v8516
        %v8518 = vpop.f32.mrf.mxu0
        %8519 = vmatprep.mubr.f32.mxu0 0.0
        %8520 = vmatmul.mubr.f32.gmra.mxu0 %v7330
        %v8521 = vpop.f32.mrf.mxu0
        %v8522 = vadd.f32 0.0, %v8521
        %v8523 = vpop.f32.mrf.mxu0
        %8524 = vmatprep.mubr.f32.mxu0 0.0
        %8525 = vmatmul.mubr.f32.gmra.mxu0 %v7333
        %v8526 = vpop.f32.mrf.mxu0
        %v8527 = vadd.f32 0.0, %v8526
        %v8528 = vpop.f32.mrf.mxu0
        %8529 = vmatprep.mubr.f32.mxu0 0.0
        %8530 = vmatmul.mubr.f32.gmra.mxu0 %v7336
        %v8531 = vpop.f32.mrf.mxu0
        %v8532 = vadd.f32 0.0, %v8531
        %v8533 = vpop.f32.mrf.mxu0
        %8534 = vmatprep.mubr.f32.mxu0 0.0
        %8535 = vmatmul.mubr.f32.gmra.mxu0 %v7339
        %v8536 = vpop.f32.mrf.mxu0
        %v8537 = vadd.f32 0.0, %v8536
        %v8538 = vpop.f32.mrf.mxu0
        %8539 = vmatprep.mubr.f32.mxu0 0.0
        %8540 = vmatmul.mubr.f32.gmra.mxu0 %v7342
        %v8541 = vpop.f32.mrf.mxu0
        %v8542 = vadd.f32 0.0, %v8541
        %v8543 = vpop.f32.mrf.mxu0
        %8544 = vmatprep.mubr.f32.mxu0 0.0
        %8545 = vmatmul.mubr.f32.gmra.mxu0 %v7345
        %v8546 = vpop.f32.mrf.mxu0
        %v8547 = vadd.f32 0.0, %v8546
        %v8548 = vpop.f32.mrf.mxu0
        %8549 = vmatprep.mubr.f32.mxu0 0.0
        %8550 = vmatmul.mubr.f32.gmra.mxu0 %v7348
        %v8551 = vpop.f32.mrf.mxu0
        %v8552 = vadd.f32 0.0, %v8551
        %v8553 = vpop.f32.mrf.mxu0
        %8554 = vmatprep.mubr.f32.mxu0 0.0
        %8555 = vmatmul.mubr.f32.gmra.mxu0 %v7351
        %v8556 = vpop.f32.mrf.mxu0
        %v8557 = vadd.f32 0.0, %v8556
        %v8558 = vpop.f32.mrf.mxu0
        %8559 = vmatprep.mubr.f32.mxu0 0.0
        %8560 = vmatmul.mubr.f32.gmra.mxu0 %v7826
        %v8561 = vpop.f32.mrf.mxu0
        %v8562 = vadd.f32 0.0, %v8561
        %v8563 = vpop.f32.mrf.mxu0
        %8564 = vmatprep.mubr.f32.mxu0 0.0
        %8565 = vmatmul.mubr.f32.gmra.mxu0 %v7829
        %v8566 = vpop.f32.mrf.mxu0
        %v8567 = vadd.f32 0.0, %v8566
        %v8568 = vpop.f32.mrf.mxu0
        %8569 = vmatprep.mubr.f32.mxu0 0.0
        %8570 = vmatmul.mubr.f32.gmra.mxu0 %v7832
        %v8571 = vpop.f32.mrf.mxu0
        %v8572 = vadd.f32 0.0, %v8571
        %v8573 = vpop.f32.mrf.mxu0
        %8574 = vmatprep.mubr.f32.mxu0 0.0
        %8575 = vmatmul.mubr.f32.gmra.mxu0 %v7835
        %v8576 = vpop.f32.mrf.mxu0
        %v8577 = vadd.f32 0.0, %v8576
        %v8578 = vpop.f32.mrf.mxu0
        %8579 = vmatprep.mubr.f32.mxu0 0.0
        %8580 = vmatmul.mubr.f32.gmra.mxu0 %v8105
        %v8581 = vpop.f32.mrf.mxu0
        %v8582 = vadd.f32 0.0, %v8581
        %v8583 = vpop.f32.mrf.mxu0
        %8584 = vmatprep.mubr.f32.mxu0 0.0
        %8585 = vmatmul.mubr.f32.gmra.mxu0 %v8108
        %v8586 = vpop.f32.mrf.mxu0
        %v8587 = vadd.f32 0.0, %v8586
        %v8588 = vpop.f32.mrf.mxu0
        %8589 = vmatprep.mubr.f32.mxu0 0.0
        %8590 = vmatmul.mubr.f32.gmra.mxu0 %v8111
        %v8591 = vpop.f32.mrf.mxu0
        %v8592 = vadd.f32 0.0, %v8591
        %v8593 = vpop.f32.mrf.mxu0
        %8594 = vmatprep.mubr.f32.mxu0 0.0
        %8595 = vmatmul.mubr.f32.gmra.mxu0 %v8114
        %v8596 = vpop.f32.mrf.mxu0
        %v8597 = vadd.f32 0.0, %v8596
        %v8598 = vpop.f32.mrf.mxu0
        %8599 = vmatprep.mubr.f32.mxu0 0.0
        %8600 = vmatmul.mubr.f32.gmra.mxu0 %v8384
        %v8601 = vpop.f32.mrf.mxu0
        %v8602 = vadd.f32 0.0, %v8601
        %v8603 = vpop.f32.mrf.mxu0
        %8604 = vmatprep.mubr.f32.mxu0 0.0
        %8605 = vmatmul.mubr.f32.gmra.mxu0 %v8387
        %v8606 = vpop.f32.mrf.mxu0
        %v8607 = vadd.f32 0.0, %v8606
        %v8608 = vpop.f32.mrf.mxu0
        %8609 = vmatprep.mubr.f32.mxu0 0.0
        %8610 = vmatmul.mubr.f32.gmra.mxu0 %v8390
        %v8611 = vpop.f32.mrf.mxu0
        %v8612 = vadd.f32 0.0, %v8611
        %v8613 = vpop.f32.mrf.mxu0
        %8614 = vmatprep.mubr.f32.mxu0 0.0
        %8615 = vmatmul.mubr.f32.gmra.mxu0 %v8393
        %v8616 = vpop.f32.mrf.mxu0
        %v8617 = vadd.f32 0.0, %v8616
        %v8618 = vpop.f32.mrf.mxu0
        %8619 = vdwg.mxu0
        %v8620 = vadd.f32 %v8341, %v8462
        %v8621 = vadd.f32 %v8342, %v8467
        %v8622 = vadd.f32 %v8343, %v8472
        %v8623 = vadd.f32 %v8344, %v8477
        %v8624 = vadd.f32 %v8345, %v8482
        %v8625 = vadd.f32 %v8346, %v8487
        %v8626 = vadd.f32 %v8347, %v8492
        %v8627 = vadd.f32 %v8348, %v8497
        %v8628 = vadd.f32 %v8349, %v8502
        %v8629 = vadd.f32 %v8350, %v8507
        %v8630 = vadd.f32 %v8351, %v8512
        %v8631 = vadd.f32 %v8352, %v8517
        %v8632 = vadd.f32 %v8353, %v8522
        %v8633 = vadd.f32 %v8354, %v8527
        %v8634 = vadd.f32 %v8355, %v8532
        %v8635 = vadd.f32 %v8356, %v8537
        %v8636 = vadd.f32 %v8357, %v8542
        %v8637 = vadd.f32 %v8358, %v8547
        %v8638 = vadd.f32 %v8359, %v8552
        %v8639 = vadd.f32 %v8360, %v8557
        %v8640 = vadd.f32 %v8361, %v8562
        %v8641 = vadd.f32 %v8362, %v8567
        %v8642 = vadd.f32 %v8363, %v8572
        %v8643 = vadd.f32 %v8364, %v8577
        %v8644 = vadd.f32 %v8365, %v8582
        %v8645 = vadd.f32 %v8366, %v8587
        %v8646 = vadd.f32 %v8367, %v8592
        %v8647 = vadd.f32 %v8368, %v8597
        %v8648 = vadd.f32 %v8369, %v8602
        %v8649 = vadd.f32 %v8370, %v8607
        %v8650 = vadd.f32 %v8371, %v8612
        %v8651 = vadd.f32 %v8372, %v8617
        %v8652 = vld [vmem:[%s4] sm:$0x1]
        %v8654 = vlaneseq
        %v8655 = vshrl.u32 %v8654, 7
        %v8656 = vsub.s32 0, %v8655
        %v8657 = vrot.slane %v8652, %v8656
        %v8659 = vadd.f32 %v8620, %v8657
        %v8660 = vadd.f32 %v8621, %v8657
        %v8661 = vadd.f32 %v8622, %v8657
        %v8662 = vadd.f32 %v8623, %v8657
        %v8663 = vadd.f32 %v8624, %v8657
        %v8664 = vadd.f32 %v8625, %v8657
        %v8665 = vadd.f32 %v8626, %v8657
        %v8666 = vadd.f32 %v8627, %v8657
        %v8667 = vadd.f32 %v8628, %v8657
        %v8668 = vadd.f32 %v8629, %v8657
        %v8669 = vadd.f32 %v8630, %v8657
        %v8670 = vadd.f32 %v8631, %v8657
        %v8671 = vadd.f32 %v8632, %v8657
        %v8672 = vadd.f32 %v8633, %v8657
        %v8673 = vadd.f32 %v8634, %v8657
        %v8674 = vadd.f32 %v8635, %v8657
        %v8675 = vadd.f32 %v8636, %v8657
        %v8676 = vadd.f32 %v8637, %v8657
        %v8677 = vadd.f32 %v8638, %v8657
        %v8678 = vadd.f32 %v8639, %v8657
        %v8679 = vadd.f32 %v8640, %v8657
        %v8680 = vadd.f32 %v8641, %v8657
        %v8681 = vadd.f32 %v8642, %v8657
        %v8682 = vadd.f32 %v8643, %v8657
        %v8683 = vadd.f32 %v8644, %v8657
        %v8684 = vadd.f32 %v8645, %v8657
        %v8685 = vadd.f32 %v8646, %v8657
        %v8686 = vadd.f32 %v8647, %v8657
        %v8687 = vadd.f32 %v8648, %v8657
        %v8688 = vadd.f32 %v8649, %v8657
        %v8689 = vadd.f32 %v8650, %v8657
        %v8690 = vadd.f32 %v8651, %v8657
        %v8691 = vmax.f32 %v8659, 0.0
        %v8692 = vmax.f32 %v8660, 0.0
        %v8693 = vmax.f32 %v8661, 0.0
        %v8694 = vmax.f32 %v8662, 0.0
        %v8695 = vmax.f32 %v8663, 0.0
        %v8696 = vmax.f32 %v8664, 0.0
        %v8697 = vmax.f32 %v8665, 0.0
        %v8698 = vmax.f32 %v8666, 0.0
        %v8699 = vmax.f32 %v8667, 0.0
        %v8700 = vmax.f32 %v8668, 0.0
        %v8701 = vmax.f32 %v8669, 0.0
        %v8702 = vmax.f32 %v8670, 0.0
        %v8703 = vmax.f32 %v8671, 0.0
        %v8704 = vmax.f32 %v8672, 0.0
        %v8705 = vmax.f32 %v8673, 0.0
        %v8706 = vmax.f32 %v8674, 0.0
        %v8707 = vmax.f32 %v8675, 0.0
        %v8708 = vmax.f32 %v8676, 0.0
        %v8709 = vmax.f32 %v8677, 0.0
        %v8710 = vmax.f32 %v8678, 0.0
        %v8711 = vmax.f32 %v8679, 0.0
        %v8712 = vmax.f32 %v8680, 0.0
        %v8713 = vmax.f32 %v8681, 0.0
        %v8714 = vmax.f32 %v8682, 0.0
        %v8715 = vmax.f32 %v8683, 0.0
        %v8716 = vmax.f32 %v8684, 0.0
        %v8717 = vmax.f32 %v8685, 0.0
        %v8718 = vmax.f32 %v8686, 0.0
        %v8719 = vmax.f32 %v8687, 0.0
        %v8720 = vmax.f32 %v8688, 0.0
        %v8721 = vmax.f32 %v8689, 0.0
        %v8722 = vmax.f32 %v8690, 0.0
        %v8723 = vld [vmem:[%s7] sm:$0xff]
        %v8724 = vld [vmem:[%s7 + $0x8] sm:$0xff]
        %v8725 = vld [vmem:[%s7 + $0x10] sm:$0xff]
        %v8726 = vld [vmem:[%s7 + $0x18] sm:$0xff]
        %v8727 = vld [vmem:[%s7 + $0x20] sm:$0xff]
        %v8728 = vld [vmem:[%s7 + $0x28] sm:$0xff]
        %v8729 = vld [vmem:[%s7 + $0x30] sm:$0xff]
        %v8730 = vld [vmem:[%s7 + $0x38] sm:$0xff]
        %v8731 = vld [vmem:[%s7 + $0x40] sm:$0xff]
        %v8732 = vld [vmem:[%s7 + $0x48] sm:$0xff]
        %v8733 = vld [vmem:[%s7 + $0x50] sm:$0xff]
        %v8734 = vld [vmem:[%s7 + $0x58] sm:$0xff]
        %v8735 = vld [vmem:[%s7 + $0x60] sm:$0xff]
        %v8736 = vld [vmem:[%s7 + $0x68] sm:$0xff]
        %v8737 = vld [vmem:[%s7 + $0x70] sm:$0xff]
        %v8738 = vld [vmem:[%s7 + $0x78] sm:$0xff]
        %8739 = vmatprep.subr.mxu0 0.0
        %8740 = vmatpush1.msra.mxu0 %v8738
        %8741 = vmatprep.subr.mxu0 0.0
        %8742 = vmatpush1.msra.mxu0 %v8737
        %8743 = vmatprep.subr.mxu0 0.0
        %8744 = vmatpush1.msra.mxu0 %v8736
        %8745 = vmatprep.subr.mxu0 0.0
        %8746 = vmatpush1.msra.mxu0 %v8735
        %8747 = vmatprep.subr.mxu0 0.0
        %8748 = vmatpush1.msra.mxu0 %v8734
        %8749 = vmatprep.subr.mxu0 0.0
        %8750 = vmatpush1.msra.mxu0 %v8733
        %8751 = vmatprep.subr.mxu0 0.0
        %8752 = vmatpush1.msra.mxu0 %v8732
        %8753 = vmatprep.subr.mxu0 0.0
        %8754 = vmatpush1.msra.mxu0 %v8731
        %8755 = vmatprep.subr.mxu0 0.0
        %8756 = vmatpush1.msra.mxu0 %v8730
        %8757 = vmatprep.subr.mxu0 0.0
        %8758 = vmatpush1.msra.mxu0 %v8729
        %8759 = vmatprep.subr.mxu0 0.0
        %8760 = vmatpush1.msra.mxu0 %v8728
        %8761 = vmatprep.subr.mxu0 0.0
        %8762 = vmatpush1.msra.mxu0 %v8727
        %8763 = vmatprep.subr.mxu0 0.0
        %8764 = vmatpush1.msra.mxu0 %v8726
        %8765 = vmatprep.subr.mxu0 0.0
        %8766 = vmatpush1.msra.mxu0 %v8725
        %8767 = vmatprep.subr.mxu0 0.0
        %8768 = vmatpush1.msra.mxu0 %v8724
        %8769 = vmatprep.subr.mxu0 0.0
        %8770 = vmatpush1.msra.mxu0 %v8723
        %8771 = vmatprep.subr.mxu0 0.0
        %8772 = vmatpush2.msra.mxu0 0.0
        %8773 = vmatprep.subr.mxu0 0.0
        %8774 = vmatpush2.msra.mxu0 0.0
        %8775 = vmatprep.subr.mxu0 0.0
        %8776 = vmatpush2.msra.mxu0 0.0
        %8777 = vmatprep.subr.mxu0 0.0
        %8778 = vmatpush2.msra.mxu0 0.0
        %8779 = vmatprep.subr.mxu0 0.0
        %8780 = vmatpush2.msra.mxu0 0.0
        %8781 = vmatprep.subr.mxu0 0.0
        %8782 = vmatpush2.msra.mxu0 0.0
        %8783 = vmatprep.subr.mxu0 0.0
        %8784 = vmatpush2.msra.mxu0 0.0
        %8785 = vmatprep.subr.mxu0 0.0
        %8786 = vmatpush2.msra.mxu0 0.0
        %8787 = vmatprep.subr.mxu0 0.0
        %8788 = vmatpush2.msra.mxu0 0.0
        %8789 = vmatprep.subr.mxu0 0.0
        %8790 = vmatpush2.msra.mxu0 0.0
        %8791 = vmatprep.subr.mxu0 0.0
        %8792 = vmatpush2.msra.mxu0 0.0
        %8793 = vmatprep.subr.mxu0 0.0
        %8794 = vmatpush2.msra.mxu0 0.0
        %8795 = vmatprep.subr.mxu0 0.0
        %8796 = vmatpush2.msra.mxu0 0.0
        %8797 = vmatprep.subr.mxu0 0.0
        %8798 = vmatpush2.msra.mxu0 0.0
        %8799 = vmatprep.subr.mxu0 0.0
        %8800 = vmatpush2.msra.mxu0 0.0
        %8801 = vmatprep.subr.mxu0 0.0
        %8802 = vmatpush2.msra.mxu0 0.0
        %8803 = vmatprep.mubr.f32.mxu0 0.0
        %8804 = vmatmul.mubr.f32.gmra.mxu0 %v8691
        %v8805 = vpop.f32.mrf.mxu0
        %v8806 = vadd.f32 0.0, %v8805
        %v8807 = vpop.f32.mrf.mxu0
        %8808 = vmatprep.mubr.f32.mxu0 0.0
        %8809 = vmatmul.mubr.f32.gmra.mxu0 %v8692
        %v8810 = vpop.f32.mrf.mxu0
        %v8811 = vadd.f32 0.0, %v8810
        %v8812 = vpop.f32.mrf.mxu0
        %8813 = vmatprep.mubr.f32.mxu0 0.0
        %8814 = vmatmul.mubr.f32.gmra.mxu0 %v8693
        %v8815 = vpop.f32.mrf.mxu0
        %v8816 = vadd.f32 0.0, %v8815
        %v8817 = vpop.f32.mrf.mxu0
        %8818 = vmatprep.mubr.f32.mxu0 0.0
        %8819 = vmatmul.mubr.f32.gmra.mxu0 %v8694
        %v8820 = vpop.f32.mrf.mxu0
        %v8821 = vadd.f32 0.0, %v8820
        %v8822 = vpop.f32.mrf.mxu0
        %8823 = vmatprep.mubr.f32.mxu0 0.0
        %8824 = vmatmul.mubr.f32.gmra.mxu0 %v8695
        %v8825 = vpop.f32.mrf.mxu0
        %v8826 = vadd.f32 0.0, %v8825
        %v8827 = vpop.f32.mrf.mxu0
        %8828 = vmatprep.mubr.f32.mxu0 0.0
        %8829 = vmatmul.mubr.f32.gmra.mxu0 %v8696
        %v8830 = vpop.f32.mrf.mxu0
        %v8831 = vadd.f32 0.0, %v8830
        %v8832 = vpop.f32.mrf.mxu0
        %8833 = vmatprep.mubr.f32.mxu0 0.0
        %8834 = vmatmul.mubr.f32.gmra.mxu0 %v8697
        %v8835 = vpop.f32.mrf.mxu0
        %v8836 = vadd.f32 0.0, %v8835
        %v8837 = vpop.f32.mrf.mxu0
        %8838 = vmatprep.mubr.f32.mxu0 0.0
        %8839 = vmatmul.mubr.f32.gmra.mxu0 %v8698
        %v8840 = vpop.f32.mrf.mxu0
        %v8841 = vadd.f32 0.0, %v8840
        %v8842 = vpop.f32.mrf.mxu0
        %8843 = vmatprep.mubr.f32.mxu0 0.0
        %8844 = vmatmul.mubr.f32.gmra.mxu0 %v8699
        %v8845 = vpop.f32.mrf.mxu0
        %v8846 = vadd.f32 0.0, %v8845
        %v8847 = vpop.f32.mrf.mxu0
        %8848 = vmatprep.mubr.f32.mxu0 0.0
        %8849 = vmatmul.mubr.f32.gmra.mxu0 %v8700
        %v8850 = vpop.f32.mrf.mxu0
        %v8851 = vadd.f32 0.0, %v8850
        %v8852 = vpop.f32.mrf.mxu0
        %8853 = vmatprep.mubr.f32.mxu0 0.0
        %8854 = vmatmul.mubr.f32.gmra.mxu0 %v8701
        %v8855 = vpop.f32.mrf.mxu0
        %v8856 = vadd.f32 0.0, %v8855
        %v8857 = vpop.f32.mrf.mxu0
        %8858 = vmatprep.mubr.f32.mxu0 0.0
        %8859 = vmatmul.mubr.f32.gmra.mxu0 %v8702
        %v8860 = vpop.f32.mrf.mxu0
        %v8861 = vadd.f32 0.0, %v8860
        %v8862 = vpop.f32.mrf.mxu0
        %8863 = vmatprep.mubr.f32.mxu0 0.0
        %8864 = vmatmul.mubr.f32.gmra.mxu0 %v8703
        %v8865 = vpop.f32.mrf.mxu0
        %v8866 = vadd.f32 0.0, %v8865
        %v8867 = vpop.f32.mrf.mxu0
        %8868 = vmatprep.mubr.f32.mxu0 0.0
        %8869 = vmatmul.mubr.f32.gmra.mxu0 %v8704
        %v8870 = vpop.f32.mrf.mxu0
        %v8871 = vadd.f32 0.0, %v8870
        %v8872 = vpop.f32.mrf.mxu0
        %8873 = vmatprep.mubr.f32.mxu0 0.0
        %8874 = vmatmul.mubr.f32.gmra.mxu0 %v8705
        %v8875 = vpop.f32.mrf.mxu0
        %v8876 = vadd.f32 0.0, %v8875
        %v8877 = vpop.f32.mrf.mxu0
        %8878 = vmatprep.mubr.f32.mxu0 0.0
        %8879 = vmatmul.mubr.f32.gmra.mxu0 %v8706
        %v8880 = vpop.f32.mrf.mxu0
        %v8881 = vadd.f32 0.0, %v8880
        %v8882 = vpop.f32.mrf.mxu0
        %8883 = vmatprep.mubr.f32.mxu0 0.0
        %8884 = vmatmul.mubr.f32.gmra.mxu0 %v8707
        %v8885 = vpop.f32.mrf.mxu0
        %v8886 = vadd.f32 0.0, %v8885
        %v8887 = vpop.f32.mrf.mxu0
        %8888 = vmatprep.mubr.f32.mxu0 0.0
        %8889 = vmatmul.mubr.f32.gmra.mxu0 %v8708
        %v8890 = vpop.f32.mrf.mxu0
        %v8891 = vadd.f32 0.0, %v8890
        %v8892 = vpop.f32.mrf.mxu0
        %8893 = vmatprep.mubr.f32.mxu0 0.0
        %8894 = vmatmul.mubr.f32.gmra.mxu0 %v8709
        %v8895 = vpop.f32.mrf.mxu0
        %v8896 = vadd.f32 0.0, %v8895
        %v8897 = vpop.f32.mrf.mxu0
        %8898 = vmatprep.mubr.f32.mxu0 0.0
        %8899 = vmatmul.mubr.f32.gmra.mxu0 %v8710
        %v8900 = vpop.f32.mrf.mxu0
        %v8901 = vadd.f32 0.0, %v8900
        %v8902 = vpop.f32.mrf.mxu0
        %8903 = vmatprep.mubr.f32.mxu0 0.0
        %8904 = vmatmul.mubr.f32.gmra.mxu0 %v8711
        %v8905 = vpop.f32.mrf.mxu0
        %v8906 = vadd.f32 0.0, %v8905
        %v8907 = vpop.f32.mrf.mxu0
        %8908 = vmatprep.mubr.f32.mxu0 0.0
        %8909 = vmatmul.mubr.f32.gmra.mxu0 %v8712
        %v8910 = vpop.f32.mrf.mxu0
        %v8911 = vadd.f32 0.0, %v8910
        %v8912 = vpop.f32.mrf.mxu0
        %8913 = vmatprep.mubr.f32.mxu0 0.0
        %8914 = vmatmul.mubr.f32.gmra.mxu0 %v8713
        %v8915 = vpop.f32.mrf.mxu0
        %v8916 = vadd.f32 0.0, %v8915
        %v8917 = vpop.f32.mrf.mxu0
        %8918 = vmatprep.mubr.f32.mxu0 0.0
        %8919 = vmatmul.mubr.f32.gmra.mxu0 %v8714
        %v8920 = vpop.f32.mrf.mxu0
        %v8921 = vadd.f32 0.0, %v8920
        %v8922 = vpop.f32.mrf.mxu0
        %8923 = vmatprep.mubr.f32.mxu0 0.0
        %8924 = vmatmul.mubr.f32.gmra.mxu0 %v8715
        %v8925 = vpop.f32.mrf.mxu0
        %v8926 = vadd.f32 0.0, %v8925
        %v8927 = vpop.f32.mrf.mxu0
        %8928 = vmatprep.mubr.f32.mxu0 0.0
        %8929 = vmatmul.mubr.f32.gmra.mxu0 %v8716
        %v8930 = vpop.f32.mrf.mxu0
        %v8931 = vadd.f32 0.0, %v8930
        %v8932 = vpop.f32.mrf.mxu0
        %8933 = vmatprep.mubr.f32.mxu0 0.0
        %8934 = vmatmul.mubr.f32.gmra.mxu0 %v8717
        %v8935 = vpop.f32.mrf.mxu0
        %v8936 = vadd.f32 0.0, %v8935
        %v8937 = vpop.f32.mrf.mxu0
        %8938 = vmatprep.mubr.f32.mxu0 0.0
        %8939 = vmatmul.mubr.f32.gmra.mxu0 %v8718
        %v8940 = vpop.f32.mrf.mxu0
        %v8941 = vadd.f32 0.0, %v8940
        %v8942 = vpop.f32.mrf.mxu0
        %8943 = vmatprep.mubr.f32.mxu0 0.0
        %8944 = vmatmul.mubr.f32.gmra.mxu0 %v8719
        %v8945 = vpop.f32.mrf.mxu0
        %v8946 = vadd.f32 0.0, %v8945
        %v8947 = vpop.f32.mrf.mxu0
        %8948 = vmatprep.mubr.f32.mxu0 0.0
        %8949 = vmatmul.mubr.f32.gmra.mxu0 %v8720
        %v8950 = vpop.f32.mrf.mxu0
        %v8951 = vadd.f32 0.0, %v8950
        %v8952 = vpop.f32.mrf.mxu0
        %8953 = vmatprep.mubr.f32.mxu0 0.0
        %8954 = vmatmul.mubr.f32.gmra.mxu0 %v8721
        %v8955 = vpop.f32.mrf.mxu0
        %v8956 = vadd.f32 0.0, %v8955
        %v8957 = vpop.f32.mrf.mxu0
        %8958 = vmatprep.mubr.f32.mxu0 0.0
        %8959 = vmatmul.mubr.f32.gmra.mxu0 %v8722
        %v8960 = vpop.f32.mrf.mxu0
        %v8961 = vadd.f32 0.0, %v8960
        %v8962 = vpop.f32.mrf.mxu0
        %8963 = vdwg.mxu0
        %v8964 = vld [vmem:[%s8] sm:$0xff]
        %v8965 = vld [vmem:[%s8 + $0x8] sm:$0xff]
        %v8966 = vld [vmem:[%s8 + $0x10] sm:$0xff]
        %v8967 = vld [vmem:[%s8 + $0x18] sm:$0xff]
        %v8968 = vld [vmem:[%s8 + $0x20] sm:$0xff]
        %v8969 = vld [vmem:[%s8 + $0x28] sm:$0xff]
        %v8970 = vld [vmem:[%s8 + $0x30] sm:$0xff]
        %v8971 = vld [vmem:[%s8 + $0x38] sm:$0xff]
        %v8972 = vld [vmem:[%s8 + $0x40] sm:$0xff]
        %v8973 = vld [vmem:[%s8 + $0x48] sm:$0xff]
        %v8974 = vld [vmem:[%s8 + $0x50] sm:$0xff]
        %v8975 = vld [vmem:[%s8 + $0x58] sm:$0xff]
        %v8976 = vld [vmem:[%s8 + $0x60] sm:$0xff]
        %v8977 = vld [vmem:[%s8 + $0x68] sm:$0xff]
        %v8978 = vld [vmem:[%s8 + $0x70] sm:$0xff]
        %v8979 = vld [vmem:[%s8 + $0x78] sm:$0xff]
        %8980 = vmatprep.subr.mxu0 0.0
        %8981 = vmatpush1.msra.mxu0 %v8979
        %8982 = vmatprep.subr.mxu0 0.0
        %8983 = vmatpush1.msra.mxu0 %v8978
        %8984 = vmatprep.subr.mxu0 0.0
        %8985 = vmatpush1.msra.mxu0 %v8977
        %8986 = vmatprep.subr.mxu0 0.0
        %8987 = vmatpush1.msra.mxu0 %v8976
        %8988 = vmatprep.subr.mxu0 0.0
        %8989 = vmatpush1.msra.mxu0 %v8975
        %8990 = vmatprep.subr.mxu0 0.0
        %8991 = vmatpush1.msra.mxu0 %v8974
        %8992 = vmatprep.subr.mxu0 0.0
        %8993 = vmatpush1.msra.mxu0 %v8973
        %8994 = vmatprep.subr.mxu0 0.0
        %8995 = vmatpush1.msra.mxu0 %v8972
        %8996 = vmatprep.subr.mxu0 0.0
        %8997 = vmatpush1.msra.mxu0 %v8971
        %8998 = vmatprep.subr.mxu0 0.0
        %8999 = vmatpush1.msra.mxu0 %v8970
        %9000 = vmatprep.subr.mxu0 0.0
        %9001 = vmatpush1.msra.mxu0 %v8969
        %9002 = vmatprep.subr.mxu0 0.0
        %9003 = vmatpush1.msra.mxu0 %v8968
        %9004 = vmatprep.subr.mxu0 0.0
        %9005 = vmatpush1.msra.mxu0 %v8967
        %9006 = vmatprep.subr.mxu0 0.0
        %9007 = vmatpush1.msra.mxu0 %v8966
        %9008 = vmatprep.subr.mxu0 0.0
        %9009 = vmatpush1.msra.mxu0 %v8965
        %9010 = vmatprep.subr.mxu0 0.0
        %9011 = vmatpush1.msra.mxu0 %v8964
        %9012 = vmatprep.subr.mxu0 0.0
        %9013 = vmatpush2.msra.mxu0 0.0
        %9014 = vmatprep.subr.mxu0 0.0
        %9015 = vmatpush2.msra.mxu0 0.0
        %9016 = vmatprep.subr.mxu0 0.0
        %9017 = vmatpush2.msra.mxu0 0.0
        %9018 = vmatprep.subr.mxu0 0.0
        %9019 = vmatpush2.msra.mxu0 0.0
        %9020 = vmatprep.subr.mxu0 0.0
        %9021 = vmatpush2.msra.mxu0 0.0
        %9022 = vmatprep.subr.mxu0 0.0
        %9023 = vmatpush2.msra.mxu0 0.0
        %9024 = vmatprep.subr.mxu0 0.0
        %9025 = vmatpush2.msra.mxu0 0.0
        %9026 = vmatprep.subr.mxu0 0.0
        %9027 = vmatpush2.msra.mxu0 0.0
        %9028 = vmatprep.subr.mxu0 0.0
        %9029 = vmatpush2.msra.mxu0 0.0
        %9030 = vmatprep.subr.mxu0 0.0
        %9031 = vmatpush2.msra.mxu0 0.0
        %9032 = vmatprep.subr.mxu0 0.0
        %9033 = vmatpush2.msra.mxu0 0.0
        %9034 = vmatprep.subr.mxu0 0.0
        %9035 = vmatpush2.msra.mxu0 0.0
        %9036 = vmatprep.subr.mxu0 0.0
        %9037 = vmatpush2.msra.mxu0 0.0
        %9038 = vmatprep.subr.mxu0 0.0
        %9039 = vmatpush2.msra.mxu0 0.0
        %9040 = vmatprep.subr.mxu0 0.0
        %9041 = vmatpush2.msra.mxu0 0.0
        %9042 = vmatprep.subr.mxu0 0.0
        %9043 = vmatpush2.msra.mxu0 0.0
        %9044 = vmatprep.mubr.f32.mxu0 0.0
        %9045 = vmatmul.mubr.f32.gmra.mxu0 %v8691
        %v9046 = vpop.f32.mrf.mxu0
        %v9047 = vadd.f32 0.0, %v9046
        %v9048 = vpop.f32.mrf.mxu0
        %9049 = vmatprep.mubr.f32.mxu0 0.0
        %9050 = vmatmul.mubr.f32.gmra.mxu0 %v8692
        %v9051 = vpop.f32.mrf.mxu0
        %v9052 = vadd.f32 0.0, %v9051
        %v9053 = vpop.f32.mrf.mxu0
        %9054 = vmatprep.mubr.f32.mxu0 0.0
        %9055 = vmatmul.mubr.f32.gmra.mxu0 %v8693
        %v9056 = vpop.f32.mrf.mxu0
        %v9057 = vadd.f32 0.0, %v9056
        %v9058 = vpop.f32.mrf.mxu0
        %9059 = vmatprep.mubr.f32.mxu0 0.0
        %9060 = vmatmul.mubr.f32.gmra.mxu0 %v8694
        %v9061 = vpop.f32.mrf.mxu0
        %v9062 = vadd.f32 0.0, %v9061
        %v9063 = vpop.f32.mrf.mxu0
        %9064 = vmatprep.mubr.f32.mxu0 0.0
        %9065 = vmatmul.mubr.f32.gmra.mxu0 %v8695
        %v9066 = vpop.f32.mrf.mxu0
        %v9067 = vadd.f32 0.0, %v9066
        %v9068 = vpop.f32.mrf.mxu0
        %9069 = vmatprep.mubr.f32.mxu0 0.0
        %9070 = vmatmul.mubr.f32.gmra.mxu0 %v8696
        %v9071 = vpop.f32.mrf.mxu0
        %v9072 = vadd.f32 0.0, %v9071
        %v9073 = vpop.f32.mrf.mxu0
        %9074 = vmatprep.mubr.f32.mxu0 0.0
        %9075 = vmatmul.mubr.f32.gmra.mxu0 %v8697
        %v9076 = vpop.f32.mrf.mxu0
        %v9077 = vadd.f32 0.0, %v9076
        %v9078 = vpop.f32.mrf.mxu0
        %9079 = vmatprep.mubr.f32.mxu0 0.0
        %9080 = vmatmul.mubr.f32.gmra.mxu0 %v8698
        %v9081 = vpop.f32.mrf.mxu0
        %v9082 = vadd.f32 0.0, %v9081
        %v9083 = vpop.f32.mrf.mxu0
        %9084 = vmatprep.mubr.f32.mxu0 0.0
        %9085 = vmatmul.mubr.f32.gmra.mxu0 %v8699
        %v9086 = vpop.f32.mrf.mxu0
        %v9087 = vadd.f32 0.0, %v9086
        %v9088 = vpop.f32.mrf.mxu0
        %9089 = vmatprep.mubr.f32.mxu0 0.0
        %9090 = vmatmul.mubr.f32.gmra.mxu0 %v8700
        %v9091 = vpop.f32.mrf.mxu0
        %v9092 = vadd.f32 0.0, %v9091
        %v9093 = vpop.f32.mrf.mxu0
        %9094 = vmatprep.mubr.f32.mxu0 0.0
        %9095 = vmatmul.mubr.f32.gmra.mxu0 %v8701
        %v9096 = vpop.f32.mrf.mxu0
        %v9097 = vadd.f32 0.0, %v9096
        %v9098 = vpop.f32.mrf.mxu0
        %9099 = vmatprep.mubr.f32.mxu0 0.0
        %9100 = vmatmul.mubr.f32.gmra.mxu0 %v8702
        %v9101 = vpop.f32.mrf.mxu0
        %v9102 = vadd.f32 0.0, %v9101
        %v9103 = vpop.f32.mrf.mxu0
        %9104 = vmatprep.mubr.f32.mxu0 0.0
        %9105 = vmatmul.mubr.f32.gmra.mxu0 %v8703
        %v9106 = vpop.f32.mrf.mxu0
        %v9107 = vadd.f32 0.0, %v9106
        %v9108 = vpop.f32.mrf.mxu0
        %9109 = vmatprep.mubr.f32.mxu0 0.0
        %9110 = vmatmul.mubr.f32.gmra.mxu0 %v8704
        %v9111 = vpop.f32.mrf.mxu0
        %v9112 = vadd.f32 0.0, %v9111
        %v9113 = vpop.f32.mrf.mxu0
        %9114 = vmatprep.mubr.f32.mxu0 0.0
        %9115 = vmatmul.mubr.f32.gmra.mxu0 %v8705
        %v9116 = vpop.f32.mrf.mxu0
        %v9117 = vadd.f32 0.0, %v9116
        %v9118 = vpop.f32.mrf.mxu0
        %9119 = vmatprep.mubr.f32.mxu0 0.0
        %9120 = vmatmul.mubr.f32.gmra.mxu0 %v8706
        %v9121 = vpop.f32.mrf.mxu0
        %v9122 = vadd.f32 0.0, %v9121
        %v9123 = vpop.f32.mrf.mxu0
        %9124 = vmatprep.mubr.f32.mxu0 0.0
        %9125 = vmatmul.mubr.f32.gmra.mxu0 %v8707
        %v9126 = vpop.f32.mrf.mxu0
        %v9127 = vadd.f32 0.0, %v9126
        %v9128 = vpop.f32.mrf.mxu0
        %9129 = vmatprep.mubr.f32.mxu0 0.0
        %9130 = vmatmul.mubr.f32.gmra.mxu0 %v8708
        %v9131 = vpop.f32.mrf.mxu0
        %v9132 = vadd.f32 0.0, %v9131
        %v9133 = vpop.f32.mrf.mxu0
        %9134 = vmatprep.mubr.f32.mxu0 0.0
        %9135 = vmatmul.mubr.f32.gmra.mxu0 %v8709
        %v9136 = vpop.f32.mrf.mxu0
        %v9137 = vadd.f32 0.0, %v9136
        %v9138 = vpop.f32.mrf.mxu0
        %9139 = vmatprep.mubr.f32.mxu0 0.0
        %9140 = vmatmul.mubr.f32.gmra.mxu0 %v8710
        %v9141 = vpop.f32.mrf.mxu0
        %v9142 = vadd.f32 0.0, %v9141
        %v9143 = vpop.f32.mrf.mxu0
        %9144 = vmatprep.mubr.f32.mxu0 0.0
        %9145 = vmatmul.mubr.f32.gmra.mxu0 %v8711
        %v9146 = vpop.f32.mrf.mxu0
        %v9147 = vadd.f32 0.0, %v9146
        %v9148 = vpop.f32.mrf.mxu0
        %9149 = vmatprep.mubr.f32.mxu0 0.0
        %9150 = vmatmul.mubr.f32.gmra.mxu0 %v8712
        %v9151 = vpop.f32.mrf.mxu0
        %v9152 = vadd.f32 0.0, %v9151
        %v9153 = vpop.f32.mrf.mxu0
        %9154 = vmatprep.mubr.f32.mxu0 0.0
        %9155 = vmatmul.mubr.f32.gmra.mxu0 %v8713
        %v9156 = vpop.f32.mrf.mxu0
        %v9157 = vadd.f32 0.0, %v9156
        %v9158 = vpop.f32.mrf.mxu0
        %9159 = vmatprep.mubr.f32.mxu0 0.0
        %9160 = vmatmul.mubr.f32.gmra.mxu0 %v8714
        %v9161 = vpop.f32.mrf.mxu0
        %v9162 = vadd.f32 0.0, %v9161
        %v9163 = vpop.f32.mrf.mxu0
        %9164 = vmatprep.mubr.f32.mxu0 0.0
        %9165 = vmatmul.mubr.f32.gmra.mxu0 %v8715
        %v9166 = vpop.f32.mrf.mxu0
        %v9167 = vadd.f32 0.0, %v9166
        %v9168 = vpop.f32.mrf.mxu0
        %9169 = vmatprep.mubr.f32.mxu0 0.0
        %9170 = vmatmul.mubr.f32.gmra.mxu0 %v8716
        %v9171 = vpop.f32.mrf.mxu0
        %v9172 = vadd.f32 0.0, %v9171
        %v9173 = vpop.f32.mrf.mxu0
        %9174 = vmatprep.mubr.f32.mxu0 0.0
        %9175 = vmatmul.mubr.f32.gmra.mxu0 %v8717
        %v9176 = vpop.f32.mrf.mxu0
        %v9177 = vadd.f32 0.0, %v9176
        %v9178 = vpop.f32.mrf.mxu0
        %9179 = vmatprep.mubr.f32.mxu0 0.0
        %9180 = vmatmul.mubr.f32.gmra.mxu0 %v8718
        %v9181 = vpop.f32.mrf.mxu0
        %v9182 = vadd.f32 0.0, %v9181
        %v9183 = vpop.f32.mrf.mxu0
        %9184 = vmatprep.mubr.f32.mxu0 0.0
        %9185 = vmatmul.mubr.f32.gmra.mxu0 %v8719
        %v9186 = vpop.f32.mrf.mxu0
        %v9187 = vadd.f32 0.0, %v9186
        %v9188 = vpop.f32.mrf.mxu0
        %9189 = vmatprep.mubr.f32.mxu0 0.0
        %9190 = vmatmul.mubr.f32.gmra.mxu0 %v8720
        %v9191 = vpop.f32.mrf.mxu0
        %v9192 = vadd.f32 0.0, %v9191
        %v9193 = vpop.f32.mrf.mxu0
        %9194 = vmatprep.mubr.f32.mxu0 0.0
        %9195 = vmatmul.mubr.f32.gmra.mxu0 %v8721
        %v9196 = vpop.f32.mrf.mxu0
        %v9197 = vadd.f32 0.0, %v9196
        %v9198 = vpop.f32.mrf.mxu0
        %9199 = vmatprep.mubr.f32.mxu0 0.0
        %9200 = vmatmul.mubr.f32.gmra.mxu0 %v8722
        %v9201 = vpop.f32.mrf.mxu0
        %v9202 = vadd.f32 0.0, %v9201
        %v9203 = vpop.f32.mrf.mxu0
        %9204 = vdwg.mxu0
        %v9205 = vmax.f32 %v8806, %v9047
        %v9206 = vmax.f32 %v8811, %v9052
        %v9207 = vmax.f32 %v8816, %v9057
        %v9208 = vmax.f32 %v8821, %v9062
        %v9209 = vmax.f32 %v8826, %v9067
        %v9210 = vmax.f32 %v8831, %v9072
        %v9211 = vmax.f32 %v8836, %v9077
        %v9212 = vmax.f32 %v8841, %v9082
        %v9213 = vmax.f32 %v8846, %v9087
        %v9214 = vmax.f32 %v8851, %v9092
        %v9215 = vmax.f32 %v8856, %v9097
        %v9216 = vmax.f32 %v8861, %v9102
        %v9217 = vmax.f32 %v8866, %v9107
        %v9218 = vmax.f32 %v8871, %v9112
        %v9219 = vmax.f32 %v8876, %v9117
        %v9220 = vmax.f32 %v8881, %v9122
        %v9221 = vmax.f32 %v8886, %v9127
        %v9222 = vmax.f32 %v8891, %v9132
        %v9223 = vmax.f32 %v8896, %v9137
        %v9224 = vmax.f32 %v8901, %v9142
        %v9225 = vmax.f32 %v8906, %v9147
        %v9226 = vmax.f32 %v8911, %v9152
        %v9227 = vmax.f32 %v8916, %v9157
        %v9228 = vmax.f32 %v8921, %v9162
        %v9229 = vmax.f32 %v8926, %v9167
        %v9230 = vmax.f32 %v8931, %v9172
        %v9231 = vmax.f32 %v8936, %v9177
        %v9232 = vmax.f32 %v8941, %v9182
        %v9233 = vmax.f32 %v8946, %v9187
        %v9234 = vmax.f32 %v8951, %v9192
        %v9235 = vmax.f32 %v8956, %v9197
        %v9236 = vmax.f32 %v8961, %v9202
        %v9237 = vmax.f32 %v9205, %v9209
        %v9238 = vmax.f32 %v9206, %v9210
        %v9239 = vmax.f32 %v9207, %v9211
        %v9240 = vmax.f32 %v9208, %v9212
        %v9241 = vmax.f32 %v9213, %v9217
        %v9242 = vmax.f32 %v9214, %v9218
        %v9243 = vmax.f32 %v9215, %v9219
        %v9244 = vmax.f32 %v9216, %v9220
        %v9245 = vmax.f32 %v9221, %v9225
        %v9246 = vmax.f32 %v9222, %v9226
        %v9247 = vmax.f32 %v9223, %v9227
        %v9248 = vmax.f32 %v9224, %v9228
        %v9249 = vmax.f32 %v9229, %v9233
        %v9250 = vmax.f32 %v9230, %v9234
        %v9251 = vmax.f32 %v9231, %v9235
        %v9252 = vmax.f32 %v9232, %v9236
        %v9253 = vld [vmem:[%s9] sm:$0xff]
        %v9254 = vld [vmem:[%s9 + $0x8] sm:$0xff]
        %v9255 = vld [vmem:[%s9 + $0x10] sm:$0xff]
        %v9256 = vld [vmem:[%s9 + $0x18] sm:$0xff]
        %v9257 = vld [vmem:[%s9 + $0x20] sm:$0xff]
        %v9258 = vld [vmem:[%s9 + $0x28] sm:$0xff]
        %v9259 = vld [vmem:[%s9 + $0x30] sm:$0xff]
        %v9260 = vld [vmem:[%s9 + $0x38] sm:$0xff]
        %v9261 = vld [vmem:[%s9 + $0x40] sm:$0xff]
        %v9262 = vld [vmem:[%s9 + $0x48] sm:$0xff]
        %v9263 = vld [vmem:[%s9 + $0x50] sm:$0xff]
        %v9264 = vld [vmem:[%s9 + $0x58] sm:$0xff]
        %v9265 = vld [vmem:[%s9 + $0x60] sm:$0xff]
        %v9266 = vld [vmem:[%s9 + $0x68] sm:$0xff]
        %v9267 = vld [vmem:[%s9 + $0x70] sm:$0xff]
        %v9268 = vld [vmem:[%s9 + $0x78] sm:$0xff]
        %vm9269 = vcmask 523264
        %v9271 = vsel %vm9269, %v9241, 0
        %v9274 = vsel %vm9269, %v9242, 0
        %v9277 = vsel %vm9269, %v9243, 0
        %v9280 = vsel %vm9269, %v9244, 0
        %9282 = vmatprep.subr.mxu0 0.0
        %9283 = vmatpush1.msra.mxu0 0.0
        %9284 = vmatprep.subr.mxu0 0.0
        %9285 = vmatpush1.msra.mxu0 0.0
        %9286 = vmatprep.subr.mxu0 0.0
        %9287 = vmatpush1.msra.mxu0 0.0
        %9288 = vmatprep.subr.mxu0 0.0
        %9289 = vmatpush1.msra.mxu0 0.0
        %9290 = vmatprep.subr.mxu0 0.0
        %9291 = vmatpush1.msra.mxu0 0.0
        %9292 = vmatprep.subr.mxu0 0.0
        %9293 = vmatpush1.msra.mxu0 0.0
        %9294 = vmatprep.subr.mxu0 0.0
        %9295 = vmatpush1.msra.mxu0 0.0
        %9296 = vmatprep.subr.mxu0 0.0
        %9297 = vmatpush1.msra.mxu0 0.0
        %9298 = vmatprep.subr.mxu0 0.0
        %9299 = vmatpush1.msra.mxu0 %v9268
        %9300 = vmatprep.subr.mxu0 0.0
        %9301 = vmatpush1.msra.mxu0 %v9267
        %9302 = vmatprep.subr.mxu0 0.0
        %9303 = vmatpush1.msra.mxu0 %v9266
        %9304 = vmatprep.subr.mxu0 0.0
        %9305 = vmatpush1.msra.mxu0 %v9265
        %9306 = vmatprep.subr.mxu0 0.0
        %9307 = vmatpush1.msra.mxu0 %v9264
        %9308 = vmatprep.subr.mxu0 0.0
        %9309 = vmatpush1.msra.mxu0 %v9263
        %9310 = vmatprep.subr.mxu0 0.0
        %9311 = vmatpush1.msra.mxu0 %v9262
        %9312 = vmatprep.subr.mxu0 0.0
        %9313 = vmatpush1.msra.mxu0 %v9261
        %9314 = vmatprep.subr.mxu0 0.0
        %9315 = vmatpush2.msra.mxu0 0.0
        %9316 = vmatprep.subr.mxu0 0.0
        %9317 = vmatpush2.msra.mxu0 0.0
        %9318 = vmatprep.subr.mxu0 0.0
        %9319 = vmatpush2.msra.mxu0 0.0
        %9320 = vmatprep.subr.mxu0 0.0
        %9321 = vmatpush2.msra.mxu0 0.0
        %9322 = vmatprep.subr.mxu0 0.0
        %9323 = vmatpush2.msra.mxu0 0.0
        %9324 = vmatprep.subr.mxu0 0.0
        %9325 = vmatpush2.msra.mxu0 0.0
        %9326 = vmatprep.subr.mxu0 0.0
        %9327 = vmatpush2.msra.mxu0 0.0
        %9328 = vmatprep.subr.mxu0 0.0
        %9329 = vmatpush2.msra.mxu0 0.0
        %9330 = vmatprep.subr.mxu0 0.0
        %9331 = vmatpush2.msra.mxu0 0.0
        %9332 = vmatprep.subr.mxu0 0.0
        %9333 = vmatpush2.msra.mxu0 0.0
        %9334 = vmatprep.subr.mxu0 0.0
        %9335 = vmatpush2.msra.mxu0 0.0
        %9336 = vmatprep.subr.mxu0 0.0
        %9337 = vmatpush2.msra.mxu0 0.0
        %9338 = vmatprep.subr.mxu0 0.0
        %9339 = vmatpush2.msra.mxu0 0.0
        %9340 = vmatprep.subr.mxu0 0.0
        %9341 = vmatpush2.msra.mxu0 0.0
        %9342 = vmatprep.subr.mxu0 0.0
        %9343 = vmatpush2.msra.mxu0 0.0
        %9344 = vmatprep.subr.mxu0 0.0
        %9345 = vmatpush2.msra.mxu0 0.0
        %9346 = vmatprep.mubr.f32.mxu0 0.0
        %9347 = vmatmul.mubr.f32.gmra.mxu0 %v9271
        %v9348 = vpop.f32.mrf.mxu0
        %v9349 = vadd.f32 0.0, %v9348
        %v9350 = vpop.f32.mrf.mxu0
        %9351 = vmatprep.mubr.f32.mxu0 0.0
        %9352 = vmatmul.mubr.f32.gmra.mxu0 %v9274
        %v9353 = vpop.f32.mrf.mxu0
        %v9354 = vadd.f32 0.0, %v9353
        %v9355 = vpop.f32.mrf.mxu0
        %9356 = vmatprep.mubr.f32.mxu0 0.0
        %9357 = vmatmul.mubr.f32.gmra.mxu0 %v9277
        %v9358 = vpop.f32.mrf.mxu0
        %v9359 = vadd.f32 0.0, %v9358
        %v9360 = vpop.f32.mrf.mxu0
        %9361 = vmatprep.mubr.f32.mxu0 0.0
        %9362 = vmatmul.mubr.f32.gmra.mxu0 %v9280
        %v9363 = vpop.f32.mrf.mxu0
        %v9364 = vadd.f32 0.0, %v9363
        %v9365 = vpop.f32.mrf.mxu0
        %9366 = vdwg.mxu0
        %v9368 = vsel %vm9269, %v9237, 0
        %v9371 = vsel %vm9269, %v9238, 0
        %v9374 = vsel %vm9269, %v9239, 0
        %v9377 = vsel %vm9269, %v9240, 0
        %9379 = vmatprep.subr.mxu0 0.0
        %9380 = vmatpush1.msra.mxu0 0.0
        %9381 = vmatprep.subr.mxu0 0.0
        %9382 = vmatpush1.msra.mxu0 0.0
        %9383 = vmatprep.subr.mxu0 0.0
        %9384 = vmatpush1.msra.mxu0 0.0
        %9385 = vmatprep.subr.mxu0 0.0
        %9386 = vmatpush1.msra.mxu0 0.0
        %9387 = vmatprep.subr.mxu0 0.0
        %9388 = vmatpush1.msra.mxu0 0.0
        %9389 = vmatprep.subr.mxu0 0.0
        %9390 = vmatpush1.msra.mxu0 0.0
        %9391 = vmatprep.subr.mxu0 0.0
        %9392 = vmatpush1.msra.mxu0 0.0
        %9393 = vmatprep.subr.mxu0 0.0
        %9394 = vmatpush1.msra.mxu0 0.0
        %9395 = vmatprep.subr.mxu0 0.0
        %9396 = vmatpush1.msra.mxu0 %v9260
        %9397 = vmatprep.subr.mxu0 0.0
        %9398 = vmatpush1.msra.mxu0 %v9259
        %9399 = vmatprep.subr.mxu0 0.0
        %9400 = vmatpush1.msra.mxu0 %v9258
        %9401 = vmatprep.subr.mxu0 0.0
        %9402 = vmatpush1.msra.mxu0 %v9257
        %9403 = vmatprep.subr.mxu0 0.0
        %9404 = vmatpush1.msra.mxu0 %v9256
        %9405 = vmatprep.subr.mxu0 0.0
        %9406 = vmatpush1.msra.mxu0 %v9255
        %9407 = vmatprep.subr.mxu0 0.0
        %9408 = vmatpush1.msra.mxu0 %v9254
        %9409 = vmatprep.subr.mxu0 0.0
        %9410 = vmatpush1.msra.mxu0 %v9253
        %9411 = vmatprep.subr.mxu0 0.0
        %9412 = vmatpush2.msra.mxu0 0.0
        %9413 = vmatprep.subr.mxu0 0.0
        %9414 = vmatpush2.msra.mxu0 0.0
        %9415 = vmatprep.subr.mxu0 0.0
        %9416 = vmatpush2.msra.mxu0 0.0
        %9417 = vmatprep.subr.mxu0 0.0
        %9418 = vmatpush2.msra.mxu0 0.0
        %9419 = vmatprep.subr.mxu0 0.0
        %9420 = vmatpush2.msra.mxu0 0.0
        %9421 = vmatprep.subr.mxu0 0.0
        %9422 = vmatpush2.msra.mxu0 0.0
        %9423 = vmatprep.subr.mxu0 0.0
        %9424 = vmatpush2.msra.mxu0 0.0
        %9425 = vmatprep.subr.mxu0 0.0
        %9426 = vmatpush2.msra.mxu0 0.0
        %9427 = vmatprep.subr.mxu0 0.0
        %9428 = vmatpush2.msra.mxu0 0.0
        %9429 = vmatprep.subr.mxu0 0.0
        %9430 = vmatpush2.msra.mxu0 0.0
        %9431 = vmatprep.subr.mxu0 0.0
        %9432 = vmatpush2.msra.mxu0 0.0
        %9433 = vmatprep.subr.mxu0 0.0
        %9434 = vmatpush2.msra.mxu0 0.0
        %9435 = vmatprep.subr.mxu0 0.0
        %9436 = vmatpush2.msra.mxu0 0.0
        %9437 = vmatprep.subr.mxu0 0.0
        %9438 = vmatpush2.msra.mxu0 0.0
        %9439 = vmatprep.subr.mxu0 0.0
        %9440 = vmatpush2.msra.mxu0 0.0
        %9441 = vmatprep.subr.mxu0 0.0
        %9442 = vmatpush2.msra.mxu0 0.0
        %9443 = vmatprep.mubr.f32.mxu0 0.0
        %9444 = vmatmul.mubr.f32.gmra.mxu0 %v9368
        %v9445 = vpop.f32.mrf.mxu0
        %v9446 = vadd.f32 %v9349, %v9445
        %v9447 = vpop.f32.mrf.mxu0
        %9448 = vmatprep.mubr.f32.mxu0 0.0
        %9449 = vmatmul.mubr.f32.gmra.mxu0 %v9371
        %v9450 = vpop.f32.mrf.mxu0
        %v9451 = vadd.f32 %v9354, %v9450
        %v9452 = vpop.f32.mrf.mxu0
        %9453 = vmatprep.mubr.f32.mxu0 0.0
        %9454 = vmatmul.mubr.f32.gmra.mxu0 %v9374
        %v9455 = vpop.f32.mrf.mxu0
        %v9456 = vadd.f32 %v9359, %v9455
        %v9457 = vpop.f32.mrf.mxu0
        %9458 = vmatprep.mubr.f32.mxu0 0.0
        %9459 = vmatmul.mubr.f32.gmra.mxu0 %v9377
        %v9460 = vpop.f32.mrf.mxu0
        %v9461 = vadd.f32 %v9364, %v9460
        %v9462 = vpop.f32.mrf.mxu0
        %9463 = vdwg.mxu0
        %v9464 = vld [vmem:[%s9 + $0x80] sm:$0xff]
        %v9465 = vld [vmem:[%s9 + $0x88] sm:$0xff]
        %v9466 = vld [vmem:[%s9 + $0x90] sm:$0xff]
        %v9467 = vld [vmem:[%s9 + $0x98] sm:$0xff]
        %v9468 = vld [vmem:[%s9 + $0xa0] sm:$0xff]
        %v9469 = vld [vmem:[%s9 + $0xa8] sm:$0xff]
        %v9470 = vld [vmem:[%s9 + $0xb0] sm:$0xff]
        %v9471 = vld [vmem:[%s9 + $0xb8] sm:$0xff]
        %v9473 = vsel %vm9269, %v9245, 0
        %v9476 = vsel %vm9269, %v9246, 0
        %v9479 = vsel %vm9269, %v9247, 0
        %v9482 = vsel %vm9269, %v9248, 0
        %9484 = vmatprep.subr.mxu0 0.0
        %9485 = vmatpush1.msra.mxu0 0.0
        %9486 = vmatprep.subr.mxu0 0.0
        %9487 = vmatpush1.msra.mxu0 0.0
        %9488 = vmatprep.subr.mxu0 0.0
        %9489 = vmatpush1.msra.mxu0 0.0
        %9490 = vmatprep.subr.mxu0 0.0
        %9491 = vmatpush1.msra.mxu0 0.0
        %9492 = vmatprep.subr.mxu0 0.0
        %9493 = vmatpush1.msra.mxu0 0.0
        %9494 = vmatprep.subr.mxu0 0.0
        %9495 = vmatpush1.msra.mxu0 0.0
        %9496 = vmatprep.subr.mxu0 0.0
        %9497 = vmatpush1.msra.mxu0 0.0
        %9498 = vmatprep.subr.mxu0 0.0
        %9499 = vmatpush1.msra.mxu0 0.0
        %9500 = vmatprep.subr.mxu0 0.0
        %9501 = vmatpush1.msra.mxu0 %v9471
        %9502 = vmatprep.subr.mxu0 0.0
        %9503 = vmatpush1.msra.mxu0 %v9470
        %9504 = vmatprep.subr.mxu0 0.0
        %9505 = vmatpush1.msra.mxu0 %v9469
        %9506 = vmatprep.subr.mxu0 0.0
        %9507 = vmatpush1.msra.mxu0 %v9468
        %9508 = vmatprep.subr.mxu0 0.0
        %9509 = vmatpush1.msra.mxu0 %v9467
        %9510 = vmatprep.subr.mxu0 0.0
        %9511 = vmatpush1.msra.mxu0 %v9466
        %9512 = vmatprep.subr.mxu0 0.0
        %9513 = vmatpush1.msra.mxu0 %v9465
        %9514 = vmatprep.subr.mxu0 0.0
        %9515 = vmatpush1.msra.mxu0 %v9464
        %9516 = vmatprep.subr.mxu0 0.0
        %9517 = vmatpush2.msra.mxu0 0.0
        %9518 = vmatprep.subr.mxu0 0.0
        %9519 = vmatpush2.msra.mxu0 0.0
        %9520 = vmatprep.subr.mxu0 0.0
        %9521 = vmatpush2.msra.mxu0 0.0
        %9522 = vmatprep.subr.mxu0 0.0
        %9523 = vmatpush2.msra.mxu0 0.0
        %9524 = vmatprep.subr.mxu0 0.0
        %9525 = vmatpush2.msra.mxu0 0.0
        %9526 = vmatprep.subr.mxu0 0.0
        %9527 = vmatpush2.msra.mxu0 0.0
        %9528 = vmatprep.subr.mxu0 0.0
        %9529 = vmatpush2.msra.mxu0 0.0
        %9530 = vmatprep.subr.mxu0 0.0
        %9531 = vmatpush2.msra.mxu0 0.0
        %9532 = vmatprep.subr.mxu0 0.0
        %9533 = vmatpush2.msra.mxu0 0.0
        %9534 = vmatprep.subr.mxu0 0.0
        %9535 = vmatpush2.msra.mxu0 0.0
        %9536 = vmatprep.subr.mxu0 0.0
        %9537 = vmatpush2.msra.mxu0 0.0
        %9538 = vmatprep.subr.mxu0 0.0
        %9539 = vmatpush2.msra.mxu0 0.0
        %9540 = vmatprep.subr.mxu0 0.0
        %9541 = vmatpush2.msra.mxu0 0.0
        %9542 = vmatprep.subr.mxu0 0.0
        %9543 = vmatpush2.msra.mxu0 0.0
        %9544 = vmatprep.subr.mxu0 0.0
        %9545 = vmatpush2.msra.mxu0 0.0
        %9546 = vmatprep.subr.mxu0 0.0
        %9547 = vmatpush2.msra.mxu0 0.0
        %9548 = vmatprep.mubr.f32.mxu0 0.0
        %9549 = vmatmul.mubr.f32.gmra.mxu0 %v9473
        %v9550 = vpop.f32.mrf.mxu0
        %v9551 = vadd.f32 0.0, %v9550
        %v9552 = vpop.f32.mrf.mxu0
        %9553 = vmatprep.mubr.f32.mxu0 0.0
        %9554 = vmatmul.mubr.f32.gmra.mxu0 %v9476
        %v9555 = vpop.f32.mrf.mxu0
        %v9556 = vadd.f32 0.0, %v9555
        %v9557 = vpop.f32.mrf.mxu0
        %9558 = vmatprep.mubr.f32.mxu0 0.0
        %9559 = vmatmul.mubr.f32.gmra.mxu0 %v9479
        %v9560 = vpop.f32.mrf.mxu0
        %v9561 = vadd.f32 0.0, %v9560
        %v9562 = vpop.f32.mrf.mxu0
        %9563 = vmatprep.mubr.f32.mxu0 0.0
        %9564 = vmatmul.mubr.f32.gmra.mxu0 %v9482
        %v9565 = vpop.f32.mrf.mxu0
        %v9566 = vadd.f32 0.0, %v9565
        %v9567 = vpop.f32.mrf.mxu0
        %9568 = vdwg.mxu0
        %v9569 = vadd.f32 %v9446, %v9551
        %v9570 = vadd.f32 %v9451, %v9556
        %v9571 = vadd.f32 %v9456, %v9561
        %v9572 = vadd.f32 %v9461, %v9566
        %v9573 = vld [vmem:[%s9 + $0xc0] sm:$0xff]
        %v9574 = vld [vmem:[%s9 + $0xc8] sm:$0xff]
        %v9575 = vld [vmem:[%s9 + $0xd0] sm:$0xff]
        %v9576 = vld [vmem:[%s9 + $0xd8] sm:$0xff]
        %v9577 = vld [vmem:[%s9 + $0xe0] sm:$0xff]
        %v9578 = vld [vmem:[%s9 + $0xe8] sm:$0xff]
        %v9579 = vld [vmem:[%s9 + $0xf0] sm:$0xff]
        %v9580 = vld [vmem:[%s9 + $0xf8] sm:$0xff]
        %v9582 = vsel %vm9269, %v9249, 0
        %v9585 = vsel %vm9269, %v9250, 0
        %v9588 = vsel %vm9269, %v9251, 0
        %v9591 = vsel %vm9269, %v9252, 0
        %9593 = vmatprep.subr.mxu0 0.0
        %9594 = vmatpush1.msra.mxu0 0.0
        %9595 = vmatprep.subr.mxu0 0.0
        %9596 = vmatpush1.msra.mxu0 0.0
        %9597 = vmatprep.subr.mxu0 0.0
        %9598 = vmatpush1.msra.mxu0 0.0
        %9599 = vmatprep.subr.mxu0 0.0
        %9600 = vmatpush1.msra.mxu0 0.0
        %9601 = vmatprep.subr.mxu0 0.0
        %9602 = vmatpush1.msra.mxu0 0.0
        %9603 = vmatprep.subr.mxu0 0.0
        %9604 = vmatpush1.msra.mxu0 0.0
        %9605 = vmatprep.subr.mxu0 0.0
        %9606 = vmatpush1.msra.mxu0 0.0
        %9607 = vmatprep.subr.mxu0 0.0
        %9608 = vmatpush1.msra.mxu0 0.0
        %9609 = vmatprep.subr.mxu0 0.0
        %9610 = vmatpush1.msra.mxu0 %v9580
        %9611 = vmatprep.subr.mxu0 0.0
        %9612 = vmatpush1.msra.mxu0 %v9579
        %9613 = vmatprep.subr.mxu0 0.0
        %9614 = vmatpush1.msra.mxu0 %v9578
        %9615 = vmatprep.subr.mxu0 0.0
        %9616 = vmatpush1.msra.mxu0 %v9577
        %9617 = vmatprep.subr.mxu0 0.0
        %9618 = vmatpush1.msra.mxu0 %v9576
        %9619 = vmatprep.subr.mxu0 0.0
        %9620 = vmatpush1.msra.mxu0 %v9575
        %9621 = vmatprep.subr.mxu0 0.0
        %9622 = vmatpush1.msra.mxu0 %v9574
        %9623 = vmatprep.subr.mxu0 0.0
        %9624 = vmatpush1.msra.mxu0 %v9573
        %9625 = vmatprep.subr.mxu0 0.0
        %9626 = vmatpush2.msra.mxu0 0.0
        %9627 = vmatprep.subr.mxu0 0.0
        %9628 = vmatpush2.msra.mxu0 0.0
        %9629 = vmatprep.subr.mxu0 0.0
        %9630 = vmatpush2.msra.mxu0 0.0
        %9631 = vmatprep.subr.mxu0 0.0
        %9632 = vmatpush2.msra.mxu0 0.0
        %9633 = vmatprep.subr.mxu0 0.0
        %9634 = vmatpush2.msra.mxu0 0.0
        %9635 = vmatprep.subr.mxu0 0.0
        %9636 = vmatpush2.msra.mxu0 0.0
        %9637 = vmatprep.subr.mxu0 0.0
        %9638 = vmatpush2.msra.mxu0 0.0
        %9639 = vmatprep.subr.mxu0 0.0
        %9640 = vmatpush2.msra.mxu0 0.0
        %9641 = vmatprep.subr.mxu0 0.0
        %9642 = vmatpush2.msra.mxu0 0.0
        %9643 = vmatprep.subr.mxu0 0.0
        %9644 = vmatpush2.msra.mxu0 0.0
        %9645 = vmatprep.subr.mxu0 0.0
        %9646 = vmatpush2.msra.mxu0 0.0
        %9647 = vmatprep.subr.mxu0 0.0
        %9648 = vmatpush2.msra.mxu0 0.0
        %9649 = vmatprep.subr.mxu0 0.0
        %9650 = vmatpush2.msra.mxu0 0.0
        %9651 = vmatprep.subr.mxu0 0.0
        %9652 = vmatpush2.msra.mxu0 0.0
        %9653 = vmatprep.subr.mxu0 0.0
        %9654 = vmatpush2.msra.mxu0 0.0
        %9655 = vmatprep.subr.mxu0 0.0
        %9656 = vmatpush2.msra.mxu0 0.0
        %9657 = vmatprep.mubr.f32.mxu0 0.0
        %9658 = vmatmul.mubr.f32.gmra.mxu0 %v9582
        %v9659 = vpop.f32.mrf.mxu0
        %v9660 = vadd.f32 0.0, %v9659
        %v9661 = vpop.f32.mrf.mxu0
        %9662 = vmatprep.mubr.f32.mxu0 0.0
        %9663 = vmatmul.mubr.f32.gmra.mxu0 %v9585
        %v9664 = vpop.f32.mrf.mxu0
        %v9665 = vadd.f32 0.0, %v9664
        %v9666 = vpop.f32.mrf.mxu0
        %9667 = vmatprep.mubr.f32.mxu0 0.0
        %9668 = vmatmul.mubr.f32.gmra.mxu0 %v9588
        %v9669 = vpop.f32.mrf.mxu0
        %v9670 = vadd.f32 0.0, %v9669
        %v9671 = vpop.f32.mrf.mxu0
        %9672 = vmatprep.mubr.f32.mxu0 0.0
        %9673 = vmatmul.mubr.f32.gmra.mxu0 %v9591
        %v9674 = vpop.f32.mrf.mxu0
        %v9675 = vadd.f32 0.0, %v9674
        %v9676 = vpop.f32.mrf.mxu0
        %9677 = vdwg.mxu0
        %v9678 = vadd.f32 %v9569, %v9660
        %v9679 = vadd.f32 %v9570, %v9665
        %v9680 = vadd.f32 %v9571, %v9670
        %v9681 = vadd.f32 %v9572, %v9675
        %v9682 = vld [vmem:[%s10] sm:$0x1]
        %v9684 = vlaneseq
        %v9685 = vshrl.u32 %v9684, 7
        %v9686 = vsub.s32 0, %v9685
        %v9687 = vrot.slane %v9682, %v9686
        %v9689 = vadd.f32 %v9678, %v9687
        %v9690 = vadd.f32 %v9679, %v9687
        %v9691 = vadd.f32 %v9680, %v9687
        %v9692 = vadd.f32 %v9681, %v9687
        %v9693 = vmax.f32 %v9689, 0.0
        %v9694 = vmax.f32 %v9690, 0.0
        %v9695 = vmax.f32 %v9691, 0.0
        %v9696 = vmax.f32 %v9692, 0.0
        %v9697 = vld [vmem:[%s11] sm:$0xff]
        %v9698 = vld [vmem:[%s11 + $0x8] sm:$0xff]
        %v9699 = vld [vmem:[%s11 + $0x10] sm:$0xff]
        %v9700 = vld [vmem:[%s11 + $0x18] sm:$0xff]
        %v9701 = vld [vmem:[%s11 + $0x20] sm:$0xff]
        %v9702 = vld [vmem:[%s11 + $0x28] sm:$0xff]
        %v9703 = vld [vmem:[%s11 + $0x30] sm:$0xff]
        %v9704 = vld [vmem:[%s11 + $0x38] sm:$0xff]
        %v9705 = vld [vmem:[%s11 + $0x40] sm:$0xff]
        %v9706 = vld [vmem:[%s11 + $0x48] sm:$0xff]
        %v9707 = vld [vmem:[%s11 + $0x50] sm:$0xff]
        %v9708 = vld [vmem:[%s11 + $0x58] sm:$0xff]
        %v9709 = vld [vmem:[%s11 + $0x60] sm:$0xff]
        %v9710 = vld [vmem:[%s11 + $0x68] sm:$0xff]
        %v9711 = vld [vmem:[%s11 + $0x70] sm:$0xff]
        %v9712 = vld [vmem:[%s11 + $0x78] sm:$0xff]
        %v9713 = vld [vmem:[%s12] sm:$0x1]
        %v9715 = vlaneseq
        %v9716 = vshrl.u32 %v9715, 7
        %v9717 = vsub.s32 0, %v9716
        %v9718 = vrot.slane %v9713, %v9717
        %9720 = vmatprep.subr.mxu0 0.0
        %9721 = vmatpush1.msra.mxu0 %v9712
        %9722 = vmatprep.subr.mxu0 0.0
        %9723 = vmatpush1.msra.mxu0 %v9711
        %9724 = vmatprep.subr.mxu0 0.0
        %9725 = vmatpush1.msra.mxu0 %v9710
        %9726 = vmatprep.subr.mxu0 0.0
        %9727 = vmatpush1.msra.mxu0 %v9709
        %9728 = vmatprep.subr.mxu0 0.0
        %9729 = vmatpush1.msra.mxu0 %v9708
        %9730 = vmatprep.subr.mxu0 0.0
        %9731 = vmatpush1.msra.mxu0 %v9707
        %9732 = vmatprep.subr.mxu0 0.0
        %9733 = vmatpush1.msra.mxu0 %v9706
        %9734 = vmatprep.subr.mxu0 0.0
        %9735 = vmatpush1.msra.mxu0 %v9705
        %9736 = vmatprep.subr.mxu0 0.0
        %9737 = vmatpush1.msra.mxu0 %v9704
        %9738 = vmatprep.subr.mxu0 0.0
        %9739 = vmatpush1.msra.mxu0 %v9703
        %9740 = vmatprep.subr.mxu0 0.0
        %9741 = vmatpush1.msra.mxu0 %v9702
        %9742 = vmatprep.subr.mxu0 0.0
        %9743 = vmatpush1.msra.mxu0 %v9701
        %9744 = vmatprep.subr.mxu0 0.0
        %9745 = vmatpush1.msra.mxu0 %v9700
        %9746 = vmatprep.subr.mxu0 0.0
        %9747 = vmatpush1.msra.mxu0 %v9699
        %9748 = vmatprep.subr.mxu0 0.0
        %9749 = vmatpush1.msra.mxu0 %v9698
        %9750 = vmatprep.subr.mxu0 0.0
        %9751 = vmatpush1.msra.mxu0 %v9697
        %9752 = vmatprep.subr.mxu0 0.0
        %9753 = vmatpush2.msra.mxu0 0.0
        %9754 = vmatprep.subr.mxu0 0.0
        %9755 = vmatpush2.msra.mxu0 0.0
        %9756 = vmatprep.subr.mxu0 0.0
        %9757 = vmatpush2.msra.mxu0 0.0
        %9758 = vmatprep.subr.mxu0 0.0
        %9759 = vmatpush2.msra.mxu0 0.0
        %9760 = vmatprep.subr.mxu0 0.0
        %9761 = vmatpush2.msra.mxu0 0.0
        %9762 = vmatprep.subr.mxu0 0.0
        %9763 = vmatpush2.msra.mxu0 0.0
        %9764 = vmatprep.subr.mxu0 0.0
        %9765 = vmatpush2.msra.mxu0 0.0
        %9766 = vmatprep.subr.mxu0 0.0
        %9767 = vmatpush2.msra.mxu0 0.0
        %9768 = vmatprep.subr.mxu0 0.0
        %9769 = vmatpush2.msra.mxu0 0.0
        %9770 = vmatprep.subr.mxu0 0.0
        %9771 = vmatpush2.msra.mxu0 0.0
        %9772 = vmatprep.subr.mxu0 0.0
        %9773 = vmatpush2.msra.mxu0 0.0
        %9774 = vmatprep.subr.mxu0 0.0
        %9775 = vmatpush2.msra.mxu0 0.0
        %9776 = vmatprep.subr.mxu0 0.0
        %9777 = vmatpush2.msra.mxu0 0.0
        %9778 = vmatprep.subr.mxu0 0.0
        %9779 = vmatpush2.msra.mxu0 0.0
        %9780 = vmatprep.subr.mxu0 0.0
        %9781 = vmatpush2.msra.mxu0 0.0
        %9782 = vmatprep.subr.mxu0 0.0
        %9783 = vmatpush2.msra.mxu0 0.0
        %9784 = vmatprep.mubr.f32.mxu0 0.0
        %9785 = vmatmul.mubr.f32.gmra.mxu0 %v9693
        %v9786 = vpop.f32.mrf.mxu0
        %v9787 = vadd.f32 %v9718, %v9786
        %v9788 = vpop.f32.mrf.mxu0
        %9789 = vmatprep.mubr.f32.mxu0 0.0
        %9790 = vmatmul.mubr.f32.gmra.mxu0 %v9694
        %v9791 = vpop.f32.mrf.mxu0
        %v9792 = vadd.f32 %v9718, %v9791
        %v9793 = vpop.f32.mrf.mxu0
        %9794 = vmatprep.mubr.f32.mxu0 0.0
        %9795 = vmatmul.mubr.f32.gmra.mxu0 %v9695
        %v9796 = vpop.f32.mrf.mxu0
        %v9797 = vadd.f32 %v9718, %v9796
        %v9798 = vpop.f32.mrf.mxu0
        %9799 = vmatprep.mubr.f32.mxu0 0.0
        %9800 = vmatmul.mubr.f32.gmra.mxu0 %v9696
        %v9801 = vpop.f32.mrf.mxu0
        %v9802 = vadd.f32 %v9718, %v9801
        %v9803 = vpop.f32.mrf.mxu0
        %9804 = vdwg.mxu0
        %v9805 = vmax.f32 %v9787, 0.0
        %v9806 = vmax.f32 %v9792, 0.0
        %v9807 = vmax.f32 %v9797, 0.0
        %v9808 = vmax.f32 %v9802, 0.0
        %v9809 = vld [vmem:[%s13] sm:$0xff]
        %v9810 = vld [vmem:[%s13 + $0x8] sm:$0xff]
        %v9811 = vld [vmem:[%s13 + $0x10] sm:$0xff]
        %v9812 = vld [vmem:[%s13 + $0x18] sm:$0xff]
        %v9813 = vld [vmem:[%s13 + $0x20] sm:$0xff]
        %v9814 = vld [vmem:[%s13 + $0x28] sm:$0xff]
        %v9815 = vld [vmem:[%s13 + $0x30] sm:$0xff]
        %v9816 = vld [vmem:[%s13 + $0x38] sm:$0xff]
        %v9817 = vld [vmem:[%s14] sm:$0x1]
        %v9819 = vlaneseq
        %v9820 = vshrl.u32 %v9819, 7
        %v9821 = vsub.s32 0, %v9820
        %v9822 = vrot.slane %v9817, %v9821
        %v9825 = vsel %vm9269, %v9805, 0
        %v9828 = vsel %vm9269, %v9806, 0
        %v9831 = vsel %vm9269, %v9807, 0
        %v9834 = vsel %vm9269, %v9808, 0
        %9836 = vmatprep.subr.mxu0 0.0
        %9837 = vmatpush1.msra.mxu0 0.0
        %9838 = vmatprep.subr.mxu0 0.0
        %9839 = vmatpush1.msra.mxu0 0.0
        %9840 = vmatprep.subr.mxu0 0.0
        %9841 = vmatpush1.msra.mxu0 0.0
        %9842 = vmatprep.subr.mxu0 0.0
        %9843 = vmatpush1.msra.mxu0 0.0
        %9844 = vmatprep.subr.mxu0 0.0
        %9845 = vmatpush1.msra.mxu0 0.0
        %9846 = vmatprep.subr.mxu0 0.0
        %9847 = vmatpush1.msra.mxu0 0.0
        %9848 = vmatprep.subr.mxu0 0.0
        %9849 = vmatpush1.msra.mxu0 0.0
        %9850 = vmatprep.subr.mxu0 0.0
        %9851 = vmatpush1.msra.mxu0 0.0
        %9852 = vmatprep.subr.mxu0 0.0
        %9853 = vmatpush1.msra.mxu0 %v9816
        %9854 = vmatprep.subr.mxu0 0.0
        %9855 = vmatpush1.msra.mxu0 %v9815
        %9856 = vmatprep.subr.mxu0 0.0
        %9857 = vmatpush1.msra.mxu0 %v9814
        %9858 = vmatprep.subr.mxu0 0.0
        %9859 = vmatpush1.msra.mxu0 %v9813
        %9860 = vmatprep.subr.mxu0 0.0
        %9861 = vmatpush1.msra.mxu0 %v9812
        %9862 = vmatprep.subr.mxu0 0.0
        %9863 = vmatpush1.msra.mxu0 %v9811
        %9864 = vmatprep.subr.mxu0 0.0
        %9865 = vmatpush1.msra.mxu0 %v9810
        %9866 = vmatprep.subr.mxu0 0.0
        %9867 = vmatpush1.msra.mxu0 %v9809
        %9868 = vmatprep.subr.mxu0 0.0
        %9869 = vmatpush2.msra.mxu0 0.0
        %9870 = vmatprep.subr.mxu0 0.0
        %9871 = vmatpush2.msra.mxu0 0.0
        %9872 = vmatprep.subr.mxu0 0.0
        %9873 = vmatpush2.msra.mxu0 0.0
        %9874 = vmatprep.subr.mxu0 0.0
        %9875 = vmatpush2.msra.mxu0 0.0
        %9876 = vmatprep.subr.mxu0 0.0
        %9877 = vmatpush2.msra.mxu0 0.0
        %9878 = vmatprep.subr.mxu0 0.0
        %9879 = vmatpush2.msra.mxu0 0.0
        %9880 = vmatprep.subr.mxu0 0.0
        %9881 = vmatpush2.msra.mxu0 0.0
        %9882 = vmatprep.subr.mxu0 0.0
        %9883 = vmatpush2.msra.mxu0 0.0
        %9884 = vmatprep.subr.mxu0 0.0
        %9885 = vmatpush2.msra.mxu0 0.0
        %9886 = vmatprep.subr.mxu0 0.0
        %9887 = vmatpush2.msra.mxu0 0.0
        %9888 = vmatprep.subr.mxu0 0.0
        %9889 = vmatpush2.msra.mxu0 0.0
        %9890 = vmatprep.subr.mxu0 0.0
        %9891 = vmatpush2.msra.mxu0 0.0
        %9892 = vmatprep.subr.mxu0 0.0
        %9893 = vmatpush2.msra.mxu0 0.0
        %9894 = vmatprep.subr.mxu0 0.0
        %9895 = vmatpush2.msra.mxu0 0.0
        %9896 = vmatprep.subr.mxu0 0.0
        %9897 = vmatpush2.msra.mxu0 0.0
        %9898 = vmatprep.subr.mxu0 0.0
        %9899 = vmatpush2.msra.mxu0 0.0
        %9900 = vmatprep.mubr.f32.mxu0 0.0
        %9901 = vmatmul.mubr.f32.gmra.mxu0 %v9825
        %v9902 = vpop.f32.mrf.mxu0
        %v9903 = vadd.f32 %v9822, %v9902
        %v9904 = vpop.f32.mrf.mxu0
        %9905 = vmatprep.mubr.f32.mxu0 0.0
        %9906 = vmatmul.mubr.f32.gmra.mxu0 %v9828
        %v9907 = vpop.f32.mrf.mxu0
        %v9908 = vadd.f32 %v9822, %v9907
        %v9909 = vpop.f32.mrf.mxu0
        %9910 = vmatprep.mubr.f32.mxu0 0.0
        %9911 = vmatmul.mubr.f32.gmra.mxu0 %v9831
        %v9912 = vpop.f32.mrf.mxu0
        %v9913 = vadd.f32 %v9822, %v9912
        %v9914 = vpop.f32.mrf.mxu0
        %9915 = vmatprep.mubr.f32.mxu0 0.0
        %9916 = vmatmul.mubr.f32.gmra.mxu0 %v9834
        %v9917 = vpop.f32.mrf.mxu0
        %v9918 = vadd.f32 %v9822, %v9917
        %v9919 = vpop.f32.mrf.mxu0
        %9920 = vdwg.mxu0
        %9921 = vst [vmem:[%s975] sm:$0xff] %v9903
        %9922 = vst [vmem:[%s975 + $0x8] sm:$0xff] %v9908
        %9923 = vst [vmem:[%s975 + $0x10] sm:$0xff] %v9913
        %9924 = vst [vmem:[%s975 + $0x18] sm:$0xff] %v9918
        %s9925 = smul.u32 4, %s26
        %p9926 = scmp.lt.s32.totalorder %s9925, 7
        %s9927 = scalar_select %p9926, %s9925, 7
        %s9928 = smul.addr %s9927, 8
        %s9929 = scalar_lea.vmem %s15, %s9928
        // Predicated region
        $region119: #{cnn_forward.1} parent=113 // pred_check
          %p9930 = pneg %p364
        $region120: #{cnn_forward.1} parent=113 // pred_check_branch
          %9932 = sbr.rel (%p9930) target = $region122
        $region121: #{cnn_forward.1} parent=113 // pred_region
          %s9933 = smul.u32 4, %s26
        $region122: #{cnn_forward.1} parent=113 // pred_fallthru
          _
      $region114: #{cnn_forward.1} parent=5 // pred_fallthru
        _
      %p9934 = scmp.le.s32.totalorder 2, %s21
      // Predicated region
      $region123: #{cnn_forward.1} parent=5 // pred_check
        %p9935 = pneg %p9934
      $region124: #{cnn_forward.1} parent=5 // pred_check_branch
        %9937 = sbr.rel (%p9935) target = $region126
      $region125: #{cnn_forward.1} parent=5 // pred_region
        %s9938 = ssub.s32 %s21, 2
        // Predicated region
        $region127: #{cnn_forward.1} parent=125 // pred_check
          %p9939 = pneg %p370
        $region128: #{cnn_forward.1} parent=125 // pred_check_branch
          %9941 = sbr.rel (%p9939) target = $region130
        $region129: #{cnn_forward.1} parent=125 // pred_region
          %s9942 = smul.u32 4, %s27
          %p9943 = scmp.lt.s32.totalorder %s9942, 7
          %s9944 = scalar_select %p9943, %s9942, 7
          %s9945 = smul.addr %s9944, 8
          %s9946 = scalar_lea.vmem %s15, %s9945
        $region130: #{cnn_forward.1} parent=125 // pred_fallthru
          _
      $region126: #{cnn_forward.1} parent=5 // pred_fallthru
        _
    $region6: #{cnn_forward.1} parent=1 // loop_footer
      %s25 = sadd.s32 1, %s21
    $region7: #{cnn_forward.1} parent=1 // loop_footer_branch
      %20 = sbr.rel target = $region3
    $region8: #{cnn_forward.1} parent=1 // loop_exit
      _

</llo_original>
